<compile_context>
chip_gen: v5e
topology: v5e:2x2
jax: 0.10.0
libtpu: 0.0.40
codegen_flags: <defaults>
</compile_context>

<pallas_src>
import functools

import jax
import jax.numpy as jnp
from jax.experimental import pallas as pl
from jax.experimental.pallas import tpu as pltpu

VMEM_SPEC = pl.BlockSpec(memory_space=pltpu.MemorySpace.VMEM)


# ------------------------------ fused kernel -------------------------------

def _vq_encoder_fused_kernel(*args, seq_len, batch_pad, h_dim, a_dim, n_layers):
    T, Bp, H, A = seq_len, batch_pad, h_dim, a_dim
    f32 = jnp.float32

    n_in = 2 + 4 + 10 * n_layers + 4
    refs = args[:n_in]
    o_ref = args[n_in]
    scr = args[n_in + 1:]                                  # (scr_r, scr_z, scr_n)

    states_ref, actions_ref = refs[0], refs[1]
    emb_w1, emb_b1, emb_w2, emb_b2 = refs[2:6]
    layer_refs = [refs[6 + 10 * l: 6 + 10 * (l + 1)] for l in range(n_layers)]
    mean_w1, mean_b1, mean_w2, mean_b2 = refs[6 + 10 * n_layers:n_in]

    def rev_t(v):
        """Reverse the T row-blocks (time) of a (T*Bp, W) value: static vreg picks."""
        return jnp.concatenate(
            [v[(T - 1 - t) * Bp:(T - t) * Bp, :] for t in range(T)], axis=0)

    # ---- embedding MLP (off the recurrence critical path) ----
    h1 = jnp.maximum(
        jnp.dot(states_ref[...], emb_w1[...], preferred_element_type=f32)
        + emb_b1[...], 0.0)
    s_emb = jnp.maximum(
        jnp.dot(h1, emb_w2[...], preferred_element_type=f32) + emb_b2[...], 0.0)
    acts = actions_ref[...]

    hn = None
    x = None                                               # (T*Bp, 2H) for layers >= 1

    for l in range(n_layers):
        lrefs = layer_refs[l]
        gate_refs = [lrefs[3 * g: 3 * g + 3] for g in range(3)]   # (wi, whh_blk, bproj)
        bhn_ref = lrefs[9]

        # ---- hoisted per-sequence input projections (one per gate, off-chain) ----
        # Scratch row-block s holds [gx_fwd(t=s) | gx_bwd(t=T-1-s)]: one aligned
        # (Bp, 2H) load feeds both directions of recurrence step s.
        for g in range(3):
            wi_ref, _, bproj_ref = gate_refs[g]
            if l == 0:
                # concat(s_emb, actions) folded into split row-blocks of W_ih
                proj = (jnp.dot(s_emb, wi_ref[pl.ds(0, H), :],
                                preferred_element_type=f32)
                        + jnp.dot(acts, wi_ref[pl.ds(H, A), :],
                                  preferred_element_type=f32))
            else:
                proj = jnp.dot(x, wi_ref[...], preferred_element_type=f32)
            fused = jnp.concatenate([proj[:, :H], rev_t(proj[:, H:])], axis=-1)
            scr[g][...] = fused + bproj_ref[...]           # b_ih (+ b_hh for r,z) folded

        whh = [gate_refs[g][1][...] for g in range(3)]     # block-diag (2H, 2H) each
        bhn = jnp.broadcast_to(bhn_ref[...], (Bp, 2 * H))  # hoisted b_hn broadcast

        # ---- fused bidirectional recurrence: step s = fwd time s + bwd time T-1-s ----
        h = jnp.zeros((Bp, 2 * H), f32)
        hs = []
        for s in range(T):
            gh_r = jnp.dot(h, whh[0], preferred_element_type=f32)
            gh_z = jnp.dot(h, whh[1], preferred_element_type=f32)
            gh_n = jnp.dot(h, whh[2], preferred_element_type=f32)
            r = jax.nn.sigmoid(scr[0][pl.ds(s * Bp, Bp), :] + gh_r)
            z = jax.nn.sigmoid(scr[1][pl.ds(s * Bp, Bp), :] + gh_z)
            n = jnp.tanh(scr[2][pl.ds(s * Bp, Bp), :] + r * (gh_n + bhn))
            h = n + z * (h - n)                            # == (1-z)*n + z*h
            hs.append(h)

        if l == n_layers - 1:
            # feats[:, -1, :] = [fwd(T-1) | bwd(T-1)]; bwd(T-1) was produced at step 0.
            hn = jnp.concatenate([hs[T - 1][:, :H], hs[0][:, H:]], axis=-1)
        else:
            # next layer input x[t] = [fwd(t) | bwd(t)]; bwd(t) lives at step T-1-t
            x = jnp.concatenate(
                [jnp.concatenate([hs[t][:, :H], hs[T - 1 - t][:, H:]], axis=-1)
                 for t in range(T)], axis=0)

    # ---- mean MLP ----
    m1 = jnp.maximum(
        jnp.dot(hn, mean_w1[...], preferred_element_type=f32) + mean_b1[...], 0.0)
    z_out = jnp.dot(m1, mean_w2[...], preferred_element_type=f32) + mean_b2[...]
    o_ref[...] = z_out.astype(o_ref.dtype)


# ------------------------------ model wrapper ------------------------------

def vq_encoder_forward(params, states, actions):
    B, T, _ = states.shape
    A = actions.shape[-1]
    H = params["emb"]["w2"].shape[1]
    n_layers = len(params["gru"])
    out_dim = params["mean"]["w2"].shape[1]
    Bp = ((B + 7) // 8) * 8                 # pad batch to the 8-sublane tile

    def to_tb(v):                            # (B,T,D) -> time-major, batch-padded (T*Bp, D)
        v = jnp.transpose(v, (1, 0, 2))
        v = jnp.pad(v, ((0, 0), (0, Bp - B), (0, 0)))
        return v.reshape(T * Bp, v.shape[-1])

    args = [to_tb(states), to_tb(actions),
            params["emb"]["w1"], params["emb"]["b1"],
            params["emb"]["w2"], params["emb"]["b2"]]

    # Host-side repack of GRU params: per gate g (r|z|n) a fused input weight
    # (Din, 2H)=[fwd|bwd], a block-diagonal recurrent weight (2H, 2H) and a fused
    # projection bias (1, 2H); plus the fused n-gate hidden bias (1, 2H).
    zH = jnp.zeros((H, H), jnp.float32)
    for layer in params["gru"]:
        wi_f, wh_f, bi_f, bh_f = layer["fwd"]
        wi_b, wh_b, bi_b, bh_b = layer["bwd"]
        for g in range(3):
            c = slice(g * H, (g + 1) * H)
            wi_g = jnp.concatenate([wi_f[:, c], wi_b[:, c]], axis=-1)
            whh_g = jnp.concatenate(
                [jnp.concatenate([wh_f[:, c], zH], axis=1),
                 jnp.concatenate([zH, wh_b[:, c]], axis=1)], axis=0)
            if g < 2:   # r, z gates: b_hh folds into the hoisted projection constant
                bproj_g = jnp.concatenate([bi_f[:, c] + bh_f[:, c],
                                           bi_b[:, c] + bh_b[:, c]], axis=-1)
            else:       # n gate: only b_ih (b_hh stays inside r*(...))
                bproj_g = jnp.concatenate([bi_f[:, c], bi_b[:, c]], axis=-1)
            args.extend([wi_g, whh_g, bproj_g])
        cn = slice(2 * H, 3 * H)
        args.append(jnp.concatenate([bh_f[:, cn], bh_b[:, cn]], axis=-1))

    args.extend([params["mean"]["w1"], params["mean"]["b1"],
                 params["mean"]["w2"], params["mean"]["b2"]])

    kernel = functools.partial(_vq_encoder_fused_kernel, seq_len=T, batch_pad=Bp,
                               h_dim=H, a_dim=A, n_layers=n_layers)

    z_mean = pl.pallas_call(
        kernel,
        out_shape=jax.ShapeDtypeStruct((Bp, out_dim), jnp.float32),
        in_specs=[VMEM_SPEC] * len(args),
        out_specs=VMEM_SPEC,
        scratch_shapes=[pltpu.VMEM((T * Bp, 2 * H), jnp.float32) for _ in range(3)],
    )(*args)
    return z_mean[:B][:, None, :]                           # (B, 1, n_z*z_dim)


# --------------------------- parameter creation ----------------------------

def init_params(key, state_dim, a_dim, z_dim, h_dim, n_z, n_layers):
    keys = jax.random.split(key, 4 + n_layers)

    def uni(k, shape, bound):
        return jax.random.uniform(k, shape, jnp.float32, -bound, bound)

    def linear(k, fan_in, fan_out):
        kw, kb = jax.random.split(k)
        b = 1.0 / float(fan_in) ** 0.5
        return uni(kw, (fan_in, fan_out), b), uni(kb, (1, fan_out), b)

    def gru_dir(k, d_in):
        k1, k2, k3, k4 = jax.random.split(k, 4)
        b = 1.0 / float(h_dim) ** 0.5
        # gate-concatenated layout along the output dim (r | z | n), stored transposed
        return (uni(k1, (d_in, 3 * h_dim), b),   # W_ih^T
                uni(k2, (h_dim, 3 * h_dim), b),  # W_hh^T
                uni(k3, (1, 3 * h_dim), b),      # b_ih
                uni(k4, (1, 3 * h_dim), b))      # b_hh

    emb_w1, emb_b1 = linear(keys[0], state_dim, h_dim)
    emb_w2, emb_b2 = linear(keys[1], h_dim, h_dim)
    mean_w1, mean_b1 = linear(keys[2], 2 * h_dim, h_dim)
    mean_w2, mean_b2 = linear(keys[3], h_dim, n_z * z_dim)

    gru = []
    for l in range(n_layers):
        d_in = (h_dim + a_dim) if l == 0 else 2 * h_dim
        kf, kb = jax.random.split(keys[4 + l])
        gru.append({"fwd": gru_dir(kf, d_in), "bwd": gru_dir(kb, d_in)})

    return {
        "emb": {"w1": emb_w1, "b1": emb_b1, "w2": emb_w2, "b2": emb_b2},
        "mean": {"w1": mean_w1, "b1": mean_b1, "w2": mean_w2, "b2": mean_b2},
        "gru": gru,
    }


# --------------------------- pure-JAX reference -----------------------------

def _mm(a, b):
    return jnp.dot(a, b, precision=jax.lax.Precision.HIGHEST)


def _ref_gru_dir(x_tbd, wi, wh, bi, bh):
    seq_len, batch, _ = x_tbd.shape
    h_dim = wh.shape[0]
    h = jnp.zeros((batch, h_dim), jnp.float32)
    outs = []
    for t in range(seq_len):
        gx = _mm(x_tbd[t], wi) + bi
        gh = _mm(h, wh) + bh
        r = jax.nn.sigmoid(gx[:, :h_dim] + gh[:, :h_dim])
        z = jax.nn.sigmoid(gx[:, h_dim:2 * h_dim] + gh[:, h_dim:2 * h_dim])
        n = jnp.tanh(gx[:, 2 * h_dim:] + r * gh[:, 2 * h_dim:])
        h = (1.0 - z) * n + z * h
        outs.append(h)
    return jnp.stack(outs, axis=0)


def _ref_forward(params, states, actions):
    emb = params["emb"]
    h = jnp.maximum(_mm(states, emb["w1"]) + emb["b1"], 0.0)
    s_emb = jnp.maximum(_mm(h, emb["w2"]) + emb["b2"], 0.0)
    x = jnp.transpose(jnp.concatenate([s_emb, actions], axis=-1), (1, 0, 2))
    for layer in params["gru"]:
        fwd = _ref_gru_dir(x, *layer["fwd"])
        bwd = jnp.flip(_ref_gru_dir(jnp.flip(x, 0), *layer["bwd"]), 0)
        x = jnp.concatenate([fwd, bwd], axis=-1)
    feats = jnp.transpose(x, (1, 0, 2))
    hn = feats[:, -1, :]
    m = params["mean"]
    h2 = jnp.maximum(_mm(hn, m["w1"]) + m["b1"], 0.0)
    return (_mm(h2, m["w2"]) + m["b2"])[:, None, :]


# --------------------------------- main -------------------------------------

if __name__ == "__main__":
    B, T = 2, 8
    STATE_DIM, A_DIM, Z_DIM, H_DIM, N_Z, N_LAYERS = 4, 2, 4, 32, 4, 4

    key = jax.random.PRNGKey(0)
    pkey, skey, akey = jax.random.split(key, 3)
    params = init_params(pkey, STATE_DIM, A_DIM, Z_DIM, H_DIM, N_Z, N_LAYERS)
    states = jax.random.normal(skey, (B, T, STATE_DIM), jnp.float32)
    actions = jax.random.normal(akey, (B, T, A_DIM), jnp.float32)

    fwd_fn = jax.jit(vq_encoder_forward)
    z_mean = fwd_fn(params, states, actions)
    jax.block_until_ready(z_mean)

    assert z_mean.shape == (B, 1, N_Z * Z_DIM), z_mean.shape

    # Reference uses exact-f32 matmuls; kernel uses the MXU's default f32 path,
    # so the tolerance is bounded by matmul precision, not layout correctness
    # (a gate-order / bias-placement / direction-fusion bug would give O(0.1) errors).
    z_ref = _ref_forward(params, states, actions)
    max_err = float(jnp.max(jnp.abs(z_mean - z_ref)))
    assert max_err < 1e-2, f"mismatch vs pure-JAX reference: {max_err}"

    print("KERNEL_OK")
</pallas_src>

<mosaic_0001>
module attributes {stable_mosaic.version = 11 : i64} {
  func.func @_vq_encoder_fused_kernel(%arg0: memref<64x4xf32, #tpu.memory_space<vmem>>, %arg1: memref<64x2xf32, #tpu.memory_space<vmem>>, %arg2: memref<4x32xf32, #tpu.memory_space<vmem>>, %arg3: memref<1x32xf32, #tpu.memory_space<vmem>>, %arg4: memref<32x32xf32, #tpu.memory_space<vmem>>, %arg5: memref<1x32xf32, #tpu.memory_space<vmem>>, %arg6: memref<34x64xf32, #tpu.memory_space<vmem>>, %arg7: memref<64x64xf32, #tpu.memory_space<vmem>>, %arg8: memref<1x64xf32, #tpu.memory_space<vmem>>, %arg9: memref<34x64xf32, #tpu.memory_space<vmem>>, %arg10: memref<64x64xf32, #tpu.memory_space<vmem>>, %arg11: memref<1x64xf32, #tpu.memory_space<vmem>>, %arg12: memref<34x64xf32, #tpu.memory_space<vmem>>, %arg13: memref<64x64xf32, #tpu.memory_space<vmem>>, %arg14: memref<1x64xf32, #tpu.memory_space<vmem>>, %arg15: memref<1x64xf32, #tpu.memory_space<vmem>>, %arg16: memref<64x64xf32, #tpu.memory_space<vmem>>, %arg17: memref<64x64xf32, #tpu.memory_space<vmem>>, %arg18: memref<1x64xf32, #tpu.memory_space<vmem>>, %arg19: memref<64x64xf32, #tpu.memory_space<vmem>>, %arg20: memref<64x64xf32, #tpu.memory_space<vmem>>, %arg21: memref<1x64xf32, #tpu.memory_space<vmem>>, %arg22: memref<64x64xf32, #tpu.memory_space<vmem>>, %arg23: memref<64x64xf32, #tpu.memory_space<vmem>>, %arg24: memref<1x64xf32, #tpu.memory_space<vmem>>, %arg25: memref<1x64xf32, #tpu.memory_space<vmem>>, %arg26: memref<64x64xf32, #tpu.memory_space<vmem>>, %arg27: memref<64x64xf32, #tpu.memory_space<vmem>>, %arg28: memref<1x64xf32, #tpu.memory_space<vmem>>, %arg29: memref<64x64xf32, #tpu.memory_space<vmem>>, %arg30: memref<64x64xf32, #tpu.memory_space<vmem>>, %arg31: memref<1x64xf32, #tpu.memory_space<vmem>>, %arg32: memref<64x64xf32, #tpu.memory_space<vmem>>, %arg33: memref<64x64xf32, #tpu.memory_space<vmem>>, %arg34: memref<1x64xf32, #tpu.memory_space<vmem>>, %arg35: memref<1x64xf32, #tpu.memory_space<vmem>>, %arg36: memref<64x64xf32, #tpu.memory_space<vmem>>, %arg37: memref<64x64xf32, #tpu.memory_space<vmem>>, %arg38: memref<1x64xf32, #tpu.memory_space<vmem>>, %arg39: memref<64x64xf32, #tpu.memory_space<vmem>>, %arg40: memref<64x64xf32, #tpu.memory_space<vmem>>, %arg41: memref<1x64xf32, #tpu.memory_space<vmem>>, %arg42: memref<64x64xf32, #tpu.memory_space<vmem>>, %arg43: memref<64x64xf32, #tpu.memory_space<vmem>>, %arg44: memref<1x64xf32, #tpu.memory_space<vmem>>, %arg45: memref<1x64xf32, #tpu.memory_space<vmem>>, %arg46: memref<64x32xf32, #tpu.memory_space<vmem>>, %arg47: memref<1x32xf32, #tpu.memory_space<vmem>>, %arg48: memref<32x16xf32, #tpu.memory_space<vmem>>, %arg49: memref<1x16xf32, #tpu.memory_space<vmem>>, %arg50: memref<8x16xf32, #tpu.memory_space<vmem>>, %arg51: memref<64x64xf32, #tpu.memory_space<vmem>>, %arg52: memref<64x64xf32, #tpu.memory_space<vmem>>, %arg53: memref<64x64xf32, #tpu.memory_space<vmem>>) attributes {dimension_semantics = [], scalar_prefetch = 0 : i64, scratch_operands = 3 : i64, tpu.core_type = #tpu.core_type<tc>} {
    %c0 = arith.constant 0 : index
    %c0_0 = arith.constant 0 : index
    %0 = vector.load %arg0[%c0, %c0_0] : memref<64x4xf32, #tpu.memory_space<vmem>>, vector<64x4xf32>
    %c0_1 = arith.constant 0 : index
    %c0_2 = arith.constant 0 : index
    %1 = vector.load %arg2[%c0_1, %c0_2] : memref<4x32xf32, #tpu.memory_space<vmem>>, vector<4x32xf32>
    %cst = arith.constant dense<0.000000e+00> : vector<64x32xf32>
    %2 = tpu.matmul %0, %1, %cst {dimension_numbers = #tpu.dot_dimension_numbers<[1], [0], [0], [1], [0, 0, 1, 1], [], []>} : vector<64x4xf32>, vector<4x32xf32>, vector<64x32xf32> -> vector<64x32xf32>
    %c0_3 = arith.constant 0 : index
    %c0_4 = arith.constant 0 : index
    %3 = vector.load %arg3[%c0_3, %c0_4] : memref<1x32xf32, #tpu.memory_space<vmem>>, vector<1x32xf32>
    %4 = vector.broadcast %3 : vector<1x32xf32> to vector<64x32xf32>
    %5 = arith.addf %2, %4 : vector<64x32xf32>
    %cst_5 = arith.constant 0.000000e+00 : f32
    %6 = vector.broadcast %cst_5 : f32 to vector<64x32xf32>
    %7 = arith.maximumf %5, %6 : vector<64x32xf32>
    %c0_6 = arith.constant 0 : index
    %c0_7 = arith.constant 0 : index
    %8 = vector.load %arg4[%c0_6, %c0_7] : memref<32x32xf32, #tpu.memory_space<vmem>>, vector<32x32xf32>
    %cst_8 = arith.constant dense<0.000000e+00> : vector<64x32xf32>
    %9 = tpu.matmul %7, %8, %cst_8 {dimension_numbers = #tpu.dot_dimension_numbers<[1], [0], [0], [1], [0, 0, 1, 1], [], []>} : vector<64x32xf32>, vector<32x32xf32>, vector<64x32xf32> -> vector<64x32xf32>
    %c0_9 = arith.constant 0 : index
    %c0_10 = arith.constant 0 : index
    %10 = vector.load %arg5[%c0_9, %c0_10] : memref<1x32xf32, #tpu.memory_space<vmem>>, vector<1x32xf32>
    %11 = vector.broadcast %10 : vector<1x32xf32> to vector<64x32xf32>
    %12 = arith.addf %9, %11 : vector<64x32xf32>
    %cst_11 = arith.constant 0.000000e+00 : f32
    %13 = vector.broadcast %cst_11 : f32 to vector<64x32xf32>
    %14 = arith.maximumf %12, %13 : vector<64x32xf32>
    %c0_12 = arith.constant 0 : index
    %c0_13 = arith.constant 0 : index
    %15 = vector.load %arg1[%c0_12, %c0_13] : memref<64x2xf32, #tpu.memory_space<vmem>>, vector<64x2xf32>
    %c0_14 = arith.constant 0 : index
    %c0_15 = arith.constant 0 : index
    %16 = vector.load %arg6[%c0_14, %c0_15] : memref<34x64xf32, #tpu.memory_space<vmem>>, vector<32x64xf32>
    %cst_16 = arith.constant dense<0.000000e+00> : vector<64x64xf32>
    %17 = tpu.matmul %14, %16, %cst_16 {dimension_numbers = #tpu.dot_dimension_numbers<[1], [0], [0], [1], [0, 0, 1, 1], [], []>} : vector<64x32xf32>, vector<32x64xf32>, vector<64x64xf32> -> vector<64x64xf32>
    %c32 = arith.constant 32 : index
    %c0_17 = arith.constant 0 : index
    %18 = vector.load %arg6[%c32, %c0_17] : memref<34x64xf32, #tpu.memory_space<vmem>>, vector<2x64xf32>
    %cst_18 = arith.constant dense<0.000000e+00> : vector<64x64xf32>
    %19 = tpu.matmul %15, %18, %cst_18 {dimension_numbers = #tpu.dot_dimension_numbers<[1], [0], [0], [1], [0, 0, 1, 1], [], []>} : vector<64x2xf32>, vector<2x64xf32>, vector<64x64xf32> -> vector<64x64xf32>
    %20 = arith.addf %17, %19 : vector<64x64xf32>
    %21 = vector.extract_strided_slice %20 {offsets = [0, 0], sizes = [64, 32], strides = [1, 1]} : vector<64x64xf32> to vector<64x32xf32>
    %22 = vector.extract_strided_slice %20 {offsets = [0, 32], sizes = [64, 32], strides = [1, 1]} : vector<64x64xf32> to vector<64x32xf32>
    %23 = vector.extract_strided_slice %22 {offsets = [56, 0], sizes = [8, 32], strides = [1, 1]} : vector<64x32xf32> to vector<8x32xf32>
    %24 = vector.extract_strided_slice %22 {offsets = [48, 0], sizes = [8, 32], strides = [1, 1]} : vector<64x32xf32> to vector<8x32xf32>
    %25 = vector.extract_strided_slice %22 {offsets = [40, 0], sizes = [8, 32], strides = [1, 1]} : vector<64x32xf32> to vector<8x32xf32>
    %26 = vector.extract_strided_slice %22 {offsets = [32, 0], sizes = [8, 32], strides = [1, 1]} : vector<64x32xf32> to vector<8x32xf32>
    %27 = vector.extract_strided_slice %22 {offsets = [24, 0], sizes = [8, 32], strides = [1, 1]} : vector<64x32xf32> to vector<8x32xf32>
    %28 = vector.extract_strided_slice %22 {offsets = [16, 0], sizes = [8, 32], strides = [1, 1]} : vector<64x32xf32> to vector<8x32xf32>
    %29 = vector.extract_strided_slice %22 {offsets = [8, 0], sizes = [8, 32], strides = [1, 1]} : vector<64x32xf32> to vector<8x32xf32>
    %30 = vector.extract_strided_slice %22 {offsets = [0, 0], sizes = [8, 32], strides = [1, 1]} : vector<64x32xf32> to vector<8x32xf32>
    %31 = tpu.concatenate %23, %24, %25, %26, %27, %28, %29, %30 in 0 : vector<8x32xf32>, vector<8x32xf32>, vector<8x32xf32>, vector<8x32xf32>, vector<8x32xf32>, vector<8x32xf32>, vector<8x32xf32>, vector<8x32xf32> -> vector<64x32xf32>
    %32 = tpu.concatenate %21, %31 in 1 : vector<64x32xf32>, vector<64x32xf32> -> vector<64x64xf32>
    %c0_19 = arith.constant 0 : index
    %c0_20 = arith.constant 0 : index
    %33 = vector.load %arg8[%c0_19, %c0_20] : memref<1x64xf32, #tpu.memory_space<vmem>>, vector<1x64xf32>
    %34 = vector.broadcast %33 : vector<1x64xf32> to vector<64x64xf32>
    %35 = arith.addf %32, %34 : vector<64x64xf32>
    %c0_21 = arith.constant 0 : index
    %c0_22 = arith.constant 0 : index
    %36 = vector.load %arg51[%c0_21, %c0_22] : memref<64x64xf32, #tpu.memory_space<vmem>>, vector<64x64xf32>
    tpu.vector_store %arg51[%c0_21, %c0_22], %35 {strides = array<i32>} : memref<64x64xf32, #tpu.memory_space<vmem>>, vector<64x64xf32>,
    %c0_23 = arith.constant 0 : index
    %c0_24 = arith.constant 0 : index
    %37 = vector.load %arg9[%c0_23, %c0_24] : memref<34x64xf32, #tpu.memory_space<vmem>>, vector<32x64xf32>
    %cst_25 = arith.constant dense<0.000000e+00> : vector<64x64xf32>
    %38 = tpu.matmul %14, %37, %cst_25 {dimension_numbers = #tpu.dot_dimension_numbers<[1], [0], [0], [1], [0, 0, 1, 1], [], []>} : vector<64x32xf32>, vector<32x64xf32>, vector<64x64xf32> -> vector<64x64xf32>
    %c32_26 = arith.constant 32 : index
    %c0_27 = arith.constant 0 : index
    %39 = vector.load %arg9[%c32_26, %c0_27] : memref<34x64xf32, #tpu.memory_space<vmem>>, vector<2x64xf32>
    %cst_28 = arith.constant dense<0.000000e+00> : vector<64x64xf32>
    %40 = tpu.matmul %15, %39, %cst_28 {dimension_numbers = #tpu.dot_dimension_numbers<[1], [0], [0], [1], [0, 0, 1, 1], [], []>} : vector<64x2xf32>, vector<2x64xf32>, vector<64x64xf32> -> vector<64x64xf32>
    %41 = arith.addf %38, %40 : vector<64x64xf32>
    %42 = vector.extract_strided_slice %41 {offsets = [0, 0], sizes = [64, 32], strides = [1, 1]} : vector<64x64xf32> to vector<64x32xf32>
    %43 = vector.extract_strided_slice %41 {offsets = [0, 32], sizes = [64, 32], strides = [1, 1]} : vector<64x64xf32> to vector<64x32xf32>
    %44 = vector.extract_strided_slice %43 {offsets = [56, 0], sizes = [8, 32], strides = [1, 1]} : vector<64x32xf32> to vector<8x32xf32>
    %45 = vector.extract_strided_slice %43 {offsets = [48, 0], sizes = [8, 32], strides = [1, 1]} : vector<64x32xf32> to vector<8x32xf32>
    %46 = vector.extract_strided_slice %43 {offsets = [40, 0], sizes = [8, 32], strides = [1, 1]} : vector<64x32xf32> to vector<8x32xf32>
    %47 = vector.extract_strided_slice %43 {offsets = [32, 0], sizes = [8, 32], strides = [1, 1]} : vector<64x32xf32> to vector<8x32xf32>
    %48 = vector.extract_strided_slice %43 {offsets = [24, 0], sizes = [8, 32], strides = [1, 1]} : vector<64x32xf32> to vector<8x32xf32>
    %49 = vector.extract_strided_slice %43 {offsets = [16, 0], sizes = [8, 32], strides = [1, 1]} : vector<64x32xf32> to vector<8x32xf32>
    %50 = vector.extract_strided_slice %43 {offsets = [8, 0], sizes = [8, 32], strides = [1, 1]} : vector<64x32xf32> to vector<8x32xf32>
    %51 = vector.extract_strided_slice %43 {offsets = [0, 0], sizes = [8, 32], strides = [1, 1]} : vector<64x32xf32> to vector<8x32xf32>
    %52 = tpu.concatenate %44, %45, %46, %47, %48, %49, %50, %51 in 0 : vector<8x32xf32>, vector<8x32xf32>, vector<8x32xf32>, vector<8x32xf32>, vector<8x32xf32>, vector<8x32xf32>, vector<8x32xf32>, vector<8x32xf32> -> vector<64x32xf32>
    %53 = tpu.concatenate %42, %52 in 1 : vector<64x32xf32>, vector<64x32xf32> -> vector<64x64xf32>
    %c0_29 = arith.constant 0 : index
    %c0_30 = arith.constant 0 : index
    %54 = vector.load %arg11[%c0_29, %c0_30] : memref<1x64xf32, #tpu.memory_space<vmem>>, vector<1x64xf32>
    %55 = vector.broadcast %54 : vector<1x64xf32> to vector<64x64xf32>
    %56 = arith.addf %53, %55 : vector<64x64xf32>
    %c0_31 = arith.constant 0 : index
    %c0_32 = arith.constant 0 : index
    %57 = vector.load %arg52[%c0_31, %c0_32] : memref<64x64xf32, #tpu.memory_space<vmem>>, vector<64x64xf32>
    tpu.vector_store %arg52[%c0_31, %c0_32], %56 {strides = array<i32>} : memref<64x64xf32, #tpu.memory_space<vmem>>, vector<64x64xf32>,
    %c0_33 = arith.constant 0 : index
    %c0_34 = arith.constant 0 : index
    %58 = vector.load %arg12[%c0_33, %c0_34] : memref<34x64xf32, #tpu.memory_space<vmem>>, vector<32x64xf32>
    %cst_35 = arith.constant dense<0.000000e+00> : vector<64x64xf32>
    %59 = tpu.matmul %14, %58, %cst_35 {dimension_numbers = #tpu.dot_dimension_numbers<[1], [0], [0], [1], [0, 0, 1, 1], [], []>} : vector<64x32xf32>, vector<32x64xf32>, vector<64x64xf32> -> vector<64x64xf32>
    %c32_36 = arith.constant 32 : index
    %c0_37 = arith.constant 0 : index
    %60 = vector.load %arg12[%c32_36, %c0_37] : memref<34x64xf32, #tpu.memory_space<vmem>>, vector<2x64xf32>
    %cst_38 = arith.constant dense<0.000000e+00> : vector<64x64xf32>
    %61 = tpu.matmul %15, %60, %cst_38 {dimension_numbers = #tpu.dot_dimension_numbers<[1], [0], [0], [1], [0, 0, 1, 1], [], []>} : vector<64x2xf32>, vector<2x64xf32>, vector<64x64xf32> -> vector<64x64xf32>
    %62 = arith.addf %59, %61 : vector<64x64xf32>
    %63 = vector.extract_strided_slice %62 {offsets = [0, 0], sizes = [64, 32], strides = [1, 1]} : vector<64x64xf32> to vector<64x32xf32>
    %64 = vector.extract_strided_slice %62 {offsets = [0, 32], sizes = [64, 32], strides = [1, 1]} : vector<64x64xf32> to vector<64x32xf32>
    %65 = vector.extract_strided_slice %64 {offsets = [56, 0], sizes = [8, 32], strides = [1, 1]} : vector<64x32xf32> to vector<8x32xf32>
    %66 = vector.extract_strided_slice %64 {offsets = [48, 0], sizes = [8, 32], strides = [1, 1]} : vector<64x32xf32> to vector<8x32xf32>
    %67 = vector.extract_strided_slice %64 {offsets = [40, 0], sizes = [8, 32], strides = [1, 1]} : vector<64x32xf32> to vector<8x32xf32>
    %68 = vector.extract_strided_slice %64 {offsets = [32, 0], sizes = [8, 32], strides = [1, 1]} : vector<64x32xf32> to vector<8x32xf32>
    %69 = vector.extract_strided_slice %64 {offsets = [24, 0], sizes = [8, 32], strides = [1, 1]} : vector<64x32xf32> to vector<8x32xf32>
    %70 = vector.extract_strided_slice %64 {offsets = [16, 0], sizes = [8, 32], strides = [1, 1]} : vector<64x32xf32> to vector<8x32xf32>
    %71 = vector.extract_strided_slice %64 {offsets = [8, 0], sizes = [8, 32], strides = [1, 1]} : vector<64x32xf32> to vector<8x32xf32>
    %72 = vector.extract_strided_slice %64 {offsets = [0, 0], sizes = [8, 32], strides = [1, 1]} : vector<64x32xf32> to vector<8x32xf32>
    %73 = tpu.concatenate %65, %66, %67, %68, %69, %70, %71, %72 in 0 : vector<8x32xf32>, vector<8x32xf32>, vector<8x32xf32>, vector<8x32xf32>, vector<8x32xf32>, vector<8x32xf32>, vector<8x32xf32>, vector<8x32xf32> -> vector<64x32xf32>
    %74 = tpu.concatenate %63, %73 in 1 : vector<64x32xf32>, vector<64x32xf32> -> vector<64x64xf32>
    %c0_39 = arith.constant 0 : index
    %c0_40 = arith.constant 0 : index
    %75 = vector.load %arg14[%c0_39, %c0_40] : memref<1x64xf32, #tpu.memory_space<vmem>>, vector<1x64xf32>
    %76 = vector.broadcast %75 : vector<1x64xf32> to vector<64x64xf32>
    %77 = arith.addf %74, %76 : vector<64x64xf32>
    %c0_41 = arith.constant 0 : index
    %c0_42 = arith.constant 0 : index
    %78 = vector.load %arg53[%c0_41, %c0_42] : memref<64x64xf32, #tpu.memory_space<vmem>>, vector<64x64xf32>
    tpu.vector_store %arg53[%c0_41, %c0_42], %77 {strides = array<i32>} : memref<64x64xf32, #tpu.memory_space<vmem>>, vector<64x64xf32>,
    %c0_43 = arith.constant 0 : index
    %c0_44 = arith.constant 0 : index
    %79 = vector.load %arg7[%c0_43, %c0_44] : memref<64x64xf32, #tpu.memory_space<vmem>>, vector<64x64xf32>
    %c0_45 = arith.constant 0 : index
    %c0_46 = arith.constant 0 : index
    %80 = vector.load %arg10[%c0_45, %c0_46] : memref<64x64xf32, #tpu.memory_space<vmem>>, vector<64x64xf32>
    %c0_47 = arith.constant 0 : index
    %c0_48 = arith.constant 0 : index
    %81 = vector.load %arg13[%c0_47, %c0_48] : memref<64x64xf32, #tpu.memory_space<vmem>>, vector<64x64xf32>
    %c0_49 = arith.constant 0 : index
    %c0_50 = arith.constant 0 : index
    %82 = vector.load %arg15[%c0_49, %c0_50] : memref<1x64xf32, #tpu.memory_space<vmem>>, vector<1x64xf32>
    %83 = vector.shape_cast %82 : vector<1x64xf32> to vector<1x64xf32>
    %84 = vector.broadcast %83 : vector<1x64xf32> to vector<8x64xf32>
    %cst_51 = arith.constant 0.000000e+00 : f32
    %85 = vector.broadcast %cst_51 : f32 to vector<8x64xf32>
    %cst_52 = arith.constant dense<0.000000e+00> : vector<8x64xf32>
    %86 = tpu.matmul %85, %79, %cst_52 {dimension_numbers = #tpu.dot_dimension_numbers<[1], [0], [0], [1], [0, 0, 1, 1], [], []>} : vector<8x64xf32>, vector<64x64xf32>, vector<8x64xf32> -> vector<8x64xf32>
    %cst_53 = arith.constant dense<0.000000e+00> : vector<8x64xf32>
    %87 = tpu.matmul %85, %80, %cst_53 {dimension_numbers = #tpu.dot_dimension_numbers<[1], [0], [0], [1], [0, 0, 1, 1], [], []>} : vector<8x64xf32>, vector<64x64xf32>, vector<8x64xf32> -> vector<8x64xf32>
    %cst_54 = arith.constant dense<0.000000e+00> : vector<8x64xf32>
    %88 = tpu.matmul %85, %81, %cst_54 {dimension_numbers = #tpu.dot_dimension_numbers<[1], [0], [0], [1], [0, 0, 1, 1], [], []>} : vector<8x64xf32>, vector<64x64xf32>, vector<8x64xf32> -> vector<8x64xf32>
    %c0_55 = arith.constant 0 : index
    %c0_56 = arith.constant 0 : index
    %89 = vector.load %arg51[%c0_55, %c0_56] : memref<64x64xf32, #tpu.memory_space<vmem>>, vector<8x64xf32>
    %90 = arith.addf %89, %86 : vector<8x64xf32>
    %91 = arith.negf %90 : vector<8x64xf32>
    %92 = math.exp %91 : vector<8x64xf32>
    %cst_57 = arith.constant 1.000000e+00 : f32
    %93 = vector.broadcast %cst_57 : f32 to vector<8x64xf32>
    %94 = arith.addf %93, %92 : vector<8x64xf32>
    %95 = arith.divf %93, %94 : vector<8x64xf32>
    %c0_58 = arith.constant 0 : index
    %c0_59 = arith.constant 0 : index
    %96 = vector.load %arg52[%c0_58, %c0_59] : memref<64x64xf32, #tpu.memory_space<vmem>>, vector<8x64xf32>
    %97 = arith.addf %96, %87 : vector<8x64xf32>
    %98 = arith.negf %97 : vector<8x64xf32>
    %99 = math.exp %98 : vector<8x64xf32>
    %cst_60 = arith.constant 1.000000e+00 : f32
    %100 = vector.broadcast %cst_60 : f32 to vector<8x64xf32>
    %101 = arith.addf %100, %99 : vector<8x64xf32>
    %102 = arith.divf %100, %101 : vector<8x64xf32>
    %c0_61 = arith.constant 0 : index
    %c0_62 = arith.constant 0 : index
    %103 = vector.load %arg53[%c0_61, %c0_62] : memref<64x64xf32, #tpu.memory_space<vmem>>, vector<8x64xf32>
    %104 = arith.addf %88, %84 : vector<8x64xf32>
    %105 = arith.mulf %95, %104 : vector<8x64xf32>
    %106 = arith.addf %103, %105 : vector<8x64xf32>
    %107 = math.tanh %106 : vector<8x64xf32>
    %108 = arith.subf %85, %107 : vector<8x64xf32>
    %109 = arith.mulf %102, %108 : vector<8x64xf32>
    %110 = arith.addf %107, %109 : vector<8x64xf32>
    %cst_63 = arith.constant dense<0.000000e+00> : vector<8x64xf32>
    %111 = tpu.matmul %110, %79, %cst_63 {dimension_numbers = #tpu.dot_dimension_numbers<[1], [0], [0], [1], [0, 0, 1, 1], [], []>} : vector<8x64xf32>, vector<64x64xf32>, vector<8x64xf32> -> vector<8x64xf32>
    %cst_64 = arith.constant dense<0.000000e+00> : vector<8x64xf32>
    %112 = tpu.matmul %110, %80, %cst_64 {dimension_numbers = #tpu.dot_dimension_numbers<[1], [0], [0], [1], [0, 0, 1, 1], [], []>} : vector<8x64xf32>, vector<64x64xf32>, vector<8x64xf32> -> vector<8x64xf32>
    %cst_65 = arith.constant dense<0.000000e+00> : vector<8x64xf32>
    %113 = tpu.matmul %110, %81, %cst_65 {dimension_numbers = #tpu.dot_dimension_numbers<[1], [0], [0], [1], [0, 0, 1, 1], [], []>} : vector<8x64xf32>, vector<64x64xf32>, vector<8x64xf32> -> vector<8x64xf32>
    %c8 = arith.constant 8 : index
    %c0_66 = arith.constant 0 : index
    %114 = vector.load %arg51[%c8, %c0_66] : memref<64x64xf32, #tpu.memory_space<vmem>>, vector<8x64xf32>
    %115 = arith.addf %114, %111 : vector<8x64xf32>
    %116 = arith.negf %115 : vector<8x64xf32>
    %117 = math.exp %116 : vector<8x64xf32>
    %cst_67 = arith.constant 1.000000e+00 : f32
    %118 = vector.broadcast %cst_67 : f32 to vector<8x64xf32>
    %119 = arith.addf %118, %117 : vector<8x64xf32>
    %120 = arith.divf %118, %119 : vector<8x64xf32>
    %c8_68 = arith.constant 8 : index
    %c0_69 = arith.constant 0 : index
    %121 = vector.load %arg52[%c8_68, %c0_69] : memref<64x64xf32, #tpu.memory_space<vmem>>, vector<8x64xf32>
    %122 = arith.addf %121, %112 : vector<8x64xf32>
    %123 = arith.negf %122 : vector<8x64xf32>
    %124 = math.exp %123 : vector<8x64xf32>
    %cst_70 = arith.constant 1.000000e+00 : f32
    %125 = vector.broadcast %cst_70 : f32 to vector<8x64xf32>
    %126 = arith.addf %125, %124 : vector<8x64xf32>
    %127 = arith.divf %125, %126 : vector<8x64xf32>
    %c8_71 = arith.constant 8 : index
    %c0_72 = arith.constant 0 : index
    %128 = vector.load %arg53[%c8_71, %c0_72] : memref<64x64xf32, #tpu.memory_space<vmem>>, vector<8x64xf32>
    %129 = arith.addf %113, %84 : vector<8x64xf32>
    %130 = arith.mulf %120, %129 : vector<8x64xf32>
    %131 = arith.addf %128, %130 : vector<8x64xf32>
    %132 = math.tanh %131 : vector<8x64xf32>
    %133 = arith.subf %110, %132 : vector<8x64xf32>
    %134 = arith.mulf %127, %133 : vector<8x64xf32>
    %135 = arith.addf %132, %134 : vector<8x64xf32>
    %cst_73 = arith.constant dense<0.000000e+00> : vector<8x64xf32>
    %136 = tpu.matmul %135, %79, %cst_73 {dimension_numbers = #tpu.dot_dimension_numbers<[1], [0], [0], [1], [0, 0, 1, 1], [], []>} : vector<8x64xf32>, vector<64x64xf32>, vector<8x64xf32> -> vector<8x64xf32>
    %cst_74 = arith.constant dense<0.000000e+00> : vector<8x64xf32>
    %137 = tpu.matmul %135, %80, %cst_74 {dimension_numbers = #tpu.dot_dimension_numbers<[1], [0], [0], [1], [0, 0, 1, 1], [], []>} : vector<8x64xf32>, vector<64x64xf32>, vector<8x64xf32> -> vector<8x64xf32>
    %cst_75 = arith.constant dense<0.000000e+00> : vector<8x64xf32>
    %138 = tpu.matmul %135, %81, %cst_75 {dimension_numbers = #tpu.dot_dimension_numbers<[1], [0], [0], [1], [0, 0, 1, 1], [], []>} : vector<8x64xf32>, vector<64x64xf32>, vector<8x64xf32> -> vector<8x64xf32>
    %c16 = arith.constant 16 : index
    %c0_76 = arith.constant 0 : index
    %139 = vector.load %arg51[%c16, %c0_76] : memref<64x64xf32, #tpu.memory_space<vmem>>, vector<8x64xf32>
    %140 = arith.addf %139, %136 : vector<8x64xf32>
    %141 = arith.negf %140 : vector<8x64xf32>
    %142 = math.exp %141 : vector<8x64xf32>
    %cst_77 = arith.constant 1.000000e+00 : f32
    %143 = vector.broadcast %cst_77 : f32 to vector<8x64xf32>
    %144 = arith.addf %143, %142 : vector<8x64xf32>
    %145 = arith.divf %143, %144 : vector<8x64xf32>
    %c16_78 = arith.constant 16 : index
    %c0_79 = arith.constant 0 : index
    %146 = vector.load %arg52[%c16_78, %c0_79] : memref<64x64xf32, #tpu.memory_space<vmem>>, vector<8x64xf32>
    %147 = arith.addf %146, %137 : vector<8x64xf32>
    %148 = arith.negf %147 : vector<8x64xf32>
    %149 = math.exp %148 : vector<8x64xf32>
    %cst_80 = arith.constant 1.000000e+00 : f32
    %150 = vector.broadcast %cst_80 : f32 to vector<8x64xf32>
    %151 = arith.addf %150, %149 : vector<8x64xf32>
    %152 = arith.divf %150, %151 : vector<8x64xf32>
    %c16_81 = arith.constant 16 : index
    %c0_82 = arith.constant 0 : index
    %153 = vector.load %arg53[%c16_81, %c0_82] : memref<64x64xf32, #tpu.memory_space<vmem>>, vector<8x64xf32>
    %154 = arith.addf %138, %84 : vector<8x64xf32>
    %155 = arith.mulf %145, %154 : vector<8x64xf32>
    %156 = arith.addf %153, %155 : vector<8x64xf32>
    %157 = math.tanh %156 : vector<8x64xf32>
    %158 = arith.subf %135, %157 : vector<8x64xf32>
    %159 = arith.mulf %152, %158 : vector<8x64xf32>
    %160 = arith.addf %157, %159 : vector<8x64xf32>
    %cst_83 = arith.constant dense<0.000000e+00> : vector<8x64xf32>
    %161 = tpu.matmul %160, %79, %cst_83 {dimension_numbers = #tpu.dot_dimension_numbers<[1], [0], [0], [1], [0, 0, 1, 1], [], []>} : vector<8x64xf32>, vector<64x64xf32>, vector<8x64xf32> -> vector<8x64xf32>
    %cst_84 = arith.constant dense<0.000000e+00> : vector<8x64xf32>
    %162 = tpu.matmul %160, %80, %cst_84 {dimension_numbers = #tpu.dot_dimension_numbers<[1], [0], [0], [1], [0, 0, 1, 1], [], []>} : vector<8x64xf32>, vector<64x64xf32>, vector<8x64xf32> -> vector<8x64xf32>
    %cst_85 = arith.constant dense<0.000000e+00> : vector<8x64xf32>
    %163 = tpu.matmul %160, %81, %cst_85 {dimension_numbers = #tpu.dot_dimension_numbers<[1], [0], [0], [1], [0, 0, 1, 1], [], []>} : vector<8x64xf32>, vector<64x64xf32>, vector<8x64xf32> -> vector<8x64xf32>
    %c24 = arith.constant 24 : index
    %c0_86 = arith.constant 0 : index
    %164 = vector.load %arg51[%c24, %c0_86] : memref<64x64xf32, #tpu.memory_space<vmem>>, vector<8x64xf32>
    %165 = arith.addf %164, %161 : vector<8x64xf32>
    %166 = arith.negf %165 : vector<8x64xf32>
    %167 = math.exp %166 : vector<8x64xf32>
    %cst_87 = arith.constant 1.000000e+00 : f32
    %168 = vector.broadcast %cst_87 : f32 to vector<8x64xf32>
    %169 = arith.addf %168, %167 : vector<8x64xf32>
    %170 = arith.divf %168, %169 : vector<8x64xf32>
    %c24_88 = arith.constant 24 : index
    %c0_89 = arith.constant 0 : index
    %171 = vector.load %arg52[%c24_88, %c0_89] : memref<64x64xf32, #tpu.memory_space<vmem>>, vector<8x64xf32>
    %172 = arith.addf %171, %162 : vector<8x64xf32>
    %173 = arith.negf %172 : vector<8x64xf32>
    %174 = math.exp %173 : vector<8x64xf32>
    %cst_90 = arith.constant 1.000000e+00 : f32
    %175 = vector.broadcast %cst_90 : f32 to vector<8x64xf32>
    %176 = arith.addf %175, %174 : vector<8x64xf32>
    %177 = arith.divf %175, %176 : vector<8x64xf32>
    %c24_91 = arith.constant 24 : index
    %c0_92 = arith.constant 0 : index
    %178 = vector.load %arg53[%c24_91, %c0_92] : memref<64x64xf32, #tpu.memory_space<vmem>>, vector<8x64xf32>
    %179 = arith.addf %163, %84 : vector<8x64xf32>
    %180 = arith.mulf %170, %179 : vector<8x64xf32>
    %181 = arith.addf %178, %180 : vector<8x64xf32>
    %182 = math.tanh %181 : vector<8x64xf32>
    %183 = arith.subf %160, %182 : vector<8x64xf32>
    %184 = arith.mulf %177, %183 : vector<8x64xf32>
    %185 = arith.addf %182, %184 : vector<8x64xf32>
    %cst_93 = arith.constant dense<0.000000e+00> : vector<8x64xf32>
    %186 = tpu.matmul %185, %79, %cst_93 {dimension_numbers = #tpu.dot_dimension_numbers<[1], [0], [0], [1], [0, 0, 1, 1], [], []>} : vector<8x64xf32>, vector<64x64xf32>, vector<8x64xf32> -> vector<8x64xf32>
    %cst_94 = arith.constant dense<0.000000e+00> : vector<8x64xf32>
    %187 = tpu.matmul %185, %80, %cst_94 {dimension_numbers = #tpu.dot_dimension_numbers<[1], [0], [0], [1], [0, 0, 1, 1], [], []>} : vector<8x64xf32>, vector<64x64xf32>, vector<8x64xf32> -> vector<8x64xf32>
    %cst_95 = arith.constant dense<0.000000e+00> : vector<8x64xf32>
    %188 = tpu.matmul %185, %81, %cst_95 {dimension_numbers = #tpu.dot_dimension_numbers<[1], [0], [0], [1], [0, 0, 1, 1], [], []>} : vector<8x64xf32>, vector<64x64xf32>, vector<8x64xf32> -> vector<8x64xf32>
    %c32_96 = arith.constant 32 : index
    %c0_97 = arith.constant 0 : index
    %189 = vector.load %arg51[%c32_96, %c0_97] : memref<64x64xf32, #tpu.memory_space<vmem>>, vector<8x64xf32>
    %190 = arith.addf %189, %186 : vector<8x64xf32>
    %191 = arith.negf %190 : vector<8x64xf32>
    %192 = math.exp %191 : vector<8x64xf32>
    %cst_98 = arith.constant 1.000000e+00 : f32
    %193 = vector.broadcast %cst_98 : f32 to vector<8x64xf32>
    %194 = arith.addf %193, %192 : vector<8x64xf32>
    %195 = arith.divf %193, %194 : vector<8x64xf32>
    %c32_99 = arith.constant 32 : index
    %c0_100 = arith.constant 0 : index
    %196 = vector.load %arg52[%c32_99, %c0_100] : memref<64x64xf32, #tpu.memory_space<vmem>>, vector<8x64xf32>
    %197 = arith.addf %196, %187 : vector<8x64xf32>
    %198 = arith.negf %197 : vector<8x64xf32>
    %199 = math.exp %198 : vector<8x64xf32>
    %cst_101 = arith.constant 1.000000e+00 : f32
    %200 = vector.broadcast %cst_101 : f32 to vector<8x64xf32>
    %201 = arith.addf %200, %199 : vector<8x64xf32>
    %202 = arith.divf %200, %201 : vector<8x64xf32>
    %c32_102 = arith.constant 32 : index
    %c0_103 = arith.constant 0 : index
    %203 = vector.load %arg53[%c32_102, %c0_103] : memref<64x64xf32, #tpu.memory_space<vmem>>, vector<8x64xf32>
    %204 = arith.addf %188, %84 : vector<8x64xf32>
    %205 = arith.mulf %195, %204 : vector<8x64xf32>
    %206 = arith.addf %203, %205 : vector<8x64xf32>
    %207 = math.tanh %206 : vector<8x64xf32>
    %208 = arith.subf %185, %207 : vector<8x64xf32>
    %209 = arith.mulf %202, %208 : vector<8x64xf32>
    %210 = arith.addf %207, %209 : vector<8x64xf32>
    %cst_104 = arith.constant dense<0.000000e+00> : vector<8x64xf32>
    %211 = tpu.matmul %210, %79, %cst_104 {dimension_numbers = #tpu.dot_dimension_numbers<[1], [0], [0], [1], [0, 0, 1, 1], [], []>} : vector<8x64xf32>, vector<64x64xf32>, vector<8x64xf32> -> vector<8x64xf32>
    %cst_105 = arith.constant dense<0.000000e+00> : vector<8x64xf32>
    %212 = tpu.matmul %210, %80, %cst_105 {dimension_numbers = #tpu.dot_dimension_numbers<[1], [0], [0], [1], [0, 0, 1, 1], [], []>} : vector<8x64xf32>, vector<64x64xf32>, vector<8x64xf32> -> vector<8x64xf32>
    %cst_106 = arith.constant dense<0.000000e+00> : vector<8x64xf32>
    %213 = tpu.matmul %210, %81, %cst_106 {dimension_numbers = #tpu.dot_dimension_numbers<[1], [0], [0], [1], [0, 0, 1, 1], [], []>} : vector<8x64xf32>, vector<64x64xf32>, vector<8x64xf32> -> vector<8x64xf32>
    %c40 = arith.constant 40 : index
    %c0_107 = arith.constant 0 : index
    %214 = vector.load %arg51[%c40, %c0_107] : memref<64x64xf32, #tpu.memory_space<vmem>>, vector<8x64xf32>
    %215 = arith.addf %214, %211 : vector<8x64xf32>
    %216 = arith.negf %215 : vector<8x64xf32>
    %217 = math.exp %216 : vector<8x64xf32>
    %cst_108 = arith.constant 1.000000e+00 : f32
    %218 = vector.broadcast %cst_108 : f32 to vector<8x64xf32>
    %219 = arith.addf %218, %217 : vector<8x64xf32>
    %220 = arith.divf %218, %219 : vector<8x64xf32>
    %c40_109 = arith.constant 40 : index
    %c0_110 = arith.constant 0 : index
    %221 = vector.load %arg52[%c40_109, %c0_110] : memref<64x64xf32, #tpu.memory_space<vmem>>, vector<8x64xf32>
    %222 = arith.addf %221, %212 : vector<8x64xf32>
    %223 = arith.negf %222 : vector<8x64xf32>
    %224 = math.exp %223 : vector<8x64xf32>
    %cst_111 = arith.constant 1.000000e+00 : f32
    %225 = vector.broadcast %cst_111 : f32 to vector<8x64xf32>
    %226 = arith.addf %225, %224 : vector<8x64xf32>
    %227 = arith.divf %225, %226 : vector<8x64xf32>
    %c40_112 = arith.constant 40 : index
    %c0_113 = arith.constant 0 : index
    %228 = vector.load %arg53[%c40_112, %c0_113] : memref<64x64xf32, #tpu.memory_space<vmem>>, vector<8x64xf32>
    %229 = arith.addf %213, %84 : vector<8x64xf32>
    %230 = arith.mulf %220, %229 : vector<8x64xf32>
    %231 = arith.addf %228, %230 : vector<8x64xf32>
    %232 = math.tanh %231 : vector<8x64xf32>
    %233 = arith.subf %210, %232 : vector<8x64xf32>
    %234 = arith.mulf %227, %233 : vector<8x64xf32>
    %235 = arith.addf %232, %234 : vector<8x64xf32>
    %cst_114 = arith.constant dense<0.000000e+00> : vector<8x64xf32>
    %236 = tpu.matmul %235, %79, %cst_114 {dimension_numbers = #tpu.dot_dimension_numbers<[1], [0], [0], [1], [0, 0, 1, 1], [], []>} : vector<8x64xf32>, vector<64x64xf32>, vector<8x64xf32> -> vector<8x64xf32>
    %cst_115 = arith.constant dense<0.000000e+00> : vector<8x64xf32>
    %237 = tpu.matmul %235, %80, %cst_115 {dimension_numbers = #tpu.dot_dimension_numbers<[1], [0], [0], [1], [0, 0, 1, 1], [], []>} : vector<8x64xf32>, vector<64x64xf32>, vector<8x64xf32> -> vector<8x64xf32>
    %cst_116 = arith.constant dense<0.000000e+00> : vector<8x64xf32>
    %238 = tpu.matmul %235, %81, %cst_116 {dimension_numbers = #tpu.dot_dimension_numbers<[1], [0], [0], [1], [0, 0, 1, 1], [], []>} : vector<8x64xf32>, vector<64x64xf32>, vector<8x64xf32> -> vector<8x64xf32>
    %c48 = arith.constant 48 : index
    %c0_117 = arith.constant 0 : index
    %239 = vector.load %arg51[%c48, %c0_117] : memref<64x64xf32, #tpu.memory_space<vmem>>, vector<8x64xf32>
    %240 = arith.addf %239, %236 : vector<8x64xf32>
    %241 = arith.negf %240 : vector<8x64xf32>
    %242 = math.exp %241 : vector<8x64xf32>
    %cst_118 = arith.constant 1.000000e+00 : f32
    %243 = vector.broadcast %cst_118 : f32 to vector<8x64xf32>
    %244 = arith.addf %243, %242 : vector<8x64xf32>
    %245 = arith.divf %243, %244 : vector<8x64xf32>
    %c48_119 = arith.constant 48 : index
    %c0_120 = arith.constant 0 : index
    %246 = vector.load %arg52[%c48_119, %c0_120] : memref<64x64xf32, #tpu.memory_space<vmem>>, vector<8x64xf32>
    %247 = arith.addf %246, %237 : vector<8x64xf32>
    %248 = arith.negf %247 : vector<8x64xf32>
    %249 = math.exp %248 : vector<8x64xf32>
    %cst_121 = arith.constant 1.000000e+00 : f32
    %250 = vector.broadcast %cst_121 : f32 to vector<8x64xf32>
    %251 = arith.addf %250, %249 : vector<8x64xf32>
    %252 = arith.divf %250, %251 : vector<8x64xf32>
    %c48_122 = arith.constant 48 : index
    %c0_123 = arith.constant 0 : index
    %253 = vector.load %arg53[%c48_122, %c0_123] : memref<64x64xf32, #tpu.memory_space<vmem>>, vector<8x64xf32>
    %254 = arith.addf %238, %84 : vector<8x64xf32>
    %255 = arith.mulf %245, %254 : vector<8x64xf32>
    %256 = arith.addf %253, %255 : vector<8x64xf32>
    %257 = math.tanh %256 : vector<8x64xf32>
    %258 = arith.subf %235, %257 : vector<8x64xf32>
    %259 = arith.mulf %252, %258 : vector<8x64xf32>
    %260 = arith.addf %257, %259 : vector<8x64xf32>
    %cst_124 = arith.constant dense<0.000000e+00> : vector<8x64xf32>
    %261 = tpu.matmul %260, %79, %cst_124 {dimension_numbers = #tpu.dot_dimension_numbers<[1], [0], [0], [1], [0, 0, 1, 1], [], []>} : vector<8x64xf32>, vector<64x64xf32>, vector<8x64xf32> -> vector<8x64xf32>
    %cst_125 = arith.constant dense<0.000000e+00> : vector<8x64xf32>
    %262 = tpu.matmul %260, %80, %cst_125 {dimension_numbers = #tpu.dot_dimension_numbers<[1], [0], [0], [1], [0, 0, 1, 1], [], []>} : vector<8x64xf32>, vector<64x64xf32>, vector<8x64xf32> -> vector<8x64xf32>
    %cst_126 = arith.constant dense<0.000000e+00> : vector<8x64xf32>
    %263 = tpu.matmul %260, %81, %cst_126 {dimension_numbers = #tpu.dot_dimension_numbers<[1], [0], [0], [1], [0, 0, 1, 1], [], []>} : vector<8x64xf32>, vector<64x64xf32>, vector<8x64xf32> -> vector<8x64xf32>
    %c56 = arith.constant 56 : index
    %c0_127 = arith.constant 0 : index
    %264 = vector.load %arg51[%c56, %c0_127] : memref<64x64xf32, #tpu.memory_space<vmem>>, vector<8x64xf32>
    %265 = arith.addf %264, %261 : vector<8x64xf32>
    %266 = arith.negf %265 : vector<8x64xf32>
    %267 = math.exp %266 : vector<8x64xf32>
    %cst_128 = arith.constant 1.000000e+00 : f32
    %268 = vector.broadcast %cst_128 : f32 to vector<8x64xf32>
    %269 = arith.addf %268, %267 : vector<8x64xf32>
    %270 = arith.divf %268, %269 : vector<8x64xf32>
    %c56_129 = arith.constant 56 : index
    %c0_130 = arith.constant 0 : index
    %271 = vector.load %arg52[%c56_129, %c0_130] : memref<64x64xf32, #tpu.memory_space<vmem>>, vector<8x64xf32>
    %272 = arith.addf %271, %262 : vector<8x64xf32>
    %273 = arith.negf %272 : vector<8x64xf32>
    %274 = math.exp %273 : vector<8x64xf32>
    %cst_131 = arith.constant 1.000000e+00 : f32
    %275 = vector.broadcast %cst_131 : f32 to vector<8x64xf32>
    %276 = arith.addf %275, %274 : vector<8x64xf32>
    %277 = arith.divf %275, %276 : vector<8x64xf32>
    %c56_132 = arith.constant 56 : index
    %c0_133 = arith.constant 0 : index
    %278 = vector.load %arg53[%c56_132, %c0_133] : memref<64x64xf32, #tpu.memory_space<vmem>>, vector<8x64xf32>
    %279 = arith.addf %263, %84 : vector<8x64xf32>
    %280 = arith.mulf %270, %279 : vector<8x64xf32>
    %281 = arith.addf %278, %280 : vector<8x64xf32>
    %282 = math.tanh %281 : vector<8x64xf32>
    %283 = arith.subf %260, %282 : vector<8x64xf32>
    %284 = arith.mulf %277, %283 : vector<8x64xf32>
    %285 = arith.addf %282, %284 : vector<8x64xf32>
    %286 = vector.extract_strided_slice %110 {offsets = [0, 0], sizes = [8, 32], strides = [1, 1]} : vector<8x64xf32> to vector<8x32xf32>
    %287 = vector.extract_strided_slice %285 {offsets = [0, 32], sizes = [8, 32], strides = [1, 1]} : vector<8x64xf32> to vector<8x32xf32>
    %288 = tpu.concatenate %286, %287 in 1 : vector<8x32xf32>, vector<8x32xf32> -> vector<8x64xf32>
    %289 = vector.extract_strided_slice %135 {offsets = [0, 0], sizes = [8, 32], strides = [1, 1]} : vector<8x64xf32> to vector<8x32xf32>
    %290 = vector.extract_strided_slice %260 {offsets = [0, 32], sizes = [8, 32], strides = [1, 1]} : vector<8x64xf32> to vector<8x32xf32>
    %291 = tpu.concatenate %289, %290 in 1 : vector<8x32xf32>, vector<8x32xf32> -> vector<8x64xf32>
    %292 = vector.extract_strided_slice %160 {offsets = [0, 0], sizes = [8, 32], strides = [1, 1]} : vector<8x64xf32> to vector<8x32xf32>
    %293 = vector.extract_strided_slice %235 {offsets = [0, 32], sizes = [8, 32], strides = [1, 1]} : vector<8x64xf32> to vector<8x32xf32>
    %294 = tpu.concatenate %292, %293 in 1 : vector<8x32xf32>, vector<8x32xf32> -> vector<8x64xf32>
    %295 = vector.extract_strided_slice %185 {offsets = [0, 0], sizes = [8, 32], strides = [1, 1]} : vector<8x64xf32> to vector<8x32xf32>
    %296 = vector.extract_strided_slice %210 {offsets = [0, 32], sizes = [8, 32], strides = [1, 1]} : vector<8x64xf32> to vector<8x32xf32>
    %297 = tpu.concatenate %295, %296 in 1 : vector<8x32xf32>, vector<8x32xf32> -> vector<8x64xf32>
    %298 = vector.extract_strided_slice %210 {offsets = [0, 0], sizes = [8, 32], strides = [1, 1]} : vector<8x64xf32> to vector<8x32xf32>
    %299 = vector.extract_strided_slice %185 {offsets = [0, 32], sizes = [8, 32], strides = [1, 1]} : vector<8x64xf32> to vector<8x32xf32>
    %300 = tpu.concatenate %298, %299 in 1 : vector<8x32xf32>, vector<8x32xf32> -> vector<8x64xf32>
    %301 = vector.extract_strided_slice %235 {offsets = [0, 0], sizes = [8, 32], strides = [1, 1]} : vector<8x64xf32> to vector<8x32xf32>
    %302 = vector.extract_strided_slice %160 {offsets = [0, 32], sizes = [8, 32], strides = [1, 1]} : vector<8x64xf32> to vector<8x32xf32>
    %303 = tpu.concatenate %301, %302 in 1 : vector<8x32xf32>, vector<8x32xf32> -> vector<8x64xf32>
    %304 = vector.extract_strided_slice %260 {offsets = [0, 0], sizes = [8, 32], strides = [1, 1]} : vector<8x64xf32> to vector<8x32xf32>
    %305 = vector.extract_strided_slice %135 {offsets = [0, 32], sizes = [8, 32], strides = [1, 1]} : vector<8x64xf32> to vector<8x32xf32>
    %306 = tpu.concatenate %304, %305 in 1 : vector<8x32xf32>, vector<8x32xf32> -> vector<8x64xf32>
    %307 = vector.extract_strided_slice %285 {offsets = [0, 0], sizes = [8, 32], strides = [1, 1]} : vector<8x64xf32> to vector<8x32xf32>
    %308 = vector.extract_strided_slice %110 {offsets = [0, 32], sizes = [8, 32], strides = [1, 1]} : vector<8x64xf32> to vector<8x32xf32>
    %309 = tpu.concatenate %307, %308 in 1 : vector<8x32xf32>, vector<8x32xf32> -> vector<8x64xf32>
    %310 = tpu.concatenate %288, %291, %294, %297, %300, %303, %306, %309 in 0 : vector<8x64xf32>, vector<8x64xf32>, vector<8x64xf32>, vector<8x64xf32>, vector<8x64xf32>, vector<8x64xf32>, vector<8x64xf32>, vector<8x64xf32> -> vector<64x64xf32>
    %c0_134 = arith.constant 0 : index
    %c0_135 = arith.constant 0 : index
    %311 = vector.load %arg16[%c0_134, %c0_135] : memref<64x64xf32, #tpu.memory_space<vmem>>, vector<64x64xf32>
    %cst_136 = arith.constant dense<0.000000e+00> : vector<64x64xf32>
    %312 = tpu.matmul %310, %311, %cst_136 {dimension_numbers = #tpu.dot_dimension_numbers<[1], [0], [0], [1], [0, 0, 1, 1], [], []>} : vector<64x64xf32>, vector<64x64xf32>, vector<64x64xf32> -> vector<64x64xf32>
    %313 = vector.extract_strided_slice %312 {offsets = [0, 0], sizes = [64, 32], strides = [1, 1]} : vector<64x64xf32> to vector<64x32xf32>
    %314 = vector.extract_strided_slice %312 {offsets = [0, 32], sizes = [64, 32], strides = [1, 1]} : vector<64x64xf32> to vector<64x32xf32>
    %315 = vector.extract_strided_slice %314 {offsets = [56, 0], sizes = [8, 32], strides = [1, 1]} : vector<64x32xf32> to vector<8x32xf32>
    %316 = vector.extract_strided_slice %314 {offsets = [48, 0], sizes = [8, 32], strides = [1, 1]} : vector<64x32xf32> to vector<8x32xf32>
    %317 = vector.extract_strided_slice %314 {offsets = [40, 0], sizes = [8, 32], strides = [1, 1]} : vector<64x32xf32> to vector<8x32xf32>
    %318 = vector.extract_strided_slice %314 {offsets = [32, 0], sizes = [8, 32], strides = [1, 1]} : vector<64x32xf32> to vector<8x32xf32>
    %319 = vector.extract_strided_slice %314 {offsets = [24, 0], sizes = [8, 32], strides = [1, 1]} : vector<64x32xf32> to vector<8x32xf32>
    %320 = vector.extract_strided_slice %314 {offsets = [16, 0], sizes = [8, 32], strides = [1, 1]} : vector<64x32xf32> to vector<8x32xf32>
    %321 = vector.extract_strided_slice %314 {offsets = [8, 0], sizes = [8, 32], strides = [1, 1]} : vector<64x32xf32> to vector<8x32xf32>
    %322 = vector.extract_strided_slice %314 {offsets = [0, 0], sizes = [8, 32], strides = [1, 1]} : vector<64x32xf32> to vector<8x32xf32>
    %323 = tpu.concatenate %315, %316, %317, %318, %319, %320, %321, %322 in 0 : vector<8x32xf32>, vector<8x32xf32>, vector<8x32xf32>, vector<8x32xf32>, vector<8x32xf32>, vector<8x32xf32>, vector<8x32xf32>, vector<8x32xf32> -> vector<64x32xf32>
    %324 = tpu.concatenate %313, %323 in 1 : vector<64x32xf32>, vector<64x32xf32> -> vector<64x64xf32>
    %c0_137 = arith.constant 0 : index
    %c0_138 = arith.constant 0 : index
    %325 = vector.load %arg18[%c0_137, %c0_138] : memref<1x64xf32, #tpu.memory_space<vmem>>, vector<1x64xf32>
    %326 = vector.broadcast %325 : vector<1x64xf32> to vector<64x64xf32>
    %327 = arith.addf %324, %326 : vector<64x64xf32>
    %c0_139 = arith.constant 0 : index
    %c0_140 = arith.constant 0 : index
    %328 = vector.load %arg51[%c0_139, %c0_140] : memref<64x64xf32, #tpu.memory_space<vmem>>, vector<64x64xf32>
    tpu.vector_store %arg51[%c0_139, %c0_140], %327 {strides = array<i32>} : memref<64x64xf32, #tpu.memory_space<vmem>>, vector<64x64xf32>,
    %c0_141 = arith.constant 0 : index
    %c0_142 = arith.constant 0 : index
    %329 = vector.load %arg19[%c0_141, %c0_142] : memref<64x64xf32, #tpu.memory_space<vmem>>, vector<64x64xf32>
    %cst_143 = arith.constant dense<0.000000e+00> : vector<64x64xf32>
    %330 = tpu.matmul %310, %329, %cst_143 {dimension_numbers = #tpu.dot_dimension_numbers<[1], [0], [0], [1], [0, 0, 1, 1], [], []>} : vector<64x64xf32>, vector<64x64xf32>, vector<64x64xf32> -> vector<64x64xf32>
    %331 = vector.extract_strided_slice %330 {offsets = [0, 0], sizes = [64, 32], strides = [1, 1]} : vector<64x64xf32> to vector<64x32xf32>
    %332 = vector.extract_strided_slice %330 {offsets = [0, 32], sizes = [64, 32], strides = [1, 1]} : vector<64x64xf32> to vector<64x32xf32>
    %333 = vector.extract_strided_slice %332 {offsets = [56, 0], sizes = [8, 32], strides = [1, 1]} : vector<64x32xf32> to vector<8x32xf32>
    %334 = vector.extract_strided_slice %332 {offsets = [48, 0], sizes = [8, 32], strides = [1, 1]} : vector<64x32xf32> to vector<8x32xf32>
    %335 = vector.extract_strided_slice %332 {offsets = [40, 0], sizes = [8, 32], strides = [1, 1]} : vector<64x32xf32> to vector<8x32xf32>
    %336 = vector.extract_strided_slice %332 {offsets = [32, 0], sizes = [8, 32], strides = [1, 1]} : vector<64x32xf32> to vector<8x32xf32>
    %337 = vector.extract_strided_slice %332 {offsets = [24, 0], sizes = [8, 32], strides = [1, 1]} : vector<64x32xf32> to vector<8x32xf32>
    %338 = vector.extract_strided_slice %332 {offsets = [16, 0], sizes = [8, 32], strides = [1, 1]} : vector<64x32xf32> to vector<8x32xf32>
    %339 = vector.extract_strided_slice %332 {offsets = [8, 0], sizes = [8, 32], strides = [1, 1]} : vector<64x32xf32> to vector<8x32xf32>
    %340 = vector.extract_strided_slice %332 {offsets = [0, 0], sizes = [8, 32], strides = [1, 1]} : vector<64x32xf32> to vector<8x32xf32>
    %341 = tpu.concatenate %333, %334, %335, %336, %337, %338, %339, %340 in 0 : vector<8x32xf32>, vector<8x32xf32>, vector<8x32xf32>, vector<8x32xf32>, vector<8x32xf32>, vector<8x32xf32>, vector<8x32xf32>, vector<8x32xf32> -> vector<64x32xf32>
    %342 = tpu.concatenate %331, %341 in 1 : vector<64x32xf32>, vector<64x32xf32> -> vector<64x64xf32>
    %c0_144 = arith.constant 0 : index
    %c0_145 = arith.constant 0 : index
    %343 = vector.load %arg21[%c0_144, %c0_145] : memref<1x64xf32, #tpu.memory_space<vmem>>, vector<1x64xf32>
    %344 = vector.broadcast %343 : vector<1x64xf32> to vector<64x64xf32>
    %345 = arith.addf %342, %344 : vector<64x64xf32>
    %c0_146 = arith.constant 0 : index
    %c0_147 = arith.constant 0 : index
    %346 = vector.load %arg52[%c0_146, %c0_147] : memref<64x64xf32, #tpu.memory_space<vmem>>, vector<64x64xf32>
    tpu.vector_store %arg52[%c0_146, %c0_147], %345 {strides = array<i32>} : memref<64x64xf32, #tpu.memory_space<vmem>>, vector<64x64xf32>,
    %c0_148 = arith.constant 0 : index
    %c0_149 = arith.constant 0 : index
    %347 = vector.load %arg22[%c0_148, %c0_149] : memref<64x64xf32, #tpu.memory_space<vmem>>, vector<64x64xf32>
    %cst_150 = arith.constant dense<0.000000e+00> : vector<64x64xf32>
    %348 = tpu.matmul %310, %347, %cst_150 {dimension_numbers = #tpu.dot_dimension_numbers<[1], [0], [0], [1], [0, 0, 1, 1], [], []>} : vector<64x64xf32>, vector<64x64xf32>, vector<64x64xf32> -> vector<64x64xf32>
    %349 = vector.extract_strided_slice %348 {offsets = [0, 0], sizes = [64, 32], strides = [1, 1]} : vector<64x64xf32> to vector<64x32xf32>
    %350 = vector.extract_strided_slice %348 {offsets = [0, 32], sizes = [64, 32], strides = [1, 1]} : vector<64x64xf32> to vector<64x32xf32>
    %351 = vector.extract_strided_slice %350 {offsets = [56, 0], sizes = [8, 32], strides = [1, 1]} : vector<64x32xf32> to vector<8x32xf32>
    %352 = vector.extract_strided_slice %350 {offsets = [48, 0], sizes = [8, 32], strides = [1, 1]} : vector<64x32xf32> to vector<8x32xf32>
    %353 = vector.extract_strided_slice %350 {offsets = [40, 0], sizes = [8, 32], strides = [1, 1]} : vector<64x32xf32> to vector<8x32xf32>
    %354 = vector.extract_strided_slice %350 {offsets = [32, 0], sizes = [8, 32], strides = [1, 1]} : vector<64x32xf32> to vector<8x32xf32>
    %355 = vector.extract_strided_slice %350 {offsets = [24, 0], sizes = [8, 32], strides = [1, 1]} : vector<64x32xf32> to vector<8x32xf32>
    %356 = vector.extract_strided_slice %350 {offsets = [16, 0], sizes = [8, 32], strides = [1, 1]} : vector<64x32xf32> to vector<8x32xf32>
    %357 = vector.extract_strided_slice %350 {offsets = [8, 0], sizes = [8, 32], strides = [1, 1]} : vector<64x32xf32> to vector<8x32xf32>
    %358 = vector.extract_strided_slice %350 {offsets = [0, 0], sizes = [8, 32], strides = [1, 1]} : vector<64x32xf32> to vector<8x32xf32>
    %359 = tpu.concatenate %351, %352, %353, %354, %355, %356, %357, %358 in 0 : vector<8x32xf32>, vector<8x32xf32>, vector<8x32xf32>, vector<8x32xf32>, vector<8x32xf32>, vector<8x32xf32>, vector<8x32xf32>, vector<8x32xf32> -> vector<64x32xf32>
    %360 = tpu.concatenate %349, %359 in 1 : vector<64x32xf32>, vector<64x32xf32> -> vector<64x64xf32>
    %c0_151 = arith.constant 0 : index
    %c0_152 = arith.constant 0 : index
    %361 = vector.load %arg24[%c0_151, %c0_152] : memref<1x64xf32, #tpu.memory_space<vmem>>, vector<1x64xf32>
    %362 = vector.broadcast %361 : vector<1x64xf32> to vector<64x64xf32>
    %363 = arith.addf %360, %362 : vector<64x64xf32>
    %c0_153 = arith.constant 0 : index
    %c0_154 = arith.constant 0 : index
    %364 = vector.load %arg53[%c0_153, %c0_154] : memref<64x64xf32, #tpu.memory_space<vmem>>, vector<64x64xf32>
    tpu.vector_store %arg53[%c0_153, %c0_154], %363 {strides = array<i32>} : memref<64x64xf32, #tpu.memory_space<vmem>>, vector<64x64xf32>,
    %c0_155 = arith.constant 0 : index
    %c0_156 = arith.constant 0 : index
    %365 = vector.load %arg17[%c0_155, %c0_156] : memref<64x64xf32, #tpu.memory_space<vmem>>, vector<64x64xf32>
    %c0_157 = arith.constant 0 : index
    %c0_158 = arith.constant 0 : index
    %366 = vector.load %arg20[%c0_157, %c0_158] : memref<64x64xf32, #tpu.memory_space<vmem>>, vector<64x64xf32>
    %c0_159 = arith.constant 0 : index
    %c0_160 = arith.constant 0 : index
    %367 = vector.load %arg23[%c0_159, %c0_160] : memref<64x64xf32, #tpu.memory_space<vmem>>, vector<64x64xf32>
    %c0_161 = arith.constant 0 : index
    %c0_162 = arith.constant 0 : index
    %368 = vector.load %arg25[%c0_161, %c0_162] : memref<1x64xf32, #tpu.memory_space<vmem>>, vector<1x64xf32>
    %369 = vector.shape_cast %368 : vector<1x64xf32> to vector<1x64xf32>
    %370 = vector.broadcast %369 : vector<1x64xf32> to vector<8x64xf32>
    %cst_163 = arith.constant 0.000000e+00 : f32
    %371 = vector.broadcast %cst_163 : f32 to vector<8x64xf32>
    %cst_164 = arith.constant dense<0.000000e+00> : vector<8x64xf32>
    %372 = tpu.matmul %371, %365, %cst_164 {dimension_numbers = #tpu.dot_dimension_numbers<[1], [0], [0], [1], [0, 0, 1, 1], [], []>} : vector<8x64xf32>, vector<64x64xf32>, vector<8x64xf32> -> vector<8x64xf32>
    %cst_165 = arith.constant dense<0.000000e+00> : vector<8x64xf32>
    %373 = tpu.matmul %371, %366, %cst_165 {dimension_numbers = #tpu.dot_dimension_numbers<[1], [0], [0], [1], [0, 0, 1, 1], [], []>} : vector<8x64xf32>, vector<64x64xf32>, vector<8x64xf32> -> vector<8x64xf32>
    %cst_166 = arith.constant dense<0.000000e+00> : vector<8x64xf32>
    %374 = tpu.matmul %371, %367, %cst_166 {dimension_numbers = #tpu.dot_dimension_numbers<[1], [0], [0], [1], [0, 0, 1, 1], [], []>} : vector<8x64xf32>, vector<64x64xf32>, vector<8x64xf32> -> vector<8x64xf32>
    %c0_167 = arith.constant 0 : index
    %c0_168 = arith.constant 0 : index
    %375 = vector.load %arg51[%c0_167, %c0_168] : memref<64x64xf32, #tpu.memory_space<vmem>>, vector<8x64xf32>
    %376 = arith.addf %375, %372 : vector<8x64xf32>
    %377 = arith.negf %376 : vector<8x64xf32>
    %378 = math.exp %377 : vector<8x64xf32>
    %cst_169 = arith.constant 1.000000e+00 : f32
    %379 = vector.broadcast %cst_169 : f32 to vector<8x64xf32>
    %380 = arith.addf %379, %378 : vector<8x64xf32>
    %381 = arith.divf %379, %380 : vector<8x64xf32>
    %c0_170 = arith.constant 0 : index
    %c0_171 = arith.constant 0 : index
    %382 = vector.load %arg52[%c0_170, %c0_171] : memref<64x64xf32, #tpu.memory_space<vmem>>, vector<8x64xf32>
    %383 = arith.addf %382, %373 : vector<8x64xf32>
    %384 = arith.negf %383 : vector<8x64xf32>
    %385 = math.exp %384 : vector<8x64xf32>
    %cst_172 = arith.constant 1.000000e+00 : f32
    %386 = vector.broadcast %cst_172 : f32 to vector<8x64xf32>
    %387 = arith.addf %386, %385 : vector<8x64xf32>
    %388 = arith.divf %386, %387 : vector<8x64xf32>
    %c0_173 = arith.constant 0 : index
    %c0_174 = arith.constant 0 : index
    %389 = vector.load %arg53[%c0_173, %c0_174] : memref<64x64xf32, #tpu.memory_space<vmem>>, vector<8x64xf32>
    %390 = arith.addf %374, %370 : vector<8x64xf32>
    %391 = arith.mulf %381, %390 : vector<8x64xf32>
    %392 = arith.addf %389, %391 : vector<8x64xf32>
    %393 = math.tanh %392 : vector<8x64xf32>
    %394 = arith.subf %371, %393 : vector<8x64xf32>
    %395 = arith.mulf %388, %394 : vector<8x64xf32>
    %396 = arith.addf %393, %395 : vector<8x64xf32>
    %cst_175 = arith.constant dense<0.000000e+00> : vector<8x64xf32>
    %397 = tpu.matmul %396, %365, %cst_175 {dimension_numbers = #tpu.dot_dimension_numbers<[1], [0], [0], [1], [0, 0, 1, 1], [], []>} : vector<8x64xf32>, vector<64x64xf32>, vector<8x64xf32> -> vector<8x64xf32>
    %cst_176 = arith.constant dense<0.000000e+00> : vector<8x64xf32>
    %398 = tpu.matmul %396, %366, %cst_176 {dimension_numbers = #tpu.dot_dimension_numbers<[1], [0], [0], [1], [0, 0, 1, 1], [], []>} : vector<8x64xf32>, vector<64x64xf32>, vector<8x64xf32> -> vector<8x64xf32>
    %cst_177 = arith.constant dense<0.000000e+00> : vector<8x64xf32>
    %399 = tpu.matmul %396, %367, %cst_177 {dimension_numbers = #tpu.dot_dimension_numbers<[1], [0], [0], [1], [0, 0, 1, 1], [], []>} : vector<8x64xf32>, vector<64x64xf32>, vector<8x64xf32> -> vector<8x64xf32>
    %c8_178 = arith.constant 8 : index
    %c0_179 = arith.constant 0 : index
    %400 = vector.load %arg51[%c8_178, %c0_179] : memref<64x64xf32, #tpu.memory_space<vmem>>, vector<8x64xf32>
    %401 = arith.addf %400, %397 : vector<8x64xf32>
    %402 = arith.negf %401 : vector<8x64xf32>
    %403 = math.exp %402 : vector<8x64xf32>
    %cst_180 = arith.constant 1.000000e+00 : f32
    %404 = vector.broadcast %cst_180 : f32 to vector<8x64xf32>
    %405 = arith.addf %404, %403 : vector<8x64xf32>
    %406 = arith.divf %404, %405 : vector<8x64xf32>
    %c8_181 = arith.constant 8 : index
    %c0_182 = arith.constant 0 : index
    %407 = vector.load %arg52[%c8_181, %c0_182] : memref<64x64xf32, #tpu.memory_space<vmem>>, vector<8x64xf32>
    %408 = arith.addf %407, %398 : vector<8x64xf32>
    %409 = arith.negf %408 : vector<8x64xf32>
    %410 = math.exp %409 : vector<8x64xf32>
    %cst_183 = arith.constant 1.000000e+00 : f32
    %411 = vector.broadcast %cst_183 : f32 to vector<8x64xf32>
    %412 = arith.addf %411, %410 : vector<8x64xf32>
    %413 = arith.divf %411, %412 : vector<8x64xf32>
    %c8_184 = arith.constant 8 : index
    %c0_185 = arith.constant 0 : index
    %414 = vector.load %arg53[%c8_184, %c0_185] : memref<64x64xf32, #tpu.memory_space<vmem>>, vector<8x64xf32>
    %415 = arith.addf %399, %370 : vector<8x64xf32>
    %416 = arith.mulf %406, %415 : vector<8x64xf32>
    %417 = arith.addf %414, %416 : vector<8x64xf32>
    %418 = math.tanh %417 : vector<8x64xf32>
    %419 = arith.subf %396, %418 : vector<8x64xf32>
    %420 = arith.mulf %413, %419 : vector<8x64xf32>
    %421 = arith.addf %418, %420 : vector<8x64xf32>
    %cst_186 = arith.constant dense<0.000000e+00> : vector<8x64xf32>
    %422 = tpu.matmul %421, %365, %cst_186 {dimension_numbers = #tpu.dot_dimension_numbers<[1], [0], [0], [1], [0, 0, 1, 1], [], []>} : vector<8x64xf32>, vector<64x64xf32>, vector<8x64xf32> -> vector<8x64xf32>
    %cst_187 = arith.constant dense<0.000000e+00> : vector<8x64xf32>
    %423 = tpu.matmul %421, %366, %cst_187 {dimension_numbers = #tpu.dot_dimension_numbers<[1], [0], [0], [1], [0, 0, 1, 1], [], []>} : vector<8x64xf32>, vector<64x64xf32>, vector<8x64xf32> -> vector<8x64xf32>
    %cst_188 = arith.constant dense<0.000000e+00> : vector<8x64xf32>
    %424 = tpu.matmul %421, %367, %cst_188 {dimension_numbers = #tpu.dot_dimension_numbers<[1], [0], [0], [1], [0, 0, 1, 1], [], []>} : vector<8x64xf32>, vector<64x64xf32>, vector<8x64xf32> -> vector<8x64xf32>
    %c16_189 = arith.constant 16 : index
    %c0_190 = arith.constant 0 : index
    %425 = vector.load %arg51[%c16_189, %c0_190] : memref<64x64xf32, #tpu.memory_space<vmem>>, vector<8x64xf32>
    %426 = arith.addf %425, %422 : vector<8x64xf32>
    %427 = arith.negf %426 : vector<8x64xf32>
    %428 = math.exp %427 : vector<8x64xf32>
    %cst_191 = arith.constant 1.000000e+00 : f32
    %429 = vector.broadcast %cst_191 : f32 to vector<8x64xf32>
    %430 = arith.addf %429, %428 : vector<8x64xf32>
    %431 = arith.divf %429, %430 : vector<8x64xf32>
    %c16_192 = arith.constant 16 : index
    %c0_193 = arith.constant 0 : index
    %432 = vector.load %arg52[%c16_192, %c0_193] : memref<64x64xf32, #tpu.memory_space<vmem>>, vector<8x64xf32>
    %433 = arith.addf %432, %423 : vector<8x64xf32>
    %434 = arith.negf %433 : vector<8x64xf32>
    %435 = math.exp %434 : vector<8x64xf32>
    %cst_194 = arith.constant 1.000000e+00 : f32
    %436 = vector.broadcast %cst_194 : f32 to vector<8x64xf32>
    %437 = arith.addf %436, %435 : vector<8x64xf32>
    %438 = arith.divf %436, %437 : vector<8x64xf32>
    %c16_195 = arith.constant 16 : index
    %c0_196 = arith.constant 0 : index
    %439 = vector.load %arg53[%c16_195, %c0_196] : memref<64x64xf32, #tpu.memory_space<vmem>>, vector<8x64xf32>
    %440 = arith.addf %424, %370 : vector<8x64xf32>
    %441 = arith.mulf %431, %440 : vector<8x64xf32>
    %442 = arith.addf %439, %441 : vector<8x64xf32>
    %443 = math.tanh %442 : vector<8x64xf32>
    %444 = arith.subf %421, %443 : vector<8x64xf32>
    %445 = arith.mulf %438, %444 : vector<8x64xf32>
    %446 = arith.addf %443, %445 : vector<8x64xf32>
    %cst_197 = arith.constant dense<0.000000e+00> : vector<8x64xf32>
    %447 = tpu.matmul %446, %365, %cst_197 {dimension_numbers = #tpu.dot_dimension_numbers<[1], [0], [0], [1], [0, 0, 1, 1], [], []>} : vector<8x64xf32>, vector<64x64xf32>, vector<8x64xf32> -> vector<8x64xf32>
    %cst_198 = arith.constant dense<0.000000e+00> : vector<8x64xf32>
    %448 = tpu.matmul %446, %366, %cst_198 {dimension_numbers = #tpu.dot_dimension_numbers<[1], [0], [0], [1], [0, 0, 1, 1], [], []>} : vector<8x64xf32>, vector<64x64xf32>, vector<8x64xf32> -> vector<8x64xf32>
    %cst_199 = arith.constant dense<0.000000e+00> : vector<8x64xf32>
    %449 = tpu.matmul %446, %367, %cst_199 {dimension_numbers = #tpu.dot_dimension_numbers<[1], [0], [0], [1], [0, 0, 1, 1], [], []>} : vector<8x64xf32>, vector<64x64xf32>, vector<8x64xf32> -> vector<8x64xf32>
    %c24_200 = arith.constant 24 : index
    %c0_201 = arith.constant 0 : index
    %450 = vector.load %arg51[%c24_200, %c0_201] : memref<64x64xf32, #tpu.memory_space<vmem>>, vector<8x64xf32>
    %451 = arith.addf %450, %447 : vector<8x64xf32>
    %452 = arith.negf %451 : vector<8x64xf32>
    %453 = math.exp %452 : vector<8x64xf32>
    %cst_202 = arith.constant 1.000000e+00 : f32
    %454 = vector.broadcast %cst_202 : f32 to vector<8x64xf32>
    %455 = arith.addf %454, %453 : vector<8x64xf32>
    %456 = arith.divf %454, %455 : vector<8x64xf32>
    %c24_203 = arith.constant 24 : index
    %c0_204 = arith.constant 0 : index
    %457 = vector.load %arg52[%c24_203, %c0_204] : memref<64x64xf32, #tpu.memory_space<vmem>>, vector<8x64xf32>
    %458 = arith.addf %457, %448 : vector<8x64xf32>
    %459 = arith.negf %458 : vector<8x64xf32>
    %460 = math.exp %459 : vector<8x64xf32>
    %cst_205 = arith.constant 1.000000e+00 : f32
    %461 = vector.broadcast %cst_205 : f32 to vector<8x64xf32>
    %462 = arith.addf %461, %460 : vector<8x64xf32>
    %463 = arith.divf %461, %462 : vector<8x64xf32>
    %c24_206 = arith.constant 24 : index
    %c0_207 = arith.constant 0 : index
    %464 = vector.load %arg53[%c24_206, %c0_207] : memref<64x64xf32, #tpu.memory_space<vmem>>, vector<8x64xf32>
    %465 = arith.addf %449, %370 : vector<8x64xf32>
    %466 = arith.mulf %456, %465 : vector<8x64xf32>
    %467 = arith.addf %464, %466 : vector<8x64xf32>
    %468 = math.tanh %467 : vector<8x64xf32>
    %469 = arith.subf %446, %468 : vector<8x64xf32>
    %470 = arith.mulf %463, %469 : vector<8x64xf32>
    %471 = arith.addf %468, %470 : vector<8x64xf32>
    %cst_208 = arith.constant dense<0.000000e+00> : vector<8x64xf32>
    %472 = tpu.matmul %471, %365, %cst_208 {dimension_numbers = #tpu.dot_dimension_numbers<[1], [0], [0], [1], [0, 0, 1, 1], [], []>} : vector<8x64xf32>, vector<64x64xf32>, vector<8x64xf32> -> vector<8x64xf32>
    %cst_209 = arith.constant dense<0.000000e+00> : vector<8x64xf32>
    %473 = tpu.matmul %471, %366, %cst_209 {dimension_numbers = #tpu.dot_dimension_numbers<[1], [0], [0], [1], [0, 0, 1, 1], [], []>} : vector<8x64xf32>, vector<64x64xf32>, vector<8x64xf32> -> vector<8x64xf32>
    %cst_210 = arith.constant dense<0.000000e+00> : vector<8x64xf32>
    %474 = tpu.matmul %471, %367, %cst_210 {dimension_numbers = #tpu.dot_dimension_numbers<[1], [0], [0], [1], [0, 0, 1, 1], [], []>} : vector<8x64xf32>, vector<64x64xf32>, vector<8x64xf32> -> vector<8x64xf32>
    %c32_211 = arith.constant 32 : index
    %c0_212 = arith.constant 0 : index
    %475 = vector.load %arg51[%c32_211, %c0_212] : memref<64x64xf32, #tpu.memory_space<vmem>>, vector<8x64xf32>
    %476 = arith.addf %475, %472 : vector<8x64xf32>
    %477 = arith.negf %476 : vector<8x64xf32>
    %478 = math.exp %477 : vector<8x64xf32>
    %cst_213 = arith.constant 1.000000e+00 : f32
    %479 = vector.broadcast %cst_213 : f32 to vector<8x64xf32>
    %480 = arith.addf %479, %478 : vector<8x64xf32>
    %481 = arith.divf %479, %480 : vector<8x64xf32>
    %c32_214 = arith.constant 32 : index
    %c0_215 = arith.constant 0 : index
    %482 = vector.load %arg52[%c32_214, %c0_215] : memref<64x64xf32, #tpu.memory_space<vmem>>, vector<8x64xf32>
    %483 = arith.addf %482, %473 : vector<8x64xf32>
    %484 = arith.negf %483 : vector<8x64xf32>
    %485 = math.exp %484 : vector<8x64xf32>
    %cst_216 = arith.constant 1.000000e+00 : f32
    %486 = vector.broadcast %cst_216 : f32 to vector<8x64xf32>
    %487 = arith.addf %486, %485 : vector<8x64xf32>
    %488 = arith.divf %486, %487 : vector<8x64xf32>
    %c32_217 = arith.constant 32 : index
    %c0_218 = arith.constant 0 : index
    %489 = vector.load %arg53[%c32_217, %c0_218] : memref<64x64xf32, #tpu.memory_space<vmem>>, vector<8x64xf32>
    %490 = arith.addf %474, %370 : vector<8x64xf32>
    %491 = arith.mulf %481, %490 : vector<8x64xf32>
    %492 = arith.addf %489, %491 : vector<8x64xf32>
    %493 = math.tanh %492 : vector<8x64xf32>
    %494 = arith.subf %471, %493 : vector<8x64xf32>
    %495 = arith.mulf %488, %494 : vector<8x64xf32>
    %496 = arith.addf %493, %495 : vector<8x64xf32>
    %cst_219 = arith.constant dense<0.000000e+00> : vector<8x64xf32>
    %497 = tpu.matmul %496, %365, %cst_219 {dimension_numbers = #tpu.dot_dimension_numbers<[1], [0], [0], [1], [0, 0, 1, 1], [], []>} : vector<8x64xf32>, vector<64x64xf32>, vector<8x64xf32> -> vector<8x64xf32>
    %cst_220 = arith.constant dense<0.000000e+00> : vector<8x64xf32>
    %498 = tpu.matmul %496, %366, %cst_220 {dimension_numbers = #tpu.dot_dimension_numbers<[1], [0], [0], [1], [0, 0, 1, 1], [], []>} : vector<8x64xf32>, vector<64x64xf32>, vector<8x64xf32> -> vector<8x64xf32>
    %cst_221 = arith.constant dense<0.000000e+00> : vector<8x64xf32>
    %499 = tpu.matmul %496, %367, %cst_221 {dimension_numbers = #tpu.dot_dimension_numbers<[1], [0], [0], [1], [0, 0, 1, 1], [], []>} : vector<8x64xf32>, vector<64x64xf32>, vector<8x64xf32> -> vector<8x64xf32>
    %c40_222 = arith.constant 40 : index
    %c0_223 = arith.constant 0 : index
    %500 = vector.load %arg51[%c40_222, %c0_223] : memref<64x64xf32, #tpu.memory_space<vmem>>, vector<8x64xf32>
    %501 = arith.addf %500, %497 : vector<8x64xf32>
    %502 = arith.negf %501 : vector<8x64xf32>
    %503 = math.exp %502 : vector<8x64xf32>
    %cst_224 = arith.constant 1.000000e+00 : f32
    %504 = vector.broadcast %cst_224 : f32 to vector<8x64xf32>
    %505 = arith.addf %504, %503 : vector<8x64xf32>
    %506 = arith.divf %504, %505 : vector<8x64xf32>
    %c40_225 = arith.constant 40 : index
    %c0_226 = arith.constant 0 : index
    %507 = vector.load %arg52[%c40_225, %c0_226] : memref<64x64xf32, #tpu.memory_space<vmem>>, vector<8x64xf32>
    %508 = arith.addf %507, %498 : vector<8x64xf32>
    %509 = arith.negf %508 : vector<8x64xf32>
    %510 = math.exp %509 : vector<8x64xf32>
    %cst_227 = arith.constant 1.000000e+00 : f32
    %511 = vector.broadcast %cst_227 : f32 to vector<8x64xf32>
    %512 = arith.addf %511, %510 : vector<8x64xf32>
    %513 = arith.divf %511, %512 : vector<8x64xf32>
    %c40_228 = arith.constant 40 : index
    %c0_229 = arith.constant 0 : index
    %514 = vector.load %arg53[%c40_228, %c0_229] : memref<64x64xf32, #tpu.memory_space<vmem>>, vector<8x64xf32>
    %515 = arith.addf %499, %370 : vector<8x64xf32>
    %516 = arith.mulf %506, %515 : vector<8x64xf32>
    %517 = arith.addf %514, %516 : vector<8x64xf32>
    %518 = math.tanh %517 : vector<8x64xf32>
    %519 = arith.subf %496, %518 : vector<8x64xf32>
    %520 = arith.mulf %513, %519 : vector<8x64xf32>
    %521 = arith.addf %518, %520 : vector<8x64xf32>
    %cst_230 = arith.constant dense<0.000000e+00> : vector<8x64xf32>
    %522 = tpu.matmul %521, %365, %cst_230 {dimension_numbers = #tpu.dot_dimension_numbers<[1], [0], [0], [1], [0, 0, 1, 1], [], []>} : vector<8x64xf32>, vector<64x64xf32>, vector<8x64xf32> -> vector<8x64xf32>
    %cst_231 = arith.constant dense<0.000000e+00> : vector<8x64xf32>
    %523 = tpu.matmul %521, %366, %cst_231 {dimension_numbers = #tpu.dot_dimension_numbers<[1], [0], [0], [1], [0, 0, 1, 1], [], []>} : vector<8x64xf32>, vector<64x64xf32>, vector<8x64xf32> -> vector<8x64xf32>
    %cst_232 = arith.constant dense<0.000000e+00> : vector<8x64xf32>
    %524 = tpu.matmul %521, %367, %cst_232 {dimension_numbers = #tpu.dot_dimension_numbers<[1], [0], [0], [1], [0, 0, 1, 1], [], []>} : vector<8x64xf32>, vector<64x64xf32>, vector<8x64xf32> -> vector<8x64xf32>
    %c48_233 = arith.constant 48 : index
    %c0_234 = arith.constant 0 : index
    %525 = vector.load %arg51[%c48_233, %c0_234] : memref<64x64xf32, #tpu.memory_space<vmem>>, vector<8x64xf32>
    %526 = arith.addf %525, %522 : vector<8x64xf32>
    %527 = arith.negf %526 : vector<8x64xf32>
    %528 = math.exp %527 : vector<8x64xf32>
    %cst_235 = arith.constant 1.000000e+00 : f32
    %529 = vector.broadcast %cst_235 : f32 to vector<8x64xf32>
    %530 = arith.addf %529, %528 : vector<8x64xf32>
    %531 = arith.divf %529, %530 : vector<8x64xf32>
    %c48_236 = arith.constant 48 : index
    %c0_237 = arith.constant 0 : index
    %532 = vector.load %arg52[%c48_236, %c0_237] : memref<64x64xf32, #tpu.memory_space<vmem>>, vector<8x64xf32>
    %533 = arith.addf %532, %523 : vector<8x64xf32>
    %534 = arith.negf %533 : vector<8x64xf32>
    %535 = math.exp %534 : vector<8x64xf32>
    %cst_238 = arith.constant 1.000000e+00 : f32
    %536 = vector.broadcast %cst_238 : f32 to vector<8x64xf32>
    %537 = arith.addf %536, %535 : vector<8x64xf32>
    %538 = arith.divf %536, %537 : vector<8x64xf32>
    %c48_239 = arith.constant 48 : index
    %c0_240 = arith.constant 0 : index
    %539 = vector.load %arg53[%c48_239, %c0_240] : memref<64x64xf32, #tpu.memory_space<vmem>>, vector<8x64xf32>
    %540 = arith.addf %524, %370 : vector<8x64xf32>
    %541 = arith.mulf %531, %540 : vector<8x64xf32>
    %542 = arith.addf %539, %541 : vector<8x64xf32>
    %543 = math.tanh %542 : vector<8x64xf32>
    %544 = arith.subf %521, %543 : vector<8x64xf32>
    %545 = arith.mulf %538, %544 : vector<8x64xf32>
    %546 = arith.addf %543, %545 : vector<8x64xf32>
    %cst_241 = arith.constant dense<0.000000e+00> : vector<8x64xf32>
    %547 = tpu.matmul %546, %365, %cst_241 {dimension_numbers = #tpu.dot_dimension_numbers<[1], [0], [0], [1], [0, 0, 1, 1], [], []>} : vector<8x64xf32>, vector<64x64xf32>, vector<8x64xf32> -> vector<8x64xf32>
    %cst_242 = arith.constant dense<0.000000e+00> : vector<8x64xf32>
    %548 = tpu.matmul %546, %366, %cst_242 {dimension_numbers = #tpu.dot_dimension_numbers<[1], [0], [0], [1], [0, 0, 1, 1], [], []>} : vector<8x64xf32>, vector<64x64xf32>, vector<8x64xf32> -> vector<8x64xf32>
    %cst_243 = arith.constant dense<0.000000e+00> : vector<8x64xf32>
    %549 = tpu.matmul %546, %367, %cst_243 {dimension_numbers = #tpu.dot_dimension_numbers<[1], [0], [0], [1], [0, 0, 1, 1], [], []>} : vector<8x64xf32>, vector<64x64xf32>, vector<8x64xf32> -> vector<8x64xf32>
    %c56_244 = arith.constant 56 : index
    %c0_245 = arith.constant 0 : index
    %550 = vector.load %arg51[%c56_244, %c0_245] : memref<64x64xf32, #tpu.memory_space<vmem>>, vector<8x64xf32>
    %551 = arith.addf %550, %547 : vector<8x64xf32>
    %552 = arith.negf %551 : vector<8x64xf32>
    %553 = math.exp %552 : vector<8x64xf32>
    %cst_246 = arith.constant 1.000000e+00 : f32
    %554 = vector.broadcast %cst_246 : f32 to vector<8x64xf32>
    %555 = arith.addf %554, %553 : vector<8x64xf32>
    %556 = arith.divf %554, %555 : vector<8x64xf32>
    %c56_247 = arith.constant 56 : index
    %c0_248 = arith.constant 0 : index
    %557 = vector.load %arg52[%c56_247, %c0_248] : memref<64x64xf32, #tpu.memory_space<vmem>>, vector<8x64xf32>
    %558 = arith.addf %557, %548 : vector<8x64xf32>
    %559 = arith.negf %558 : vector<8x64xf32>
    %560 = math.exp %559 : vector<8x64xf32>
    %cst_249 = arith.constant 1.000000e+00 : f32
    %561 = vector.broadcast %cst_249 : f32 to vector<8x64xf32>
    %562 = arith.addf %561, %560 : vector<8x64xf32>
    %563 = arith.divf %561, %562 : vector<8x64xf32>
    %c56_250 = arith.constant 56 : index
    %c0_251 = arith.constant 0 : index
    %564 = vector.load %arg53[%c56_250, %c0_251] : memref<64x64xf32, #tpu.memory_space<vmem>>, vector<8x64xf32>
    %565 = arith.addf %549, %370 : vector<8x64xf32>
    %566 = arith.mulf %556, %565 : vector<8x64xf32>
    %567 = arith.addf %564, %566 : vector<8x64xf32>
    %568 = math.tanh %567 : vector<8x64xf32>
    %569 = arith.subf %546, %568 : vector<8x64xf32>
    %570 = arith.mulf %563, %569 : vector<8x64xf32>
    %571 = arith.addf %568, %570 : vector<8x64xf32>
    %572 = vector.extract_strided_slice %396 {offsets = [0, 0], sizes = [8, 32], strides = [1, 1]} : vector<8x64xf32> to vector<8x32xf32>
    %573 = vector.extract_strided_slice %571 {offsets = [0, 32], sizes = [8, 32], strides = [1, 1]} : vector<8x64xf32> to vector<8x32xf32>
    %574 = tpu.concatenate %572, %573 in 1 : vector<8x32xf32>, vector<8x32xf32> -> vector<8x64xf32>
    %575 = vector.extract_strided_slice %421 {offsets = [0, 0], sizes = [8, 32], strides = [1, 1]} : vector<8x64xf32> to vector<8x32xf32>
    %576 = vector.extract_strided_slice %546 {offsets = [0, 32], sizes = [8, 32], strides = [1, 1]} : vector<8x64xf32> to vector<8x32xf32>
    %577 = tpu.concatenate %575, %576 in 1 : vector<8x32xf32>, vector<8x32xf32> -> vector<8x64xf32>
    %578 = vector.extract_strided_slice %446 {offsets = [0, 0], sizes = [8, 32], strides = [1, 1]} : vector<8x64xf32> to vector<8x32xf32>
    %579 = vector.extract_strided_slice %521 {offsets = [0, 32], sizes = [8, 32], strides = [1, 1]} : vector<8x64xf32> to vector<8x32xf32>
    %580 = tpu.concatenate %578, %579 in 1 : vector<8x32xf32>, vector<8x32xf32> -> vector<8x64xf32>
    %581 = vector.extract_strided_slice %471 {offsets = [0, 0], sizes = [8, 32], strides = [1, 1]} : vector<8x64xf32> to vector<8x32xf32>
    %582 = vector.extract_strided_slice %496 {offsets = [0, 32], sizes = [8, 32], strides = [1, 1]} : vector<8x64xf32> to vector<8x32xf32>
    %583 = tpu.concatenate %581, %582 in 1 : vector<8x32xf32>, vector<8x32xf32> -> vector<8x64xf32>
    %584 = vector.extract_strided_slice %496 {offsets = [0, 0], sizes = [8, 32], strides = [1, 1]} : vector<8x64xf32> to vector<8x32xf32>
    %585 = vector.extract_strided_slice %471 {offsets = [0, 32], sizes = [8, 32], strides = [1, 1]} : vector<8x64xf32> to vector<8x32xf32>
    %586 = tpu.concatenate %584, %585 in 1 : vector<8x32xf32>, vector<8x32xf32> -> vector<8x64xf32>
    %587 = vector.extract_strided_slice %521 {offsets = [0, 0], sizes = [8, 32], strides = [1, 1]} : vector<8x64xf32> to vector<8x32xf32>
    %588 = vector.extract_strided_slice %446 {offsets = [0, 32], sizes = [8, 32], strides = [1, 1]} : vector<8x64xf32> to vector<8x32xf32>
    %589 = tpu.concatenate %587, %588 in 1 : vector<8x32xf32>, vector<8x32xf32> -> vector<8x64xf32>
    %590 = vector.extract_strided_slice %546 {offsets = [0, 0], sizes = [8, 32], strides = [1, 1]} : vector<8x64xf32> to vector<8x32xf32>
    %591 = vector.extract_strided_slice %421 {offsets = [0, 32], sizes = [8, 32], strides = [1, 1]} : vector<8x64xf32> to vector<8x32xf32>
    %592 = tpu.concatenate %590, %591 in 1 : vector<8x32xf32>, vector<8x32xf32> -> vector<8x64xf32>
    %593 = vector.extract_strided_slice %571 {offsets = [0, 0], sizes = [8, 32], strides = [1, 1]} : vector<8x64xf32> to vector<8x32xf32>
    %594 = vector.extract_strided_slice %396 {offsets = [0, 32], sizes = [8, 32], strides = [1, 1]} : vector<8x64xf32> to vector<8x32xf32>
    %595 = tpu.concatenate %593, %594 in 1 : vector<8x32xf32>, vector<8x32xf32> -> vector<8x64xf32>
    %596 = tpu.concatenate %574, %577, %580, %583, %586, %589, %592, %595 in 0 : vector<8x64xf32>, vector<8x64xf32>, vector<8x64xf32>, vector<8x64xf32>, vector<8x64xf32>, vector<8x64xf32>, vector<8x64xf32>, vector<8x64xf32> -> vector<64x64xf32>
    %c0_252 = arith.constant 0 : index
    %c0_253 = arith.constant 0 : index
    %597 = vector.load %arg26[%c0_252, %c0_253] : memref<64x64xf32, #tpu.memory_space<vmem>>, vector<64x64xf32>
    %cst_254 = arith.constant dense<0.000000e+00> : vector<64x64xf32>
    %598 = tpu.matmul %596, %597, %cst_254 {dimension_numbers = #tpu.dot_dimension_numbers<[1], [0], [0], [1], [0, 0, 1, 1], [], []>} : vector<64x64xf32>, vector<64x64xf32>, vector<64x64xf32> -> vector<64x64xf32>
    %599 = vector.extract_strided_slice %598 {offsets = [0, 0], sizes = [64, 32], strides = [1, 1]} : vector<64x64xf32> to vector<64x32xf32>
    %600 = vector.extract_strided_slice %598 {offsets = [0, 32], sizes = [64, 32], strides = [1, 1]} : vector<64x64xf32> to vector<64x32xf32>
    %601 = vector.extract_strided_slice %600 {offsets = [56, 0], sizes = [8, 32], strides = [1, 1]} : vector<64x32xf32> to vector<8x32xf32>
    %602 = vector.extract_strided_slice %600 {offsets = [48, 0], sizes = [8, 32], strides = [1, 1]} : vector<64x32xf32> to vector<8x32xf32>
    %603 = vector.extract_strided_slice %600 {offsets = [40, 0], sizes = [8, 32], strides = [1, 1]} : vector<64x32xf32> to vector<8x32xf32>
    %604 = vector.extract_strided_slice %600 {offsets = [32, 0], sizes = [8, 32], strides = [1, 1]} : vector<64x32xf32> to vector<8x32xf32>
    %605 = vector.extract_strided_slice %600 {offsets = [24, 0], sizes = [8, 32], strides = [1, 1]} : vector<64x32xf32> to vector<8x32xf32>
    %606 = vector.extract_strided_slice %600 {offsets = [16, 0], sizes = [8, 32], strides = [1, 1]} : vector<64x32xf32> to vector<8x32xf32>
    %607 = vector.extract_strided_slice %600 {offsets = [8, 0], sizes = [8, 32], strides = [1, 1]} : vector<64x32xf32> to vector<8x32xf32>
    %608 = vector.extract_strided_slice %600 {offsets = [0, 0], sizes = [8, 32], strides = [1, 1]} : vector<64x32xf32> to vector<8x32xf32>
    %609 = tpu.concatenate %601, %602, %603, %604, %605, %606, %607, %608 in 0 : vector<8x32xf32>, vector<8x32xf32>, vector<8x32xf32>, vector<8x32xf32>, vector<8x32xf32>, vector<8x32xf32>, vector<8x32xf32>, vector<8x32xf32> -> vector<64x32xf32>
    %610 = tpu.concatenate %599, %609 in 1 : vector<64x32xf32>, vector<64x32xf32> -> vector<64x64xf32>
    %c0_255 = arith.constant 0 : index
    %c0_256 = arith.constant 0 : index
    %611 = vector.load %arg28[%c0_255, %c0_256] : memref<1x64xf32, #tpu.memory_space<vmem>>, vector<1x64xf32>
    %612 = vector.broadcast %611 : vector<1x64xf32> to vector<64x64xf32>
    %613 = arith.addf %610, %612 : vector<64x64xf32>
    %c0_257 = arith.constant 0 : index
    %c0_258 = arith.constant 0 : index
    %614 = vector.load %arg51[%c0_257, %c0_258] : memref<64x64xf32, #tpu.memory_space<vmem>>, vector<64x64xf32>
    tpu.vector_store %arg51[%c0_257, %c0_258], %613 {strides = array<i32>} : memref<64x64xf32, #tpu.memory_space<vmem>>, vector<64x64xf32>,
    %c0_259 = arith.constant 0 : index
    %c0_260 = arith.constant 0 : index
    %615 = vector.load %arg29[%c0_259, %c0_260] : memref<64x64xf32, #tpu.memory_space<vmem>>, vector<64x64xf32>
    %cst_261 = arith.constant dense<0.000000e+00> : vector<64x64xf32>
    %616 = tpu.matmul %596, %615, %cst_261 {dimension_numbers = #tpu.dot_dimension_numbers<[1], [0], [0], [1], [0, 0, 1, 1], [], []>} : vector<64x64xf32>, vector<64x64xf32>, vector<64x64xf32> -> vector<64x64xf32>
    %617 = vector.extract_strided_slice %616 {offsets = [0, 0], sizes = [64, 32], strides = [1, 1]} : vector<64x64xf32> to vector<64x32xf32>
    %618 = vector.extract_strided_slice %616 {offsets = [0, 32], sizes = [64, 32], strides = [1, 1]} : vector<64x64xf32> to vector<64x32xf32>
    %619 = vector.extract_strided_slice %618 {offsets = [56, 0], sizes = [8, 32], strides = [1, 1]} : vector<64x32xf32> to vector<8x32xf32>
    %620 = vector.extract_strided_slice %618 {offsets = [48, 0], sizes = [8, 32], strides = [1, 1]} : vector<64x32xf32> to vector<8x32xf32>
    %621 = vector.extract_strided_slice %618 {offsets = [40, 0], sizes = [8, 32], strides = [1, 1]} : vector<64x32xf32> to vector<8x32xf32>
    %622 = vector.extract_strided_slice %618 {offsets = [32, 0], sizes = [8, 32], strides = [1, 1]} : vector<64x32xf32> to vector<8x32xf32>
    %623 = vector.extract_strided_slice %618 {offsets = [24, 0], sizes = [8, 32], strides = [1, 1]} : vector<64x32xf32> to vector<8x32xf32>
    %624 = vector.extract_strided_slice %618 {offsets = [16, 0], sizes = [8, 32], strides = [1, 1]} : vector<64x32xf32> to vector<8x32xf32>
    %625 = vector.extract_strided_slice %618 {offsets = [8, 0], sizes = [8, 32], strides = [1, 1]} : vector<64x32xf32> to vector<8x32xf32>
    %626 = vector.extract_strided_slice %618 {offsets = [0, 0], sizes = [8, 32], strides = [1, 1]} : vector<64x32xf32> to vector<8x32xf32>
    %627 = tpu.concatenate %619, %620, %621, %622, %623, %624, %625, %626 in 0 : vector<8x32xf32>, vector<8x32xf32>, vector<8x32xf32>, vector<8x32xf32>, vector<8x32xf32>, vector<8x32xf32>, vector<8x32xf32>, vector<8x32xf32> -> vector<64x32xf32>
    %628 = tpu.concatenate %617, %627 in 1 : vector<64x32xf32>, vector<64x32xf32> -> vector<64x64xf32>
    %c0_262 = arith.constant 0 : index
    %c0_263 = arith.constant 0 : index
    %629 = vector.load %arg31[%c0_262, %c0_263] : memref<1x64xf32, #tpu.memory_space<vmem>>, vector<1x64xf32>
    %630 = vector.broadcast %629 : vector<1x64xf32> to vector<64x64xf32>
    %631 = arith.addf %628, %630 : vector<64x64xf32>
    %c0_264 = arith.constant 0 : index
    %c0_265 = arith.constant 0 : index
    %632 = vector.load %arg52[%c0_264, %c0_265] : memref<64x64xf32, #tpu.memory_space<vmem>>, vector<64x64xf32>
    tpu.vector_store %arg52[%c0_264, %c0_265], %631 {strides = array<i32>} : memref<64x64xf32, #tpu.memory_space<vmem>>, vector<64x64xf32>,
    %c0_266 = arith.constant 0 : index
    %c0_267 = arith.constant 0 : index
    %633 = vector.load %arg32[%c0_266, %c0_267] : memref<64x64xf32, #tpu.memory_space<vmem>>, vector<64x64xf32>
    %cst_268 = arith.constant dense<0.000000e+00> : vector<64x64xf32>
    %634 = tpu.matmul %596, %633, %cst_268 {dimension_numbers = #tpu.dot_dimension_numbers<[1], [0], [0], [1], [0, 0, 1, 1], [], []>} : vector<64x64xf32>, vector<64x64xf32>, vector<64x64xf32> -> vector<64x64xf32>
    %635 = vector.extract_strided_slice %634 {offsets = [0, 0], sizes = [64, 32], strides = [1, 1]} : vector<64x64xf32> to vector<64x32xf32>
    %636 = vector.extract_strided_slice %634 {offsets = [0, 32], sizes = [64, 32], strides = [1, 1]} : vector<64x64xf32> to vector<64x32xf32>
    %637 = vector.extract_strided_slice %636 {offsets = [56, 0], sizes = [8, 32], strides = [1, 1]} : vector<64x32xf32> to vector<8x32xf32>
    %638 = vector.extract_strided_slice %636 {offsets = [48, 0], sizes = [8, 32], strides = [1, 1]} : vector<64x32xf32> to vector<8x32xf32>
    %639 = vector.extract_strided_slice %636 {offsets = [40, 0], sizes = [8, 32], strides = [1, 1]} : vector<64x32xf32> to vector<8x32xf32>
    %640 = vector.extract_strided_slice %636 {offsets = [32, 0], sizes = [8, 32], strides = [1, 1]} : vector<64x32xf32> to vector<8x32xf32>
    %641 = vector.extract_strided_slice %636 {offsets = [24, 0], sizes = [8, 32], strides = [1, 1]} : vector<64x32xf32> to vector<8x32xf32>
    %642 = vector.extract_strided_slice %636 {offsets = [16, 0], sizes = [8, 32], strides = [1, 1]} : vector<64x32xf32> to vector<8x32xf32>
    %643 = vector.extract_strided_slice %636 {offsets = [8, 0], sizes = [8, 32], strides = [1, 1]} : vector<64x32xf32> to vector<8x32xf32>
    %644 = vector.extract_strided_slice %636 {offsets = [0, 0], sizes = [8, 32], strides = [1, 1]} : vector<64x32xf32> to vector<8x32xf32>
    %645 = tpu.concatenate %637, %638, %639, %640, %641, %642, %643, %644 in 0 : vector<8x32xf32>, vector<8x32xf32>, vector<8x32xf32>, vector<8x32xf32>, vector<8x32xf32>, vector<8x32xf32>, vector<8x32xf32>, vector<8x32xf32> -> vector<64x32xf32>
    %646 = tpu.concatenate %635, %645 in 1 : vector<64x32xf32>, vector<64x32xf32> -> vector<64x64xf32>
    %c0_269 = arith.constant 0 : index
    %c0_270 = arith.constant 0 : index
    %647 = vector.load %arg34[%c0_269, %c0_270] : memref<1x64xf32, #tpu.memory_space<vmem>>, vector<1x64xf32>
    %648 = vector.broadcast %647 : vector<1x64xf32> to vector<64x64xf32>
    %649 = arith.addf %646, %648 : vector<64x64xf32>
    %c0_271 = arith.constant 0 : index
    %c0_272 = arith.constant 0 : index
    %650 = vector.load %arg53[%c0_271, %c0_272] : memref<64x64xf32, #tpu.memory_space<vmem>>, vector<64x64xf32>
    tpu.vector_store %arg53[%c0_271, %c0_272], %649 {strides = array<i32>} : memref<64x64xf32, #tpu.memory_space<vmem>>, vector<64x64xf32>,
    %c0_273 = arith.constant 0 : index
    %c0_274 = arith.constant 0 : index
    %651 = vector.load %arg27[%c0_273, %c0_274] : memref<64x64xf32, #tpu.memory_space<vmem>>, vector<64x64xf32>
    %c0_275 = arith.constant 0 : index
    %c0_276 = arith.constant 0 : index
    %652 = vector.load %arg30[%c0_275, %c0_276] : memref<64x64xf32, #tpu.memory_space<vmem>>, vector<64x64xf32>
    %c0_277 = arith.constant 0 : index
    %c0_278 = arith.constant 0 : index
    %653 = vector.load %arg33[%c0_277, %c0_278] : memref<64x64xf32, #tpu.memory_space<vmem>>, vector<64x64xf32>
    %c0_279 = arith.constant 0 : index
    %c0_280 = arith.constant 0 : index
    %654 = vector.load %arg35[%c0_279, %c0_280] : memref<1x64xf32, #tpu.memory_space<vmem>>, vector<1x64xf32>
    %655 = vector.shape_cast %654 : vector<1x64xf32> to vector<1x64xf32>
    %656 = vector.broadcast %655 : vector<1x64xf32> to vector<8x64xf32>
    %cst_281 = arith.constant 0.000000e+00 : f32
    %657 = vector.broadcast %cst_281 : f32 to vector<8x64xf32>
    %cst_282 = arith.constant dense<0.000000e+00> : vector<8x64xf32>
    %658 = tpu.matmul %657, %651, %cst_282 {dimension_numbers = #tpu.dot_dimension_numbers<[1], [0], [0], [1], [0, 0, 1, 1], [], []>} : vector<8x64xf32>, vector<64x64xf32>, vector<8x64xf32> -> vector<8x64xf32>
    %cst_283 = arith.constant dense<0.000000e+00> : vector<8x64xf32>
    %659 = tpu.matmul %657, %652, %cst_283 {dimension_numbers = #tpu.dot_dimension_numbers<[1], [0], [0], [1], [0, 0, 1, 1], [], []>} : vector<8x64xf32>, vector<64x64xf32>, vector<8x64xf32> -> vector<8x64xf32>
    %cst_284 = arith.constant dense<0.000000e+00> : vector<8x64xf32>
    %660 = tpu.matmul %657, %653, %cst_284 {dimension_numbers = #tpu.dot_dimension_numbers<[1], [0], [0], [1], [0, 0, 1, 1], [], []>} : vector<8x64xf32>, vector<64x64xf32>, vector<8x64xf32> -> vector<8x64xf32>
    %c0_285 = arith.constant 0 : index
    %c0_286 = arith.constant 0 : index
    %661 = vector.load %arg51[%c0_285, %c0_286] : memref<64x64xf32, #tpu.memory_space<vmem>>, vector<8x64xf32>
    %662 = arith.addf %661, %658 : vector<8x64xf32>
    %663 = arith.negf %662 : vector<8x64xf32>
    %664 = math.exp %663 : vector<8x64xf32>
    %cst_287 = arith.constant 1.000000e+00 : f32
    %665 = vector.broadcast %cst_287 : f32 to vector<8x64xf32>
    %666 = arith.addf %665, %664 : vector<8x64xf32>
    %667 = arith.divf %665, %666 : vector<8x64xf32>
    %c0_288 = arith.constant 0 : index
    %c0_289 = arith.constant 0 : index
    %668 = vector.load %arg52[%c0_288, %c0_289] : memref<64x64xf32, #tpu.memory_space<vmem>>, vector<8x64xf32>
    %669 = arith.addf %668, %659 : vector<8x64xf32>
    %670 = arith.negf %669 : vector<8x64xf32>
    %671 = math.exp %670 : vector<8x64xf32>
    %cst_290 = arith.constant 1.000000e+00 : f32
    %672 = vector.broadcast %cst_290 : f32 to vector<8x64xf32>
    %673 = arith.addf %672, %671 : vector<8x64xf32>
    %674 = arith.divf %672, %673 : vector<8x64xf32>
    %c0_291 = arith.constant 0 : index
    %c0_292 = arith.constant 0 : index
    %675 = vector.load %arg53[%c0_291, %c0_292] : memref<64x64xf32, #tpu.memory_space<vmem>>, vector<8x64xf32>
    %676 = arith.addf %660, %656 : vector<8x64xf32>
    %677 = arith.mulf %667, %676 : vector<8x64xf32>
    %678 = arith.addf %675, %677 : vector<8x64xf32>
    %679 = math.tanh %678 : vector<8x64xf32>
    %680 = arith.subf %657, %679 : vector<8x64xf32>
    %681 = arith.mulf %674, %680 : vector<8x64xf32>
    %682 = arith.addf %679, %681 : vector<8x64xf32>
    %cst_293 = arith.constant dense<0.000000e+00> : vector<8x64xf32>
    %683 = tpu.matmul %682, %651, %cst_293 {dimension_numbers = #tpu.dot_dimension_numbers<[1], [0], [0], [1], [0, 0, 1, 1], [], []>} : vector<8x64xf32>, vector<64x64xf32>, vector<8x64xf32> -> vector<8x64xf32>
    %cst_294 = arith.constant dense<0.000000e+00> : vector<8x64xf32>
    %684 = tpu.matmul %682, %652, %cst_294 {dimension_numbers = #tpu.dot_dimension_numbers<[1], [0], [0], [1], [0, 0, 1, 1], [], []>} : vector<8x64xf32>, vector<64x64xf32>, vector<8x64xf32> -> vector<8x64xf32>
    %cst_295 = arith.constant dense<0.000000e+00> : vector<8x64xf32>
    %685 = tpu.matmul %682, %653, %cst_295 {dimension_numbers = #tpu.dot_dimension_numbers<[1], [0], [0], [1], [0, 0, 1, 1], [], []>} : vector<8x64xf32>, vector<64x64xf32>, vector<8x64xf32> -> vector<8x64xf32>
    %c8_296 = arith.constant 8 : index
    %c0_297 = arith.constant 0 : index
    %686 = vector.load %arg51[%c8_296, %c0_297] : memref<64x64xf32, #tpu.memory_space<vmem>>, vector<8x64xf32>
    %687 = arith.addf %686, %683 : vector<8x64xf32>
    %688 = arith.negf %687 : vector<8x64xf32>
    %689 = math.exp %688 : vector<8x64xf32>
    %cst_298 = arith.constant 1.000000e+00 : f32
    %690 = vector.broadcast %cst_298 : f32 to vector<8x64xf32>
    %691 = arith.addf %690, %689 : vector<8x64xf32>
    %692 = arith.divf %690, %691 : vector<8x64xf32>
    %c8_299 = arith.constant 8 : index
    %c0_300 = arith.constant 0 : index
    %693 = vector.load %arg52[%c8_299, %c0_300] : memref<64x64xf32, #tpu.memory_space<vmem>>, vector<8x64xf32>
    %694 = arith.addf %693, %684 : vector<8x64xf32>
    %695 = arith.negf %694 : vector<8x64xf32>
    %696 = math.exp %695 : vector<8x64xf32>
    %cst_301 = arith.constant 1.000000e+00 : f32
    %697 = vector.broadcast %cst_301 : f32 to vector<8x64xf32>
    %698 = arith.addf %697, %696 : vector<8x64xf32>
    %699 = arith.divf %697, %698 : vector<8x64xf32>
    %c8_302 = arith.constant 8 : index
    %c0_303 = arith.constant 0 : index
    %700 = vector.load %arg53[%c8_302, %c0_303] : memref<64x64xf32, #tpu.memory_space<vmem>>, vector<8x64xf32>
    %701 = arith.addf %685, %656 : vector<8x64xf32>
    %702 = arith.mulf %692, %701 : vector<8x64xf32>
    %703 = arith.addf %700, %702 : vector<8x64xf32>
    %704 = math.tanh %703 : vector<8x64xf32>
    %705 = arith.subf %682, %704 : vector<8x64xf32>
    %706 = arith.mulf %699, %705 : vector<8x64xf32>
    %707 = arith.addf %704, %706 : vector<8x64xf32>
    %cst_304 = arith.constant dense<0.000000e+00> : vector<8x64xf32>
    %708 = tpu.matmul %707, %651, %cst_304 {dimension_numbers = #tpu.dot_dimension_numbers<[1], [0], [0], [1], [0, 0, 1, 1], [], []>} : vector<8x64xf32>, vector<64x64xf32>, vector<8x64xf32> -> vector<8x64xf32>
    %cst_305 = arith.constant dense<0.000000e+00> : vector<8x64xf32>
    %709 = tpu.matmul %707, %652, %cst_305 {dimension_numbers = #tpu.dot_dimension_numbers<[1], [0], [0], [1], [0, 0, 1, 1], [], []>} : vector<8x64xf32>, vector<64x64xf32>, vector<8x64xf32> -> vector<8x64xf32>
    %cst_306 = arith.constant dense<0.000000e+00> : vector<8x64xf32>
    %710 = tpu.matmul %707, %653, %cst_306 {dimension_numbers = #tpu.dot_dimension_numbers<[1], [0], [0], [1], [0, 0, 1, 1], [], []>} : vector<8x64xf32>, vector<64x64xf32>, vector<8x64xf32> -> vector<8x64xf32>
    %c16_307 = arith.constant 16 : index
    %c0_308 = arith.constant 0 : index
    %711 = vector.load %arg51[%c16_307, %c0_308] : memref<64x64xf32, #tpu.memory_space<vmem>>, vector<8x64xf32>
    %712 = arith.addf %711, %708 : vector<8x64xf32>
    %713 = arith.negf %712 : vector<8x64xf32>
    %714 = math.exp %713 : vector<8x64xf32>
    %cst_309 = arith.constant 1.000000e+00 : f32
    %715 = vector.broadcast %cst_309 : f32 to vector<8x64xf32>
    %716 = arith.addf %715, %714 : vector<8x64xf32>
    %717 = arith.divf %715, %716 : vector<8x64xf32>
    %c16_310 = arith.constant 16 : index
    %c0_311 = arith.constant 0 : index
    %718 = vector.load %arg52[%c16_310, %c0_311] : memref<64x64xf32, #tpu.memory_space<vmem>>, vector<8x64xf32>
    %719 = arith.addf %718, %709 : vector<8x64xf32>
    %720 = arith.negf %719 : vector<8x64xf32>
    %721 = math.exp %720 : vector<8x64xf32>
    %cst_312 = arith.constant 1.000000e+00 : f32
    %722 = vector.broadcast %cst_312 : f32 to vector<8x64xf32>
    %723 = arith.addf %722, %721 : vector<8x64xf32>
    %724 = arith.divf %722, %723 : vector<8x64xf32>
    %c16_313 = arith.constant 16 : index
    %c0_314 = arith.constant 0 : index
    %725 = vector.load %arg53[%c16_313, %c0_314] : memref<64x64xf32, #tpu.memory_space<vmem>>, vector<8x64xf32>
    %726 = arith.addf %710, %656 : vector<8x64xf32>
    %727 = arith.mulf %717, %726 : vector<8x64xf32>
    %728 = arith.addf %725, %727 : vector<8x64xf32>
    %729 = math.tanh %728 : vector<8x64xf32>
    %730 = arith.subf %707, %729 : vector<8x64xf32>
    %731 = arith.mulf %724, %730 : vector<8x64xf32>
    %732 = arith.addf %729, %731 : vector<8x64xf32>
    %cst_315 = arith.constant dense<0.000000e+00> : vector<8x64xf32>
    %733 = tpu.matmul %732, %651, %cst_315 {dimension_numbers = #tpu.dot_dimension_numbers<[1], [0], [0], [1], [0, 0, 1, 1], [], []>} : vector<8x64xf32>, vector<64x64xf32>, vector<8x64xf32> -> vector<8x64xf32>
    %cst_316 = arith.constant dense<0.000000e+00> : vector<8x64xf32>
    %734 = tpu.matmul %732, %652, %cst_316 {dimension_numbers = #tpu.dot_dimension_numbers<[1], [0], [0], [1], [0, 0, 1, 1], [], []>} : vector<8x64xf32>, vector<64x64xf32>, vector<8x64xf32> -> vector<8x64xf32>
    %cst_317 = arith.constant dense<0.000000e+00> : vector<8x64xf32>
    %735 = tpu.matmul %732, %653, %cst_317 {dimension_numbers = #tpu.dot_dimension_numbers<[1], [0], [0], [1], [0, 0, 1, 1], [], []>} : vector<8x64xf32>, vector<64x64xf32>, vector<8x64xf32> -> vector<8x64xf32>
    %c24_318 = arith.constant 24 : index
    %c0_319 = arith.constant 0 : index
    %736 = vector.load %arg51[%c24_318, %c0_319] : memref<64x64xf32, #tpu.memory_space<vmem>>, vector<8x64xf32>
    %737 = arith.addf %736, %733 : vector<8x64xf32>
    %738 = arith.negf %737 : vector<8x64xf32>
    %739 = math.exp %738 : vector<8x64xf32>
    %cst_320 = arith.constant 1.000000e+00 : f32
    %740 = vector.broadcast %cst_320 : f32 to vector<8x64xf32>
    %741 = arith.addf %740, %739 : vector<8x64xf32>
    %742 = arith.divf %740, %741 : vector<8x64xf32>
    %c24_321 = arith.constant 24 : index
    %c0_322 = arith.constant 0 : index
    %743 = vector.load %arg52[%c24_321, %c0_322] : memref<64x64xf32, #tpu.memory_space<vmem>>, vector<8x64xf32>
    %744 = arith.addf %743, %734 : vector<8x64xf32>
    %745 = arith.negf %744 : vector<8x64xf32>
    %746 = math.exp %745 : vector<8x64xf32>
    %cst_323 = arith.constant 1.000000e+00 : f32
    %747 = vector.broadcast %cst_323 : f32 to vector<8x64xf32>
    %748 = arith.addf %747, %746 : vector<8x64xf32>
    %749 = arith.divf %747, %748 : vector<8x64xf32>
    %c24_324 = arith.constant 24 : index
    %c0_325 = arith.constant 0 : index
    %750 = vector.load %arg53[%c24_324, %c0_325] : memref<64x64xf32, #tpu.memory_space<vmem>>, vector<8x64xf32>
    %751 = arith.addf %735, %656 : vector<8x64xf32>
    %752 = arith.mulf %742, %751 : vector<8x64xf32>
    %753 = arith.addf %750, %752 : vector<8x64xf32>
    %754 = math.tanh %753 : vector<8x64xf32>
    %755 = arith.subf %732, %754 : vector<8x64xf32>
    %756 = arith.mulf %749, %755 : vector<8x64xf32>
    %757 = arith.addf %754, %756 : vector<8x64xf32>
    %cst_326 = arith.constant dense<0.000000e+00> : vector<8x64xf32>
    %758 = tpu.matmul %757, %651, %cst_326 {dimension_numbers = #tpu.dot_dimension_numbers<[1], [0], [0], [1], [0, 0, 1, 1], [], []>} : vector<8x64xf32>, vector<64x64xf32>, vector<8x64xf32> -> vector<8x64xf32>
    %cst_327 = arith.constant dense<0.000000e+00> : vector<8x64xf32>
    %759 = tpu.matmul %757, %652, %cst_327 {dimension_numbers = #tpu.dot_dimension_numbers<[1], [0], [0], [1], [0, 0, 1, 1], [], []>} : vector<8x64xf32>, vector<64x64xf32>, vector<8x64xf32> -> vector<8x64xf32>
    %cst_328 = arith.constant dense<0.000000e+00> : vector<8x64xf32>
    %760 = tpu.matmul %757, %653, %cst_328 {dimension_numbers = #tpu.dot_dimension_numbers<[1], [0], [0], [1], [0, 0, 1, 1], [], []>} : vector<8x64xf32>, vector<64x64xf32>, vector<8x64xf32> -> vector<8x64xf32>
    %c32_329 = arith.constant 32 : index
    %c0_330 = arith.constant 0 : index
    %761 = vector.load %arg51[%c32_329, %c0_330] : memref<64x64xf32, #tpu.memory_space<vmem>>, vector<8x64xf32>
    %762 = arith.addf %761, %758 : vector<8x64xf32>
    %763 = arith.negf %762 : vector<8x64xf32>
    %764 = math.exp %763 : vector<8x64xf32>
    %cst_331 = arith.constant 1.000000e+00 : f32
    %765 = vector.broadcast %cst_331 : f32 to vector<8x64xf32>
    %766 = arith.addf %765, %764 : vector<8x64xf32>
    %767 = arith.divf %765, %766 : vector<8x64xf32>
    %c32_332 = arith.constant 32 : index
    %c0_333 = arith.constant 0 : index
    %768 = vector.load %arg52[%c32_332, %c0_333] : memref<64x64xf32, #tpu.memory_space<vmem>>, vector<8x64xf32>
    %769 = arith.addf %768, %759 : vector<8x64xf32>
    %770 = arith.negf %769 : vector<8x64xf32>
    %771 = math.exp %770 : vector<8x64xf32>
    %cst_334 = arith.constant 1.000000e+00 : f32
    %772 = vector.broadcast %cst_334 : f32 to vector<8x64xf32>
    %773 = arith.addf %772, %771 : vector<8x64xf32>
    %774 = arith.divf %772, %773 : vector<8x64xf32>
    %c32_335 = arith.constant 32 : index
    %c0_336 = arith.constant 0 : index
    %775 = vector.load %arg53[%c32_335, %c0_336] : memref<64x64xf32, #tpu.memory_space<vmem>>, vector<8x64xf32>
    %776 = arith.addf %760, %656 : vector<8x64xf32>
    %777 = arith.mulf %767, %776 : vector<8x64xf32>
    %778 = arith.addf %775, %777 : vector<8x64xf32>
    %779 = math.tanh %778 : vector<8x64xf32>
    %780 = arith.subf %757, %779 : vector<8x64xf32>
    %781 = arith.mulf %774, %780 : vector<8x64xf32>
    %782 = arith.addf %779, %781 : vector<8x64xf32>
    %cst_337 = arith.constant dense<0.000000e+00> : vector<8x64xf32>
    %783 = tpu.matmul %782, %651, %cst_337 {dimension_numbers = #tpu.dot_dimension_numbers<[1], [0], [0], [1], [0, 0, 1, 1], [], []>} : vector<8x64xf32>, vector<64x64xf32>, vector<8x64xf32> -> vector<8x64xf32>
    %cst_338 = arith.constant dense<0.000000e+00> : vector<8x64xf32>
    %784 = tpu.matmul %782, %652, %cst_338 {dimension_numbers = #tpu.dot_dimension_numbers<[1], [0], [0], [1], [0, 0, 1, 1], [], []>} : vector<8x64xf32>, vector<64x64xf32>, vector<8x64xf32> -> vector<8x64xf32>
    %cst_339 = arith.constant dense<0.000000e+00> : vector<8x64xf32>
    %785 = tpu.matmul %782, %653, %cst_339 {dimension_numbers = #tpu.dot_dimension_numbers<[1], [0], [0], [1], [0, 0, 1, 1], [], []>} : vector<8x64xf32>, vector<64x64xf32>, vector<8x64xf32> -> vector<8x64xf32>
    %c40_340 = arith.constant 40 : index
    %c0_341 = arith.constant 0 : index
    %786 = vector.load %arg51[%c40_340, %c0_341] : memref<64x64xf32, #tpu.memory_space<vmem>>, vector<8x64xf32>
    %787 = arith.addf %786, %783 : vector<8x64xf32>
    %788 = arith.negf %787 : vector<8x64xf32>
    %789 = math.exp %788 : vector<8x64xf32>
    %cst_342 = arith.constant 1.000000e+00 : f32
    %790 = vector.broadcast %cst_342 : f32 to vector<8x64xf32>
    %791 = arith.addf %790, %789 : vector<8x64xf32>
    %792 = arith.divf %790, %791 : vector<8x64xf32>
    %c40_343 = arith.constant 40 : index
    %c0_344 = arith.constant 0 : index
    %793 = vector.load %arg52[%c40_343, %c0_344] : memref<64x64xf32, #tpu.memory_space<vmem>>, vector<8x64xf32>
    %794 = arith.addf %793, %784 : vector<8x64xf32>
    %795 = arith.negf %794 : vector<8x64xf32>
    %796 = math.exp %795 : vector<8x64xf32>
    %cst_345 = arith.constant 1.000000e+00 : f32
    %797 = vector.broadcast %cst_345 : f32 to vector<8x64xf32>
    %798 = arith.addf %797, %796 : vector<8x64xf32>
    %799 = arith.divf %797, %798 : vector<8x64xf32>
    %c40_346 = arith.constant 40 : index
    %c0_347 = arith.constant 0 : index
    %800 = vector.load %arg53[%c40_346, %c0_347] : memref<64x64xf32, #tpu.memory_space<vmem>>, vector<8x64xf32>
    %801 = arith.addf %785, %656 : vector<8x64xf32>
    %802 = arith.mulf %792, %801 : vector<8x64xf32>
    %803 = arith.addf %800, %802 : vector<8x64xf32>
    %804 = math.tanh %803 : vector<8x64xf32>
    %805 = arith.subf %782, %804 : vector<8x64xf32>
    %806 = arith.mulf %799, %805 : vector<8x64xf32>
    %807 = arith.addf %804, %806 : vector<8x64xf32>
    %cst_348 = arith.constant dense<0.000000e+00> : vector<8x64xf32>
    %808 = tpu.matmul %807, %651, %cst_348 {dimension_numbers = #tpu.dot_dimension_numbers<[1], [0], [0], [1], [0, 0, 1, 1], [], []>} : vector<8x64xf32>, vector<64x64xf32>, vector<8x64xf32> -> vector<8x64xf32>
    %cst_349 = arith.constant dense<0.000000e+00> : vector<8x64xf32>
    %809 = tpu.matmul %807, %652, %cst_349 {dimension_numbers = #tpu.dot_dimension_numbers<[1], [0], [0], [1], [0, 0, 1, 1], [], []>} : vector<8x64xf32>, vector<64x64xf32>, vector<8x64xf32> -> vector<8x64xf32>
    %cst_350 = arith.constant dense<0.000000e+00> : vector<8x64xf32>
    %810 = tpu.matmul %807, %653, %cst_350 {dimension_numbers = #tpu.dot_dimension_numbers<[1], [0], [0], [1], [0, 0, 1, 1], [], []>} : vector<8x64xf32>, vector<64x64xf32>, vector<8x64xf32> -> vector<8x64xf32>
    %c48_351 = arith.constant 48 : index
    %c0_352 = arith.constant 0 : index
    %811 = vector.load %arg51[%c48_351, %c0_352] : memref<64x64xf32, #tpu.memory_space<vmem>>, vector<8x64xf32>
    %812 = arith.addf %811, %808 : vector<8x64xf32>
    %813 = arith.negf %812 : vector<8x64xf32>
    %814 = math.exp %813 : vector<8x64xf32>
    %cst_353 = arith.constant 1.000000e+00 : f32
    %815 = vector.broadcast %cst_353 : f32 to vector<8x64xf32>
    %816 = arith.addf %815, %814 : vector<8x64xf32>
    %817 = arith.divf %815, %816 : vector<8x64xf32>
    %c48_354 = arith.constant 48 : index
    %c0_355 = arith.constant 0 : index
    %818 = vector.load %arg52[%c48_354, %c0_355] : memref<64x64xf32, #tpu.memory_space<vmem>>, vector<8x64xf32>
    %819 = arith.addf %818, %809 : vector<8x64xf32>
    %820 = arith.negf %819 : vector<8x64xf32>
    %821 = math.exp %820 : vector<8x64xf32>
    %cst_356 = arith.constant 1.000000e+00 : f32
    %822 = vector.broadcast %cst_356 : f32 to vector<8x64xf32>
    %823 = arith.addf %822, %821 : vector<8x64xf32>
    %824 = arith.divf %822, %823 : vector<8x64xf32>
    %c48_357 = arith.constant 48 : index
    %c0_358 = arith.constant 0 : index
    %825 = vector.load %arg53[%c48_357, %c0_358] : memref<64x64xf32, #tpu.memory_space<vmem>>, vector<8x64xf32>
    %826 = arith.addf %810, %656 : vector<8x64xf32>
    %827 = arith.mulf %817, %826 : vector<8x64xf32>
    %828 = arith.addf %825, %827 : vector<8x64xf32>
    %829 = math.tanh %828 : vector<8x64xf32>
    %830 = arith.subf %807, %829 : vector<8x64xf32>
    %831 = arith.mulf %824, %830 : vector<8x64xf32>
    %832 = arith.addf %829, %831 : vector<8x64xf32>
    %cst_359 = arith.constant dense<0.000000e+00> : vector<8x64xf32>
    %833 = tpu.matmul %832, %651, %cst_359 {dimension_numbers = #tpu.dot_dimension_numbers<[1], [0], [0], [1], [0, 0, 1, 1], [], []>} : vector<8x64xf32>, vector<64x64xf32>, vector<8x64xf32> -> vector<8x64xf32>
    %cst_360 = arith.constant dense<0.000000e+00> : vector<8x64xf32>
    %834 = tpu.matmul %832, %652, %cst_360 {dimension_numbers = #tpu.dot_dimension_numbers<[1], [0], [0], [1], [0, 0, 1, 1], [], []>} : vector<8x64xf32>, vector<64x64xf32>, vector<8x64xf32> -> vector<8x64xf32>
    %cst_361 = arith.constant dense<0.000000e+00> : vector<8x64xf32>
    %835 = tpu.matmul %832, %653, %cst_361 {dimension_numbers = #tpu.dot_dimension_numbers<[1], [0], [0], [1], [0, 0, 1, 1], [], []>} : vector<8x64xf32>, vector<64x64xf32>, vector<8x64xf32> -> vector<8x64xf32>
    %c56_362 = arith.constant 56 : index
    %c0_363 = arith.constant 0 : index
    %836 = vector.load %arg51[%c56_362, %c0_363] : memref<64x64xf32, #tpu.memory_space<vmem>>, vector<8x64xf32>
    %837 = arith.addf %836, %833 : vector<8x64xf32>
    %838 = arith.negf %837 : vector<8x64xf32>
    %839 = math.exp %838 : vector<8x64xf32>
    %cst_364 = arith.constant 1.000000e+00 : f32
    %840 = vector.broadcast %cst_364 : f32 to vector<8x64xf32>
    %841 = arith.addf %840, %839 : vector<8x64xf32>
    %842 = arith.divf %840, %841 : vector<8x64xf32>
    %c56_365 = arith.constant 56 : index
    %c0_366 = arith.constant 0 : index
    %843 = vector.load %arg52[%c56_365, %c0_366] : memref<64x64xf32, #tpu.memory_space<vmem>>, vector<8x64xf32>
    %844 = arith.addf %843, %834 : vector<8x64xf32>
    %845 = arith.negf %844 : vector<8x64xf32>
    %846 = math.exp %845 : vector<8x64xf32>
    %cst_367 = arith.constant 1.000000e+00 : f32
    %847 = vector.broadcast %cst_367 : f32 to vector<8x64xf32>
    %848 = arith.addf %847, %846 : vector<8x64xf32>
    %849 = arith.divf %847, %848 : vector<8x64xf32>
    %c56_368 = arith.constant 56 : index
    %c0_369 = arith.constant 0 : index
    %850 = vector.load %arg53[%c56_368, %c0_369] : memref<64x64xf32, #tpu.memory_space<vmem>>, vector<8x64xf32>
    %851 = arith.addf %835, %656 : vector<8x64xf32>
    %852 = arith.mulf %842, %851 : vector<8x64xf32>
    %853 = arith.addf %850, %852 : vector<8x64xf32>
    %854 = math.tanh %853 : vector<8x64xf32>
    %855 = arith.subf %832, %854 : vector<8x64xf32>
    %856 = arith.mulf %849, %855 : vector<8x64xf32>
    %857 = arith.addf %854, %856 : vector<8x64xf32>
    %858 = vector.extract_strided_slice %682 {offsets = [0, 0], sizes = [8, 32], strides = [1, 1]} : vector<8x64xf32> to vector<8x32xf32>
    %859 = vector.extract_strided_slice %857 {offsets = [0, 32], sizes = [8, 32], strides = [1, 1]} : vector<8x64xf32> to vector<8x32xf32>
    %860 = tpu.concatenate %858, %859 in 1 : vector<8x32xf32>, vector<8x32xf32> -> vector<8x64xf32>
    %861 = vector.extract_strided_slice %707 {offsets = [0, 0], sizes = [8, 32], strides = [1, 1]} : vector<8x64xf32> to vector<8x32xf32>
    %862 = vector.extract_strided_slice %832 {offsets = [0, 32], sizes = [8, 32], strides = [1, 1]} : vector<8x64xf32> to vector<8x32xf32>
    %863 = tpu.concatenate %861, %862 in 1 : vector<8x32xf32>, vector<8x32xf32> -> vector<8x64xf32>
    %864 = vector.extract_strided_slice %732 {offsets = [0, 0], sizes = [8, 32], strides = [1, 1]} : vector<8x64xf32> to vector<8x32xf32>
    %865 = vector.extract_strided_slice %807 {offsets = [0, 32], sizes = [8, 32], strides = [1, 1]} : vector<8x64xf32> to vector<8x32xf32>
    %866 = tpu.concatenate %864, %865 in 1 : vector<8x32xf32>, vector<8x32xf32> -> vector<8x64xf32>
    %867 = vector.extract_strided_slice %757 {offsets = [0, 0], sizes = [8, 32], strides = [1, 1]} : vector<8x64xf32> to vector<8x32xf32>
    %868 = vector.extract_strided_slice %782 {offsets = [0, 32], sizes = [8, 32], strides = [1, 1]} : vector<8x64xf32> to vector<8x32xf32>
    %869 = tpu.concatenate %867, %868 in 1 : vector<8x32xf32>, vector<8x32xf32> -> vector<8x64xf32>
    %870 = vector.extract_strided_slice %782 {offsets = [0, 0], sizes = [8, 32], strides = [1, 1]} : vector<8x64xf32> to vector<8x32xf32>
    %871 = vector.extract_strided_slice %757 {offsets = [0, 32], sizes = [8, 32], strides = [1, 1]} : vector<8x64xf32> to vector<8x32xf32>
    %872 = tpu.concatenate %870, %871 in 1 : vector<8x32xf32>, vector<8x32xf32> -> vector<8x64xf32>
    %873 = vector.extract_strided_slice %807 {offsets = [0, 0], sizes = [8, 32], strides = [1, 1]} : vector<8x64xf32> to vector<8x32xf32>
    %874 = vector.extract_strided_slice %732 {offsets = [0, 32], sizes = [8, 32], strides = [1, 1]} : vector<8x64xf32> to vector<8x32xf32>
    %875 = tpu.concatenate %873, %874 in 1 : vector<8x32xf32>, vector<8x32xf32> -> vector<8x64xf32>
    %876 = vector.extract_strided_slice %832 {offsets = [0, 0], sizes = [8, 32], strides = [1, 1]} : vector<8x64xf32> to vector<8x32xf32>
    %877 = vector.extract_strided_slice %707 {offsets = [0, 32], sizes = [8, 32], strides = [1, 1]} : vector<8x64xf32> to vector<8x32xf32>
    %878 = tpu.concatenate %876, %877 in 1 : vector<8x32xf32>, vector<8x32xf32> -> vector<8x64xf32>
    %879 = vector.extract_strided_slice %857 {offsets = [0, 0], sizes = [8, 32], strides = [1, 1]} : vector<8x64xf32> to vector<8x32xf32>
    %880 = vector.extract_strided_slice %682 {offsets = [0, 32], sizes = [8, 32], strides = [1, 1]} : vector<8x64xf32> to vector<8x32xf32>
    %881 = tpu.concatenate %879, %880 in 1 : vector<8x32xf32>, vector<8x32xf32> -> vector<8x64xf32>
    %882 = tpu.concatenate %860, %863, %866, %869, %872, %875, %878, %881 in 0 : vector<8x64xf32>, vector<8x64xf32>, vector<8x64xf32>, vector<8x64xf32>, vector<8x64xf32>, vector<8x64xf32>, vector<8x64xf32>, vector<8x64xf32> -> vector<64x64xf32>
    %c0_370 = arith.constant 0 : index
    %c0_371 = arith.constant 0 : index
    %883 = vector.load %arg36[%c0_370, %c0_371] : memref<64x64xf32, #tpu.memory_space<vmem>>, vector<64x64xf32>
    %cst_372 = arith.constant dense<0.000000e+00> : vector<64x64xf32>
    %884 = tpu.matmul %882, %883, %cst_372 {dimension_numbers = #tpu.dot_dimension_numbers<[1], [0], [0], [1], [0, 0, 1, 1], [], []>} : vector<64x64xf32>, vector<64x64xf32>, vector<64x64xf32> -> vector<64x64xf32>
    %885 = vector.extract_strided_slice %884 {offsets = [0, 0], sizes = [64, 32], strides = [1, 1]} : vector<64x64xf32> to vector<64x32xf32>
    %886 = vector.extract_strided_slice %884 {offsets = [0, 32], sizes = [64, 32], strides = [1, 1]} : vector<64x64xf32> to vector<64x32xf32>
    %887 = vector.extract_strided_slice %886 {offsets = [56, 0], sizes = [8, 32], strides = [1, 1]} : vector<64x32xf32> to vector<8x32xf32>
    %888 = vector.extract_strided_slice %886 {offsets = [48, 0], sizes = [8, 32], strides = [1, 1]} : vector<64x32xf32> to vector<8x32xf32>
    %889 = vector.extract_strided_slice %886 {offsets = [40, 0], sizes = [8, 32], strides = [1, 1]} : vector<64x32xf32> to vector<8x32xf32>
    %890 = vector.extract_strided_slice %886 {offsets = [32, 0], sizes = [8, 32], strides = [1, 1]} : vector<64x32xf32> to vector<8x32xf32>
    %891 = vector.extract_strided_slice %886 {offsets = [24, 0], sizes = [8, 32], strides = [1, 1]} : vector<64x32xf32> to vector<8x32xf32>
    %892 = vector.extract_strided_slice %886 {offsets = [16, 0], sizes = [8, 32], strides = [1, 1]} : vector<64x32xf32> to vector<8x32xf32>
    %893 = vector.extract_strided_slice %886 {offsets = [8, 0], sizes = [8, 32], strides = [1, 1]} : vector<64x32xf32> to vector<8x32xf32>
    %894 = vector.extract_strided_slice %886 {offsets = [0, 0], sizes = [8, 32], strides = [1, 1]} : vector<64x32xf32> to vector<8x32xf32>
    %895 = tpu.concatenate %887, %888, %889, %890, %891, %892, %893, %894 in 0 : vector<8x32xf32>, vector<8x32xf32>, vector<8x32xf32>, vector<8x32xf32>, vector<8x32xf32>, vector<8x32xf32>, vector<8x32xf32>, vector<8x32xf32> -> vector<64x32xf32>
    %896 = tpu.concatenate %885, %895 in 1 : vector<64x32xf32>, vector<64x32xf32> -> vector<64x64xf32>
    %c0_373 = arith.constant 0 : index
    %c0_374 = arith.constant 0 : index
    %897 = vector.load %arg38[%c0_373, %c0_374] : memref<1x64xf32, #tpu.memory_space<vmem>>, vector<1x64xf32>
    %898 = vector.broadcast %897 : vector<1x64xf32> to vector<64x64xf32>
    %899 = arith.addf %896, %898 : vector<64x64xf32>
    %c0_375 = arith.constant 0 : index
    %c0_376 = arith.constant 0 : index
    %900 = vector.load %arg51[%c0_375, %c0_376] : memref<64x64xf32, #tpu.memory_space<vmem>>, vector<64x64xf32>
    tpu.vector_store %arg51[%c0_375, %c0_376], %899 {strides = array<i32>} : memref<64x64xf32, #tpu.memory_space<vmem>>, vector<64x64xf32>,
    %c0_377 = arith.constant 0 : index
    %c0_378 = arith.constant 0 : index
    %901 = vector.load %arg39[%c0_377, %c0_378] : memref<64x64xf32, #tpu.memory_space<vmem>>, vector<64x64xf32>
    %cst_379 = arith.constant dense<0.000000e+00> : vector<64x64xf32>
    %902 = tpu.matmul %882, %901, %cst_379 {dimension_numbers = #tpu.dot_dimension_numbers<[1], [0], [0], [1], [0, 0, 1, 1], [], []>} : vector<64x64xf32>, vector<64x64xf32>, vector<64x64xf32> -> vector<64x64xf32>
    %903 = vector.extract_strided_slice %902 {offsets = [0, 0], sizes = [64, 32], strides = [1, 1]} : vector<64x64xf32> to vector<64x32xf32>
    %904 = vector.extract_strided_slice %902 {offsets = [0, 32], sizes = [64, 32], strides = [1, 1]} : vector<64x64xf32> to vector<64x32xf32>
    %905 = vector.extract_strided_slice %904 {offsets = [56, 0], sizes = [8, 32], strides = [1, 1]} : vector<64x32xf32> to vector<8x32xf32>
    %906 = vector.extract_strided_slice %904 {offsets = [48, 0], sizes = [8, 32], strides = [1, 1]} : vector<64x32xf32> to vector<8x32xf32>
    %907 = vector.extract_strided_slice %904 {offsets = [40, 0], sizes = [8, 32], strides = [1, 1]} : vector<64x32xf32> to vector<8x32xf32>
    %908 = vector.extract_strided_slice %904 {offsets = [32, 0], sizes = [8, 32], strides = [1, 1]} : vector<64x32xf32> to vector<8x32xf32>
    %909 = vector.extract_strided_slice %904 {offsets = [24, 0], sizes = [8, 32], strides = [1, 1]} : vector<64x32xf32> to vector<8x32xf32>
    %910 = vector.extract_strided_slice %904 {offsets = [16, 0], sizes = [8, 32], strides = [1, 1]} : vector<64x32xf32> to vector<8x32xf32>
    %911 = vector.extract_strided_slice %904 {offsets = [8, 0], sizes = [8, 32], strides = [1, 1]} : vector<64x32xf32> to vector<8x32xf32>
    %912 = vector.extract_strided_slice %904 {offsets = [0, 0], sizes = [8, 32], strides = [1, 1]} : vector<64x32xf32> to vector<8x32xf32>
    %913 = tpu.concatenate %905, %906, %907, %908, %909, %910, %911, %912 in 0 : vector<8x32xf32>, vector<8x32xf32>, vector<8x32xf32>, vector<8x32xf32>, vector<8x32xf32>, vector<8x32xf32>, vector<8x32xf32>, vector<8x32xf32> -> vector<64x32xf32>
    %914 = tpu.concatenate %903, %913 in 1 : vector<64x32xf32>, vector<64x32xf32> -> vector<64x64xf32>
    %c0_380 = arith.constant 0 : index
    %c0_381 = arith.constant 0 : index
    %915 = vector.load %arg41[%c0_380, %c0_381] : memref<1x64xf32, #tpu.memory_space<vmem>>, vector<1x64xf32>
    %916 = vector.broadcast %915 : vector<1x64xf32> to vector<64x64xf32>
    %917 = arith.addf %914, %916 : vector<64x64xf32>
    %c0_382 = arith.constant 0 : index
    %c0_383 = arith.constant 0 : index
    %918 = vector.load %arg52[%c0_382, %c0_383] : memref<64x64xf32, #tpu.memory_space<vmem>>, vector<64x64xf32>
    tpu.vector_store %arg52[%c0_382, %c0_383], %917 {strides = array<i32>} : memref<64x64xf32, #tpu.memory_space<vmem>>, vector<64x64xf32>,
    %c0_384 = arith.constant 0 : index
    %c0_385 = arith.constant 0 : index
    %919 = vector.load %arg42[%c0_384, %c0_385] : memref<64x64xf32, #tpu.memory_space<vmem>>, vector<64x64xf32>
    %cst_386 = arith.constant dense<0.000000e+00> : vector<64x64xf32>
    %920 = tpu.matmul %882, %919, %cst_386 {dimension_numbers = #tpu.dot_dimension_numbers<[1], [0], [0], [1], [0, 0, 1, 1], [], []>} : vector<64x64xf32>, vector<64x64xf32>, vector<64x64xf32> -> vector<64x64xf32>
    %921 = vector.extract_strided_slice %920 {offsets = [0, 0], sizes = [64, 32], strides = [1, 1]} : vector<64x64xf32> to vector<64x32xf32>
    %922 = vector.extract_strided_slice %920 {offsets = [0, 32], sizes = [64, 32], strides = [1, 1]} : vector<64x64xf32> to vector<64x32xf32>
    %923 = vector.extract_strided_slice %922 {offsets = [56, 0], sizes = [8, 32], strides = [1, 1]} : vector<64x32xf32> to vector<8x32xf32>
    %924 = vector.extract_strided_slice %922 {offsets = [48, 0], sizes = [8, 32], strides = [1, 1]} : vector<64x32xf32> to vector<8x32xf32>
    %925 = vector.extract_strided_slice %922 {offsets = [40, 0], sizes = [8, 32], strides = [1, 1]} : vector<64x32xf32> to vector<8x32xf32>
    %926 = vector.extract_strided_slice %922 {offsets = [32, 0], sizes = [8, 32], strides = [1, 1]} : vector<64x32xf32> to vector<8x32xf32>
    %927 = vector.extract_strided_slice %922 {offsets = [24, 0], sizes = [8, 32], strides = [1, 1]} : vector<64x32xf32> to vector<8x32xf32>
    %928 = vector.extract_strided_slice %922 {offsets = [16, 0], sizes = [8, 32], strides = [1, 1]} : vector<64x32xf32> to vector<8x32xf32>
    %929 = vector.extract_strided_slice %922 {offsets = [8, 0], sizes = [8, 32], strides = [1, 1]} : vector<64x32xf32> to vector<8x32xf32>
    %930 = vector.extract_strided_slice %922 {offsets = [0, 0], sizes = [8, 32], strides = [1, 1]} : vector<64x32xf32> to vector<8x32xf32>
    %931 = tpu.concatenate %923, %924, %925, %926, %927, %928, %929, %930 in 0 : vector<8x32xf32>, vector<8x32xf32>, vector<8x32xf32>, vector<8x32xf32>, vector<8x32xf32>, vector<8x32xf32>, vector<8x32xf32>, vector<8x32xf32> -> vector<64x32xf32>
    %932 = tpu.concatenate %921, %931 in 1 : vector<64x32xf32>, vector<64x32xf32> -> vector<64x64xf32>
    %c0_387 = arith.constant 0 : index
    %c0_388 = arith.constant 0 : index
    %933 = vector.load %arg44[%c0_387, %c0_388] : memref<1x64xf32, #tpu.memory_space<vmem>>, vector<1x64xf32>
    %934 = vector.broadcast %933 : vector<1x64xf32> to vector<64x64xf32>
    %935 = arith.addf %932, %934 : vector<64x64xf32>
    %c0_389 = arith.constant 0 : index
    %c0_390 = arith.constant 0 : index
    %936 = vector.load %arg53[%c0_389, %c0_390] : memref<64x64xf32, #tpu.memory_space<vmem>>, vector<64x64xf32>
    tpu.vector_store %arg53[%c0_389, %c0_390], %935 {strides = array<i32>} : memref<64x64xf32, #tpu.memory_space<vmem>>, vector<64x64xf32>,
    %c0_391 = arith.constant 0 : index
    %c0_392 = arith.constant 0 : index
    %937 = vector.load %arg37[%c0_391, %c0_392] : memref<64x64xf32, #tpu.memory_space<vmem>>, vector<64x64xf32>
    %c0_393 = arith.constant 0 : index
    %c0_394 = arith.constant 0 : index
    %938 = vector.load %arg40[%c0_393, %c0_394] : memref<64x64xf32, #tpu.memory_space<vmem>>, vector<64x64xf32>
    %c0_395 = arith.constant 0 : index
    %c0_396 = arith.constant 0 : index
    %939 = vector.load %arg43[%c0_395, %c0_396] : memref<64x64xf32, #tpu.memory_space<vmem>>, vector<64x64xf32>
    %c0_397 = arith.constant 0 : index
    %c0_398 = arith.constant 0 : index
    %940 = vector.load %arg45[%c0_397, %c0_398] : memref<1x64xf32, #tpu.memory_space<vmem>>, vector<1x64xf32>
    %941 = vector.shape_cast %940 : vector<1x64xf32> to vector<1x64xf32>
    %942 = vector.broadcast %941 : vector<1x64xf32> to vector<8x64xf32>
    %cst_399 = arith.constant 0.000000e+00 : f32
    %943 = vector.broadcast %cst_399 : f32 to vector<8x64xf32>
    %cst_400 = arith.constant dense<0.000000e+00> : vector<8x64xf32>
    %944 = tpu.matmul %943, %937, %cst_400 {dimension_numbers = #tpu.dot_dimension_numbers<[1], [0], [0], [1], [0, 0, 1, 1], [], []>} : vector<8x64xf32>, vector<64x64xf32>, vector<8x64xf32> -> vector<8x64xf32>
    %cst_401 = arith.constant dense<0.000000e+00> : vector<8x64xf32>
    %945 = tpu.matmul %943, %938, %cst_401 {dimension_numbers = #tpu.dot_dimension_numbers<[1], [0], [0], [1], [0, 0, 1, 1], [], []>} : vector<8x64xf32>, vector<64x64xf32>, vector<8x64xf32> -> vector<8x64xf32>
    %cst_402 = arith.constant dense<0.000000e+00> : vector<8x64xf32>
    %946 = tpu.matmul %943, %939, %cst_402 {dimension_numbers = #tpu.dot_dimension_numbers<[1], [0], [0], [1], [0, 0, 1, 1], [], []>} : vector<8x64xf32>, vector<64x64xf32>, vector<8x64xf32> -> vector<8x64xf32>
    %c0_403 = arith.constant 0 : index
    %c0_404 = arith.constant 0 : index
    %947 = vector.load %arg51[%c0_403, %c0_404] : memref<64x64xf32, #tpu.memory_space<vmem>>, vector<8x64xf32>
    %948 = arith.addf %947, %944 : vector<8x64xf32>
    %949 = arith.negf %948 : vector<8x64xf32>
    %950 = math.exp %949 : vector<8x64xf32>
    %cst_405 = arith.constant 1.000000e+00 : f32
    %951 = vector.broadcast %cst_405 : f32 to vector<8x64xf32>
    %952 = arith.addf %951, %950 : vector<8x64xf32>
    %953 = arith.divf %951, %952 : vector<8x64xf32>
    %c0_406 = arith.constant 0 : index
    %c0_407 = arith.constant 0 : index
    %954 = vector.load %arg52[%c0_406, %c0_407] : memref<64x64xf32, #tpu.memory_space<vmem>>, vector<8x64xf32>
    %955 = arith.addf %954, %945 : vector<8x64xf32>
    %956 = arith.negf %955 : vector<8x64xf32>
    %957 = math.exp %956 : vector<8x64xf32>
    %cst_408 = arith.constant 1.000000e+00 : f32
    %958 = vector.broadcast %cst_408 : f32 to vector<8x64xf32>
    %959 = arith.addf %958, %957 : vector<8x64xf32>
    %960 = arith.divf %958, %959 : vector<8x64xf32>
    %c0_409 = arith.constant 0 : index
    %c0_410 = arith.constant 0 : index
    %961 = vector.load %arg53[%c0_409, %c0_410] : memref<64x64xf32, #tpu.memory_space<vmem>>, vector<8x64xf32>
    %962 = arith.addf %946, %942 : vector<8x64xf32>
    %963 = arith.mulf %953, %962 : vector<8x64xf32>
    %964 = arith.addf %961, %963 : vector<8x64xf32>
    %965 = math.tanh %964 : vector<8x64xf32>
    %966 = arith.subf %943, %965 : vector<8x64xf32>
    %967 = arith.mulf %960, %966 : vector<8x64xf32>
    %968 = arith.addf %965, %967 : vector<8x64xf32>
    %cst_411 = arith.constant dense<0.000000e+00> : vector<8x64xf32>
    %969 = tpu.matmul %968, %937, %cst_411 {dimension_numbers = #tpu.dot_dimension_numbers<[1], [0], [0], [1], [0, 0, 1, 1], [], []>} : vector<8x64xf32>, vector<64x64xf32>, vector<8x64xf32> -> vector<8x64xf32>
    %cst_412 = arith.constant dense<0.000000e+00> : vector<8x64xf32>
    %970 = tpu.matmul %968, %938, %cst_412 {dimension_numbers = #tpu.dot_dimension_numbers<[1], [0], [0], [1], [0, 0, 1, 1], [], []>} : vector<8x64xf32>, vector<64x64xf32>, vector<8x64xf32> -> vector<8x64xf32>
    %cst_413 = arith.constant dense<0.000000e+00> : vector<8x64xf32>
    %971 = tpu.matmul %968, %939, %cst_413 {dimension_numbers = #tpu.dot_dimension_numbers<[1], [0], [0], [1], [0, 0, 1, 1], [], []>} : vector<8x64xf32>, vector<64x64xf32>, vector<8x64xf32> -> vector<8x64xf32>
    %c8_414 = arith.constant 8 : index
    %c0_415 = arith.constant 0 : index
    %972 = vector.load %arg51[%c8_414, %c0_415] : memref<64x64xf32, #tpu.memory_space<vmem>>, vector<8x64xf32>
    %973 = arith.addf %972, %969 : vector<8x64xf32>
    %974 = arith.negf %973 : vector<8x64xf32>
    %975 = math.exp %974 : vector<8x64xf32>
    %cst_416 = arith.constant 1.000000e+00 : f32
    %976 = vector.broadcast %cst_416 : f32 to vector<8x64xf32>
    %977 = arith.addf %976, %975 : vector<8x64xf32>
    %978 = arith.divf %976, %977 : vector<8x64xf32>
    %c8_417 = arith.constant 8 : index
    %c0_418 = arith.constant 0 : index
    %979 = vector.load %arg52[%c8_417, %c0_418] : memref<64x64xf32, #tpu.memory_space<vmem>>, vector<8x64xf32>
    %980 = arith.addf %979, %970 : vector<8x64xf32>
    %981 = arith.negf %980 : vector<8x64xf32>
    %982 = math.exp %981 : vector<8x64xf32>
    %cst_419 = arith.constant 1.000000e+00 : f32
    %983 = vector.broadcast %cst_419 : f32 to vector<8x64xf32>
    %984 = arith.addf %983, %982 : vector<8x64xf32>
    %985 = arith.divf %983, %984 : vector<8x64xf32>
    %c8_420 = arith.constant 8 : index
    %c0_421 = arith.constant 0 : index
    %986 = vector.load %arg53[%c8_420, %c0_421] : memref<64x64xf32, #tpu.memory_space<vmem>>, vector<8x64xf32>
    %987 = arith.addf %971, %942 : vector<8x64xf32>
    %988 = arith.mulf %978, %987 : vector<8x64xf32>
    %989 = arith.addf %986, %988 : vector<8x64xf32>
    %990 = math.tanh %989 : vector<8x64xf32>
    %991 = arith.subf %968, %990 : vector<8x64xf32>
    %992 = arith.mulf %985, %991 : vector<8x64xf32>
    %993 = arith.addf %990, %992 : vector<8x64xf32>
    %cst_422 = arith.constant dense<0.000000e+00> : vector<8x64xf32>
    %994 = tpu.matmul %993, %937, %cst_422 {dimension_numbers = #tpu.dot_dimension_numbers<[1], [0], [0], [1], [0, 0, 1, 1], [], []>} : vector<8x64xf32>, vector<64x64xf32>, vector<8x64xf32> -> vector<8x64xf32>
    %cst_423 = arith.constant dense<0.000000e+00> : vector<8x64xf32>
    %995 = tpu.matmul %993, %938, %cst_423 {dimension_numbers = #tpu.dot_dimension_numbers<[1], [0], [0], [1], [0, 0, 1, 1], [], []>} : vector<8x64xf32>, vector<64x64xf32>, vector<8x64xf32> -> vector<8x64xf32>
    %cst_424 = arith.constant dense<0.000000e+00> : vector<8x64xf32>
    %996 = tpu.matmul %993, %939, %cst_424 {dimension_numbers = #tpu.dot_dimension_numbers<[1], [0], [0], [1], [0, 0, 1, 1], [], []>} : vector<8x64xf32>, vector<64x64xf32>, vector<8x64xf32> -> vector<8x64xf32>
    %c16_425 = arith.constant 16 : index
    %c0_426 = arith.constant 0 : index
    %997 = vector.load %arg51[%c16_425, %c0_426] : memref<64x64xf32, #tpu.memory_space<vmem>>, vector<8x64xf32>
    %998 = arith.addf %997, %994 : vector<8x64xf32>
    %999 = arith.negf %998 : vector<8x64xf32>
    %1000 = math.exp %999 : vector<8x64xf32>
    %cst_427 = arith.constant 1.000000e+00 : f32
    %1001 = vector.broadcast %cst_427 : f32 to vector<8x64xf32>
    %1002 = arith.addf %1001, %1000 : vector<8x64xf32>
    %1003 = arith.divf %1001, %1002 : vector<8x64xf32>
    %c16_428 = arith.constant 16 : index
    %c0_429 = arith.constant 0 : index
    %1004 = vector.load %arg52[%c16_428, %c0_429] : memref<64x64xf32, #tpu.memory_space<vmem>>, vector<8x64xf32>
    %1005 = arith.addf %1004, %995 : vector<8x64xf32>
    %1006 = arith.negf %1005 : vector<8x64xf32>
    %1007 = math.exp %1006 : vector<8x64xf32>
    %cst_430 = arith.constant 1.000000e+00 : f32
    %1008 = vector.broadcast %cst_430 : f32 to vector<8x64xf32>
    %1009 = arith.addf %1008, %1007 : vector<8x64xf32>
    %1010 = arith.divf %1008, %1009 : vector<8x64xf32>
    %c16_431 = arith.constant 16 : index
    %c0_432 = arith.constant 0 : index
    %1011 = vector.load %arg53[%c16_431, %c0_432] : memref<64x64xf32, #tpu.memory_space<vmem>>, vector<8x64xf32>
    %1012 = arith.addf %996, %942 : vector<8x64xf32>
    %1013 = arith.mulf %1003, %1012 : vector<8x64xf32>
    %1014 = arith.addf %1011, %1013 : vector<8x64xf32>
    %1015 = math.tanh %1014 : vector<8x64xf32>
    %1016 = arith.subf %993, %1015 : vector<8x64xf32>
    %1017 = arith.mulf %1010, %1016 : vector<8x64xf32>
    %1018 = arith.addf %1015, %1017 : vector<8x64xf32>
    %cst_433 = arith.constant dense<0.000000e+00> : vector<8x64xf32>
    %1019 = tpu.matmul %1018, %937, %cst_433 {dimension_numbers = #tpu.dot_dimension_numbers<[1], [0], [0], [1], [0, 0, 1, 1], [], []>} : vector<8x64xf32>, vector<64x64xf32>, vector<8x64xf32> -> vector<8x64xf32>
    %cst_434 = arith.constant dense<0.000000e+00> : vector<8x64xf32>
    %1020 = tpu.matmul %1018, %938, %cst_434 {dimension_numbers = #tpu.dot_dimension_numbers<[1], [0], [0], [1], [0, 0, 1, 1], [], []>} : vector<8x64xf32>, vector<64x64xf32>, vector<8x64xf32> -> vector<8x64xf32>
    %cst_435 = arith.constant dense<0.000000e+00> : vector<8x64xf32>
    %1021 = tpu.matmul %1018, %939, %cst_435 {dimension_numbers = #tpu.dot_dimension_numbers<[1], [0], [0], [1], [0, 0, 1, 1], [], []>} : vector<8x64xf32>, vector<64x64xf32>, vector<8x64xf32> -> vector<8x64xf32>
    %c24_436 = arith.constant 24 : index
    %c0_437 = arith.constant 0 : index
    %1022 = vector.load %arg51[%c24_436, %c0_437] : memref<64x64xf32, #tpu.memory_space<vmem>>, vector<8x64xf32>
    %1023 = arith.addf %1022, %1019 : vector<8x64xf32>
    %1024 = arith.negf %1023 : vector<8x64xf32>
    %1025 = math.exp %1024 : vector<8x64xf32>
    %cst_438 = arith.constant 1.000000e+00 : f32
    %1026 = vector.broadcast %cst_438 : f32 to vector<8x64xf32>
    %1027 = arith.addf %1026, %1025 : vector<8x64xf32>
    %1028 = arith.divf %1026, %1027 : vector<8x64xf32>
    %c24_439 = arith.constant 24 : index
    %c0_440 = arith.constant 0 : index
    %1029 = vector.load %arg52[%c24_439, %c0_440] : memref<64x64xf32, #tpu.memory_space<vmem>>, vector<8x64xf32>
    %1030 = arith.addf %1029, %1020 : vector<8x64xf32>
    %1031 = arith.negf %1030 : vector<8x64xf32>
    %1032 = math.exp %1031 : vector<8x64xf32>
    %cst_441 = arith.constant 1.000000e+00 : f32
    %1033 = vector.broadcast %cst_441 : f32 to vector<8x64xf32>
    %1034 = arith.addf %1033, %1032 : vector<8x64xf32>
    %1035 = arith.divf %1033, %1034 : vector<8x64xf32>
    %c24_442 = arith.constant 24 : index
    %c0_443 = arith.constant 0 : index
    %1036 = vector.load %arg53[%c24_442, %c0_443] : memref<64x64xf32, #tpu.memory_space<vmem>>, vector<8x64xf32>
    %1037 = arith.addf %1021, %942 : vector<8x64xf32>
    %1038 = arith.mulf %1028, %1037 : vector<8x64xf32>
    %1039 = arith.addf %1036, %1038 : vector<8x64xf32>
    %1040 = math.tanh %1039 : vector<8x64xf32>
    %1041 = arith.subf %1018, %1040 : vector<8x64xf32>
    %1042 = arith.mulf %1035, %1041 : vector<8x64xf32>
    %1043 = arith.addf %1040, %1042 : vector<8x64xf32>
    %cst_444 = arith.constant dense<0.000000e+00> : vector<8x64xf32>
    %1044 = tpu.matmul %1043, %937, %cst_444 {dimension_numbers = #tpu.dot_dimension_numbers<[1], [0], [0], [1], [0, 0, 1, 1], [], []>} : vector<8x64xf32>, vector<64x64xf32>, vector<8x64xf32> -> vector<8x64xf32>
    %cst_445 = arith.constant dense<0.000000e+00> : vector<8x64xf32>
    %1045 = tpu.matmul %1043, %938, %cst_445 {dimension_numbers = #tpu.dot_dimension_numbers<[1], [0], [0], [1], [0, 0, 1, 1], [], []>} : vector<8x64xf32>, vector<64x64xf32>, vector<8x64xf32> -> vector<8x64xf32>
    %cst_446 = arith.constant dense<0.000000e+00> : vector<8x64xf32>
    %1046 = tpu.matmul %1043, %939, %cst_446 {dimension_numbers = #tpu.dot_dimension_numbers<[1], [0], [0], [1], [0, 0, 1, 1], [], []>} : vector<8x64xf32>, vector<64x64xf32>, vector<8x64xf32> -> vector<8x64xf32>
    %c32_447 = arith.constant 32 : index
    %c0_448 = arith.constant 0 : index
    %1047 = vector.load %arg51[%c32_447, %c0_448] : memref<64x64xf32, #tpu.memory_space<vmem>>, vector<8x64xf32>
    %1048 = arith.addf %1047, %1044 : vector<8x64xf32>
    %1049 = arith.negf %1048 : vector<8x64xf32>
    %1050 = math.exp %1049 : vector<8x64xf32>
    %cst_449 = arith.constant 1.000000e+00 : f32
    %1051 = vector.broadcast %cst_449 : f32 to vector<8x64xf32>
    %1052 = arith.addf %1051, %1050 : vector<8x64xf32>
    %1053 = arith.divf %1051, %1052 : vector<8x64xf32>
    %c32_450 = arith.constant 32 : index
    %c0_451 = arith.constant 0 : index
    %1054 = vector.load %arg52[%c32_450, %c0_451] : memref<64x64xf32, #tpu.memory_space<vmem>>, vector<8x64xf32>
    %1055 = arith.addf %1054, %1045 : vector<8x64xf32>
    %1056 = arith.negf %1055 : vector<8x64xf32>
    %1057 = math.exp %1056 : vector<8x64xf32>
    %cst_452 = arith.constant 1.000000e+00 : f32
    %1058 = vector.broadcast %cst_452 : f32 to vector<8x64xf32>
    %1059 = arith.addf %1058, %1057 : vector<8x64xf32>
    %1060 = arith.divf %1058, %1059 : vector<8x64xf32>
    %c32_453 = arith.constant 32 : index
    %c0_454 = arith.constant 0 : index
    %1061 = vector.load %arg53[%c32_453, %c0_454] : memref<64x64xf32, #tpu.memory_space<vmem>>, vector<8x64xf32>
    %1062 = arith.addf %1046, %942 : vector<8x64xf32>
    %1063 = arith.mulf %1053, %1062 : vector<8x64xf32>
    %1064 = arith.addf %1061, %1063 : vector<8x64xf32>
    %1065 = math.tanh %1064 : vector<8x64xf32>
    %1066 = arith.subf %1043, %1065 : vector<8x64xf32>
    %1067 = arith.mulf %1060, %1066 : vector<8x64xf32>
    %1068 = arith.addf %1065, %1067 : vector<8x64xf32>
    %cst_455 = arith.constant dense<0.000000e+00> : vector<8x64xf32>
    %1069 = tpu.matmul %1068, %937, %cst_455 {dimension_numbers = #tpu.dot_dimension_numbers<[1], [0], [0], [1], [0, 0, 1, 1], [], []>} : vector<8x64xf32>, vector<64x64xf32>, vector<8x64xf32> -> vector<8x64xf32>
    %cst_456 = arith.constant dense<0.000000e+00> : vector<8x64xf32>
    %1070 = tpu.matmul %1068, %938, %cst_456 {dimension_numbers = #tpu.dot_dimension_numbers<[1], [0], [0], [1], [0, 0, 1, 1], [], []>} : vector<8x64xf32>, vector<64x64xf32>, vector<8x64xf32> -> vector<8x64xf32>
    %cst_457 = arith.constant dense<0.000000e+00> : vector<8x64xf32>
    %1071 = tpu.matmul %1068, %939, %cst_457 {dimension_numbers = #tpu.dot_dimension_numbers<[1], [0], [0], [1], [0, 0, 1, 1], [], []>} : vector<8x64xf32>, vector<64x64xf32>, vector<8x64xf32> -> vector<8x64xf32>
    %c40_458 = arith.constant 40 : index
    %c0_459 = arith.constant 0 : index
    %1072 = vector.load %arg51[%c40_458, %c0_459] : memref<64x64xf32, #tpu.memory_space<vmem>>, vector<8x64xf32>
    %1073 = arith.addf %1072, %1069 : vector<8x64xf32>
    %1074 = arith.negf %1073 : vector<8x64xf32>
    %1075 = math.exp %1074 : vector<8x64xf32>
    %cst_460 = arith.constant 1.000000e+00 : f32
    %1076 = vector.broadcast %cst_460 : f32 to vector<8x64xf32>
    %1077 = arith.addf %1076, %1075 : vector<8x64xf32>
    %1078 = arith.divf %1076, %1077 : vector<8x64xf32>
    %c40_461 = arith.constant 40 : index
    %c0_462 = arith.constant 0 : index
    %1079 = vector.load %arg52[%c40_461, %c0_462] : memref<64x64xf32, #tpu.memory_space<vmem>>, vector<8x64xf32>
    %1080 = arith.addf %1079, %1070 : vector<8x64xf32>
    %1081 = arith.negf %1080 : vector<8x64xf32>
    %1082 = math.exp %1081 : vector<8x64xf32>
    %cst_463 = arith.constant 1.000000e+00 : f32
    %1083 = vector.broadcast %cst_463 : f32 to vector<8x64xf32>
    %1084 = arith.addf %1083, %1082 : vector<8x64xf32>
    %1085 = arith.divf %1083, %1084 : vector<8x64xf32>
    %c40_464 = arith.constant 40 : index
    %c0_465 = arith.constant 0 : index
    %1086 = vector.load %arg53[%c40_464, %c0_465] : memref<64x64xf32, #tpu.memory_space<vmem>>, vector<8x64xf32>
    %1087 = arith.addf %1071, %942 : vector<8x64xf32>
    %1088 = arith.mulf %1078, %1087 : vector<8x64xf32>
    %1089 = arith.addf %1086, %1088 : vector<8x64xf32>
    %1090 = math.tanh %1089 : vector<8x64xf32>
    %1091 = arith.subf %1068, %1090 : vector<8x64xf32>
    %1092 = arith.mulf %1085, %1091 : vector<8x64xf32>
    %1093 = arith.addf %1090, %1092 : vector<8x64xf32>
    %cst_466 = arith.constant dense<0.000000e+00> : vector<8x64xf32>
    %1094 = tpu.matmul %1093, %937, %cst_466 {dimension_numbers = #tpu.dot_dimension_numbers<[1], [0], [0], [1], [0, 0, 1, 1], [], []>} : vector<8x64xf32>, vector<64x64xf32>, vector<8x64xf32> -> vector<8x64xf32>
    %cst_467 = arith.constant dense<0.000000e+00> : vector<8x64xf32>
    %1095 = tpu.matmul %1093, %938, %cst_467 {dimension_numbers = #tpu.dot_dimension_numbers<[1], [0], [0], [1], [0, 0, 1, 1], [], []>} : vector<8x64xf32>, vector<64x64xf32>, vector<8x64xf32> -> vector<8x64xf32>
    %cst_468 = arith.constant dense<0.000000e+00> : vector<8x64xf32>
    %1096 = tpu.matmul %1093, %939, %cst_468 {dimension_numbers = #tpu.dot_dimension_numbers<[1], [0], [0], [1], [0, 0, 1, 1], [], []>} : vector<8x64xf32>, vector<64x64xf32>, vector<8x64xf32> -> vector<8x64xf32>
    %c48_469 = arith.constant 48 : index
    %c0_470 = arith.constant 0 : index
    %1097 = vector.load %arg51[%c48_469, %c0_470] : memref<64x64xf32, #tpu.memory_space<vmem>>, vector<8x64xf32>
    %1098 = arith.addf %1097, %1094 : vector<8x64xf32>
    %1099 = arith.negf %1098 : vector<8x64xf32>
    %1100 = math.exp %1099 : vector<8x64xf32>
    %cst_471 = arith.constant 1.000000e+00 : f32
    %1101 = vector.broadcast %cst_471 : f32 to vector<8x64xf32>
    %1102 = arith.addf %1101, %1100 : vector<8x64xf32>
    %1103 = arith.divf %1101, %1102 : vector<8x64xf32>
    %c48_472 = arith.constant 48 : index
    %c0_473 = arith.constant 0 : index
    %1104 = vector.load %arg52[%c48_472, %c0_473] : memref<64x64xf32, #tpu.memory_space<vmem>>, vector<8x64xf32>
    %1105 = arith.addf %1104, %1095 : vector<8x64xf32>
    %1106 = arith.negf %1105 : vector<8x64xf32>
    %1107 = math.exp %1106 : vector<8x64xf32>
    %cst_474 = arith.constant 1.000000e+00 : f32
    %1108 = vector.broadcast %cst_474 : f32 to vector<8x64xf32>
    %1109 = arith.addf %1108, %1107 : vector<8x64xf32>
    %1110 = arith.divf %1108, %1109 : vector<8x64xf32>
    %c48_475 = arith.constant 48 : index
    %c0_476 = arith.constant 0 : index
    %1111 = vector.load %arg53[%c48_475, %c0_476] : memref<64x64xf32, #tpu.memory_space<vmem>>, vector<8x64xf32>
    %1112 = arith.addf %1096, %942 : vector<8x64xf32>
    %1113 = arith.mulf %1103, %1112 : vector<8x64xf32>
    %1114 = arith.addf %1111, %1113 : vector<8x64xf32>
    %1115 = math.tanh %1114 : vector<8x64xf32>
    %1116 = arith.subf %1093, %1115 : vector<8x64xf32>
    %1117 = arith.mulf %1110, %1116 : vector<8x64xf32>
    %1118 = arith.addf %1115, %1117 : vector<8x64xf32>
    %cst_477 = arith.constant dense<0.000000e+00> : vector<8x64xf32>
    %1119 = tpu.matmul %1118, %937, %cst_477 {dimension_numbers = #tpu.dot_dimension_numbers<[1], [0], [0], [1], [0, 0, 1, 1], [], []>} : vector<8x64xf32>, vector<64x64xf32>, vector<8x64xf32> -> vector<8x64xf32>
    %cst_478 = arith.constant dense<0.000000e+00> : vector<8x64xf32>
    %1120 = tpu.matmul %1118, %938, %cst_478 {dimension_numbers = #tpu.dot_dimension_numbers<[1], [0], [0], [1], [0, 0, 1, 1], [], []>} : vector<8x64xf32>, vector<64x64xf32>, vector<8x64xf32> -> vector<8x64xf32>
    %cst_479 = arith.constant dense<0.000000e+00> : vector<8x64xf32>
    %1121 = tpu.matmul %1118, %939, %cst_479 {dimension_numbers = #tpu.dot_dimension_numbers<[1], [0], [0], [1], [0, 0, 1, 1], [], []>} : vector<8x64xf32>, vector<64x64xf32>, vector<8x64xf32> -> vector<8x64xf32>
    %c56_480 = arith.constant 56 : index
    %c0_481 = arith.constant 0 : index
    %1122 = vector.load %arg51[%c56_480, %c0_481] : memref<64x64xf32, #tpu.memory_space<vmem>>, vector<8x64xf32>
    %1123 = arith.addf %1122, %1119 : vector<8x64xf32>
    %1124 = arith.negf %1123 : vector<8x64xf32>
    %1125 = math.exp %1124 : vector<8x64xf32>
    %cst_482 = arith.constant 1.000000e+00 : f32
    %1126 = vector.broadcast %cst_482 : f32 to vector<8x64xf32>
    %1127 = arith.addf %1126, %1125 : vector<8x64xf32>
    %1128 = arith.divf %1126, %1127 : vector<8x64xf32>
    %c56_483 = arith.constant 56 : index
    %c0_484 = arith.constant 0 : index
    %1129 = vector.load %arg52[%c56_483, %c0_484] : memref<64x64xf32, #tpu.memory_space<vmem>>, vector<8x64xf32>
    %1130 = arith.addf %1129, %1120 : vector<8x64xf32>
    %1131 = arith.negf %1130 : vector<8x64xf32>
    %1132 = math.exp %1131 : vector<8x64xf32>
    %cst_485 = arith.constant 1.000000e+00 : f32
    %1133 = vector.broadcast %cst_485 : f32 to vector<8x64xf32>
    %1134 = arith.addf %1133, %1132 : vector<8x64xf32>
    %1135 = arith.divf %1133, %1134 : vector<8x64xf32>
    %c56_486 = arith.constant 56 : index
    %c0_487 = arith.constant 0 : index
    %1136 = vector.load %arg53[%c56_486, %c0_487] : memref<64x64xf32, #tpu.memory_space<vmem>>, vector<8x64xf32>
    %1137 = arith.addf %1121, %942 : vector<8x64xf32>
    %1138 = arith.mulf %1128, %1137 : vector<8x64xf32>
    %1139 = arith.addf %1136, %1138 : vector<8x64xf32>
    %1140 = math.tanh %1139 : vector<8x64xf32>
    %1141 = arith.subf %1118, %1140 : vector<8x64xf32>
    %1142 = arith.mulf %1135, %1141 : vector<8x64xf32>
    %1143 = arith.addf %1140, %1142 : vector<8x64xf32>
    %1144 = vector.extract_strided_slice %1143 {offsets = [0, 0], sizes = [8, 32], strides = [1, 1]} : vector<8x64xf32> to vector<8x32xf32>
    %1145 = vector.extract_strided_slice %968 {offsets = [0, 32], sizes = [8, 32], strides = [1, 1]} : vector<8x64xf32> to vector<8x32xf32>
    %1146 = tpu.concatenate %1144, %1145 in 1 : vector<8x32xf32>, vector<8x32xf32> -> vector<8x64xf32>
    %c0_488 = arith.constant 0 : index
    %c0_489 = arith.constant 0 : index
    %1147 = vector.load %arg46[%c0_488, %c0_489] : memref<64x32xf32, #tpu.memory_space<vmem>>, vector<64x32xf32>
    %cst_490 = arith.constant dense<0.000000e+00> : vector<8x32xf32>
    %1148 = tpu.matmul %1146, %1147, %cst_490 {dimension_numbers = #tpu.dot_dimension_numbers<[1], [0], [0], [1], [0, 0, 1, 1], [], []>} : vector<8x64xf32>, vector<64x32xf32>, vector<8x32xf32> -> vector<8x32xf32>
    %c0_491 = arith.constant 0 : index
    %c0_492 = arith.constant 0 : index
    %1149 = vector.load %arg47[%c0_491, %c0_492] : memref<1x32xf32, #tpu.memory_space<vmem>>, vector<1x32xf32>
    %1150 = vector.broadcast %1149 : vector<1x32xf32> to vector<8x32xf32>
    %1151 = arith.addf %1148, %1150 : vector<8x32xf32>
    %cst_493 = arith.constant 0.000000e+00 : f32
    %1152 = vector.broadcast %cst_493 : f32 to vector<8x32xf32>
    %1153 = arith.maximumf %1151, %1152 : vector<8x32xf32>
    %c0_494 = arith.constant 0 : index
    %c0_495 = arith.constant 0 : index
    %1154 = vector.load %arg48[%c0_494, %c0_495] : memref<32x16xf32, #tpu.memory_space<vmem>>, vector<32x16xf32>
    %cst_496 = arith.constant dense<0.000000e+00> : vector<8x16xf32>
    %1155 = tpu.matmul %1153, %1154, %cst_496 {dimension_numbers = #tpu.dot_dimension_numbers<[1], [0], [0], [1], [0, 0, 1, 1], [], []>} : vector<8x32xf32>, vector<32x16xf32>, vector<8x16xf32> -> vector<8x16xf32>
    %c0_497 = arith.constant 0 : index
    %c0_498 = arith.constant 0 : index
    %1156 = vector.load %arg49[%c0_497, %c0_498] : memref<1x16xf32, #tpu.memory_space<vmem>>, vector<1x16xf32>
    %1157 = vector.broadcast %1156 : vector<1x16xf32> to vector<8x16xf32>
    %1158 = arith.addf %1155, %1157 : vector<8x16xf32>
    %c0_499 = arith.constant 0 : index
    %c0_500 = arith.constant 0 : index
    %1159 = vector.load %arg50[%c0_499, %c0_500] : memref<8x16xf32, #tpu.memory_space<vmem>>, vector<8x16xf32>
    tpu.vector_store %arg50[%c0_499, %c0_500], %1158 {strides = array<i32>} : memref<8x16xf32, #tpu.memory_space<vmem>>, vector<8x16xf32>,
    return
  }
}

</mosaic_0001>

<llo_original>
// kernel: vq_encoder_forward.1
$region0: #{vq_encoder_forward.1}
  #allocation0 [shape = 'u32[]', space=smem, size = 0x4, offset = 0x4, fixed_abs, tag = 'smem constant byte address 0x4 - core index']
  #allocation1 [shape = 'u32[72,128]{1,0:T(1,128)}', space=vmem, size = 0x9000, scoped, tag = 'internal scratch']
  #allocation2 [shape = 'f32[64,64]{1,0:T(8,128)}', space=vmem, size = 0x8000, scoped, tag = 'scratch operand']
  #allocation3 [shape = 'f32[64,64]{1,0:T(8,128)}', space=vmem, size = 0x8000, scoped, tag = 'scratch operand']
  #allocation4 [shape = 'f32[64,64]{1,0:T(8,128)}', space=vmem, size = 0x8000, scoped, tag = 'scratch operand']
  %s0 = inlined_call_operand.smem [shape: u32[51], index: -1, kind: input, shape index: {}]
  %s1 = sld [smem:[%s0]]
  %s2 = scalar_lea.smem %s0, 1
  %s3 = sld [smem:[%s2]]
  %s4 = scalar_lea.smem %s0, 2
  %s5 = sld [smem:[%s4]]
  %s6 = scalar_lea.smem %s0, 3
  %s7 = sld [smem:[%s6]]
  %s8 = scalar_lea.smem %s0, 4
  %s9 = sld [smem:[%s8]]
  %s10 = scalar_lea.smem %s0, 5
  %s11 = sld [smem:[%s10]]
  %s12 = scalar_lea.smem %s0, 6
  %s13 = sld [smem:[%s12]]
  %s14 = scalar_lea.smem %s0, 7
  %s15 = sld [smem:[%s14]]
  %s16 = scalar_lea.smem %s0, 8
  %s17 = sld [smem:[%s16]]
  %s18 = scalar_lea.smem %s0, 9
  %s19 = sld [smem:[%s18]]
  %s20 = scalar_lea.smem %s0, 10
  %s21 = sld [smem:[%s20]]
  %s22 = scalar_lea.smem %s0, 11
  %s23 = sld [smem:[%s22]]
  %s24 = scalar_lea.smem %s0, 12
  %s25 = sld [smem:[%s24]]
  %s26 = scalar_lea.smem %s0, 13
  %s27 = sld [smem:[%s26]]
  %s28 = scalar_lea.smem %s0, 14
  %s29 = sld [smem:[%s28]]
  %s30 = scalar_lea.smem %s0, 15
  %s31 = sld [smem:[%s30]]
  %s32 = scalar_lea.smem %s0, 16
  %s33 = sld [smem:[%s32]]
  %s34 = scalar_lea.smem %s0, 17
  %s35 = sld [smem:[%s34]]
  %s36 = scalar_lea.smem %s0, 18
  %s37 = sld [smem:[%s36]]
  %s38 = scalar_lea.smem %s0, 19
  %s39 = sld [smem:[%s38]]
  %s40 = scalar_lea.smem %s0, 20
  %s41 = sld [smem:[%s40]]
  %s42 = scalar_lea.smem %s0, 21
  %s43 = sld [smem:[%s42]]
  %s44 = scalar_lea.smem %s0, 22
  %s45 = sld [smem:[%s44]]
  %s46 = scalar_lea.smem %s0, 23
  %s47 = sld [smem:[%s46]]
  %s48 = scalar_lea.smem %s0, 24
  %s49 = sld [smem:[%s48]]
  %s50 = scalar_lea.smem %s0, 25
  %s51 = sld [smem:[%s50]]
  %s52 = scalar_lea.smem %s0, 26
  %s53 = sld [smem:[%s52]]
  %s54 = scalar_lea.smem %s0, 27
  %s55 = sld [smem:[%s54]]
  %s56 = scalar_lea.smem %s0, 28
  %s57 = sld [smem:[%s56]]
  %s58 = scalar_lea.smem %s0, 29
  %s59 = sld [smem:[%s58]]
  %s60 = scalar_lea.smem %s0, 30
  %s61 = sld [smem:[%s60]]
  %s62 = scalar_lea.smem %s0, 31
  %s63 = sld [smem:[%s62]]
  %s64 = scalar_lea.smem %s0, 32
  %s65 = sld [smem:[%s64]]
  %s66 = scalar_lea.smem %s0, 33
  %s67 = sld [smem:[%s66]]
  %s68 = scalar_lea.smem %s0, 34
  %s69 = sld [smem:[%s68]]
  %s70 = scalar_lea.smem %s0, 35
  %s71 = sld [smem:[%s70]]
  %s72 = scalar_lea.smem %s0, 36
  %s73 = sld [smem:[%s72]]
  %s74 = scalar_lea.smem %s0, 37
  %s75 = sld [smem:[%s74]]
  %s76 = scalar_lea.smem %s0, 38
  %s77 = sld [smem:[%s76]]
  %s78 = scalar_lea.smem %s0, 39
  %s79 = sld [smem:[%s78]]
  %s80 = scalar_lea.smem %s0, 40
  %s81 = sld [smem:[%s80]]
  %s82 = scalar_lea.smem %s0, 41
  %s83 = sld [smem:[%s82]]
  %s84 = scalar_lea.smem %s0, 42
  %s85 = sld [smem:[%s84]]
  %s86 = scalar_lea.smem %s0, 43
  %s87 = sld [smem:[%s86]]
  %s88 = scalar_lea.smem %s0, 44
  %s89 = sld [smem:[%s88]]
  %s90 = scalar_lea.smem %s0, 45
  %s91 = sld [smem:[%s90]]
  %s92 = scalar_lea.smem %s0, 46
  %s93 = sld [smem:[%s92]]
  %s94 = scalar_lea.smem %s0, 47
  %s95 = sld [smem:[%s94]]
  %s96 = scalar_lea.smem %s0, 48
  %s97 = sld [smem:[%s96]]
  %s98 = scalar_lea.smem %s0, 49
  %s99 = sld [smem:[%s98]]
  %s100 = scalar_lea.smem %s0, 50
  %s101 = sld [smem:[%s100]]
  %s102 = sld [smem:[#allocation0]]
  $region210: #{vq_encoder_forward.1} parent=0
    _
  %s104 = ssub.s32 1, %s102
  %s105 = scalar_select 0, %s104, %s102
  // Predicated region
  $region2: #{vq_encoder_forward.1} parent=0 // pred_check
    _
  $region3: #{vq_encoder_forward.1} parent=0 // pred_check_branch
    %107 = sbr.rel (0) target = $region5
  $region4: #{vq_encoder_forward.1} parent=0 // pred_region
    _
  $region5: #{vq_encoder_forward.1} parent=0 // pred_fallthru
    _
  // Predicated region
  $region6: #{vq_encoder_forward.1} parent=0 // pred_check
    _
  $region7: #{vq_encoder_forward.1} parent=0 // pred_check_branch
    %109 = sbr.rel (0) target = $region9
  $region8: #{vq_encoder_forward.1} parent=0 // pred_region
    _
  $region9: #{vq_encoder_forward.1} parent=0 // pred_fallthru
    _
  // Predicated region
  $region10: #{vq_encoder_forward.1} parent=0 // pred_check
    _
  $region11: #{vq_encoder_forward.1} parent=0 // pred_check_branch
    %111 = sbr.rel (0) target = $region13
  $region12: #{vq_encoder_forward.1} parent=0 // pred_region
    _
  $region13: #{vq_encoder_forward.1} parent=0 // pred_fallthru
    _
  // Predicated region
  $region14: #{vq_encoder_forward.1} parent=0 // pred_check
    _
  $region15: #{vq_encoder_forward.1} parent=0 // pred_check_branch
    %113 = sbr.rel (0) target = $region17
  $region16: #{vq_encoder_forward.1} parent=0 // pred_region
    _
  $region17: #{vq_encoder_forward.1} parent=0 // pred_fallthru
    _
  // Predicated region
  $region18: #{vq_encoder_forward.1} parent=0 // pred_check
    _
  $region19: #{vq_encoder_forward.1} parent=0 // pred_check_branch
    %115 = sbr.rel (0) target = $region21
  $region20: #{vq_encoder_forward.1} parent=0 // pred_region
    _
  $region21: #{vq_encoder_forward.1} parent=0 // pred_fallthru
    _
  // Predicated region
  $region22: #{vq_encoder_forward.1} parent=0 // pred_check
    _
  $region23: #{vq_encoder_forward.1} parent=0 // pred_check_branch
    %117 = sbr.rel (0) target = $region25
  $region24: #{vq_encoder_forward.1} parent=0 // pred_region
    _
  $region25: #{vq_encoder_forward.1} parent=0 // pred_fallthru
    _
  // Predicated region
  $region26: #{vq_encoder_forward.1} parent=0 // pred_check
    _
  $region27: #{vq_encoder_forward.1} parent=0 // pred_check_branch
    %119 = sbr.rel (0) target = $region29
  $region28: #{vq_encoder_forward.1} parent=0 // pred_region
    _
  $region29: #{vq_encoder_forward.1} parent=0 // pred_fallthru
    _
  // Predicated region
  $region30: #{vq_encoder_forward.1} parent=0 // pred_check
    _
  $region31: #{vq_encoder_forward.1} parent=0 // pred_check_branch
    %121 = sbr.rel (0) target = $region33
  $region32: #{vq_encoder_forward.1} parent=0 // pred_region
    _
  $region33: #{vq_encoder_forward.1} parent=0 // pred_fallthru
    _
  // Predicated region
  $region34: #{vq_encoder_forward.1} parent=0 // pred_check
    _
  $region35: #{vq_encoder_forward.1} parent=0 // pred_check_branch
    %123 = sbr.rel (0) target = $region37
  $region36: #{vq_encoder_forward.1} parent=0 // pred_region
    _
  $region37: #{vq_encoder_forward.1} parent=0 // pred_fallthru
    _
  // Predicated region
  $region38: #{vq_encoder_forward.1} parent=0 // pred_check
    _
  $region39: #{vq_encoder_forward.1} parent=0 // pred_check_branch
    %125 = sbr.rel (0) target = $region41
  $region40: #{vq_encoder_forward.1} parent=0 // pred_region
    _
  $region41: #{vq_encoder_forward.1} parent=0 // pred_fallthru
    _
  // Predicated region
  $region42: #{vq_encoder_forward.1} parent=0 // pred_check
    _
  $region43: #{vq_encoder_forward.1} parent=0 // pred_check_branch
    %127 = sbr.rel (0) target = $region45
  $region44: #{vq_encoder_forward.1} parent=0 // pred_region
    _
  $region45: #{vq_encoder_forward.1} parent=0 // pred_fallthru
    _
  // Predicated region
  $region46: #{vq_encoder_forward.1} parent=0 // pred_check
    _
  $region47: #{vq_encoder_forward.1} parent=0 // pred_check_branch
    %129 = sbr.rel (0) target = $region49
  $region48: #{vq_encoder_forward.1} parent=0 // pred_region
    _
  $region49: #{vq_encoder_forward.1} parent=0 // pred_fallthru
    _
  // Predicated region
  $region50: #{vq_encoder_forward.1} parent=0 // pred_check
    _
  $region51: #{vq_encoder_forward.1} parent=0 // pred_check_branch
    %131 = sbr.rel (0) target = $region53
  $region52: #{vq_encoder_forward.1} parent=0 // pred_region
    _
  $region53: #{vq_encoder_forward.1} parent=0 // pred_fallthru
    _
  // Predicated region
  $region54: #{vq_encoder_forward.1} parent=0 // pred_check
    _
  $region55: #{vq_encoder_forward.1} parent=0 // pred_check_branch
    %133 = sbr.rel (0) target = $region57
  $region56: #{vq_encoder_forward.1} parent=0 // pred_region
    _
  $region57: #{vq_encoder_forward.1} parent=0 // pred_fallthru
    _
  // Predicated region
  $region58: #{vq_encoder_forward.1} parent=0 // pred_check
    _
  $region59: #{vq_encoder_forward.1} parent=0 // pred_check_branch
    %135 = sbr.rel (0) target = $region61
  $region60: #{vq_encoder_forward.1} parent=0 // pred_region
    _
  $region61: #{vq_encoder_forward.1} parent=0 // pred_fallthru
    _
  // Predicated region
  $region62: #{vq_encoder_forward.1} parent=0 // pred_check
    _
  $region63: #{vq_encoder_forward.1} parent=0 // pred_check_branch
    %137 = sbr.rel (0) target = $region65
  $region64: #{vq_encoder_forward.1} parent=0 // pred_region
    _
  $region65: #{vq_encoder_forward.1} parent=0 // pred_fallthru
    _
  // Predicated region
  $region66: #{vq_encoder_forward.1} parent=0 // pred_check
    _
  $region67: #{vq_encoder_forward.1} parent=0 // pred_check_branch
    %139 = sbr.rel (0) target = $region69
  $region68: #{vq_encoder_forward.1} parent=0 // pred_region
    _
  $region69: #{vq_encoder_forward.1} parent=0 // pred_fallthru
    _
  // Predicated region
  $region70: #{vq_encoder_forward.1} parent=0 // pred_check
    _
  $region71: #{vq_encoder_forward.1} parent=0 // pred_check_branch
    %141 = sbr.rel (0) target = $region73
  $region72: #{vq_encoder_forward.1} parent=0 // pred_region
    _
  $region73: #{vq_encoder_forward.1} parent=0 // pred_fallthru
    _
  // Predicated region
  $region74: #{vq_encoder_forward.1} parent=0 // pred_check
    _
  $region75: #{vq_encoder_forward.1} parent=0 // pred_check_branch
    %143 = sbr.rel (0) target = $region77
  $region76: #{vq_encoder_forward.1} parent=0 // pred_region
    _
  $region77: #{vq_encoder_forward.1} parent=0 // pred_fallthru
    _
  // Predicated region
  $region78: #{vq_encoder_forward.1} parent=0 // pred_check
    _
  $region79: #{vq_encoder_forward.1} parent=0 // pred_check_branch
    %145 = sbr.rel (0) target = $region81
  $region80: #{vq_encoder_forward.1} parent=0 // pred_region
    _
  $region81: #{vq_encoder_forward.1} parent=0 // pred_fallthru
    _
  // Predicated region
  $region82: #{vq_encoder_forward.1} parent=0 // pred_check
    _
  $region83: #{vq_encoder_forward.1} parent=0 // pred_check_branch
    %147 = sbr.rel (0) target = $region85
  $region84: #{vq_encoder_forward.1} parent=0 // pred_region
    _
  $region85: #{vq_encoder_forward.1} parent=0 // pred_fallthru
    _
  // Predicated region
  $region86: #{vq_encoder_forward.1} parent=0 // pred_check
    _
  $region87: #{vq_encoder_forward.1} parent=0 // pred_check_branch
    %149 = sbr.rel (0) target = $region89
  $region88: #{vq_encoder_forward.1} parent=0 // pred_region
    _
  $region89: #{vq_encoder_forward.1} parent=0 // pred_fallthru
    _
  // Predicated region
  $region90: #{vq_encoder_forward.1} parent=0 // pred_check
    _
  $region91: #{vq_encoder_forward.1} parent=0 // pred_check_branch
    %151 = sbr.rel (0) target = $region93
  $region92: #{vq_encoder_forward.1} parent=0 // pred_region
    _
  $region93: #{vq_encoder_forward.1} parent=0 // pred_fallthru
    _
  // Predicated region
  $region94: #{vq_encoder_forward.1} parent=0 // pred_check
    _
  $region95: #{vq_encoder_forward.1} parent=0 // pred_check_branch
    %153 = sbr.rel (0) target = $region97
  $region96: #{vq_encoder_forward.1} parent=0 // pred_region
    _
  $region97: #{vq_encoder_forward.1} parent=0 // pred_fallthru
    _
  // Predicated region
  $region98: #{vq_encoder_forward.1} parent=0 // pred_check
    _
  $region99: #{vq_encoder_forward.1} parent=0 // pred_check_branch
    %155 = sbr.rel (0) target = $region101
  $region100: #{vq_encoder_forward.1} parent=0 // pred_region
    _
  $region101: #{vq_encoder_forward.1} parent=0 // pred_fallthru
    _
  // Predicated region
  $region102: #{vq_encoder_forward.1} parent=0 // pred_check
    _
  $region103: #{vq_encoder_forward.1} parent=0 // pred_check_branch
    %157 = sbr.rel (0) target = $region105
  $region104: #{vq_encoder_forward.1} parent=0 // pred_region
    _
  $region105: #{vq_encoder_forward.1} parent=0 // pred_fallthru
    _
  // Predicated region
  $region106: #{vq_encoder_forward.1} parent=0 // pred_check
    _
  $region107: #{vq_encoder_forward.1} parent=0 // pred_check_branch
    %159 = sbr.rel (0) target = $region109
  $region108: #{vq_encoder_forward.1} parent=0 // pred_region
    _
  $region109: #{vq_encoder_forward.1} parent=0 // pred_fallthru
    _
  // Predicated region
  $region110: #{vq_encoder_forward.1} parent=0 // pred_check
    _
  $region111: #{vq_encoder_forward.1} parent=0 // pred_check_branch
    %161 = sbr.rel (0) target = $region113
  $region112: #{vq_encoder_forward.1} parent=0 // pred_region
    _
  $region113: #{vq_encoder_forward.1} parent=0 // pred_fallthru
    _
  // Predicated region
  $region114: #{vq_encoder_forward.1} parent=0 // pred_check
    _
  $region115: #{vq_encoder_forward.1} parent=0 // pred_check_branch
    %163 = sbr.rel (0) target = $region117
  $region116: #{vq_encoder_forward.1} parent=0 // pred_region
    _
  $region117: #{vq_encoder_forward.1} parent=0 // pred_fallthru
    _
  // Predicated region
  $region118: #{vq_encoder_forward.1} parent=0 // pred_check
    _
  $region119: #{vq_encoder_forward.1} parent=0 // pred_check_branch
    %165 = sbr.rel (0) target = $region121
  $region120: #{vq_encoder_forward.1} parent=0 // pred_region
    _
  $region121: #{vq_encoder_forward.1} parent=0 // pred_fallthru
    _
  // Predicated region
  $region122: #{vq_encoder_forward.1} parent=0 // pred_check
    _
  $region123: #{vq_encoder_forward.1} parent=0 // pred_check_branch
    %167 = sbr.rel (0) target = $region125
  $region124: #{vq_encoder_forward.1} parent=0 // pred_region
    _
  $region125: #{vq_encoder_forward.1} parent=0 // pred_fallthru
    _
  // Predicated region
  $region126: #{vq_encoder_forward.1} parent=0 // pred_check
    _
  $region127: #{vq_encoder_forward.1} parent=0 // pred_check_branch
    %169 = sbr.rel (0) target = $region129
  $region128: #{vq_encoder_forward.1} parent=0 // pred_region
    _
  $region129: #{vq_encoder_forward.1} parent=0 // pred_fallthru
    _
  // Predicated region
  $region130: #{vq_encoder_forward.1} parent=0 // pred_check
    _
  $region131: #{vq_encoder_forward.1} parent=0 // pred_check_branch
    %171 = sbr.rel (0) target = $region133
  $region132: #{vq_encoder_forward.1} parent=0 // pred_region
    _
  $region133: #{vq_encoder_forward.1} parent=0 // pred_fallthru
    _
  // Predicated region
  $region134: #{vq_encoder_forward.1} parent=0 // pred_check
    _
  $region135: #{vq_encoder_forward.1} parent=0 // pred_check_branch
    %173 = sbr.rel (0) target = $region137
  $region136: #{vq_encoder_forward.1} parent=0 // pred_region
    _
  $region137: #{vq_encoder_forward.1} parent=0 // pred_fallthru
    _
  // Predicated region
  $region138: #{vq_encoder_forward.1} parent=0 // pred_check
    _
  $region139: #{vq_encoder_forward.1} parent=0 // pred_check_branch
    %175 = sbr.rel (0) target = $region141
  $region140: #{vq_encoder_forward.1} parent=0 // pred_region
    _
  $region141: #{vq_encoder_forward.1} parent=0 // pred_fallthru
    _
  // Predicated region
  $region142: #{vq_encoder_forward.1} parent=0 // pred_check
    _
  $region143: #{vq_encoder_forward.1} parent=0 // pred_check_branch
    %177 = sbr.rel (0) target = $region145
  $region144: #{vq_encoder_forward.1} parent=0 // pred_region
    _
  $region145: #{vq_encoder_forward.1} parent=0 // pred_fallthru
    _
  // Predicated region
  $region146: #{vq_encoder_forward.1} parent=0 // pred_check
    _
  $region147: #{vq_encoder_forward.1} parent=0 // pred_check_branch
    %179 = sbr.rel (0) target = $region149
  $region148: #{vq_encoder_forward.1} parent=0 // pred_region
    _
  $region149: #{vq_encoder_forward.1} parent=0 // pred_fallthru
    _
  // Predicated region
  $region150: #{vq_encoder_forward.1} parent=0 // pred_check
    _
  $region151: #{vq_encoder_forward.1} parent=0 // pred_check_branch
    %181 = sbr.rel (0) target = $region153
  $region152: #{vq_encoder_forward.1} parent=0 // pred_region
    _
  $region153: #{vq_encoder_forward.1} parent=0 // pred_fallthru
    _
  // Predicated region
  $region154: #{vq_encoder_forward.1} parent=0 // pred_check
    _
  $region155: #{vq_encoder_forward.1} parent=0 // pred_check_branch
    %183 = sbr.rel (0) target = $region157
  $region156: #{vq_encoder_forward.1} parent=0 // pred_region
    _
  $region157: #{vq_encoder_forward.1} parent=0 // pred_fallthru
    _
  // Predicated region
  $region158: #{vq_encoder_forward.1} parent=0 // pred_check
    _
  $region159: #{vq_encoder_forward.1} parent=0 // pred_check_branch
    %185 = sbr.rel (0) target = $region161
  $region160: #{vq_encoder_forward.1} parent=0 // pred_region
    _
  $region161: #{vq_encoder_forward.1} parent=0 // pred_fallthru
    _
  // Predicated region
  $region162: #{vq_encoder_forward.1} parent=0 // pred_check
    _
  $region163: #{vq_encoder_forward.1} parent=0 // pred_check_branch
    %187 = sbr.rel (0) target = $region165
  $region164: #{vq_encoder_forward.1} parent=0 // pred_region
    _
  $region165: #{vq_encoder_forward.1} parent=0 // pred_fallthru
    _
  // Predicated region
  $region166: #{vq_encoder_forward.1} parent=0 // pred_check
    _
  $region167: #{vq_encoder_forward.1} parent=0 // pred_check_branch
    %189 = sbr.rel (0) target = $region169
  $region168: #{vq_encoder_forward.1} parent=0 // pred_region
    _
  $region169: #{vq_encoder_forward.1} parent=0 // pred_fallthru
    _
  // Predicated region
  $region170: #{vq_encoder_forward.1} parent=0 // pred_check
    _
  $region171: #{vq_encoder_forward.1} parent=0 // pred_check_branch
    %191 = sbr.rel (0) target = $region173
  $region172: #{vq_encoder_forward.1} parent=0 // pred_region
    _
  $region173: #{vq_encoder_forward.1} parent=0 // pred_fallthru
    _
  // Predicated region
  $region174: #{vq_encoder_forward.1} parent=0 // pred_check
    _
  $region175: #{vq_encoder_forward.1} parent=0 // pred_check_branch
    %193 = sbr.rel (0) target = $region177
  $region176: #{vq_encoder_forward.1} parent=0 // pred_region
    _
  $region177: #{vq_encoder_forward.1} parent=0 // pred_fallthru
    _
  // Predicated region
  $region178: #{vq_encoder_forward.1} parent=0 // pred_check
    _
  $region179: #{vq_encoder_forward.1} parent=0 // pred_check_branch
    %195 = sbr.rel (0) target = $region181
  $region180: #{vq_encoder_forward.1} parent=0 // pred_region
    _
  $region181: #{vq_encoder_forward.1} parent=0 // pred_fallthru
    _
  // Predicated region
  $region182: #{vq_encoder_forward.1} parent=0 // pred_check
    _
  $region183: #{vq_encoder_forward.1} parent=0 // pred_check_branch
    %197 = sbr.rel (0) target = $region185
  $region184: #{vq_encoder_forward.1} parent=0 // pred_region
    _
  $region185: #{vq_encoder_forward.1} parent=0 // pred_fallthru
    _
  // Predicated region
  $region186: #{vq_encoder_forward.1} parent=0 // pred_check
    _
  $region187: #{vq_encoder_forward.1} parent=0 // pred_check_branch
    %199 = sbr.rel (0) target = $region189
  $region188: #{vq_encoder_forward.1} parent=0 // pred_region
    _
  $region189: #{vq_encoder_forward.1} parent=0 // pred_fallthru
    _
  // Predicated region
  $region190: #{vq_encoder_forward.1} parent=0 // pred_check
    _
  $region191: #{vq_encoder_forward.1} parent=0 // pred_check_branch
    %201 = sbr.rel (0) target = $region193
  $region192: #{vq_encoder_forward.1} parent=0 // pred_region
    _
  $region193: #{vq_encoder_forward.1} parent=0 // pred_fallthru
    _
  // Predicated region
  $region194: #{vq_encoder_forward.1} parent=0 // pred_check
    _
  $region195: #{vq_encoder_forward.1} parent=0 // pred_check_branch
    %203 = sbr.rel (0) target = $region197
  $region196: #{vq_encoder_forward.1} parent=0 // pred_region
    _
  $region197: #{vq_encoder_forward.1} parent=0 // pred_fallthru
    _
  // Predicated region
  $region198: #{vq_encoder_forward.1} parent=0 // pred_check
    _
  $region199: #{vq_encoder_forward.1} parent=0 // pred_check_branch
    %205 = sbr.rel (0) target = $region201
  $region200: #{vq_encoder_forward.1} parent=0 // pred_region
    _
  $region201: #{vq_encoder_forward.1} parent=0 // pred_fallthru
    _
  %v206 = vld [vmem:[%s1] sm:$0xff]
  %v207 = vld [vmem:[%s1 + $0x8] sm:$0xff]
  %v208 = vld [vmem:[%s1 + $0x10] sm:$0xff]
  %v209 = vld [vmem:[%s1 + $0x18] sm:$0xff]
  %v210 = vld [vmem:[%s1 + $0x20] sm:$0xff]
  %v211 = vld [vmem:[%s1 + $0x28] sm:$0xff]
  %v212 = vld [vmem:[%s1 + $0x30] sm:$0xff]
  %v213 = vld [vmem:[%s1 + $0x38] sm:$0xff]
  %v214 = vld [vmem:[%s5] sm:$0xf]
  %v215 = vld [vmem:[%s7] sm:$0x1]
  %v217 = vperm.slane %v215, 0
  %vm219 = vcmask 31744
  %v221 = vsel %vm219, %v206, 0
  %v224 = vsel %vm219, %v207, 0
  %v227 = vsel %vm219, %v208, 0
  %v230 = vsel %vm219, %v209, 0
  %v233 = vsel %vm219, %v210, 0
  %v236 = vsel %vm219, %v211, 0
  %v239 = vsel %vm219, %v212, 0
  %v242 = vsel %vm219, %v213, 0
  %vm244 = vcmask 1043456
  %v246 = vsel %vm244, %v214, 0
  %248 = vmatpush.msra.mxu0 0.0
  %249 = vmatpush.msra.mxu0 0.0
  %250 = vmatpush.msra.mxu0 0.0
  %251 = vmatpush.msra.mxu0 0.0
  %252 = vmatpush.msra.mxu0 0.0
  %253 = vmatpush.msra.mxu0 0.0
  %254 = vmatpush.msra.mxu0 0.0
  %255 = vmatpush.msra.mxu0 0.0
  %256 = vmatpush.msra.mxu0 0.0
  %257 = vmatpush.msra.mxu0 0.0
  %258 = vmatpush.msra.mxu0 0.0
  %259 = vmatpush.msra.mxu0 0.0
  %260 = vmatpush.msra.mxu0 0.0
  %261 = vmatpush.msra.mxu0 0.0
  %262 = vmatpush.msra.mxu0 0.0
  %263 = vmatpush.msra.mxu0 %v246
  %264 = vmatmul.f32.gmra.mxu0 %v221
  %v265 = vpop.f32.mrf.mxu0
  %v266 = vadd.f32 %v217, %v265
  %267 = vmatmul.f32.gmra.mxu0 %v224
  %v268 = vpop.f32.mrf.mxu0
  %v269 = vadd.f32 %v217, %v268
  %270 = vmatmul.f32.gmra.mxu0 %v227
  %v271 = vpop.f32.mrf.mxu0
  %v272 = vadd.f32 %v217, %v271
  %273 = vmatmul.f32.gmra.mxu0 %v230
  %v274 = vpop.f32.mrf.mxu0
  %v275 = vadd.f32 %v217, %v274
  %276 = vmatmul.f32.gmra.mxu0 %v233
  %v277 = vpop.f32.mrf.mxu0
  %v278 = vadd.f32 %v217, %v277
  %279 = vmatmul.f32.gmra.mxu0 %v236
  %v280 = vpop.f32.mrf.mxu0
  %v281 = vadd.f32 %v217, %v280
  %282 = vmatmul.f32.gmra.mxu0 %v239
  %v283 = vpop.f32.mrf.mxu0
  %v284 = vadd.f32 %v217, %v283
  %285 = vmatmul.f32.gmra.mxu0 %v242
  %v286 = vpop.f32.mrf.mxu0
  %v287 = vadd.f32 %v217, %v286
  %288 = vdwg.mxu0
  %v289 = vmax.f32 %v266, 0.0
  %v290 = vmax.f32 %v269, 0.0
  %v291 = vmax.f32 %v272, 0.0
  %v292 = vmax.f32 %v275, 0.0
  %v293 = vmax.f32 %v278, 0.0
  %v294 = vmax.f32 %v281, 0.0
  %v295 = vmax.f32 %v284, 0.0
  %v296 = vmax.f32 %v287, 0.0
  %v297 = vld [vmem:[%s9] sm:$0xff]
  %v298 = vld [vmem:[%s9 + $0x8] sm:$0xff]
  %v299 = vld [vmem:[%s9 + $0x10] sm:$0xff]
  %v300 = vld [vmem:[%s9 + $0x18] sm:$0xff]
  %v301 = vld [vmem:[%s11] sm:$0x1]
  %v303 = vperm.slane %v301, 0
  %vm305 = vcmask 261120
  %v307 = vsel %vm305, %v289, 0
  %v310 = vsel %vm305, %v290, 0
  %v313 = vsel %vm305, %v291, 0
  %v316 = vsel %vm305, %v292, 0
  %v319 = vsel %vm305, %v293, 0
  %v322 = vsel %vm305, %v294, 0
  %v325 = vsel %vm305, %v295, 0
  %v328 = vsel %vm305, %v296, 0
  %330 = vmatpush.msra.mxu0 0.0
  %331 = vmatpush.msra.mxu0 0.0
  %332 = vmatpush.msra.mxu0 0.0
  %333 = vmatpush.msra.mxu0 0.0
  %334 = vmatpush.msra.mxu0 0.0
  %335 = vmatpush.msra.mxu0 0.0
  %336 = vmatpush.msra.mxu0 0.0
  %337 = vmatpush.msra.mxu0 0.0
  %338 = vmatpush.msra.mxu0 0.0
  %339 = vmatpush.msra.mxu0 0.0
  %340 = vmatpush.msra.mxu0 0.0
  %341 = vmatpush.msra.mxu0 0.0
  %342 = vmatpush.msra.mxu0 %v300
  %343 = vmatpush.msra.mxu0 %v299
  %344 = vmatpush.msra.mxu0 %v298
  %345 = vmatpush.msra.mxu0 %v297
  %346 = vmatmul.f32.gmra.mxu0 %v307
  %v347 = vpop.f32.mrf.mxu0
  %v348 = vadd.f32 %v303, %v347
  %349 = vmatmul.f32.gmra.mxu0 %v310
  %v350 = vpop.f32.mrf.mxu0
  %v351 = vadd.f32 %v303, %v350
  %352 = vmatmul.f32.gmra.mxu0 %v313
  %v353 = vpop.f32.mrf.mxu0
  %v354 = vadd.f32 %v303, %v353
  %355 = vmatmul.f32.gmra.mxu0 %v316
  %v356 = vpop.f32.mrf.mxu0
  %v357 = vadd.f32 %v303, %v356
  %358 = vmatmul.f32.gmra.mxu0 %v319
  %v359 = vpop.f32.mrf.mxu0
  %v360 = vadd.f32 %v303, %v359
  %361 = vmatmul.f32.gmra.mxu0 %v322
  %v362 = vpop.f32.mrf.mxu0
  %v363 = vadd.f32 %v303, %v362
  %364 = vmatmul.f32.gmra.mxu0 %v325
  %v365 = vpop.f32.mrf.mxu0
  %v366 = vadd.f32 %v303, %v365
  %367 = vmatmul.f32.gmra.mxu0 %v328
  %v368 = vpop.f32.mrf.mxu0
  %v369 = vadd.f32 %v303, %v368
  %370 = vdwg.mxu0
  %v371 = vmax.f32 %v348, 0.0
  %v372 = vmax.f32 %v351, 0.0
  %v373 = vmax.f32 %v354, 0.0
  %v374 = vmax.f32 %v357, 0.0
  %v375 = vmax.f32 %v360, 0.0
  %v376 = vmax.f32 %v363, 0.0
  %v377 = vmax.f32 %v366, 0.0
  %v378 = vmax.f32 %v369, 0.0
  %v379 = vld [vmem:[%s3] sm:$0xff]
  %v380 = vld [vmem:[%s3 + $0x8] sm:$0xff]
  %v381 = vld [vmem:[%s3 + $0x10] sm:$0xff]
  %v382 = vld [vmem:[%s3 + $0x18] sm:$0xff]
  %v383 = vld [vmem:[%s3 + $0x20] sm:$0xff]
  %v384 = vld [vmem:[%s3 + $0x28] sm:$0xff]
  %v385 = vld [vmem:[%s3 + $0x30] sm:$0xff]
  %v386 = vld [vmem:[%s3 + $0x38] sm:$0xff]
  %v387 = vld [vmem:[%s13] sm:$0xff]
  %v388 = vld [vmem:[%s13 + $0x8] sm:$0xff]
  %v389 = vld [vmem:[%s13 + $0x10] sm:$0xff]
  %v390 = vld [vmem:[%s13 + $0x18] sm:$0xff]
  %v391 = vld [vmem:[%s13 + $0x20] sm:$0x3]
  %vm392 = vcmask 15360
  %v394 = vsel %vm392, %v379, 0
  %v397 = vsel %vm392, %v380, 0
  %v400 = vsel %vm392, %v381, 0
  %v403 = vsel %vm392, %v382, 0
  %v406 = vsel %vm392, %v383, 0
  %v409 = vsel %vm392, %v384, 0
  %v412 = vsel %vm392, %v385, 0
  %v415 = vsel %vm392, %v386, 0
  %vm417 = vcmask 1041408
  %v419 = vsel %vm417, %v391, 0
  %421 = vmatpush.msra.mxu0 0.0
  %422 = vmatpush.msra.mxu0 0.0
  %423 = vmatpush.msra.mxu0 0.0
  %424 = vmatpush.msra.mxu0 0.0
  %425 = vmatpush.msra.mxu0 0.0
  %426 = vmatpush.msra.mxu0 0.0
  %427 = vmatpush.msra.mxu0 0.0
  %428 = vmatpush.msra.mxu0 0.0
  %429 = vmatpush.msra.mxu0 0.0
  %430 = vmatpush.msra.mxu0 0.0
  %431 = vmatpush.msra.mxu0 0.0
  %432 = vmatpush.msra.mxu0 0.0
  %433 = vmatpush.msra.mxu0 0.0
  %434 = vmatpush.msra.mxu0 0.0
  %435 = vmatpush.msra.mxu0 0.0
  %436 = vmatpush.msra.mxu0 %v419
  %437 = vmatmul.f32.gmra.mxu0 %v394
  %v438 = vpop.f32.mrf.mxu0
  %v439 = vadd.f32 0.0, %v438
  %440 = vmatmul.f32.gmra.mxu0 %v397
  %v441 = vpop.f32.mrf.mxu0
  %v442 = vadd.f32 0.0, %v441
  %443 = vmatmul.f32.gmra.mxu0 %v400
  %v444 = vpop.f32.mrf.mxu0
  %v445 = vadd.f32 0.0, %v444
  %446 = vmatmul.f32.gmra.mxu0 %v403
  %v447 = vpop.f32.mrf.mxu0
  %v448 = vadd.f32 0.0, %v447
  %449 = vmatmul.f32.gmra.mxu0 %v406
  %v450 = vpop.f32.mrf.mxu0
  %v451 = vadd.f32 0.0, %v450
  %452 = vmatmul.f32.gmra.mxu0 %v409
  %v453 = vpop.f32.mrf.mxu0
  %v454 = vadd.f32 0.0, %v453
  %455 = vmatmul.f32.gmra.mxu0 %v412
  %v456 = vpop.f32.mrf.mxu0
  %v457 = vadd.f32 0.0, %v456
  %458 = vmatmul.f32.gmra.mxu0 %v415
  %v459 = vpop.f32.mrf.mxu0
  %v460 = vadd.f32 0.0, %v459
  %461 = vdwg.mxu0
  %v463 = vsel %vm305, %v371, 0
  %v466 = vsel %vm305, %v372, 0
  %v469 = vsel %vm305, %v373, 0
  %v472 = vsel %vm305, %v374, 0
  %v475 = vsel %vm305, %v375, 0
  %v478 = vsel %vm305, %v376, 0
  %v481 = vsel %vm305, %v377, 0
  %v484 = vsel %vm305, %v378, 0
  %486 = vmatpush.msra.mxu0 0.0
  %487 = vmatpush.msra.mxu0 0.0
  %488 = vmatpush.msra.mxu0 0.0
  %489 = vmatpush.msra.mxu0 0.0
  %490 = vmatpush.msra.mxu0 0.0
  %491 = vmatpush.msra.mxu0 0.0
  %492 = vmatpush.msra.mxu0 0.0
  %493 = vmatpush.msra.mxu0 0.0
  %494 = vmatpush.msra.mxu0 0.0
  %495 = vmatpush.msra.mxu0 0.0
  %496 = vmatpush.msra.mxu0 0.0
  %497 = vmatpush.msra.mxu0 0.0
  %498 = vmatpush.msra.mxu0 %v390
  %499 = vmatpush.msra.mxu0 %v389
  %500 = vmatpush.msra.mxu0 %v388
  %501 = vmatpush.msra.mxu0 %v387
  %502 = vmatmul.f32.gmra.mxu0 %v463
  %v503 = vpop.f32.mrf.mxu0
  %v504 = vadd.f32 %v439, %v503
  %505 = vmatmul.f32.gmra.mxu0 %v466
  %v506 = vpop.f32.mrf.mxu0
  %v507 = vadd.f32 %v442, %v506
  %508 = vmatmul.f32.gmra.mxu0 %v469
  %v509 = vpop.f32.mrf.mxu0
  %v510 = vadd.f32 %v445, %v509
  %511 = vmatmul.f32.gmra.mxu0 %v472
  %v512 = vpop.f32.mrf.mxu0
  %v513 = vadd.f32 %v448, %v512
  %514 = vmatmul.f32.gmra.mxu0 %v475
  %v515 = vpop.f32.mrf.mxu0
  %v516 = vadd.f32 %v451, %v515
  %517 = vmatmul.f32.gmra.mxu0 %v478
  %v518 = vpop.f32.mrf.mxu0
  %v519 = vadd.f32 %v454, %v518
  %520 = vmatmul.f32.gmra.mxu0 %v481
  %v521 = vpop.f32.mrf.mxu0
  %v522 = vadd.f32 %v457, %v521
  %523 = vmatmul.f32.gmra.mxu0 %v484
  %v524 = vpop.f32.mrf.mxu0
  %v525 = vadd.f32 %v460, %v524
  %526 = vdwg.mxu0
  %v527 = vsel %vm305, %v504, %v525
  %v528 = vsel %vm305, %v507, %v522
  %v529 = vsel %vm305, %v510, %v519
  %v530 = vsel %vm305, %v513, %v516
  %v531 = vsel %vm305, %v516, %v513
  %v532 = vsel %vm305, %v519, %v510
  %v533 = vsel %vm305, %v522, %v507
  %v534 = vsel %vm305, %v525, %v504
  %v535 = vld [vmem:[%s17] sm:$0x1]
  %v537 = vperm.slane %v535, 0
  %v539 = vadd.f32 %v527, %v537
  %v540 = vadd.f32 %v528, %v537
  %v541 = vadd.f32 %v529, %v537
  %v542 = vadd.f32 %v530, %v537
  %v543 = vadd.f32 %v531, %v537
  %v544 = vadd.f32 %v532, %v537
  %v545 = vadd.f32 %v533, %v537
  %v546 = vadd.f32 %v534, %v537
  %vm547 = vcmask 523264
  %548 = vst.msk [vmem:[#allocation2] sm:$0xff] %vm547, %v539
  %549 = vst.msk [vmem:[#allocation2 + $0x8] sm:$0xff] %vm547, %v540
  %550 = vst.msk [vmem:[#allocation2 + $0x10] sm:$0xff] %vm547, %v541
  %551 = vst.msk [vmem:[#allocation2 + $0x18] sm:$0xff] %vm547, %v542
  %552 = vst.msk [vmem:[#allocation2 + $0x20] sm:$0xff] %vm547, %v543
  %553 = vst.msk [vmem:[#allocation2 + $0x28] sm:$0xff] %vm547, %v544
  %554 = vst.msk [vmem:[#allocation2 + $0x30] sm:$0xff] %vm547, %v545
  %555 = vst.msk [vmem:[#allocation2 + $0x38] sm:$0xff] %vm547, %v546
  %v556 = vld [vmem:[%s19] sm:$0xff]
  %v557 = vld [vmem:[%s19 + $0x8] sm:$0xff]
  %v558 = vld [vmem:[%s19 + $0x10] sm:$0xff]
  %v559 = vld [vmem:[%s19 + $0x18] sm:$0xff]
  %v560 = vld [vmem:[%s19 + $0x20] sm:$0x3]
  %v562 = vsel %vm417, %v560, 0
  %564 = vmatpush.msra.mxu0 0.0
  %565 = vmatpush.msra.mxu0 0.0
  %566 = vmatpush.msra.mxu0 0.0
  %567 = vmatpush.msra.mxu0 0.0
  %568 = vmatpush.msra.mxu0 0.0
  %569 = vmatpush.msra.mxu0 0.0
  %570 = vmatpush.msra.mxu0 0.0
  %571 = vmatpush.msra.mxu0 0.0
  %572 = vmatpush.msra.mxu0 0.0
  %573 = vmatpush.msra.mxu0 0.0
  %574 = vmatpush.msra.mxu0 0.0
  %575 = vmatpush.msra.mxu0 0.0
  %576 = vmatpush.msra.mxu0 0.0
  %577 = vmatpush.msra.mxu0 0.0
  %578 = vmatpush.msra.mxu0 0.0
  %579 = vmatpush.msra.mxu0 %v562
  %580 = vmatmul.f32.gmra.mxu0 %v394
  %v581 = vpop.f32.mrf.mxu0
  %v582 = vadd.f32 0.0, %v581
  %583 = vmatmul.f32.gmra.mxu0 %v397
  %v584 = vpop.f32.mrf.mxu0
  %v585 = vadd.f32 0.0, %v584
  %586 = vmatmul.f32.gmra.mxu0 %v400
  %v587 = vpop.f32.mrf.mxu0
  %v588 = vadd.f32 0.0, %v587
  %589 = vmatmul.f32.gmra.mxu0 %v403
  %v590 = vpop.f32.mrf.mxu0
  %v591 = vadd.f32 0.0, %v590
  %592 = vmatmul.f32.gmra.mxu0 %v406
  %v593 = vpop.f32.mrf.mxu0
  %v594 = vadd.f32 0.0, %v593
  %595 = vmatmul.f32.gmra.mxu0 %v409
  %v596 = vpop.f32.mrf.mxu0
  %v597 = vadd.f32 0.0, %v596
  %598 = vmatmul.f32.gmra.mxu0 %v412
  %v599 = vpop.f32.mrf.mxu0
  %v600 = vadd.f32 0.0, %v599
  %601 = vmatmul.f32.gmra.mxu0 %v415
  %v602 = vpop.f32.mrf.mxu0
  %v603 = vadd.f32 0.0, %v602
  %604 = vdwg.mxu0
  %605 = vmatpush.msra.mxu0 0.0
  %606 = vmatpush.msra.mxu0 0.0
  %607 = vmatpush.msra.mxu0 0.0
  %608 = vmatpush.msra.mxu0 0.0
  %609 = vmatpush.msra.mxu0 0.0
  %610 = vmatpush.msra.mxu0 0.0
  %611 = vmatpush.msra.mxu0 0.0
  %612 = vmatpush.msra.mxu0 0.0
  %613 = vmatpush.msra.mxu0 0.0
  %614 = vmatpush.msra.mxu0 0.0
  %615 = vmatpush.msra.mxu0 0.0
  %616 = vmatpush.msra.mxu0 0.0
  %617 = vmatpush.msra.mxu0 %v559
  %618 = vmatpush.msra.mxu0 %v558
  %619 = vmatpush.msra.mxu0 %v557
  %620 = vmatpush.msra.mxu0 %v556
  %621 = vmatmul.f32.gmra.mxu0 %v463
  %v622 = vpop.f32.mrf.mxu0
  %v623 = vadd.f32 %v582, %v622
  %624 = vmatmul.f32.gmra.mxu0 %v466
  %v625 = vpop.f32.mrf.mxu0
  %v626 = vadd.f32 %v585, %v625
  %627 = vmatmul.f32.gmra.mxu0 %v469
  %v628 = vpop.f32.mrf.mxu0
  %v629 = vadd.f32 %v588, %v628
  %630 = vmatmul.f32.gmra.mxu0 %v472
  %v631 = vpop.f32.mrf.mxu0
  %v632 = vadd.f32 %v591, %v631
  %633 = vmatmul.f32.gmra.mxu0 %v475
  %v634 = vpop.f32.mrf.mxu0
  %v635 = vadd.f32 %v594, %v634
  %636 = vmatmul.f32.gmra.mxu0 %v478
  %v637 = vpop.f32.mrf.mxu0
  %v638 = vadd.f32 %v597, %v637
  %639 = vmatmul.f32.gmra.mxu0 %v481
  %v640 = vpop.f32.mrf.mxu0
  %v641 = vadd.f32 %v600, %v640
  %642 = vmatmul.f32.gmra.mxu0 %v484
  %v643 = vpop.f32.mrf.mxu0
  %v644 = vadd.f32 %v603, %v643
  %645 = vdwg.mxu0
  %v646 = vsel %vm305, %v623, %v644
  %v647 = vsel %vm305, %v626, %v641
  %v648 = vsel %vm305, %v629, %v638
  %v649 = vsel %vm305, %v632, %v635
  %v650 = vsel %vm305, %v635, %v632
  %v651 = vsel %vm305, %v638, %v629
  %v652 = vsel %vm305, %v641, %v626
  %v653 = vsel %vm305, %v644, %v623
  %v654 = vld [vmem:[%s23] sm:$0x1]
  %v656 = vperm.slane %v654, 0
  %v658 = vadd.f32 %v646, %v656
  %v659 = vadd.f32 %v647, %v656
  %v660 = vadd.f32 %v648, %v656
  %v661 = vadd.f32 %v649, %v656
  %v662 = vadd.f32 %v650, %v656
  %v663 = vadd.f32 %v651, %v656
  %v664 = vadd.f32 %v652, %v656
  %v665 = vadd.f32 %v653, %v656
  %666 = vst.msk [vmem:[#allocation3] sm:$0xff] %vm547, %v658
  %667 = vst.msk [vmem:[#allocation3 + $0x8] sm:$0xff] %vm547, %v659
  %668 = vst.msk [vmem:[#allocation3 + $0x10] sm:$0xff] %vm547, %v660
  %669 = vst.msk [vmem:[#allocation3 + $0x18] sm:$0xff] %vm547, %v661
  %670 = vst.msk [vmem:[#allocation3 + $0x20] sm:$0xff] %vm547, %v662
  %671 = vst.msk [vmem:[#allocation3 + $0x28] sm:$0xff] %vm547, %v663
  %672 = vst.msk [vmem:[#allocation3 + $0x30] sm:$0xff] %vm547, %v664
  %673 = vst.msk [vmem:[#allocation3 + $0x38] sm:$0xff] %vm547, %v665
  %v674 = vld [vmem:[%s25] sm:$0xff]
  %v675 = vld [vmem:[%s25 + $0x8] sm:$0xff]
  %v676 = vld [vmem:[%s25 + $0x10] sm:$0xff]
  %v677 = vld [vmem:[%s25 + $0x18] sm:$0xff]
  %v678 = vld [vmem:[%s25 + $0x20] sm:$0x3]
  %v680 = vsel %vm417, %v678, 0
  %682 = vmatpush.msra.mxu0 0.0
  %683 = vmatpush.msra.mxu0 0.0
  %684 = vmatpush.msra.mxu0 0.0
  %685 = vmatpush.msra.mxu0 0.0
  %686 = vmatpush.msra.mxu0 0.0
  %687 = vmatpush.msra.mxu0 0.0
  %688 = vmatpush.msra.mxu0 0.0
  %689 = vmatpush.msra.mxu0 0.0
  %690 = vmatpush.msra.mxu0 0.0
  %691 = vmatpush.msra.mxu0 0.0
  %692 = vmatpush.msra.mxu0 0.0
  %693 = vmatpush.msra.mxu0 0.0
  %694 = vmatpush.msra.mxu0 0.0
  %695 = vmatpush.msra.mxu0 0.0
  %696 = vmatpush.msra.mxu0 0.0
  %697 = vmatpush.msra.mxu0 %v680
  %698 = vmatmul.f32.gmra.mxu0 %v394
  %v699 = vpop.f32.mrf.mxu0
  %v700 = vadd.f32 0.0, %v699
  %701 = vmatmul.f32.gmra.mxu0 %v397
  %v702 = vpop.f32.mrf.mxu0
  %v703 = vadd.f32 0.0, %v702
  %704 = vmatmul.f32.gmra.mxu0 %v400
  %v705 = vpop.f32.mrf.mxu0
  %v706 = vadd.f32 0.0, %v705
  %707 = vmatmul.f32.gmra.mxu0 %v403
  %v708 = vpop.f32.mrf.mxu0
  %v709 = vadd.f32 0.0, %v708
  %710 = vmatmul.f32.gmra.mxu0 %v406
  %v711 = vpop.f32.mrf.mxu0
  %v712 = vadd.f32 0.0, %v711
  %713 = vmatmul.f32.gmra.mxu0 %v409
  %v714 = vpop.f32.mrf.mxu0
  %v715 = vadd.f32 0.0, %v714
  %716 = vmatmul.f32.gmra.mxu0 %v412
  %v717 = vpop.f32.mrf.mxu0
  %v718 = vadd.f32 0.0, %v717
  %719 = vmatmul.f32.gmra.mxu0 %v415
  %v720 = vpop.f32.mrf.mxu0
  %v721 = vadd.f32 0.0, %v720
  %722 = vdwg.mxu0
  %723 = vmatpush.msra.mxu0 0.0
  %724 = vmatpush.msra.mxu0 0.0
  %725 = vmatpush.msra.mxu0 0.0
  %726 = vmatpush.msra.mxu0 0.0
  %727 = vmatpush.msra.mxu0 0.0
  %728 = vmatpush.msra.mxu0 0.0
  %729 = vmatpush.msra.mxu0 0.0
  %730 = vmatpush.msra.mxu0 0.0
  %731 = vmatpush.msra.mxu0 0.0
  %732 = vmatpush.msra.mxu0 0.0
  %733 = vmatpush.msra.mxu0 0.0
  %734 = vmatpush.msra.mxu0 0.0
  %735 = vmatpush.msra.mxu0 %v677
  %736 = vmatpush.msra.mxu0 %v676
  %737 = vmatpush.msra.mxu0 %v675
  %738 = vmatpush.msra.mxu0 %v674
  %739 = vmatmul.f32.gmra.mxu0 %v463
  %v740 = vpop.f32.mrf.mxu0
  %v741 = vadd.f32 %v700, %v740
  %742 = vmatmul.f32.gmra.mxu0 %v466
  %v743 = vpop.f32.mrf.mxu0
  %v744 = vadd.f32 %v703, %v743
  %745 = vmatmul.f32.gmra.mxu0 %v469
  %v746 = vpop.f32.mrf.mxu0
  %v747 = vadd.f32 %v706, %v746
  %748 = vmatmul.f32.gmra.mxu0 %v472
  %v749 = vpop.f32.mrf.mxu0
  %v750 = vadd.f32 %v709, %v749
  %751 = vmatmul.f32.gmra.mxu0 %v475
  %v752 = vpop.f32.mrf.mxu0
  %v753 = vadd.f32 %v712, %v752
  %754 = vmatmul.f32.gmra.mxu0 %v478
  %v755 = vpop.f32.mrf.mxu0
  %v756 = vadd.f32 %v715, %v755
  %757 = vmatmul.f32.gmra.mxu0 %v481
  %v758 = vpop.f32.mrf.mxu0
  %v759 = vadd.f32 %v718, %v758
  %760 = vmatmul.f32.gmra.mxu0 %v484
  %v761 = vpop.f32.mrf.mxu0
  %v762 = vadd.f32 %v721, %v761
  %763 = vdwg.mxu0
  %v764 = vsel %vm305, %v741, %v762
  %v765 = vsel %vm305, %v744, %v759
  %v766 = vsel %vm305, %v747, %v756
  %v767 = vsel %vm305, %v750, %v753
  %v768 = vsel %vm305, %v753, %v750
  %v769 = vsel %vm305, %v756, %v747
  %v770 = vsel %vm305, %v759, %v744
  %v771 = vsel %vm305, %v762, %v741
  %v772 = vld [vmem:[%s29] sm:$0x1]
  %v774 = vperm.slane %v772, 0
  %v776 = vadd.f32 %v764, %v774
  %v777 = vadd.f32 %v765, %v774
  %v778 = vadd.f32 %v766, %v774
  %v779 = vadd.f32 %v767, %v774
  %v780 = vadd.f32 %v768, %v774
  %v781 = vadd.f32 %v769, %v774
  %v782 = vadd.f32 %v770, %v774
  %v783 = vadd.f32 %v771, %v774
  %784 = vst.msk [vmem:[#allocation4] sm:$0xff] %vm547, %v776
  %785 = vst.msk [vmem:[#allocation4 + $0x8] sm:$0xff] %vm547, %v777
  %786 = vst.msk [vmem:[#allocation4 + $0x10] sm:$0xff] %vm547, %v778
  %787 = vst.msk [vmem:[#allocation4 + $0x18] sm:$0xff] %vm547, %v779
  %788 = vst.msk [vmem:[#allocation4 + $0x20] sm:$0xff] %vm547, %v780
  %789 = vst.msk [vmem:[#allocation4 + $0x28] sm:$0xff] %vm547, %v781
  %790 = vst.msk [vmem:[#allocation4 + $0x30] sm:$0xff] %vm547, %v782
  %791 = vst.msk [vmem:[#allocation4 + $0x38] sm:$0xff] %vm547, %v783
  %v792 = vld [vmem:[%s15] sm:$0xff]
  %v793 = vld [vmem:[%s15 + $0x8] sm:$0xff]
  %v794 = vld [vmem:[%s15 + $0x10] sm:$0xff]
  %v795 = vld [vmem:[%s15 + $0x18] sm:$0xff]
  %v796 = vld [vmem:[%s15 + $0x20] sm:$0xff]
  %v797 = vld [vmem:[%s15 + $0x28] sm:$0xff]
  %v798 = vld [vmem:[%s15 + $0x30] sm:$0xff]
  %v799 = vld [vmem:[%s15 + $0x38] sm:$0xff]
  %v800 = vld [vmem:[%s21] sm:$0xff]
  %v801 = vld [vmem:[%s21 + $0x8] sm:$0xff]
  %v802 = vld [vmem:[%s21 + $0x10] sm:$0xff]
  %v803 = vld [vmem:[%s21 + $0x18] sm:$0xff]
  %v804 = vld [vmem:[%s21 + $0x20] sm:$0xff]
  %v805 = vld [vmem:[%s21 + $0x28] sm:$0xff]
  %v806 = vld [vmem:[%s21 + $0x30] sm:$0xff]
  %v807 = vld [vmem:[%s21 + $0x38] sm:$0xff]
  %v808 = vld [vmem:[%s27] sm:$0xff]
  %v809 = vld [vmem:[%s27 + $0x8] sm:$0xff]
  %v810 = vld [vmem:[%s27 + $0x10] sm:$0xff]
  %v811 = vld [vmem:[%s27 + $0x18] sm:$0xff]
  %v812 = vld [vmem:[%s27 + $0x20] sm:$0xff]
  %v813 = vld [vmem:[%s27 + $0x28] sm:$0xff]
  %v814 = vld [vmem:[%s27 + $0x30] sm:$0xff]
  %v815 = vld [vmem:[%s27 + $0x38] sm:$0xff]
  %v816 = vld [vmem:[%s31] sm:$0x1]
  %v818 = vperm.slane %v816, 0
  %v821 = vsel %vm547, 0.0, 0
  %823 = vmatpush.msra.mxu0 0.0
  %824 = vmatpush.msra.mxu0 0.0
  %825 = vmatpush.msra.mxu0 0.0
  %826 = vmatpush.msra.mxu0 0.0
  %827 = vmatpush.msra.mxu0 0.0
  %828 = vmatpush.msra.mxu0 0.0
  %829 = vmatpush.msra.mxu0 0.0
  %830 = vmatpush.msra.mxu0 0.0
  %831 = vmatpush.msra.mxu0 %v799
  %832 = vmatpush.msra.mxu0 %v798
  %833 = vmatpush.msra.mxu0 %v797
  %834 = vmatpush.msra.mxu0 %v796
  %835 = vmatpush.msra.mxu0 %v795
  %836 = vmatpush.msra.mxu0 %v794
  %837 = vmatpush.msra.mxu0 %v793
  %838 = vmatpush.msra.mxu0 %v792
  %839 = vmatmul.f32.gmra.mxu0 %v821
  %v840 = vpop.f32.mrf.mxu0
  %v841 = vadd.f32 0.0, %v840
  %842 = vdwg.mxu0
  %843 = vmatpush.msra.mxu0 0.0
  %844 = vmatpush.msra.mxu0 0.0
  %845 = vmatpush.msra.mxu0 0.0
  %846 = vmatpush.msra.mxu0 0.0
  %847 = vmatpush.msra.mxu0 0.0
  %848 = vmatpush.msra.mxu0 0.0
  %849 = vmatpush.msra.mxu0 0.0
  %850 = vmatpush.msra.mxu0 0.0
  %851 = vmatpush.msra.mxu0 %v807
  %852 = vmatpush.msra.mxu0 %v806
  %853 = vmatpush.msra.mxu0 %v805
  %854 = vmatpush.msra.mxu0 %v804
  %855 = vmatpush.msra.mxu0 %v803
  %856 = vmatpush.msra.mxu0 %v802
  %857 = vmatpush.msra.mxu0 %v801
  %858 = vmatpush.msra.mxu0 %v800
  %859 = vmatmul.f32.gmra.mxu0 %v821
  %v860 = vpop.f32.mrf.mxu0
  %v861 = vadd.f32 0.0, %v860
  %862 = vdwg.mxu0
  %v863 = vld [vmem:[#allocation2] sm:$0xff]
  %v864 = vadd.f32 %v863, %v841
  %v865 = vxor.u32 %v864, 2147483648
  %v866 = vmul.f32 %v865, 1.442695
  %v867 = vpow.pop %v866
  %v868 = vadd.f32 %v867, 1.0
  %v869 = vrcp.pop %v868
  %v870 = vmul.f32 %v868, %v869
  %v871 = vsub.f32 1.0, %v870
  %v872 = vmul.f32 %v869, %v871
  %v873 = vadd.f32 %v869, %v872
  %vm874 = vweird.f32 %v868
  %vm875 = vweird.f32 %v869
  %vm876 = vmor %vm874, %vm875
  %v877 = vsel %vm876, %v869, %v873
  %v878 = vand.u32 2147483647, %v868
  %vm879 = vcmp.eq.f32.partialorder %v878, 8.507059e+37
  %v880 = vand.u32 %v868, 2147483648
  %v881 = vor.u32 1.1754944e-38, %v880
  %v882 = vsel %vm879, %v881, %v877
  %v883 = vmul.f32 1.0, %v882
  %v884 = vld [vmem:[#allocation3] sm:$0xff]
  %v885 = vadd.f32 %v884, %v861
  %v886 = vxor.u32 %v885, 2147483648
  %v887 = vmul.f32 %v886, 1.442695
  %v888 = vpow.pop %v887
  %v889 = vadd.f32 %v888, 1.0
  %v890 = vrcp.pop %v889
  %v891 = vmul.f32 %v889, %v890
  %v892 = vsub.f32 1.0, %v891
  %v893 = vmul.f32 %v890, %v892
  %v894 = vadd.f32 %v890, %v893
  %vm895 = vweird.f32 %v889
  %vm896 = vweird.f32 %v890
  %vm897 = vmor %vm895, %vm896
  %v898 = vsel %vm897, %v890, %v894
  %v899 = vand.u32 2147483647, %v889
  %vm900 = vcmp.eq.f32.partialorder %v899, 8.507059e+37
  %v901 = vand.u32 %v889, 2147483648
  %v902 = vor.u32 1.1754944e-38, %v901
  %v903 = vsel %vm900, %v902, %v898
  %v904 = vmul.f32 1.0, %v903
  %v905 = vld [vmem:[#allocation4] sm:$0xff]
  %906 = vmatpush.msra.mxu0 0.0
  %907 = vmatpush.msra.mxu0 0.0
  %908 = vmatpush.msra.mxu0 0.0
  %909 = vmatpush.msra.mxu0 0.0
  %910 = vmatpush.msra.mxu0 0.0
  %911 = vmatpush.msra.mxu0 0.0
  %912 = vmatpush.msra.mxu0 0.0
  %913 = vmatpush.msra.mxu0 0.0
  %914 = vmatpush.msra.mxu0 %v815
  %915 = vmatpush.msra.mxu0 %v814
  %916 = vmatpush.msra.mxu0 %v813
  %917 = vmatpush.msra.mxu0 %v812
  %918 = vmatpush.msra.mxu0 %v811
  %919 = vmatpush.msra.mxu0 %v810
  %920 = vmatpush.msra.mxu0 %v809
  %921 = vmatpush.msra.mxu0 %v808
  %922 = vmatmul.f32.gmra.mxu0 %v821
  %v923 = vpop.f32.mrf.mxu0
  %v924 = vadd.f32 %v818, %v923
  %925 = vdwg.mxu0
  %v926 = vmul.f32 %v883, %v924
  %v927 = vadd.f32 %v905, %v926
  %v928 = vtanh.pop %v927
  %v929 = vsub.f32 0.0, %v928
  %v930 = vmul.f32 %v904, %v929
  %v931 = vadd.f32 %v928, %v930
  %v933 = vsel %vm547, %v931, 0
  %935 = vmatpush.msra.mxu0 0.0
  %936 = vmatpush.msra.mxu0 0.0
  %937 = vmatpush.msra.mxu0 0.0
  %938 = vmatpush.msra.mxu0 0.0
  %939 = vmatpush.msra.mxu0 0.0
  %940 = vmatpush.msra.mxu0 0.0
  %941 = vmatpush.msra.mxu0 0.0
  %942 = vmatpush.msra.mxu0 0.0
  %943 = vmatpush.msra.mxu0 %v799
  %944 = vmatpush.msra.mxu0 %v798
  %945 = vmatpush.msra.mxu0 %v797
  %946 = vmatpush.msra.mxu0 %v796
  %947 = vmatpush.msra.mxu0 %v795
  %948 = vmatpush.msra.mxu0 %v794
  %949 = vmatpush.msra.mxu0 %v793
  %950 = vmatpush.msra.mxu0 %v792
  %951 = vmatmul.f32.gmra.mxu0 %v933
  %v952 = vpop.f32.mrf.mxu0
  %v953 = vadd.f32 0.0, %v952
  %954 = vdwg.mxu0
  %955 = vmatpush.msra.mxu0 0.0
  %956 = vmatpush.msra.mxu0 0.0
  %957 = vmatpush.msra.mxu0 0.0
  %958 = vmatpush.msra.mxu0 0.0
  %959 = vmatpush.msra.mxu0 0.0
  %960 = vmatpush.msra.mxu0 0.0
  %961 = vmatpush.msra.mxu0 0.0
  %962 = vmatpush.msra.mxu0 0.0
  %963 = vmatpush.msra.mxu0 %v807
  %964 = vmatpush.msra.mxu0 %v806
  %965 = vmatpush.msra.mxu0 %v805
  %966 = vmatpush.msra.mxu0 %v804
  %967 = vmatpush.msra.mxu0 %v803
  %968 = vmatpush.msra.mxu0 %v802
  %969 = vmatpush.msra.mxu0 %v801
  %970 = vmatpush.msra.mxu0 %v800
  %971 = vmatmul.f32.gmra.mxu0 %v933
  %v972 = vpop.f32.mrf.mxu0
  %v973 = vadd.f32 0.0, %v972
  %974 = vdwg.mxu0
  %v975 = vld [vmem:[#allocation2 + $0x8] sm:$0xff]
  %v976 = vadd.f32 %v975, %v953
  %v977 = vxor.u32 %v976, 2147483648
  %v978 = vmul.f32 %v977, 1.442695
  %v979 = vpow.pop %v978
  %v980 = vadd.f32 %v979, 1.0
  %v981 = vrcp.pop %v980
  %v982 = vmul.f32 %v980, %v981
  %v983 = vsub.f32 1.0, %v982
  %v984 = vmul.f32 %v981, %v983
  %v985 = vadd.f32 %v981, %v984
  %vm986 = vweird.f32 %v980
  %vm987 = vweird.f32 %v981
  %vm988 = vmor %vm986, %vm987
  %v989 = vsel %vm988, %v981, %v985
  %v990 = vand.u32 2147483647, %v980
  %vm991 = vcmp.eq.f32.partialorder %v990, 8.507059e+37
  %v992 = vand.u32 %v980, 2147483648
  %v993 = vor.u32 1.1754944e-38, %v992
  %v994 = vsel %vm991, %v993, %v989
  %v995 = vmul.f32 1.0, %v994
  %v996 = vld [vmem:[#allocation3 + $0x8] sm:$0xff]
  %v997 = vadd.f32 %v996, %v973
  %v998 = vxor.u32 %v997, 2147483648
  %v999 = vmul.f32 %v998, 1.442695
  %v1000 = vpow.pop %v999
  %v1001 = vadd.f32 %v1000, 1.0
  %v1002 = vrcp.pop %v1001
  %v1003 = vmul.f32 %v1001, %v1002
  %v1004 = vsub.f32 1.0, %v1003
  %v1005 = vmul.f32 %v1002, %v1004
  %v1006 = vadd.f32 %v1002, %v1005
  %vm1007 = vweird.f32 %v1001
  %vm1008 = vweird.f32 %v1002
  %vm1009 = vmor %vm1007, %vm1008
  %v1010 = vsel %vm1009, %v1002, %v1006
  %v1011 = vand.u32 2147483647, %v1001
  %vm1012 = vcmp.eq.f32.partialorder %v1011, 8.507059e+37
  %v1013 = vand.u32 %v1001, 2147483648
  %v1014 = vor.u32 1.1754944e-38, %v1013
  %v1015 = vsel %vm1012, %v1014, %v1010
  %v1016 = vmul.f32 1.0, %v1015
  %v1017 = vld [vmem:[#allocation4 + $0x8] sm:$0xff]
  %1018 = vmatpush.msra.mxu0 0.0
  %1019 = vmatpush.msra.mxu0 0.0
  %1020 = vmatpush.msra.mxu0 0.0
  %1021 = vmatpush.msra.mxu0 0.0
  %1022 = vmatpush.msra.mxu0 0.0
  %1023 = vmatpush.msra.mxu0 0.0
  %1024 = vmatpush.msra.mxu0 0.0
  %1025 = vmatpush.msra.mxu0 0.0
  %1026 = vmatpush.msra.mxu0 %v815
  %1027 = vmatpush.msra.mxu0 %v814
  %1028 = vmatpush.msra.mxu0 %v813
  %1029 = vmatpush.msra.mxu0 %v812
  %1030 = vmatpush.msra.mxu0 %v811
  %1031 = vmatpush.msra.mxu0 %v810
  %1032 = vmatpush.msra.mxu0 %v809
  %1033 = vmatpush.msra.mxu0 %v808
  %1034 = vmatmul.f32.gmra.mxu0 %v933
  %v1035 = vpop.f32.mrf.mxu0
  %v1036 = vadd.f32 %v818, %v1035
  %1037 = vdwg.mxu0
  %v1038 = vmul.f32 %v995, %v1036
  %v1039 = vadd.f32 %v1017, %v1038
  %v1040 = vtanh.pop %v1039
  %v1041 = vsub.f32 %v931, %v1040
  %v1042 = vmul.f32 %v1016, %v1041
  %v1043 = vadd.f32 %v1040, %v1042
  %v1045 = vsel %vm547, %v1043, 0
  %1047 = vmatpush.msra.mxu0 0.0
  %1048 = vmatpush.msra.mxu0 0.0
  %1049 = vmatpush.msra.mxu0 0.0
  %1050 = vmatpush.msra.mxu0 0.0
  %1051 = vmatpush.msra.mxu0 0.0
  %1052 = vmatpush.msra.mxu0 0.0
  %1053 = vmatpush.msra.mxu0 0.0
  %1054 = vmatpush.msra.mxu0 0.0
  %1055 = vmatpush.msra.mxu0 %v799
  %1056 = vmatpush.msra.mxu0 %v798
  %1057 = vmatpush.msra.mxu0 %v797
  %1058 = vmatpush.msra.mxu0 %v796
  %1059 = vmatpush.msra.mxu0 %v795
  %1060 = vmatpush.msra.mxu0 %v794
  %1061 = vmatpush.msra.mxu0 %v793
  %1062 = vmatpush.msra.mxu0 %v792
  %1063 = vmatmul.f32.gmra.mxu0 %v1045
  %v1064 = vpop.f32.mrf.mxu0
  %v1065 = vadd.f32 0.0, %v1064
  %1066 = vdwg.mxu0
  %1067 = vmatpush.msra.mxu0 0.0
  %1068 = vmatpush.msra.mxu0 0.0
  %1069 = vmatpush.msra.mxu0 0.0
  %1070 = vmatpush.msra.mxu0 0.0
  %1071 = vmatpush.msra.mxu0 0.0
  %1072 = vmatpush.msra.mxu0 0.0
  %1073 = vmatpush.msra.mxu0 0.0
  %1074 = vmatpush.msra.mxu0 0.0
  %1075 = vmatpush.msra.mxu0 %v807
  %1076 = vmatpush.msra.mxu0 %v806
  %1077 = vmatpush.msra.mxu0 %v805
  %1078 = vmatpush.msra.mxu0 %v804
  %1079 = vmatpush.msra.mxu0 %v803
  %1080 = vmatpush.msra.mxu0 %v802
  %1081 = vmatpush.msra.mxu0 %v801
  %1082 = vmatpush.msra.mxu0 %v800
  %1083 = vmatmul.f32.gmra.mxu0 %v1045
  %v1084 = vpop.f32.mrf.mxu0
  %v1085 = vadd.f32 0.0, %v1084
  %1086 = vdwg.mxu0
  %v1087 = vld [vmem:[#allocation2 + $0x10] sm:$0xff]
  %v1088 = vadd.f32 %v1087, %v1065
  %v1089 = vxor.u32 %v1088, 2147483648
  %v1090 = vmul.f32 %v1089, 1.442695
  %v1091 = vpow.pop %v1090
  %v1092 = vadd.f32 %v1091, 1.0
  %v1093 = vrcp.pop %v1092
  %v1094 = vmul.f32 %v1092, %v1093
  %v1095 = vsub.f32 1.0, %v1094
  %v1096 = vmul.f32 %v1093, %v1095
  %v1097 = vadd.f32 %v1093, %v1096
  %vm1098 = vweird.f32 %v1092
  %vm1099 = vweird.f32 %v1093
  %vm1100 = vmor %vm1098, %vm1099
  %v1101 = vsel %vm1100, %v1093, %v1097
  %v1102 = vand.u32 2147483647, %v1092
  %vm1103 = vcmp.eq.f32.partialorder %v1102, 8.507059e+37
  %v1104 = vand.u32 %v1092, 2147483648
  %v1105 = vor.u32 1.1754944e-38, %v1104
  %v1106 = vsel %vm1103, %v1105, %v1101
  %v1107 = vmul.f32 1.0, %v1106
  %v1108 = vld [vmem:[#allocation3 + $0x10] sm:$0xff]
  %v1109 = vadd.f32 %v1108, %v1085
  %v1110 = vxor.u32 %v1109, 2147483648
  %v1111 = vmul.f32 %v1110, 1.442695
  %v1112 = vpow.pop %v1111
  %v1113 = vadd.f32 %v1112, 1.0
  %v1114 = vrcp.pop %v1113
  %v1115 = vmul.f32 %v1113, %v1114
  %v1116 = vsub.f32 1.0, %v1115
  %v1117 = vmul.f32 %v1114, %v1116
  %v1118 = vadd.f32 %v1114, %v1117
  %vm1119 = vweird.f32 %v1113
  %vm1120 = vweird.f32 %v1114
  %vm1121 = vmor %vm1119, %vm1120
  %v1122 = vsel %vm1121, %v1114, %v1118
  %v1123 = vand.u32 2147483647, %v1113
  %vm1124 = vcmp.eq.f32.partialorder %v1123, 8.507059e+37
  %v1125 = vand.u32 %v1113, 2147483648
  %v1126 = vor.u32 1.1754944e-38, %v1125
  %v1127 = vsel %vm1124, %v1126, %v1122
  %v1128 = vmul.f32 1.0, %v1127
  %v1129 = vld [vmem:[#allocation4 + $0x10] sm:$0xff]
  %1130 = vmatpush.msra.mxu0 0.0
  %1131 = vmatpush.msra.mxu0 0.0
  %1132 = vmatpush.msra.mxu0 0.0
  %1133 = vmatpush.msra.mxu0 0.0
  %1134 = vmatpush.msra.mxu0 0.0
  %1135 = vmatpush.msra.mxu0 0.0
  %1136 = vmatpush.msra.mxu0 0.0
  %1137 = vmatpush.msra.mxu0 0.0
  %1138 = vmatpush.msra.mxu0 %v815
  %1139 = vmatpush.msra.mxu0 %v814
  %1140 = vmatpush.msra.mxu0 %v813
  %1141 = vmatpush.msra.mxu0 %v812
  %1142 = vmatpush.msra.mxu0 %v811
  %1143 = vmatpush.msra.mxu0 %v810
  %1144 = vmatpush.msra.mxu0 %v809
  %1145 = vmatpush.msra.mxu0 %v808
  %1146 = vmatmul.f32.gmra.mxu0 %v1045
  %v1147 = vpop.f32.mrf.mxu0
  %v1148 = vadd.f32 %v818, %v1147
  %1149 = vdwg.mxu0
  %v1150 = vmul.f32 %v1107, %v1148
  %v1151 = vadd.f32 %v1129, %v1150
  %v1152 = vtanh.pop %v1151
  %v1153 = vsub.f32 %v1043, %v1152
  %v1154 = vmul.f32 %v1128, %v1153
  %v1155 = vadd.f32 %v1152, %v1154
  %v1157 = vsel %vm547, %v1155, 0
  %1159 = vmatpush.msra.mxu0 0.0
  %1160 = vmatpush.msra.mxu0 0.0
  %1161 = vmatpush.msra.mxu0 0.0
  %1162 = vmatpush.msra.mxu0 0.0
  %1163 = vmatpush.msra.mxu0 0.0
  %1164 = vmatpush.msra.mxu0 0.0
  %1165 = vmatpush.msra.mxu0 0.0
  %1166 = vmatpush.msra.mxu0 0.0
  %1167 = vmatpush.msra.mxu0 %v799
  %1168 = vmatpush.msra.mxu0 %v798
  %1169 = vmatpush.msra.mxu0 %v797
  %1170 = vmatpush.msra.mxu0 %v796
  %1171 = vmatpush.msra.mxu0 %v795
  %1172 = vmatpush.msra.mxu0 %v794
  %1173 = vmatpush.msra.mxu0 %v793
  %1174 = vmatpush.msra.mxu0 %v792
  %1175 = vmatmul.f32.gmra.mxu0 %v1157
  %v1176 = vpop.f32.mrf.mxu0
  %v1177 = vadd.f32 0.0, %v1176
  %1178 = vdwg.mxu0
  %1179 = vmatpush.msra.mxu0 0.0
  %1180 = vmatpush.msra.mxu0 0.0
  %1181 = vmatpush.msra.mxu0 0.0
  %1182 = vmatpush.msra.mxu0 0.0
  %1183 = vmatpush.msra.mxu0 0.0
  %1184 = vmatpush.msra.mxu0 0.0
  %1185 = vmatpush.msra.mxu0 0.0
  %1186 = vmatpush.msra.mxu0 0.0
  %1187 = vmatpush.msra.mxu0 %v807
  %1188 = vmatpush.msra.mxu0 %v806
  %1189 = vmatpush.msra.mxu0 %v805
  %1190 = vmatpush.msra.mxu0 %v804
  %1191 = vmatpush.msra.mxu0 %v803
  %1192 = vmatpush.msra.mxu0 %v802
  %1193 = vmatpush.msra.mxu0 %v801
  %1194 = vmatpush.msra.mxu0 %v800
  %1195 = vmatmul.f32.gmra.mxu0 %v1157
  %v1196 = vpop.f32.mrf.mxu0
  %v1197 = vadd.f32 0.0, %v1196
  %1198 = vdwg.mxu0
  %v1199 = vld [vmem:[#allocation2 + $0x18] sm:$0xff]
  %v1200 = vadd.f32 %v1199, %v1177
  %v1201 = vxor.u32 %v1200, 2147483648
  %v1202 = vmul.f32 %v1201, 1.442695
  %v1203 = vpow.pop %v1202
  %v1204 = vadd.f32 %v1203, 1.0
  %v1205 = vrcp.pop %v1204
  %v1206 = vmul.f32 %v1204, %v1205
  %v1207 = vsub.f32 1.0, %v1206
  %v1208 = vmul.f32 %v1205, %v1207
  %v1209 = vadd.f32 %v1205, %v1208
  %vm1210 = vweird.f32 %v1204
  %vm1211 = vweird.f32 %v1205
  %vm1212 = vmor %vm1210, %vm1211
  %v1213 = vsel %vm1212, %v1205, %v1209
  %v1214 = vand.u32 2147483647, %v1204
  %vm1215 = vcmp.eq.f32.partialorder %v1214, 8.507059e+37
  %v1216 = vand.u32 %v1204, 2147483648
  %v1217 = vor.u32 1.1754944e-38, %v1216
  %v1218 = vsel %vm1215, %v1217, %v1213
  %v1219 = vmul.f32 1.0, %v1218
  %v1220 = vld [vmem:[#allocation3 + $0x18] sm:$0xff]
  %v1221 = vadd.f32 %v1220, %v1197
  %v1222 = vxor.u32 %v1221, 2147483648
  %v1223 = vmul.f32 %v1222, 1.442695
  %v1224 = vpow.pop %v1223
  %v1225 = vadd.f32 %v1224, 1.0
  %v1226 = vrcp.pop %v1225
  %v1227 = vmul.f32 %v1225, %v1226
  %v1228 = vsub.f32 1.0, %v1227
  %v1229 = vmul.f32 %v1226, %v1228
  %v1230 = vadd.f32 %v1226, %v1229
  %vm1231 = vweird.f32 %v1225
  %vm1232 = vweird.f32 %v1226
  %vm1233 = vmor %vm1231, %vm1232
  %v1234 = vsel %vm1233, %v1226, %v1230
  %v1235 = vand.u32 2147483647, %v1225
  %vm1236 = vcmp.eq.f32.partialorder %v1235, 8.507059e+37
  %v1237 = vand.u32 %v1225, 2147483648
  %v1238 = vor.u32 1.1754944e-38, %v1237
  %v1239 = vsel %vm1236, %v1238, %v1234
  %v1240 = vmul.f32 1.0, %v1239
  %v1241 = vld [vmem:[#allocation4 + $0x18] sm:$0xff]
  %1242 = vmatpush.msra.mxu0 0.0
  %1243 = vmatpush.msra.mxu0 0.0
  %1244 = vmatpush.msra.mxu0 0.0
  %1245 = vmatpush.msra.mxu0 0.0
  %1246 = vmatpush.msra.mxu0 0.0
  %1247 = vmatpush.msra.mxu0 0.0
  %1248 = vmatpush.msra.mxu0 0.0
  %1249 = vmatpush.msra.mxu0 0.0
  %1250 = vmatpush.msra.mxu0 %v815
  %1251 = vmatpush.msra.mxu0 %v814
  %1252 = vmatpush.msra.mxu0 %v813
  %1253 = vmatpush.msra.mxu0 %v812
  %1254 = vmatpush.msra.mxu0 %v811
  %1255 = vmatpush.msra.mxu0 %v810
  %1256 = vmatpush.msra.mxu0 %v809
  %1257 = vmatpush.msra.mxu0 %v808
  %1258 = vmatmul.f32.gmra.mxu0 %v1157
  %v1259 = vpop.f32.mrf.mxu0
  %v1260 = vadd.f32 %v818, %v1259
  %1261 = vdwg.mxu0
  %v1262 = vmul.f32 %v1219, %v1260
  %v1263 = vadd.f32 %v1241, %v1262
  %v1264 = vtanh.pop %v1263
  %v1265 = vsub.f32 %v1155, %v1264
  %v1266 = vmul.f32 %v1240, %v1265
  %v1267 = vadd.f32 %v1264, %v1266
  %v1269 = vsel %vm547, %v1267, 0
  %1271 = vmatpush.msra.mxu0 0.0
  %1272 = vmatpush.msra.mxu0 0.0
  %1273 = vmatpush.msra.mxu0 0.0
  %1274 = vmatpush.msra.mxu0 0.0
  %1275 = vmatpush.msra.mxu0 0.0
  %1276 = vmatpush.msra.mxu0 0.0
  %1277 = vmatpush.msra.mxu0 0.0
  %1278 = vmatpush.msra.mxu0 0.0
  %1279 = vmatpush.msra.mxu0 %v799
  %1280 = vmatpush.msra.mxu0 %v798
  %1281 = vmatpush.msra.mxu0 %v797
  %1282 = vmatpush.msra.mxu0 %v796
  %1283 = vmatpush.msra.mxu0 %v795
  %1284 = vmatpush.msra.mxu0 %v794
  %1285 = vmatpush.msra.mxu0 %v793
  %1286 = vmatpush.msra.mxu0 %v792
  %1287 = vmatmul.f32.gmra.mxu0 %v1269
  %v1288 = vpop.f32.mrf.mxu0
  %v1289 = vadd.f32 0.0, %v1288
  %1290 = vdwg.mxu0
  %1291 = vmatpush.msra.mxu0 0.0
  %1292 = vmatpush.msra.mxu0 0.0
  %1293 = vmatpush.msra.mxu0 0.0
  %1294 = vmatpush.msra.mxu0 0.0
  %1295 = vmatpush.msra.mxu0 0.0
  %1296 = vmatpush.msra.mxu0 0.0
  %1297 = vmatpush.msra.mxu0 0.0
  %1298 = vmatpush.msra.mxu0 0.0
  %1299 = vmatpush.msra.mxu0 %v807
  %1300 = vmatpush.msra.mxu0 %v806
  %1301 = vmatpush.msra.mxu0 %v805
  %1302 = vmatpush.msra.mxu0 %v804
  %1303 = vmatpush.msra.mxu0 %v803
  %1304 = vmatpush.msra.mxu0 %v802
  %1305 = vmatpush.msra.mxu0 %v801
  %1306 = vmatpush.msra.mxu0 %v800
  %1307 = vmatmul.f32.gmra.mxu0 %v1269
  %v1308 = vpop.f32.mrf.mxu0
  %v1309 = vadd.f32 0.0, %v1308
  %1310 = vdwg.mxu0
  %v1311 = vld [vmem:[#allocation2 + $0x20] sm:$0xff]
  %v1312 = vadd.f32 %v1311, %v1289
  %v1313 = vxor.u32 %v1312, 2147483648
  %v1314 = vmul.f32 %v1313, 1.442695
  %v1315 = vpow.pop %v1314
  %v1316 = vadd.f32 %v1315, 1.0
  %v1317 = vrcp.pop %v1316
  %v1318 = vmul.f32 %v1316, %v1317
  %v1319 = vsub.f32 1.0, %v1318
  %v1320 = vmul.f32 %v1317, %v1319
  %v1321 = vadd.f32 %v1317, %v1320
  %vm1322 = vweird.f32 %v1316
  %vm1323 = vweird.f32 %v1317
  %vm1324 = vmor %vm1322, %vm1323
  %v1325 = vsel %vm1324, %v1317, %v1321
  %v1326 = vand.u32 2147483647, %v1316
  %vm1327 = vcmp.eq.f32.partialorder %v1326, 8.507059e+37
  %v1328 = vand.u32 %v1316, 2147483648
  %v1329 = vor.u32 1.1754944e-38, %v1328
  %v1330 = vsel %vm1327, %v1329, %v1325
  %v1331 = vmul.f32 1.0, %v1330
  %v1332 = vld [vmem:[#allocation3 + $0x20] sm:$0xff]
  %v1333 = vadd.f32 %v1332, %v1309
  %v1334 = vxor.u32 %v1333, 2147483648
  %v1335 = vmul.f32 %v1334, 1.442695
  %v1336 = vpow.pop %v1335
  %v1337 = vadd.f32 %v1336, 1.0
  %v1338 = vrcp.pop %v1337
  %v1339 = vmul.f32 %v1337, %v1338
  %v1340 = vsub.f32 1.0, %v1339
  %v1341 = vmul.f32 %v1338, %v1340
  %v1342 = vadd.f32 %v1338, %v1341
  %vm1343 = vweird.f32 %v1337
  %vm1344 = vweird.f32 %v1338
  %vm1345 = vmor %vm1343, %vm1344
  %v1346 = vsel %vm1345, %v1338, %v1342
  %v1347 = vand.u32 2147483647, %v1337
  %vm1348 = vcmp.eq.f32.partialorder %v1347, 8.507059e+37
  %v1349 = vand.u32 %v1337, 2147483648
  %v1350 = vor.u32 1.1754944e-38, %v1349
  %v1351 = vsel %vm1348, %v1350, %v1346
  %v1352 = vmul.f32 1.0, %v1351
  %v1353 = vld [vmem:[#allocation4 + $0x20] sm:$0xff]
  %1354 = vmatpush.msra.mxu0 0.0
  %1355 = vmatpush.msra.mxu0 0.0
  %1356 = vmatpush.msra.mxu0 0.0
  %1357 = vmatpush.msra.mxu0 0.0
  %1358 = vmatpush.msra.mxu0 0.0
  %1359 = vmatpush.msra.mxu0 0.0
  %1360 = vmatpush.msra.mxu0 0.0
  %1361 = vmatpush.msra.mxu0 0.0
  %1362 = vmatpush.msra.mxu0 %v815
  %1363 = vmatpush.msra.mxu0 %v814
  %1364 = vmatpush.msra.mxu0 %v813
  %1365 = vmatpush.msra.mxu0 %v812
  %1366 = vmatpush.msra.mxu0 %v811
  %1367 = vmatpush.msra.mxu0 %v810
  %1368 = vmatpush.msra.mxu0 %v809
  %1369 = vmatpush.msra.mxu0 %v808
  %1370 = vmatmul.f32.gmra.mxu0 %v1269
  %v1371 = vpop.f32.mrf.mxu0
  %v1372 = vadd.f32 %v818, %v1371
  %1373 = vdwg.mxu0
  %v1374 = vmul.f32 %v1331, %v1372
  %v1375 = vadd.f32 %v1353, %v1374
  %v1376 = vtanh.pop %v1375
  %v1377 = vsub.f32 %v1267, %v1376
  %v1378 = vmul.f32 %v1352, %v1377
  %v1379 = vadd.f32 %v1376, %v1378
  %v1381 = vsel %vm547, %v1379, 0
  %1383 = vmatpush.msra.mxu0 0.0
  %1384 = vmatpush.msra.mxu0 0.0
  %1385 = vmatpush.msra.mxu0 0.0
  %1386 = vmatpush.msra.mxu0 0.0
  %1387 = vmatpush.msra.mxu0 0.0
  %1388 = vmatpush.msra.mxu0 0.0
  %1389 = vmatpush.msra.mxu0 0.0
  %1390 = vmatpush.msra.mxu0 0.0
  %1391 = vmatpush.msra.mxu0 %v799
  %1392 = vmatpush.msra.mxu0 %v798
  %1393 = vmatpush.msra.mxu0 %v797
  %1394 = vmatpush.msra.mxu0 %v796
  %1395 = vmatpush.msra.mxu0 %v795
  %1396 = vmatpush.msra.mxu0 %v794
  %1397 = vmatpush.msra.mxu0 %v793
  %1398 = vmatpush.msra.mxu0 %v792
  %1399 = vmatmul.f32.gmra.mxu0 %v1381
  %v1400 = vpop.f32.mrf.mxu0
  %v1401 = vadd.f32 0.0, %v1400
  %1402 = vdwg.mxu0
  %1403 = vmatpush.msra.mxu0 0.0
  %1404 = vmatpush.msra.mxu0 0.0
  %1405 = vmatpush.msra.mxu0 0.0
  %1406 = vmatpush.msra.mxu0 0.0
  %1407 = vmatpush.msra.mxu0 0.0
  %1408 = vmatpush.msra.mxu0 0.0
  %1409 = vmatpush.msra.mxu0 0.0
  %1410 = vmatpush.msra.mxu0 0.0
  %1411 = vmatpush.msra.mxu0 %v807
  %1412 = vmatpush.msra.mxu0 %v806
  %1413 = vmatpush.msra.mxu0 %v805
  %1414 = vmatpush.msra.mxu0 %v804
  %1415 = vmatpush.msra.mxu0 %v803
  %1416 = vmatpush.msra.mxu0 %v802
  %1417 = vmatpush.msra.mxu0 %v801
  %1418 = vmatpush.msra.mxu0 %v800
  %1419 = vmatmul.f32.gmra.mxu0 %v1381
  %v1420 = vpop.f32.mrf.mxu0
  %v1421 = vadd.f32 0.0, %v1420
  %1422 = vdwg.mxu0
  %v1423 = vld [vmem:[#allocation2 + $0x28] sm:$0xff]
  %v1424 = vadd.f32 %v1423, %v1401
  %v1425 = vxor.u32 %v1424, 2147483648
  %v1426 = vmul.f32 %v1425, 1.442695
  %v1427 = vpow.pop %v1426
  %v1428 = vadd.f32 %v1427, 1.0
  %v1429 = vrcp.pop %v1428
  %v1430 = vmul.f32 %v1428, %v1429
  %v1431 = vsub.f32 1.0, %v1430
  %v1432 = vmul.f32 %v1429, %v1431
  %v1433 = vadd.f32 %v1429, %v1432
  %vm1434 = vweird.f32 %v1428
  %vm1435 = vweird.f32 %v1429
  %vm1436 = vmor %vm1434, %vm1435
  %v1437 = vsel %vm1436, %v1429, %v1433
  %v1438 = vand.u32 2147483647, %v1428
  %vm1439 = vcmp.eq.f32.partialorder %v1438, 8.507059e+37
  %v1440 = vand.u32 %v1428, 2147483648
  %v1441 = vor.u32 1.1754944e-38, %v1440
  %v1442 = vsel %vm1439, %v1441, %v1437
  %v1443 = vmul.f32 1.0, %v1442
  %v1444 = vld [vmem:[#allocation3 + $0x28] sm:$0xff]
  %v1445 = vadd.f32 %v1444, %v1421
  %v1446 = vxor.u32 %v1445, 2147483648
  %v1447 = vmul.f32 %v1446, 1.442695
  %v1448 = vpow.pop %v1447
  %v1449 = vadd.f32 %v1448, 1.0
  %v1450 = vrcp.pop %v1449
  %v1451 = vmul.f32 %v1449, %v1450
  %v1452 = vsub.f32 1.0, %v1451
  %v1453 = vmul.f32 %v1450, %v1452
  %v1454 = vadd.f32 %v1450, %v1453
  %vm1455 = vweird.f32 %v1449
  %vm1456 = vweird.f32 %v1450
  %vm1457 = vmor %vm1455, %vm1456
  %v1458 = vsel %vm1457, %v1450, %v1454
  %v1459 = vand.u32 2147483647, %v1449
  %vm1460 = vcmp.eq.f32.partialorder %v1459, 8.507059e+37
  %v1461 = vand.u32 %v1449, 2147483648
  %v1462 = vor.u32 1.1754944e-38, %v1461
  %v1463 = vsel %vm1460, %v1462, %v1458
  %v1464 = vmul.f32 1.0, %v1463
  %v1465 = vld [vmem:[#allocation4 + $0x28] sm:$0xff]
  %1466 = vmatpush.msra.mxu0 0.0
  %1467 = vmatpush.msra.mxu0 0.0
  %1468 = vmatpush.msra.mxu0 0.0
  %1469 = vmatpush.msra.mxu0 0.0
  %1470 = vmatpush.msra.mxu0 0.0
  %1471 = vmatpush.msra.mxu0 0.0
  %1472 = vmatpush.msra.mxu0 0.0
  %1473 = vmatpush.msra.mxu0 0.0
  %1474 = vmatpush.msra.mxu0 %v815
  %1475 = vmatpush.msra.mxu0 %v814
  %1476 = vmatpush.msra.mxu0 %v813
  %1477 = vmatpush.msra.mxu0 %v812
  %1478 = vmatpush.msra.mxu0 %v811
  %1479 = vmatpush.msra.mxu0 %v810
  %1480 = vmatpush.msra.mxu0 %v809
  %1481 = vmatpush.msra.mxu0 %v808
  %1482 = vmatmul.f32.gmra.mxu0 %v1381
  %v1483 = vpop.f32.mrf.mxu0
  %v1484 = vadd.f32 %v818, %v1483
  %1485 = vdwg.mxu0
  %v1486 = vmul.f32 %v1443, %v1484
  %v1487 = vadd.f32 %v1465, %v1486
  %v1488 = vtanh.pop %v1487
  %v1489 = vsub.f32 %v1379, %v1488
  %v1490 = vmul.f32 %v1464, %v1489
  %v1491 = vadd.f32 %v1488, %v1490
  %v1493 = vsel %vm547, %v1491, 0
  %1495 = vmatpush.msra.mxu0 0.0
  %1496 = vmatpush.msra.mxu0 0.0
  %1497 = vmatpush.msra.mxu0 0.0
  %1498 = vmatpush.msra.mxu0 0.0
  %1499 = vmatpush.msra.mxu0 0.0
  %1500 = vmatpush.msra.mxu0 0.0
  %1501 = vmatpush.msra.mxu0 0.0
  %1502 = vmatpush.msra.mxu0 0.0
  %1503 = vmatpush.msra.mxu0 %v799
  %1504 = vmatpush.msra.mxu0 %v798
  %1505 = vmatpush.msra.mxu0 %v797
  %1506 = vmatpush.msra.mxu0 %v796
  %1507 = vmatpush.msra.mxu0 %v795
  %1508 = vmatpush.msra.mxu0 %v794
  %1509 = vmatpush.msra.mxu0 %v793
  %1510 = vmatpush.msra.mxu0 %v792
  %1511 = vmatmul.f32.gmra.mxu0 %v1493
  %v1512 = vpop.f32.mrf.mxu0
  %v1513 = vadd.f32 0.0, %v1512
  %1514 = vdwg.mxu0
  %1515 = vmatpush.msra.mxu0 0.0
  %1516 = vmatpush.msra.mxu0 0.0
  %1517 = vmatpush.msra.mxu0 0.0
  %1518 = vmatpush.msra.mxu0 0.0
  %1519 = vmatpush.msra.mxu0 0.0
  %1520 = vmatpush.msra.mxu0 0.0
  %1521 = vmatpush.msra.mxu0 0.0
  %1522 = vmatpush.msra.mxu0 0.0
  %1523 = vmatpush.msra.mxu0 %v807
  %1524 = vmatpush.msra.mxu0 %v806
  %1525 = vmatpush.msra.mxu0 %v805
  %1526 = vmatpush.msra.mxu0 %v804
  %1527 = vmatpush.msra.mxu0 %v803
  %1528 = vmatpush.msra.mxu0 %v802
  %1529 = vmatpush.msra.mxu0 %v801
  %1530 = vmatpush.msra.mxu0 %v800
  %1531 = vmatmul.f32.gmra.mxu0 %v1493
  %v1532 = vpop.f32.mrf.mxu0
  %v1533 = vadd.f32 0.0, %v1532
  %1534 = vdwg.mxu0
  %v1535 = vld [vmem:[#allocation2 + $0x30] sm:$0xff]
  %v1536 = vadd.f32 %v1535, %v1513
  %v1537 = vxor.u32 %v1536, 2147483648
  %v1538 = vmul.f32 %v1537, 1.442695
  %v1539 = vpow.pop %v1538
  %v1540 = vadd.f32 %v1539, 1.0
  %v1541 = vrcp.pop %v1540
  %v1542 = vmul.f32 %v1540, %v1541
  %v1543 = vsub.f32 1.0, %v1542
  %v1544 = vmul.f32 %v1541, %v1543
  %v1545 = vadd.f32 %v1541, %v1544
  %vm1546 = vweird.f32 %v1540
  %vm1547 = vweird.f32 %v1541
  %vm1548 = vmor %vm1546, %vm1547
  %v1549 = vsel %vm1548, %v1541, %v1545
  %v1550 = vand.u32 2147483647, %v1540
  %vm1551 = vcmp.eq.f32.partialorder %v1550, 8.507059e+37
  %v1552 = vand.u32 %v1540, 2147483648
  %v1553 = vor.u32 1.1754944e-38, %v1552
  %v1554 = vsel %vm1551, %v1553, %v1549
  %v1555 = vmul.f32 1.0, %v1554
  %v1556 = vld [vmem:[#allocation3 + $0x30] sm:$0xff]
  %v1557 = vadd.f32 %v1556, %v1533
  %v1558 = vxor.u32 %v1557, 2147483648
  %v1559 = vmul.f32 %v1558, 1.442695
  %v1560 = vpow.pop %v1559
  %v1561 = vadd.f32 %v1560, 1.0
  %v1562 = vrcp.pop %v1561
  %v1563 = vmul.f32 %v1561, %v1562
  %v1564 = vsub.f32 1.0, %v1563
  %v1565 = vmul.f32 %v1562, %v1564
  %v1566 = vadd.f32 %v1562, %v1565
  %vm1567 = vweird.f32 %v1561
  %vm1568 = vweird.f32 %v1562
  %vm1569 = vmor %vm1567, %vm1568
  %v1570 = vsel %vm1569, %v1562, %v1566
  %v1571 = vand.u32 2147483647, %v1561
  %vm1572 = vcmp.eq.f32.partialorder %v1571, 8.507059e+37
  %v1573 = vand.u32 %v1561, 2147483648
  %v1574 = vor.u32 1.1754944e-38, %v1573
  %v1575 = vsel %vm1572, %v1574, %v1570
  %v1576 = vmul.f32 1.0, %v1575
  %v1577 = vld [vmem:[#allocation4 + $0x30] sm:$0xff]
  %1578 = vmatpush.msra.mxu0 0.0
  %1579 = vmatpush.msra.mxu0 0.0
  %1580 = vmatpush.msra.mxu0 0.0
  %1581 = vmatpush.msra.mxu0 0.0
  %1582 = vmatpush.msra.mxu0 0.0
  %1583 = vmatpush.msra.mxu0 0.0
  %1584 = vmatpush.msra.mxu0 0.0
  %1585 = vmatpush.msra.mxu0 0.0
  %1586 = vmatpush.msra.mxu0 %v815
  %1587 = vmatpush.msra.mxu0 %v814
  %1588 = vmatpush.msra.mxu0 %v813
  %1589 = vmatpush.msra.mxu0 %v812
  %1590 = vmatpush.msra.mxu0 %v811
  %1591 = vmatpush.msra.mxu0 %v810
  %1592 = vmatpush.msra.mxu0 %v809
  %1593 = vmatpush.msra.mxu0 %v808
  %1594 = vmatmul.f32.gmra.mxu0 %v1493
  %v1595 = vpop.f32.mrf.mxu0
  %v1596 = vadd.f32 %v818, %v1595
  %1597 = vdwg.mxu0
  %v1598 = vmul.f32 %v1555, %v1596
  %v1599 = vadd.f32 %v1577, %v1598
  %v1600 = vtanh.pop %v1599
  %v1601 = vsub.f32 %v1491, %v1600
  %v1602 = vmul.f32 %v1576, %v1601
  %v1603 = vadd.f32 %v1600, %v1602
  %v1605 = vsel %vm547, %v1603, 0
  %1607 = vmatpush.msra.mxu0 0.0
  %1608 = vmatpush.msra.mxu0 0.0
  %1609 = vmatpush.msra.mxu0 0.0
  %1610 = vmatpush.msra.mxu0 0.0
  %1611 = vmatpush.msra.mxu0 0.0
  %1612 = vmatpush.msra.mxu0 0.0
  %1613 = vmatpush.msra.mxu0 0.0
  %1614 = vmatpush.msra.mxu0 0.0
  %1615 = vmatpush.msra.mxu0 %v799
  %1616 = vmatpush.msra.mxu0 %v798
  %1617 = vmatpush.msra.mxu0 %v797
  %1618 = vmatpush.msra.mxu0 %v796
  %1619 = vmatpush.msra.mxu0 %v795
  %1620 = vmatpush.msra.mxu0 %v794
  %1621 = vmatpush.msra.mxu0 %v793
  %1622 = vmatpush.msra.mxu0 %v792
  %1623 = vmatmul.f32.gmra.mxu0 %v1605
  %v1624 = vpop.f32.mrf.mxu0
  %v1625 = vadd.f32 0.0, %v1624
  %1626 = vdwg.mxu0
  %1627 = vmatpush.msra.mxu0 0.0
  %1628 = vmatpush.msra.mxu0 0.0
  %1629 = vmatpush.msra.mxu0 0.0
  %1630 = vmatpush.msra.mxu0 0.0
  %1631 = vmatpush.msra.mxu0 0.0
  %1632 = vmatpush.msra.mxu0 0.0
  %1633 = vmatpush.msra.mxu0 0.0
  %1634 = vmatpush.msra.mxu0 0.0
  %1635 = vmatpush.msra.mxu0 %v807
  %1636 = vmatpush.msra.mxu0 %v806
  %1637 = vmatpush.msra.mxu0 %v805
  %1638 = vmatpush.msra.mxu0 %v804
  %1639 = vmatpush.msra.mxu0 %v803
  %1640 = vmatpush.msra.mxu0 %v802
  %1641 = vmatpush.msra.mxu0 %v801
  %1642 = vmatpush.msra.mxu0 %v800
  %1643 = vmatmul.f32.gmra.mxu0 %v1605
  %v1644 = vpop.f32.mrf.mxu0
  %v1645 = vadd.f32 0.0, %v1644
  %1646 = vdwg.mxu0
  %v1647 = vld [vmem:[#allocation2 + $0x38] sm:$0xff]
  %v1648 = vadd.f32 %v1647, %v1625
  %v1649 = vxor.u32 %v1648, 2147483648
  %v1650 = vmul.f32 %v1649, 1.442695
  %v1651 = vpow.pop %v1650
  %v1652 = vadd.f32 %v1651, 1.0
  %v1653 = vrcp.pop %v1652
  %v1654 = vmul.f32 %v1652, %v1653
  %v1655 = vsub.f32 1.0, %v1654
  %v1656 = vmul.f32 %v1653, %v1655
  %v1657 = vadd.f32 %v1653, %v1656
  %vm1658 = vweird.f32 %v1652
  %vm1659 = vweird.f32 %v1653
  %vm1660 = vmor %vm1658, %vm1659
  %v1661 = vsel %vm1660, %v1653, %v1657
  %v1662 = vand.u32 2147483647, %v1652
  %vm1663 = vcmp.eq.f32.partialorder %v1662, 8.507059e+37
  %v1664 = vand.u32 %v1652, 2147483648
  %v1665 = vor.u32 1.1754944e-38, %v1664
  %v1666 = vsel %vm1663, %v1665, %v1661
  %v1667 = vmul.f32 1.0, %v1666
  %v1668 = vld [vmem:[#allocation3 + $0x38] sm:$0xff]
  %v1669 = vadd.f32 %v1668, %v1645
  %v1670 = vxor.u32 %v1669, 2147483648
  %v1671 = vmul.f32 %v1670, 1.442695
  %v1672 = vpow.pop %v1671
  %v1673 = vadd.f32 %v1672, 1.0
  %v1674 = vrcp.pop %v1673
  %v1675 = vmul.f32 %v1673, %v1674
  %v1676 = vsub.f32 1.0, %v1675
  %v1677 = vmul.f32 %v1674, %v1676
  %v1678 = vadd.f32 %v1674, %v1677
  %vm1679 = vweird.f32 %v1673
  %vm1680 = vweird.f32 %v1674
  %vm1681 = vmor %vm1679, %vm1680
  %v1682 = vsel %vm1681, %v1674, %v1678
  %v1683 = vand.u32 2147483647, %v1673
  %vm1684 = vcmp.eq.f32.partialorder %v1683, 8.507059e+37
  %v1685 = vand.u32 %v1673, 2147483648
  %v1686 = vor.u32 1.1754944e-38, %v1685
  %v1687 = vsel %vm1684, %v1686, %v1682
  %v1688 = vmul.f32 1.0, %v1687
  %v1689 = vld [vmem:[#allocation4 + $0x38] sm:$0xff]
  %1690 = vmatpush.msra.mxu0 0.0
  %1691 = vmatpush.msra.mxu0 0.0
  %1692 = vmatpush.msra.mxu0 0.0
  %1693 = vmatpush.msra.mxu0 0.0
  %1694 = vmatpush.msra.mxu0 0.0
  %1695 = vmatpush.msra.mxu0 0.0
  %1696 = vmatpush.msra.mxu0 0.0
  %1697 = vmatpush.msra.mxu0 0.0
  %1698 = vmatpush.msra.mxu0 %v815
  %1699 = vmatpush.msra.mxu0 %v814
  %1700 = vmatpush.msra.mxu0 %v813
  %1701 = vmatpush.msra.mxu0 %v812
  %1702 = vmatpush.msra.mxu0 %v811
  %1703 = vmatpush.msra.mxu0 %v810
  %1704 = vmatpush.msra.mxu0 %v809
  %1705 = vmatpush.msra.mxu0 %v808
  %1706 = vmatmul.f32.gmra.mxu0 %v1605
  %v1707 = vpop.f32.mrf.mxu0
  %v1708 = vadd.f32 %v818, %v1707
  %1709 = vdwg.mxu0
  %v1710 = vmul.f32 %v1667, %v1708
  %v1711 = vadd.f32 %v1689, %v1710
  %v1712 = vtanh.pop %v1711
  %v1713 = vsub.f32 %v1603, %v1712
  %v1714 = vmul.f32 %v1688, %v1713
  %v1715 = vadd.f32 %v1712, %v1714
  %v1716 = vsel %vm305, %v931, %v1715
  %v1717 = vsel %vm305, %v1043, %v1603
  %v1718 = vsel %vm305, %v1155, %v1491
  %v1719 = vsel %vm305, %v1267, %v1379
  %v1720 = vsel %vm305, %v1379, %v1267
  %v1721 = vsel %vm305, %v1491, %v1155
  %v1722 = vsel %vm305, %v1603, %v1043
  %v1723 = vsel %vm305, %v1715, %v931
  %v1724 = vld [vmem:[%s33] sm:$0xff]
  %v1725 = vld [vmem:[%s33 + $0x8] sm:$0xff]
  %v1726 = vld [vmem:[%s33 + $0x10] sm:$0xff]
  %v1727 = vld [vmem:[%s33 + $0x18] sm:$0xff]
  %v1728 = vld [vmem:[%s33 + $0x20] sm:$0xff]
  %v1729 = vld [vmem:[%s33 + $0x28] sm:$0xff]
  %v1730 = vld [vmem:[%s33 + $0x30] sm:$0xff]
  %v1731 = vld [vmem:[%s33 + $0x38] sm:$0xff]
  %v1733 = vsel %vm547, %v1716, 0
  %v1736 = vsel %vm547, %v1717, 0
  %v1739 = vsel %vm547, %v1718, 0
  %v1742 = vsel %vm547, %v1719, 0
  %v1745 = vsel %vm547, %v1720, 0
  %v1748 = vsel %vm547, %v1721, 0
  %v1751 = vsel %vm547, %v1722, 0
  %v1754 = vsel %vm547, %v1723, 0
  %1756 = vmatpush.msra.mxu0 0.0
  %1757 = vmatpush.msra.mxu0 0.0
  %1758 = vmatpush.msra.mxu0 0.0
  %1759 = vmatpush.msra.mxu0 0.0
  %1760 = vmatpush.msra.mxu0 0.0
  %1761 = vmatpush.msra.mxu0 0.0
  %1762 = vmatpush.msra.mxu0 0.0
  %1763 = vmatpush.msra.mxu0 0.0
  %1764 = vmatpush.msra.mxu0 %v1731
  %1765 = vmatpush.msra.mxu0 %v1730
  %1766 = vmatpush.msra.mxu0 %v1729
  %1767 = vmatpush.msra.mxu0 %v1728
  %1768 = vmatpush.msra.mxu0 %v1727
  %1769 = vmatpush.msra.mxu0 %v1726
  %1770 = vmatpush.msra.mxu0 %v1725
  %1771 = vmatpush.msra.mxu0 %v1724
  %1772 = vmatmul.f32.gmra.mxu0 %v1733
  %v1773 = vpop.f32.mrf.mxu0
  %v1774 = vadd.f32 0.0, %v1773
  %1775 = vmatmul.f32.gmra.mxu0 %v1736
  %v1776 = vpop.f32.mrf.mxu0
  %v1777 = vadd.f32 0.0, %v1776
  %1778 = vmatmul.f32.gmra.mxu0 %v1739
  %v1779 = vpop.f32.mrf.mxu0
  %v1780 = vadd.f32 0.0, %v1779
  %1781 = vmatmul.f32.gmra.mxu0 %v1742
  %v1782 = vpop.f32.mrf.mxu0
  %v1783 = vadd.f32 0.0, %v1782
  %1784 = vmatmul.f32.gmra.mxu0 %v1745
  %v1785 = vpop.f32.mrf.mxu0
  %v1786 = vadd.f32 0.0, %v1785
  %1787 = vmatmul.f32.gmra.mxu0 %v1748
  %v1788 = vpop.f32.mrf.mxu0
  %v1789 = vadd.f32 0.0, %v1788
  %1790 = vmatmul.f32.gmra.mxu0 %v1751
  %v1791 = vpop.f32.mrf.mxu0
  %v1792 = vadd.f32 0.0, %v1791
  %1793 = vmatmul.f32.gmra.mxu0 %v1754
  %v1794 = vpop.f32.mrf.mxu0
  %v1795 = vadd.f32 0.0, %v1794
  %1796 = vdwg.mxu0
  %v1797 = vsel %vm305, %v1774, %v1795
  %v1798 = vsel %vm305, %v1777, %v1792
  %v1799 = vsel %vm305, %v1780, %v1789
  %v1800 = vsel %vm305, %v1783, %v1786
  %v1801 = vsel %vm305, %v1786, %v1783
  %v1802 = vsel %vm305, %v1789, %v1780
  %v1803 = vsel %vm305, %v1792, %v1777
  %v1804 = vsel %vm305, %v1795, %v1774
  %v1805 = vld [vmem:[%s37] sm:$0x1]
  %v1807 = vperm.slane %v1805, 0
  %v1809 = vadd.f32 %v1797, %v1807
  %v1810 = vadd.f32 %v1798, %v1807
  %v1811 = vadd.f32 %v1799, %v1807
  %v1812 = vadd.f32 %v1800, %v1807
  %v1813 = vadd.f32 %v1801, %v1807
  %v1814 = vadd.f32 %v1802, %v1807
  %v1815 = vadd.f32 %v1803, %v1807
  %v1816 = vadd.f32 %v1804, %v1807
  %1817 = vst.msk [vmem:[#allocation2] sm:$0xff] %vm547, %v1809
  %1818 = vst.msk [vmem:[#allocation2 + $0x8] sm:$0xff] %vm547, %v1810
  %1819 = vst.msk [vmem:[#allocation2 + $0x10] sm:$0xff] %vm547, %v1811
  %1820 = vst.msk [vmem:[#allocation2 + $0x18] sm:$0xff] %vm547, %v1812
  %1821 = vst.msk [vmem:[#allocation2 + $0x20] sm:$0xff] %vm547, %v1813
  %1822 = vst.msk [vmem:[#allocation2 + $0x28] sm:$0xff] %vm547, %v1814
  %1823 = vst.msk [vmem:[#allocation2 + $0x30] sm:$0xff] %vm547, %v1815
  %1824 = vst.msk [vmem:[#allocation2 + $0x38] sm:$0xff] %vm547, %v1816
  %v1825 = vld [vmem:[%s39] sm:$0xff]
  %v1826 = vld [vmem:[%s39 + $0x8] sm:$0xff]
  %v1827 = vld [vmem:[%s39 + $0x10] sm:$0xff]
  %v1828 = vld [vmem:[%s39 + $0x18] sm:$0xff]
  %v1829 = vld [vmem:[%s39 + $0x20] sm:$0xff]
  %v1830 = vld [vmem:[%s39 + $0x28] sm:$0xff]
  %v1831 = vld [vmem:[%s39 + $0x30] sm:$0xff]
  %v1832 = vld [vmem:[%s39 + $0x38] sm:$0xff]
  %1833 = vmatpush.msra.mxu0 0.0
  %1834 = vmatpush.msra.mxu0 0.0
  %1835 = vmatpush.msra.mxu0 0.0
  %1836 = vmatpush.msra.mxu0 0.0
  %1837 = vmatpush.msra.mxu0 0.0
  %1838 = vmatpush.msra.mxu0 0.0
  %1839 = vmatpush.msra.mxu0 0.0
  %1840 = vmatpush.msra.mxu0 0.0
  %1841 = vmatpush.msra.mxu0 %v1832
  %1842 = vmatpush.msra.mxu0 %v1831
  %1843 = vmatpush.msra.mxu0 %v1830
  %1844 = vmatpush.msra.mxu0 %v1829
  %1845 = vmatpush.msra.mxu0 %v1828
  %1846 = vmatpush.msra.mxu0 %v1827
  %1847 = vmatpush.msra.mxu0 %v1826
  %1848 = vmatpush.msra.mxu0 %v1825
  %1849 = vmatmul.f32.gmra.mxu0 %v1733
  %v1850 = vpop.f32.mrf.mxu0
  %v1851 = vadd.f32 0.0, %v1850
  %1852 = vmatmul.f32.gmra.mxu0 %v1736
  %v1853 = vpop.f32.mrf.mxu0
  %v1854 = vadd.f32 0.0, %v1853
  %1855 = vmatmul.f32.gmra.mxu0 %v1739
  %v1856 = vpop.f32.mrf.mxu0
  %v1857 = vadd.f32 0.0, %v1856
  %1858 = vmatmul.f32.gmra.mxu0 %v1742
  %v1859 = vpop.f32.mrf.mxu0
  %v1860 = vadd.f32 0.0, %v1859
  %1861 = vmatmul.f32.gmra.mxu0 %v1745
  %v1862 = vpop.f32.mrf.mxu0
  %v1863 = vadd.f32 0.0, %v1862
  %1864 = vmatmul.f32.gmra.mxu0 %v1748
  %v1865 = vpop.f32.mrf.mxu0
  %v1866 = vadd.f32 0.0, %v1865
  %1867 = vmatmul.f32.gmra.mxu0 %v1751
  %v1868 = vpop.f32.mrf.mxu0
  %v1869 = vadd.f32 0.0, %v1868
  %1870 = vmatmul.f32.gmra.mxu0 %v1754
  %v1871 = vpop.f32.mrf.mxu0
  %v1872 = vadd.f32 0.0, %v1871
  %1873 = vdwg.mxu0
  %v1874 = vsel %vm305, %v1851, %v1872
  %v1875 = vsel %vm305, %v1854, %v1869
  %v1876 = vsel %vm305, %v1857, %v1866
  %v1877 = vsel %vm305, %v1860, %v1863
  %v1878 = vsel %vm305, %v1863, %v1860
  %v1879 = vsel %vm305, %v1866, %v1857
  %v1880 = vsel %vm305, %v1869, %v1854
  %v1881 = vsel %vm305, %v1872, %v1851
  %v1882 = vld [vmem:[%s43] sm:$0x1]
  %v1884 = vperm.slane %v1882, 0
  %v1886 = vadd.f32 %v1874, %v1884
  %v1887 = vadd.f32 %v1875, %v1884
  %v1888 = vadd.f32 %v1876, %v1884
  %v1889 = vadd.f32 %v1877, %v1884
  %v1890 = vadd.f32 %v1878, %v1884
  %v1891 = vadd.f32 %v1879, %v1884
  %v1892 = vadd.f32 %v1880, %v1884
  %v1893 = vadd.f32 %v1881, %v1884
  %1894 = vst.msk [vmem:[#allocation3] sm:$0xff] %vm547, %v1886
  %1895 = vst.msk [vmem:[#allocation3 + $0x8] sm:$0xff] %vm547, %v1887
  %1896 = vst.msk [vmem:[#allocation3 + $0x10] sm:$0xff] %vm547, %v1888
  %1897 = vst.msk [vmem:[#allocation3 + $0x18] sm:$0xff] %vm547, %v1889
  %1898 = vst.msk [vmem:[#allocation3 + $0x20] sm:$0xff] %vm547, %v1890
  %1899 = vst.msk [vmem:[#allocation3 + $0x28] sm:$0xff] %vm547, %v1891
  %1900 = vst.msk [vmem:[#allocation3 + $0x30] sm:$0xff] %vm547, %v1892
  %1901 = vst.msk [vmem:[#allocation3 + $0x38] sm:$0xff] %vm547, %v1893
  %v1902 = vld [vmem:[%s45] sm:$0xff]
  %v1903 = vld [vmem:[%s45 + $0x8] sm:$0xff]
  %v1904 = vld [vmem:[%s45 + $0x10] sm:$0xff]
  %v1905 = vld [vmem:[%s45 + $0x18] sm:$0xff]
  %v1906 = vld [vmem:[%s45 + $0x20] sm:$0xff]
  %v1907 = vld [vmem:[%s45 + $0x28] sm:$0xff]
  %v1908 = vld [vmem:[%s45 + $0x30] sm:$0xff]
  %v1909 = vld [vmem:[%s45 + $0x38] sm:$0xff]
  %1910 = vmatpush.msra.mxu0 0.0
  %1911 = vmatpush.msra.mxu0 0.0
  %1912 = vmatpush.msra.mxu0 0.0
  %1913 = vmatpush.msra.mxu0 0.0
  %1914 = vmatpush.msra.mxu0 0.0
  %1915 = vmatpush.msra.mxu0 0.0
  %1916 = vmatpush.msra.mxu0 0.0
  %1917 = vmatpush.msra.mxu0 0.0
  %1918 = vmatpush.msra.mxu0 %v1909
  %1919 = vmatpush.msra.mxu0 %v1908
  %1920 = vmatpush.msra.mxu0 %v1907
  %1921 = vmatpush.msra.mxu0 %v1906
  %1922 = vmatpush.msra.mxu0 %v1905
  %1923 = vmatpush.msra.mxu0 %v1904
  %1924 = vmatpush.msra.mxu0 %v1903
  %1925 = vmatpush.msra.mxu0 %v1902
  %1926 = vmatmul.f32.gmra.mxu0 %v1733
  %v1927 = vpop.f32.mrf.mxu0
  %v1928 = vadd.f32 0.0, %v1927
  %1929 = vmatmul.f32.gmra.mxu0 %v1736
  %v1930 = vpop.f32.mrf.mxu0
  %v1931 = vadd.f32 0.0, %v1930
  %1932 = vmatmul.f32.gmra.mxu0 %v1739
  %v1933 = vpop.f32.mrf.mxu0
  %v1934 = vadd.f32 0.0, %v1933
  %1935 = vmatmul.f32.gmra.mxu0 %v1742
  %v1936 = vpop.f32.mrf.mxu0
  %v1937 = vadd.f32 0.0, %v1936
  %1938 = vmatmul.f32.gmra.mxu0 %v1745
  %v1939 = vpop.f32.mrf.mxu0
  %v1940 = vadd.f32 0.0, %v1939
  %1941 = vmatmul.f32.gmra.mxu0 %v1748
  %v1942 = vpop.f32.mrf.mxu0
  %v1943 = vadd.f32 0.0, %v1942
  %1944 = vmatmul.f32.gmra.mxu0 %v1751
  %v1945 = vpop.f32.mrf.mxu0
  %v1946 = vadd.f32 0.0, %v1945
  %1947 = vmatmul.f32.gmra.mxu0 %v1754
  %v1948 = vpop.f32.mrf.mxu0
  %v1949 = vadd.f32 0.0, %v1948
  %1950 = vdwg.mxu0
  %v1951 = vsel %vm305, %v1928, %v1949
  %v1952 = vsel %vm305, %v1931, %v1946
  %v1953 = vsel %vm305, %v1934, %v1943
  %v1954 = vsel %vm305, %v1937, %v1940
  %v1955 = vsel %vm305, %v1940, %v1937
  %v1956 = vsel %vm305, %v1943, %v1934
  %v1957 = vsel %vm305, %v1946, %v1931
  %v1958 = vsel %vm305, %v1949, %v1928
  %v1959 = vld [vmem:[%s49] sm:$0x1]
  %v1961 = vperm.slane %v1959, 0
  %v1963 = vadd.f32 %v1951, %v1961
  %v1964 = vadd.f32 %v1952, %v1961
  %v1965 = vadd.f32 %v1953, %v1961
  %v1966 = vadd.f32 %v1954, %v1961
  %v1967 = vadd.f32 %v1955, %v1961
  %v1968 = vadd.f32 %v1956, %v1961
  %v1969 = vadd.f32 %v1957, %v1961
  %v1970 = vadd.f32 %v1958, %v1961
  %1971 = vst.msk [vmem:[#allocation4] sm:$0xff] %vm547, %v1963
  %1972 = vst.msk [vmem:[#allocation4 + $0x8] sm:$0xff] %vm547, %v1964
  %1973 = vst.msk [vmem:[#allocation4 + $0x10] sm:$0xff] %vm547, %v1965
  %1974 = vst.msk [vmem:[#allocation4 + $0x18] sm:$0xff] %vm547, %v1966
  %1975 = vst.msk [vmem:[#allocation4 + $0x20] sm:$0xff] %vm547, %v1967
  %1976 = vst.msk [vmem:[#allocation4 + $0x28] sm:$0xff] %vm547, %v1968
  %1977 = vst.msk [vmem:[#allocation4 + $0x30] sm:$0xff] %vm547, %v1969
  %1978 = vst.msk [vmem:[#allocation4 + $0x38] sm:$0xff] %vm547, %v1970
  %v1979 = vld [vmem:[%s35] sm:$0xff]
  %v1980 = vld [vmem:[%s35 + $0x8] sm:$0xff]
  %v1981 = vld [vmem:[%s35 + $0x10] sm:$0xff]
  %v1982 = vld [vmem:[%s35 + $0x18] sm:$0xff]
  %v1983 = vld [vmem:[%s35 + $0x20] sm:$0xff]
  %v1984 = vld [vmem:[%s35 + $0x28] sm:$0xff]
  %v1985 = vld [vmem:[%s35 + $0x30] sm:$0xff]
  %v1986 = vld [vmem:[%s35 + $0x38] sm:$0xff]
  %v1987 = vld [vmem:[%s41] sm:$0xff]
  %v1988 = vld [vmem:[%s41 + $0x8] sm:$0xff]
  %v1989 = vld [vmem:[%s41 + $0x10] sm:$0xff]
  %v1990 = vld [vmem:[%s41 + $0x18] sm:$0xff]
  %v1991 = vld [vmem:[%s41 + $0x20] sm:$0xff]
  %v1992 = vld [vmem:[%s41 + $0x28] sm:$0xff]
  %v1993 = vld [vmem:[%s41 + $0x30] sm:$0xff]
  %v1994 = vld [vmem:[%s41 + $0x38] sm:$0xff]
  %v1995 = vld [vmem:[%s47] sm:$0xff]
  %v1996 = vld [vmem:[%s47 + $0x8] sm:$0xff]
  %v1997 = vld [vmem:[%s47 + $0x10] sm:$0xff]
  %v1998 = vld [vmem:[%s47 + $0x18] sm:$0xff]
  %v1999 = vld [vmem:[%s47 + $0x20] sm:$0xff]
  %v2000 = vld [vmem:[%s47 + $0x28] sm:$0xff]
  %v2001 = vld [vmem:[%s47 + $0x30] sm:$0xff]
  %v2002 = vld [vmem:[%s47 + $0x38] sm:$0xff]
  %v2003 = vld [vmem:[%s51] sm:$0x1]
  %v2005 = vperm.slane %v2003, 0
  %2007 = vmatpush.msra.mxu0 0.0
  %2008 = vmatpush.msra.mxu0 0.0
  %2009 = vmatpush.msra.mxu0 0.0
  %2010 = vmatpush.msra.mxu0 0.0
  %2011 = vmatpush.msra.mxu0 0.0
  %2012 = vmatpush.msra.mxu0 0.0
  %2013 = vmatpush.msra.mxu0 0.0
  %2014 = vmatpush.msra.mxu0 0.0
  %2015 = vmatpush.msra.mxu0 %v1986
  %2016 = vmatpush.msra.mxu0 %v1985
  %2017 = vmatpush.msra.mxu0 %v1984
  %2018 = vmatpush.msra.mxu0 %v1983
  %2019 = vmatpush.msra.mxu0 %v1982
  %2020 = vmatpush.msra.mxu0 %v1981
  %2021 = vmatpush.msra.mxu0 %v1980
  %2022 = vmatpush.msra.mxu0 %v1979
  %2023 = vmatmul.f32.gmra.mxu0 %v821
  %v2024 = vpop.f32.mrf.mxu0
  %v2025 = vadd.f32 0.0, %v2024
  %2026 = vdwg.mxu0
  %2027 = vmatpush.msra.mxu0 0.0
  %2028 = vmatpush.msra.mxu0 0.0
  %2029 = vmatpush.msra.mxu0 0.0
  %2030 = vmatpush.msra.mxu0 0.0
  %2031 = vmatpush.msra.mxu0 0.0
  %2032 = vmatpush.msra.mxu0 0.0
  %2033 = vmatpush.msra.mxu0 0.0
  %2034 = vmatpush.msra.mxu0 0.0
  %2035 = vmatpush.msra.mxu0 %v1994
  %2036 = vmatpush.msra.mxu0 %v1993
  %2037 = vmatpush.msra.mxu0 %v1992
  %2038 = vmatpush.msra.mxu0 %v1991
  %2039 = vmatpush.msra.mxu0 %v1990
  %2040 = vmatpush.msra.mxu0 %v1989
  %2041 = vmatpush.msra.mxu0 %v1988
  %2042 = vmatpush.msra.mxu0 %v1987
  %2043 = vmatmul.f32.gmra.mxu0 %v821
  %v2044 = vpop.f32.mrf.mxu0
  %v2045 = vadd.f32 0.0, %v2044
  %2046 = vdwg.mxu0
  %v2047 = vld [vmem:[#allocation2] sm:$0xff]
  %v2048 = vadd.f32 %v2047, %v2025
  %v2049 = vxor.u32 %v2048, 2147483648
  %v2050 = vmul.f32 %v2049, 1.442695
  %v2051 = vpow.pop %v2050
  %v2052 = vadd.f32 %v2051, 1.0
  %v2053 = vrcp.pop %v2052
  %v2054 = vmul.f32 %v2052, %v2053
  %v2055 = vsub.f32 1.0, %v2054
  %v2056 = vmul.f32 %v2053, %v2055
  %v2057 = vadd.f32 %v2053, %v2056
  %vm2058 = vweird.f32 %v2052
  %vm2059 = vweird.f32 %v2053
  %vm2060 = vmor %vm2058, %vm2059
  %v2061 = vsel %vm2060, %v2053, %v2057
  %v2062 = vand.u32 2147483647, %v2052
  %vm2063 = vcmp.eq.f32.partialorder %v2062, 8.507059e+37
  %v2064 = vand.u32 %v2052, 2147483648
  %v2065 = vor.u32 1.1754944e-38, %v2064
  %v2066 = vsel %vm2063, %v2065, %v2061
  %v2067 = vmul.f32 1.0, %v2066
  %v2068 = vld [vmem:[#allocation3] sm:$0xff]
  %v2069 = vadd.f32 %v2068, %v2045
  %v2070 = vxor.u32 %v2069, 2147483648
  %v2071 = vmul.f32 %v2070, 1.442695
  %v2072 = vpow.pop %v2071
  %v2073 = vadd.f32 %v2072, 1.0
  %v2074 = vrcp.pop %v2073
  %v2075 = vmul.f32 %v2073, %v2074
  %v2076 = vsub.f32 1.0, %v2075
  %v2077 = vmul.f32 %v2074, %v2076
  %v2078 = vadd.f32 %v2074, %v2077
  %vm2079 = vweird.f32 %v2073
  %vm2080 = vweird.f32 %v2074
  %vm2081 = vmor %vm2079, %vm2080
  %v2082 = vsel %vm2081, %v2074, %v2078
  %v2083 = vand.u32 2147483647, %v2073
  %vm2084 = vcmp.eq.f32.partialorder %v2083, 8.507059e+37
  %v2085 = vand.u32 %v2073, 2147483648
  %v2086 = vor.u32 1.1754944e-38, %v2085
  %v2087 = vsel %vm2084, %v2086, %v2082
  %v2088 = vmul.f32 1.0, %v2087
  %v2089 = vld [vmem:[#allocation4] sm:$0xff]
  %2090 = vmatpush.msra.mxu0 0.0
  %2091 = vmatpush.msra.mxu0 0.0
  %2092 = vmatpush.msra.mxu0 0.0
  %2093 = vmatpush.msra.mxu0 0.0
  %2094 = vmatpush.msra.mxu0 0.0
  %2095 = vmatpush.msra.mxu0 0.0
  %2096 = vmatpush.msra.mxu0 0.0
  %2097 = vmatpush.msra.mxu0 0.0
  %2098 = vmatpush.msra.mxu0 %v2002
  %2099 = vmatpush.msra.mxu0 %v2001
  %2100 = vmatpush.msra.mxu0 %v2000
  %2101 = vmatpush.msra.mxu0 %v1999
  %2102 = vmatpush.msra.mxu0 %v1998
  %2103 = vmatpush.msra.mxu0 %v1997
  %2104 = vmatpush.msra.mxu0 %v1996
  %2105 = vmatpush.msra.mxu0 %v1995
  %2106 = vmatmul.f32.gmra.mxu0 %v821
  %v2107 = vpop.f32.mrf.mxu0
  %v2108 = vadd.f32 %v2005, %v2107
  %2109 = vdwg.mxu0
  %v2110 = vmul.f32 %v2067, %v2108
  %v2111 = vadd.f32 %v2089, %v2110
  %v2112 = vtanh.pop %v2111
  %v2113 = vsub.f32 0.0, %v2112
  %v2114 = vmul.f32 %v2088, %v2113
  %v2115 = vadd.f32 %v2112, %v2114
  %v2117 = vsel %vm547, %v2115, 0
  %2119 = vmatpush.msra.mxu0 0.0
  %2120 = vmatpush.msra.mxu0 0.0
  %2121 = vmatpush.msra.mxu0 0.0
  %2122 = vmatpush.msra.mxu0 0.0
  %2123 = vmatpush.msra.mxu0 0.0
  %2124 = vmatpush.msra.mxu0 0.0
  %2125 = vmatpush.msra.mxu0 0.0
  %2126 = vmatpush.msra.mxu0 0.0
  %2127 = vmatpush.msra.mxu0 %v1986
  %2128 = vmatpush.msra.mxu0 %v1985
  %2129 = vmatpush.msra.mxu0 %v1984
  %2130 = vmatpush.msra.mxu0 %v1983
  %2131 = vmatpush.msra.mxu0 %v1982
  %2132 = vmatpush.msra.mxu0 %v1981
  %2133 = vmatpush.msra.mxu0 %v1980
  %2134 = vmatpush.msra.mxu0 %v1979
  %2135 = vmatmul.f32.gmra.mxu0 %v2117
  %v2136 = vpop.f32.mrf.mxu0
  %v2137 = vadd.f32 0.0, %v2136
  %2138 = vdwg.mxu0
  %2139 = vmatpush.msra.mxu0 0.0
  %2140 = vmatpush.msra.mxu0 0.0
  %2141 = vmatpush.msra.mxu0 0.0
  %2142 = vmatpush.msra.mxu0 0.0
  %2143 = vmatpush.msra.mxu0 0.0
  %2144 = vmatpush.msra.mxu0 0.0
  %2145 = vmatpush.msra.mxu0 0.0
  %2146 = vmatpush.msra.mxu0 0.0
  %2147 = vmatpush.msra.mxu0 %v1994
  %2148 = vmatpush.msra.mxu0 %v1993
  %2149 = vmatpush.msra.mxu0 %v1992
  %2150 = vmatpush.msra.mxu0 %v1991
  %2151 = vmatpush.msra.mxu0 %v1990
  %2152 = vmatpush.msra.mxu0 %v1989
  %2153 = vmatpush.msra.mxu0 %v1988
  %2154 = vmatpush.msra.mxu0 %v1987
  %2155 = vmatmul.f32.gmra.mxu0 %v2117
  %v2156 = vpop.f32.mrf.mxu0
  %v2157 = vadd.f32 0.0, %v2156
  %2158 = vdwg.mxu0
  %v2159 = vld [vmem:[#allocation2 + $0x8] sm:$0xff]
  %v2160 = vadd.f32 %v2159, %v2137
  %v2161 = vxor.u32 %v2160, 2147483648
  %v2162 = vmul.f32 %v2161, 1.442695
  %v2163 = vpow.pop %v2162
  %v2164 = vadd.f32 %v2163, 1.0
  %v2165 = vrcp.pop %v2164
  %v2166 = vmul.f32 %v2164, %v2165
  %v2167 = vsub.f32 1.0, %v2166
  %v2168 = vmul.f32 %v2165, %v2167
  %v2169 = vadd.f32 %v2165, %v2168
  %vm2170 = vweird.f32 %v2164
  %vm2171 = vweird.f32 %v2165
  %vm2172 = vmor %vm2170, %vm2171
  %v2173 = vsel %vm2172, %v2165, %v2169
  %v2174 = vand.u32 2147483647, %v2164
  %vm2175 = vcmp.eq.f32.partialorder %v2174, 8.507059e+37
  %v2176 = vand.u32 %v2164, 2147483648
  %v2177 = vor.u32 1.1754944e-38, %v2176
  %v2178 = vsel %vm2175, %v2177, %v2173
  %v2179 = vmul.f32 1.0, %v2178
  %v2180 = vld [vmem:[#allocation3 + $0x8] sm:$0xff]
  %v2181 = vadd.f32 %v2180, %v2157
  %v2182 = vxor.u32 %v2181, 2147483648
  %v2183 = vmul.f32 %v2182, 1.442695
  %v2184 = vpow.pop %v2183
  %v2185 = vadd.f32 %v2184, 1.0
  %v2186 = vrcp.pop %v2185
  %v2187 = vmul.f32 %v2185, %v2186
  %v2188 = vsub.f32 1.0, %v2187
  %v2189 = vmul.f32 %v2186, %v2188
  %v2190 = vadd.f32 %v2186, %v2189
  %vm2191 = vweird.f32 %v2185
  %vm2192 = vweird.f32 %v2186
  %vm2193 = vmor %vm2191, %vm2192
  %v2194 = vsel %vm2193, %v2186, %v2190
  %v2195 = vand.u32 2147483647, %v2185
  %vm2196 = vcmp.eq.f32.partialorder %v2195, 8.507059e+37
  %v2197 = vand.u32 %v2185, 2147483648
  %v2198 = vor.u32 1.1754944e-38, %v2197
  %v2199 = vsel %vm2196, %v2198, %v2194
  %v2200 = vmul.f32 1.0, %v2199
  %v2201 = vld [vmem:[#allocation4 + $0x8] sm:$0xff]
  %2202 = vmatpush.msra.mxu0 0.0
  %2203 = vmatpush.msra.mxu0 0.0
  %2204 = vmatpush.msra.mxu0 0.0
  %2205 = vmatpush.msra.mxu0 0.0
  %2206 = vmatpush.msra.mxu0 0.0
  %2207 = vmatpush.msra.mxu0 0.0
  %2208 = vmatpush.msra.mxu0 0.0
  %2209 = vmatpush.msra.mxu0 0.0
  %2210 = vmatpush.msra.mxu0 %v2002
  %2211 = vmatpush.msra.mxu0 %v2001
  %2212 = vmatpush.msra.mxu0 %v2000
  %2213 = vmatpush.msra.mxu0 %v1999
  %2214 = vmatpush.msra.mxu0 %v1998
  %2215 = vmatpush.msra.mxu0 %v1997
  %2216 = vmatpush.msra.mxu0 %v1996
  %2217 = vmatpush.msra.mxu0 %v1995
  %2218 = vmatmul.f32.gmra.mxu0 %v2117
  %v2219 = vpop.f32.mrf.mxu0
  %v2220 = vadd.f32 %v2005, %v2219
  %2221 = vdwg.mxu0
  %v2222 = vmul.f32 %v2179, %v2220
  %v2223 = vadd.f32 %v2201, %v2222
  %v2224 = vtanh.pop %v2223
  %v2225 = vsub.f32 %v2115, %v2224
  %v2226 = vmul.f32 %v2200, %v2225
  %v2227 = vadd.f32 %v2224, %v2226
  %v2229 = vsel %vm547, %v2227, 0
  %2231 = vmatpush.msra.mxu0 0.0
  %2232 = vmatpush.msra.mxu0 0.0
  %2233 = vmatpush.msra.mxu0 0.0
  %2234 = vmatpush.msra.mxu0 0.0
  %2235 = vmatpush.msra.mxu0 0.0
  %2236 = vmatpush.msra.mxu0 0.0
  %2237 = vmatpush.msra.mxu0 0.0
  %2238 = vmatpush.msra.mxu0 0.0
  %2239 = vmatpush.msra.mxu0 %v1986
  %2240 = vmatpush.msra.mxu0 %v1985
  %2241 = vmatpush.msra.mxu0 %v1984
  %2242 = vmatpush.msra.mxu0 %v1983
  %2243 = vmatpush.msra.mxu0 %v1982
  %2244 = vmatpush.msra.mxu0 %v1981
  %2245 = vmatpush.msra.mxu0 %v1980
  %2246 = vmatpush.msra.mxu0 %v1979
  %2247 = vmatmul.f32.gmra.mxu0 %v2229
  %v2248 = vpop.f32.mrf.mxu0
  %v2249 = vadd.f32 0.0, %v2248
  %2250 = vdwg.mxu0
  %2251 = vmatpush.msra.mxu0 0.0
  %2252 = vmatpush.msra.mxu0 0.0
  %2253 = vmatpush.msra.mxu0 0.0
  %2254 = vmatpush.msra.mxu0 0.0
  %2255 = vmatpush.msra.mxu0 0.0
  %2256 = vmatpush.msra.mxu0 0.0
  %2257 = vmatpush.msra.mxu0 0.0
  %2258 = vmatpush.msra.mxu0 0.0
  %2259 = vmatpush.msra.mxu0 %v1994
  %2260 = vmatpush.msra.mxu0 %v1993
  %2261 = vmatpush.msra.mxu0 %v1992
  %2262 = vmatpush.msra.mxu0 %v1991
  %2263 = vmatpush.msra.mxu0 %v1990
  %2264 = vmatpush.msra.mxu0 %v1989
  %2265 = vmatpush.msra.mxu0 %v1988
  %2266 = vmatpush.msra.mxu0 %v1987
  %2267 = vmatmul.f32.gmra.mxu0 %v2229
  %v2268 = vpop.f32.mrf.mxu0
  %v2269 = vadd.f32 0.0, %v2268
  %2270 = vdwg.mxu0
  %v2271 = vld [vmem:[#allocation2 + $0x10] sm:$0xff]
  %v2272 = vadd.f32 %v2271, %v2249
  %v2273 = vxor.u32 %v2272, 2147483648
  %v2274 = vmul.f32 %v2273, 1.442695
  %v2275 = vpow.pop %v2274
  %v2276 = vadd.f32 %v2275, 1.0
  %v2277 = vrcp.pop %v2276
  %v2278 = vmul.f32 %v2276, %v2277
  %v2279 = vsub.f32 1.0, %v2278
  %v2280 = vmul.f32 %v2277, %v2279
  %v2281 = vadd.f32 %v2277, %v2280
  %vm2282 = vweird.f32 %v2276
  %vm2283 = vweird.f32 %v2277
  %vm2284 = vmor %vm2282, %vm2283
  %v2285 = vsel %vm2284, %v2277, %v2281
  %v2286 = vand.u32 2147483647, %v2276
  %vm2287 = vcmp.eq.f32.partialorder %v2286, 8.507059e+37
  %v2288 = vand.u32 %v2276, 2147483648
  %v2289 = vor.u32 1.1754944e-38, %v2288
  %v2290 = vsel %vm2287, %v2289, %v2285
  %v2291 = vmul.f32 1.0, %v2290
  %v2292 = vld [vmem:[#allocation3 + $0x10] sm:$0xff]
  %v2293 = vadd.f32 %v2292, %v2269
  %v2294 = vxor.u32 %v2293, 2147483648
  %v2295 = vmul.f32 %v2294, 1.442695
  %v2296 = vpow.pop %v2295
  %v2297 = vadd.f32 %v2296, 1.0
  %v2298 = vrcp.pop %v2297
  %v2299 = vmul.f32 %v2297, %v2298
  %v2300 = vsub.f32 1.0, %v2299
  %v2301 = vmul.f32 %v2298, %v2300
  %v2302 = vadd.f32 %v2298, %v2301
  %vm2303 = vweird.f32 %v2297
  %vm2304 = vweird.f32 %v2298
  %vm2305 = vmor %vm2303, %vm2304
  %v2306 = vsel %vm2305, %v2298, %v2302
  %v2307 = vand.u32 2147483647, %v2297
  %vm2308 = vcmp.eq.f32.partialorder %v2307, 8.507059e+37
  %v2309 = vand.u32 %v2297, 2147483648
  %v2310 = vor.u32 1.1754944e-38, %v2309
  %v2311 = vsel %vm2308, %v2310, %v2306
  %v2312 = vmul.f32 1.0, %v2311
  %v2313 = vld [vmem:[#allocation4 + $0x10] sm:$0xff]
  %2314 = vmatpush.msra.mxu0 0.0
  %2315 = vmatpush.msra.mxu0 0.0
  %2316 = vmatpush.msra.mxu0 0.0
  %2317 = vmatpush.msra.mxu0 0.0
  %2318 = vmatpush.msra.mxu0 0.0
  %2319 = vmatpush.msra.mxu0 0.0
  %2320 = vmatpush.msra.mxu0 0.0
  %2321 = vmatpush.msra.mxu0 0.0
  %2322 = vmatpush.msra.mxu0 %v2002
  %2323 = vmatpush.msra.mxu0 %v2001
  %2324 = vmatpush.msra.mxu0 %v2000
  %2325 = vmatpush.msra.mxu0 %v1999
  %2326 = vmatpush.msra.mxu0 %v1998
  %2327 = vmatpush.msra.mxu0 %v1997
  %2328 = vmatpush.msra.mxu0 %v1996
  %2329 = vmatpush.msra.mxu0 %v1995
  %2330 = vmatmul.f32.gmra.mxu0 %v2229
  %v2331 = vpop.f32.mrf.mxu0
  %v2332 = vadd.f32 %v2005, %v2331
  %2333 = vdwg.mxu0
  %v2334 = vmul.f32 %v2291, %v2332
  %v2335 = vadd.f32 %v2313, %v2334
  %v2336 = vtanh.pop %v2335
  %v2337 = vsub.f32 %v2227, %v2336
  %v2338 = vmul.f32 %v2312, %v2337
  %v2339 = vadd.f32 %v2336, %v2338
  %v2341 = vsel %vm547, %v2339, 0
  %2343 = vmatpush.msra.mxu0 0.0
  %2344 = vmatpush.msra.mxu0 0.0
  %2345 = vmatpush.msra.mxu0 0.0
  %2346 = vmatpush.msra.mxu0 0.0
  %2347 = vmatpush.msra.mxu0 0.0
  %2348 = vmatpush.msra.mxu0 0.0
  %2349 = vmatpush.msra.mxu0 0.0
  %2350 = vmatpush.msra.mxu0 0.0
  %2351 = vmatpush.msra.mxu0 %v1986
  %2352 = vmatpush.msra.mxu0 %v1985
  %2353 = vmatpush.msra.mxu0 %v1984
  %2354 = vmatpush.msra.mxu0 %v1983
  %2355 = vmatpush.msra.mxu0 %v1982
  %2356 = vmatpush.msra.mxu0 %v1981
  %2357 = vmatpush.msra.mxu0 %v1980
  %2358 = vmatpush.msra.mxu0 %v1979
  %2359 = vmatmul.f32.gmra.mxu0 %v2341
  %v2360 = vpop.f32.mrf.mxu0
  %v2361 = vadd.f32 0.0, %v2360
  %2362 = vdwg.mxu0
  %2363 = vmatpush.msra.mxu0 0.0
  %2364 = vmatpush.msra.mxu0 0.0
  %2365 = vmatpush.msra.mxu0 0.0
  %2366 = vmatpush.msra.mxu0 0.0
  %2367 = vmatpush.msra.mxu0 0.0
  %2368 = vmatpush.msra.mxu0 0.0
  %2369 = vmatpush.msra.mxu0 0.0
  %2370 = vmatpush.msra.mxu0 0.0
  %2371 = vmatpush.msra.mxu0 %v1994
  %2372 = vmatpush.msra.mxu0 %v1993
  %2373 = vmatpush.msra.mxu0 %v1992
  %2374 = vmatpush.msra.mxu0 %v1991
  %2375 = vmatpush.msra.mxu0 %v1990
  %2376 = vmatpush.msra.mxu0 %v1989
  %2377 = vmatpush.msra.mxu0 %v1988
  %2378 = vmatpush.msra.mxu0 %v1987
  %2379 = vmatmul.f32.gmra.mxu0 %v2341
  %v2380 = vpop.f32.mrf.mxu0
  %v2381 = vadd.f32 0.0, %v2380
  %2382 = vdwg.mxu0
  %v2383 = vld [vmem:[#allocation2 + $0x18] sm:$0xff]
  %v2384 = vadd.f32 %v2383, %v2361
  %v2385 = vxor.u32 %v2384, 2147483648
  %v2386 = vmul.f32 %v2385, 1.442695
  %v2387 = vpow.pop %v2386
  %v2388 = vadd.f32 %v2387, 1.0
  %v2389 = vrcp.pop %v2388
  %v2390 = vmul.f32 %v2388, %v2389
  %v2391 = vsub.f32 1.0, %v2390
  %v2392 = vmul.f32 %v2389, %v2391
  %v2393 = vadd.f32 %v2389, %v2392
  %vm2394 = vweird.f32 %v2388
  %vm2395 = vweird.f32 %v2389
  %vm2396 = vmor %vm2394, %vm2395
  %v2397 = vsel %vm2396, %v2389, %v2393
  %v2398 = vand.u32 2147483647, %v2388
  %vm2399 = vcmp.eq.f32.partialorder %v2398, 8.507059e+37
  %v2400 = vand.u32 %v2388, 2147483648
  %v2401 = vor.u32 1.1754944e-38, %v2400
  %v2402 = vsel %vm2399, %v2401, %v2397
  %v2403 = vmul.f32 1.0, %v2402
  %v2404 = vld [vmem:[#allocation3 + $0x18] sm:$0xff]
  %v2405 = vadd.f32 %v2404, %v2381
  %v2406 = vxor.u32 %v2405, 2147483648
  %v2407 = vmul.f32 %v2406, 1.442695
  %v2408 = vpow.pop %v2407
  %v2409 = vadd.f32 %v2408, 1.0
  %v2410 = vrcp.pop %v2409
  %v2411 = vmul.f32 %v2409, %v2410
  %v2412 = vsub.f32 1.0, %v2411
  %v2413 = vmul.f32 %v2410, %v2412
  %v2414 = vadd.f32 %v2410, %v2413
  %vm2415 = vweird.f32 %v2409
  %vm2416 = vweird.f32 %v2410
  %vm2417 = vmor %vm2415, %vm2416
  %v2418 = vsel %vm2417, %v2410, %v2414
  %v2419 = vand.u32 2147483647, %v2409
  %vm2420 = vcmp.eq.f32.partialorder %v2419, 8.507059e+37
  %v2421 = vand.u32 %v2409, 2147483648
  %v2422 = vor.u32 1.1754944e-38, %v2421
  %v2423 = vsel %vm2420, %v2422, %v2418
  %v2424 = vmul.f32 1.0, %v2423
  %v2425 = vld [vmem:[#allocation4 + $0x18] sm:$0xff]
  %2426 = vmatpush.msra.mxu0 0.0
  %2427 = vmatpush.msra.mxu0 0.0
  %2428 = vmatpush.msra.mxu0 0.0
  %2429 = vmatpush.msra.mxu0 0.0
  %2430 = vmatpush.msra.mxu0 0.0
  %2431 = vmatpush.msra.mxu0 0.0
  %2432 = vmatpush.msra.mxu0 0.0
  %2433 = vmatpush.msra.mxu0 0.0
  %2434 = vmatpush.msra.mxu0 %v2002
  %2435 = vmatpush.msra.mxu0 %v2001
  %2436 = vmatpush.msra.mxu0 %v2000
  %2437 = vmatpush.msra.mxu0 %v1999
  %2438 = vmatpush.msra.mxu0 %v1998
  %2439 = vmatpush.msra.mxu0 %v1997
  %2440 = vmatpush.msra.mxu0 %v1996
  %2441 = vmatpush.msra.mxu0 %v1995
  %2442 = vmatmul.f32.gmra.mxu0 %v2341
  %v2443 = vpop.f32.mrf.mxu0
  %v2444 = vadd.f32 %v2005, %v2443
  %2445 = vdwg.mxu0
  %v2446 = vmul.f32 %v2403, %v2444
  %v2447 = vadd.f32 %v2425, %v2446
  %v2448 = vtanh.pop %v2447
  %v2449 = vsub.f32 %v2339, %v2448
  %v2450 = vmul.f32 %v2424, %v2449
  %v2451 = vadd.f32 %v2448, %v2450
  %v2453 = vsel %vm547, %v2451, 0
  %2455 = vmatpush.msra.mxu0 0.0
  %2456 = vmatpush.msra.mxu0 0.0
  %2457 = vmatpush.msra.mxu0 0.0
  %2458 = vmatpush.msra.mxu0 0.0
  %2459 = vmatpush.msra.mxu0 0.0
  %2460 = vmatpush.msra.mxu0 0.0
  %2461 = vmatpush.msra.mxu0 0.0
  %2462 = vmatpush.msra.mxu0 0.0
  %2463 = vmatpush.msra.mxu0 %v1986
  %2464 = vmatpush.msra.mxu0 %v1985
  %2465 = vmatpush.msra.mxu0 %v1984
  %2466 = vmatpush.msra.mxu0 %v1983
  %2467 = vmatpush.msra.mxu0 %v1982
  %2468 = vmatpush.msra.mxu0 %v1981
  %2469 = vmatpush.msra.mxu0 %v1980
  %2470 = vmatpush.msra.mxu0 %v1979
  %2471 = vmatmul.f32.gmra.mxu0 %v2453
  %v2472 = vpop.f32.mrf.mxu0
  %v2473 = vadd.f32 0.0, %v2472
  %2474 = vdwg.mxu0
  %2475 = vmatpush.msra.mxu0 0.0
  %2476 = vmatpush.msra.mxu0 0.0
  %2477 = vmatpush.msra.mxu0 0.0
  %2478 = vmatpush.msra.mxu0 0.0
  %2479 = vmatpush.msra.mxu0 0.0
  %2480 = vmatpush.msra.mxu0 0.0
  %2481 = vmatpush.msra.mxu0 0.0
  %2482 = vmatpush.msra.mxu0 0.0
  %2483 = vmatpush.msra.mxu0 %v1994
  %2484 = vmatpush.msra.mxu0 %v1993
  %2485 = vmatpush.msra.mxu0 %v1992
  %2486 = vmatpush.msra.mxu0 %v1991
  %2487 = vmatpush.msra.mxu0 %v1990
  %2488 = vmatpush.msra.mxu0 %v1989
  %2489 = vmatpush.msra.mxu0 %v1988
  %2490 = vmatpush.msra.mxu0 %v1987
  %2491 = vmatmul.f32.gmra.mxu0 %v2453
  %v2492 = vpop.f32.mrf.mxu0
  %v2493 = vadd.f32 0.0, %v2492
  %2494 = vdwg.mxu0
  %v2495 = vld [vmem:[#allocation2 + $0x20] sm:$0xff]
  %v2496 = vadd.f32 %v2495, %v2473
  %v2497 = vxor.u32 %v2496, 2147483648
  %v2498 = vmul.f32 %v2497, 1.442695
  %v2499 = vpow.pop %v2498
  %v2500 = vadd.f32 %v2499, 1.0
  %v2501 = vrcp.pop %v2500
  %v2502 = vmul.f32 %v2500, %v2501
  %v2503 = vsub.f32 1.0, %v2502
  %v2504 = vmul.f32 %v2501, %v2503
  %v2505 = vadd.f32 %v2501, %v2504
  %vm2506 = vweird.f32 %v2500
  %vm2507 = vweird.f32 %v2501
  %vm2508 = vmor %vm2506, %vm2507
  %v2509 = vsel %vm2508, %v2501, %v2505
  %v2510 = vand.u32 2147483647, %v2500
  %vm2511 = vcmp.eq.f32.partialorder %v2510, 8.507059e+37
  %v2512 = vand.u32 %v2500, 2147483648
  %v2513 = vor.u32 1.1754944e-38, %v2512
  %v2514 = vsel %vm2511, %v2513, %v2509
  %v2515 = vmul.f32 1.0, %v2514
  %v2516 = vld [vmem:[#allocation3 + $0x20] sm:$0xff]
  %v2517 = vadd.f32 %v2516, %v2493
  %v2518 = vxor.u32 %v2517, 2147483648
  %v2519 = vmul.f32 %v2518, 1.442695
  %v2520 = vpow.pop %v2519
  %v2521 = vadd.f32 %v2520, 1.0
  %v2522 = vrcp.pop %v2521
  %v2523 = vmul.f32 %v2521, %v2522
  %v2524 = vsub.f32 1.0, %v2523
  %v2525 = vmul.f32 %v2522, %v2524
  %v2526 = vadd.f32 %v2522, %v2525
  %vm2527 = vweird.f32 %v2521
  %vm2528 = vweird.f32 %v2522
  %vm2529 = vmor %vm2527, %vm2528
  %v2530 = vsel %vm2529, %v2522, %v2526
  %v2531 = vand.u32 2147483647, %v2521
  %vm2532 = vcmp.eq.f32.partialorder %v2531, 8.507059e+37
  %v2533 = vand.u32 %v2521, 2147483648
  %v2534 = vor.u32 1.1754944e-38, %v2533
  %v2535 = vsel %vm2532, %v2534, %v2530
  %v2536 = vmul.f32 1.0, %v2535
  %v2537 = vld [vmem:[#allocation4 + $0x20] sm:$0xff]
  %2538 = vmatpush.msra.mxu0 0.0
  %2539 = vmatpush.msra.mxu0 0.0
  %2540 = vmatpush.msra.mxu0 0.0
  %2541 = vmatpush.msra.mxu0 0.0
  %2542 = vmatpush.msra.mxu0 0.0
  %2543 = vmatpush.msra.mxu0 0.0
  %2544 = vmatpush.msra.mxu0 0.0
  %2545 = vmatpush.msra.mxu0 0.0
  %2546 = vmatpush.msra.mxu0 %v2002
  %2547 = vmatpush.msra.mxu0 %v2001
  %2548 = vmatpush.msra.mxu0 %v2000
  %2549 = vmatpush.msra.mxu0 %v1999
  %2550 = vmatpush.msra.mxu0 %v1998
  %2551 = vmatpush.msra.mxu0 %v1997
  %2552 = vmatpush.msra.mxu0 %v1996
  %2553 = vmatpush.msra.mxu0 %v1995
  %2554 = vmatmul.f32.gmra.mxu0 %v2453
  %v2555 = vpop.f32.mrf.mxu0
  %v2556 = vadd.f32 %v2005, %v2555
  %2557 = vdwg.mxu0
  %v2558 = vmul.f32 %v2515, %v2556
  %v2559 = vadd.f32 %v2537, %v2558
  %v2560 = vtanh.pop %v2559
  %v2561 = vsub.f32 %v2451, %v2560
  %v2562 = vmul.f32 %v2536, %v2561
  %v2563 = vadd.f32 %v2560, %v2562
  %v2565 = vsel %vm547, %v2563, 0
  %2567 = vmatpush.msra.mxu0 0.0
  %2568 = vmatpush.msra.mxu0 0.0
  %2569 = vmatpush.msra.mxu0 0.0
  %2570 = vmatpush.msra.mxu0 0.0
  %2571 = vmatpush.msra.mxu0 0.0
  %2572 = vmatpush.msra.mxu0 0.0
  %2573 = vmatpush.msra.mxu0 0.0
  %2574 = vmatpush.msra.mxu0 0.0
  %2575 = vmatpush.msra.mxu0 %v1986
  %2576 = vmatpush.msra.mxu0 %v1985
  %2577 = vmatpush.msra.mxu0 %v1984
  %2578 = vmatpush.msra.mxu0 %v1983
  %2579 = vmatpush.msra.mxu0 %v1982
  %2580 = vmatpush.msra.mxu0 %v1981
  %2581 = vmatpush.msra.mxu0 %v1980
  %2582 = vmatpush.msra.mxu0 %v1979
  %2583 = vmatmul.f32.gmra.mxu0 %v2565
  %v2584 = vpop.f32.mrf.mxu0
  %v2585 = vadd.f32 0.0, %v2584
  %2586 = vdwg.mxu0
  %2587 = vmatpush.msra.mxu0 0.0
  %2588 = vmatpush.msra.mxu0 0.0
  %2589 = vmatpush.msra.mxu0 0.0
  %2590 = vmatpush.msra.mxu0 0.0
  %2591 = vmatpush.msra.mxu0 0.0
  %2592 = vmatpush.msra.mxu0 0.0
  %2593 = vmatpush.msra.mxu0 0.0
  %2594 = vmatpush.msra.mxu0 0.0
  %2595 = vmatpush.msra.mxu0 %v1994
  %2596 = vmatpush.msra.mxu0 %v1993
  %2597 = vmatpush.msra.mxu0 %v1992
  %2598 = vmatpush.msra.mxu0 %v1991
  %2599 = vmatpush.msra.mxu0 %v1990
  %2600 = vmatpush.msra.mxu0 %v1989
  %2601 = vmatpush.msra.mxu0 %v1988
  %2602 = vmatpush.msra.mxu0 %v1987
  %2603 = vmatmul.f32.gmra.mxu0 %v2565
  %v2604 = vpop.f32.mrf.mxu0
  %v2605 = vadd.f32 0.0, %v2604
  %2606 = vdwg.mxu0
  %v2607 = vld [vmem:[#allocation2 + $0x28] sm:$0xff]
  %v2608 = vadd.f32 %v2607, %v2585
  %v2609 = vxor.u32 %v2608, 2147483648
  %v2610 = vmul.f32 %v2609, 1.442695
  %v2611 = vpow.pop %v2610
  %v2612 = vadd.f32 %v2611, 1.0
  %v2613 = vrcp.pop %v2612
  %v2614 = vmul.f32 %v2612, %v2613
  %v2615 = vsub.f32 1.0, %v2614
  %v2616 = vmul.f32 %v2613, %v2615
  %v2617 = vadd.f32 %v2613, %v2616
  %vm2618 = vweird.f32 %v2612
  %vm2619 = vweird.f32 %v2613
  %vm2620 = vmor %vm2618, %vm2619
  %v2621 = vsel %vm2620, %v2613, %v2617
  %v2622 = vand.u32 2147483647, %v2612
  %vm2623 = vcmp.eq.f32.partialorder %v2622, 8.507059e+37
  %v2624 = vand.u32 %v2612, 2147483648
  %v2625 = vor.u32 1.1754944e-38, %v2624
  %v2626 = vsel %vm2623, %v2625, %v2621
  %v2627 = vmul.f32 1.0, %v2626
  %v2628 = vld [vmem:[#allocation3 + $0x28] sm:$0xff]
  %v2629 = vadd.f32 %v2628, %v2605
  %v2630 = vxor.u32 %v2629, 2147483648
  %v2631 = vmul.f32 %v2630, 1.442695
  %v2632 = vpow.pop %v2631
  %v2633 = vadd.f32 %v2632, 1.0
  %v2634 = vrcp.pop %v2633
  %v2635 = vmul.f32 %v2633, %v2634
  %v2636 = vsub.f32 1.0, %v2635
  %v2637 = vmul.f32 %v2634, %v2636
  %v2638 = vadd.f32 %v2634, %v2637
  %vm2639 = vweird.f32 %v2633
  %vm2640 = vweird.f32 %v2634
  %vm2641 = vmor %vm2639, %vm2640
  %v2642 = vsel %vm2641, %v2634, %v2638
  %v2643 = vand.u32 2147483647, %v2633
  %vm2644 = vcmp.eq.f32.partialorder %v2643, 8.507059e+37
  %v2645 = vand.u32 %v2633, 2147483648
  %v2646 = vor.u32 1.1754944e-38, %v2645
  %v2647 = vsel %vm2644, %v2646, %v2642
  %v2648 = vmul.f32 1.0, %v2647
  %v2649 = vld [vmem:[#allocation4 + $0x28] sm:$0xff]
  %2650 = vmatpush.msra.mxu0 0.0
  %2651 = vmatpush.msra.mxu0 0.0
  %2652 = vmatpush.msra.mxu0 0.0
  %2653 = vmatpush.msra.mxu0 0.0
  %2654 = vmatpush.msra.mxu0 0.0
  %2655 = vmatpush.msra.mxu0 0.0
  %2656 = vmatpush.msra.mxu0 0.0
  %2657 = vmatpush.msra.mxu0 0.0
  %2658 = vmatpush.msra.mxu0 %v2002
  %2659 = vmatpush.msra.mxu0 %v2001
  %2660 = vmatpush.msra.mxu0 %v2000
  %2661 = vmatpush.msra.mxu0 %v1999
  %2662 = vmatpush.msra.mxu0 %v1998
  %2663 = vmatpush.msra.mxu0 %v1997
  %2664 = vmatpush.msra.mxu0 %v1996
  %2665 = vmatpush.msra.mxu0 %v1995
  %2666 = vmatmul.f32.gmra.mxu0 %v2565
  %v2667 = vpop.f32.mrf.mxu0
  %v2668 = vadd.f32 %v2005, %v2667
  %2669 = vdwg.mxu0
  %v2670 = vmul.f32 %v2627, %v2668
  %v2671 = vadd.f32 %v2649, %v2670
  %v2672 = vtanh.pop %v2671
  %v2673 = vsub.f32 %v2563, %v2672
  %v2674 = vmul.f32 %v2648, %v2673
  %v2675 = vadd.f32 %v2672, %v2674
  %v2677 = vsel %vm547, %v2675, 0
  %2679 = vmatpush.msra.mxu0 0.0
  %2680 = vmatpush.msra.mxu0 0.0
  %2681 = vmatpush.msra.mxu0 0.0
  %2682 = vmatpush.msra.mxu0 0.0
  %2683 = vmatpush.msra.mxu0 0.0
  %2684 = vmatpush.msra.mxu0 0.0
  %2685 = vmatpush.msra.mxu0 0.0
  %2686 = vmatpush.msra.mxu0 0.0
  %2687 = vmatpush.msra.mxu0 %v1986
  %2688 = vmatpush.msra.mxu0 %v1985
  %2689 = vmatpush.msra.mxu0 %v1984
  %2690 = vmatpush.msra.mxu0 %v1983
  %2691 = vmatpush.msra.mxu0 %v1982
  %2692 = vmatpush.msra.mxu0 %v1981
  %2693 = vmatpush.msra.mxu0 %v1980
  %2694 = vmatpush.msra.mxu0 %v1979
  %2695 = vmatmul.f32.gmra.mxu0 %v2677
  %v2696 = vpop.f32.mrf.mxu0
  %v2697 = vadd.f32 0.0, %v2696
  %2698 = vdwg.mxu0
  %2699 = vmatpush.msra.mxu0 0.0
  %2700 = vmatpush.msra.mxu0 0.0
  %2701 = vmatpush.msra.mxu0 0.0
  %2702 = vmatpush.msra.mxu0 0.0
  %2703 = vmatpush.msra.mxu0 0.0
  %2704 = vmatpush.msra.mxu0 0.0
  %2705 = vmatpush.msra.mxu0 0.0
  %2706 = vmatpush.msra.mxu0 0.0
  %2707 = vmatpush.msra.mxu0 %v1994
  %2708 = vmatpush.msra.mxu0 %v1993
  %2709 = vmatpush.msra.mxu0 %v1992
  %2710 = vmatpush.msra.mxu0 %v1991
  %2711 = vmatpush.msra.mxu0 %v1990
  %2712 = vmatpush.msra.mxu0 %v1989
  %2713 = vmatpush.msra.mxu0 %v1988
  %2714 = vmatpush.msra.mxu0 %v1987
  %2715 = vmatmul.f32.gmra.mxu0 %v2677
  %v2716 = vpop.f32.mrf.mxu0
  %v2717 = vadd.f32 0.0, %v2716
  %2718 = vdwg.mxu0
  %v2719 = vld [vmem:[#allocation2 + $0x30] sm:$0xff]
  %v2720 = vadd.f32 %v2719, %v2697
  %v2721 = vxor.u32 %v2720, 2147483648
  %v2722 = vmul.f32 %v2721, 1.442695
  %v2723 = vpow.pop %v2722
  %v2724 = vadd.f32 %v2723, 1.0
  %v2725 = vrcp.pop %v2724
  %v2726 = vmul.f32 %v2724, %v2725
  %v2727 = vsub.f32 1.0, %v2726
  %v2728 = vmul.f32 %v2725, %v2727
  %v2729 = vadd.f32 %v2725, %v2728
  %vm2730 = vweird.f32 %v2724
  %vm2731 = vweird.f32 %v2725
  %vm2732 = vmor %vm2730, %vm2731
  %v2733 = vsel %vm2732, %v2725, %v2729
  %v2734 = vand.u32 2147483647, %v2724
  %vm2735 = vcmp.eq.f32.partialorder %v2734, 8.507059e+37
  %v2736 = vand.u32 %v2724, 2147483648
  %v2737 = vor.u32 1.1754944e-38, %v2736
  %v2738 = vsel %vm2735, %v2737, %v2733
  %v2739 = vmul.f32 1.0, %v2738
  %v2740 = vld [vmem:[#allocation3 + $0x30] sm:$0xff]
  %v2741 = vadd.f32 %v2740, %v2717
  %v2742 = vxor.u32 %v2741, 2147483648
  %v2743 = vmul.f32 %v2742, 1.442695
  %v2744 = vpow.pop %v2743
  %v2745 = vadd.f32 %v2744, 1.0
  %v2746 = vrcp.pop %v2745
  %v2747 = vmul.f32 %v2745, %v2746
  %v2748 = vsub.f32 1.0, %v2747
  %v2749 = vmul.f32 %v2746, %v2748
  %v2750 = vadd.f32 %v2746, %v2749
  %vm2751 = vweird.f32 %v2745
  %vm2752 = vweird.f32 %v2746
  %vm2753 = vmor %vm2751, %vm2752
  %v2754 = vsel %vm2753, %v2746, %v2750
  %v2755 = vand.u32 2147483647, %v2745
  %vm2756 = vcmp.eq.f32.partialorder %v2755, 8.507059e+37
  %v2757 = vand.u32 %v2745, 2147483648
  %v2758 = vor.u32 1.1754944e-38, %v2757
  %v2759 = vsel %vm2756, %v2758, %v2754
  %v2760 = vmul.f32 1.0, %v2759
  %v2761 = vld [vmem:[#allocation4 + $0x30] sm:$0xff]
  %2762 = vmatpush.msra.mxu0 0.0
  %2763 = vmatpush.msra.mxu0 0.0
  %2764 = vmatpush.msra.mxu0 0.0
  %2765 = vmatpush.msra.mxu0 0.0
  %2766 = vmatpush.msra.mxu0 0.0
  %2767 = vmatpush.msra.mxu0 0.0
  %2768 = vmatpush.msra.mxu0 0.0
  %2769 = vmatpush.msra.mxu0 0.0
  %2770 = vmatpush.msra.mxu0 %v2002
  %2771 = vmatpush.msra.mxu0 %v2001
  %2772 = vmatpush.msra.mxu0 %v2000
  %2773 = vmatpush.msra.mxu0 %v1999
  %2774 = vmatpush.msra.mxu0 %v1998
  %2775 = vmatpush.msra.mxu0 %v1997
  %2776 = vmatpush.msra.mxu0 %v1996
  %2777 = vmatpush.msra.mxu0 %v1995
  %2778 = vmatmul.f32.gmra.mxu0 %v2677
  %v2779 = vpop.f32.mrf.mxu0
  %v2780 = vadd.f32 %v2005, %v2779
  %2781 = vdwg.mxu0
  %v2782 = vmul.f32 %v2739, %v2780
  %v2783 = vadd.f32 %v2761, %v2782
  %v2784 = vtanh.pop %v2783
  %v2785 = vsub.f32 %v2675, %v2784
  %v2786 = vmul.f32 %v2760, %v2785
  %v2787 = vadd.f32 %v2784, %v2786
  %v2789 = vsel %vm547, %v2787, 0
  %2791 = vmatpush.msra.mxu0 0.0
  %2792 = vmatpush.msra.mxu0 0.0
  %2793 = vmatpush.msra.mxu0 0.0
  %2794 = vmatpush.msra.mxu0 0.0
  %2795 = vmatpush.msra.mxu0 0.0
  %2796 = vmatpush.msra.mxu0 0.0
  %2797 = vmatpush.msra.mxu0 0.0
  %2798 = vmatpush.msra.mxu0 0.0
  %2799 = vmatpush.msra.mxu0 %v1986
  %2800 = vmatpush.msra.mxu0 %v1985
  %2801 = vmatpush.msra.mxu0 %v1984
  %2802 = vmatpush.msra.mxu0 %v1983
  %2803 = vmatpush.msra.mxu0 %v1982
  %2804 = vmatpush.msra.mxu0 %v1981
  %2805 = vmatpush.msra.mxu0 %v1980
  %2806 = vmatpush.msra.mxu0 %v1979
  %2807 = vmatmul.f32.gmra.mxu0 %v2789
  %v2808 = vpop.f32.mrf.mxu0
  %v2809 = vadd.f32 0.0, %v2808
  %2810 = vdwg.mxu0
  %2811 = vmatpush.msra.mxu0 0.0
  %2812 = vmatpush.msra.mxu0 0.0
  %2813 = vmatpush.msra.mxu0 0.0
  %2814 = vmatpush.msra.mxu0 0.0
  %2815 = vmatpush.msra.mxu0 0.0
  %2816 = vmatpush.msra.mxu0 0.0
  %2817 = vmatpush.msra.mxu0 0.0
  %2818 = vmatpush.msra.mxu0 0.0
  %2819 = vmatpush.msra.mxu0 %v1994
  %2820 = vmatpush.msra.mxu0 %v1993
  %2821 = vmatpush.msra.mxu0 %v1992
  %2822 = vmatpush.msra.mxu0 %v1991
  %2823 = vmatpush.msra.mxu0 %v1990
  %2824 = vmatpush.msra.mxu0 %v1989
  %2825 = vmatpush.msra.mxu0 %v1988
  %2826 = vmatpush.msra.mxu0 %v1987
  %2827 = vmatmul.f32.gmra.mxu0 %v2789
  %v2828 = vpop.f32.mrf.mxu0
  %v2829 = vadd.f32 0.0, %v2828
  %2830 = vdwg.mxu0
  %v2831 = vld [vmem:[#allocation2 + $0x38] sm:$0xff]
  %v2832 = vadd.f32 %v2831, %v2809
  %v2833 = vxor.u32 %v2832, 2147483648
  %v2834 = vmul.f32 %v2833, 1.442695
  %v2835 = vpow.pop %v2834
  %v2836 = vadd.f32 %v2835, 1.0
  %v2837 = vrcp.pop %v2836
  %v2838 = vmul.f32 %v2836, %v2837
  %v2839 = vsub.f32 1.0, %v2838
  %v2840 = vmul.f32 %v2837, %v2839
  %v2841 = vadd.f32 %v2837, %v2840
  %vm2842 = vweird.f32 %v2836
  %vm2843 = vweird.f32 %v2837
  %vm2844 = vmor %vm2842, %vm2843
  %v2845 = vsel %vm2844, %v2837, %v2841
  %v2846 = vand.u32 2147483647, %v2836
  %vm2847 = vcmp.eq.f32.partialorder %v2846, 8.507059e+37
  %v2848 = vand.u32 %v2836, 2147483648
  %v2849 = vor.u32 1.1754944e-38, %v2848
  %v2850 = vsel %vm2847, %v2849, %v2845
  %v2851 = vmul.f32 1.0, %v2850
  %v2852 = vld [vmem:[#allocation3 + $0x38] sm:$0xff]
  %v2853 = vadd.f32 %v2852, %v2829
  %v2854 = vxor.u32 %v2853, 2147483648
  %v2855 = vmul.f32 %v2854, 1.442695
  %v2856 = vpow.pop %v2855
  %v2857 = vadd.f32 %v2856, 1.0
  %v2858 = vrcp.pop %v2857
  %v2859 = vmul.f32 %v2857, %v2858
  %v2860 = vsub.f32 1.0, %v2859
  %v2861 = vmul.f32 %v2858, %v2860
  %v2862 = vadd.f32 %v2858, %v2861
  %vm2863 = vweird.f32 %v2857
  %vm2864 = vweird.f32 %v2858
  %vm2865 = vmor %vm2863, %vm2864
  %v2866 = vsel %vm2865, %v2858, %v2862
  %v2867 = vand.u32 2147483647, %v2857
  %vm2868 = vcmp.eq.f32.partialorder %v2867, 8.507059e+37
  %v2869 = vand.u32 %v2857, 2147483648
  %v2870 = vor.u32 1.1754944e-38, %v2869
  %v2871 = vsel %vm2868, %v2870, %v2866
  %v2872 = vmul.f32 1.0, %v2871
  %v2873 = vld [vmem:[#allocation4 + $0x38] sm:$0xff]
  %2874 = vmatpush.msra.mxu0 0.0
  %2875 = vmatpush.msra.mxu0 0.0
  %2876 = vmatpush.msra.mxu0 0.0
  %2877 = vmatpush.msra.mxu0 0.0
  %2878 = vmatpush.msra.mxu0 0.0
  %2879 = vmatpush.msra.mxu0 0.0
  %2880 = vmatpush.msra.mxu0 0.0
  %2881 = vmatpush.msra.mxu0 0.0
  %2882 = vmatpush.msra.mxu0 %v2002
  %2883 = vmatpush.msra.mxu0 %v2001
  %2884 = vmatpush.msra.mxu0 %v2000
  %2885 = vmatpush.msra.mxu0 %v1999
  %2886 = vmatpush.msra.mxu0 %v1998
  %2887 = vmatpush.msra.mxu0 %v1997
  %2888 = vmatpush.msra.mxu0 %v1996
  %2889 = vmatpush.msra.mxu0 %v1995
  %2890 = vmatmul.f32.gmra.mxu0 %v2789
  %v2891 = vpop.f32.mrf.mxu0
  %v2892 = vadd.f32 %v2005, %v2891
  %2893 = vdwg.mxu0
  %v2894 = vmul.f32 %v2851, %v2892
  %v2895 = vadd.f32 %v2873, %v2894
  %v2896 = vtanh.pop %v2895
  %v2897 = vsub.f32 %v2787, %v2896
  %v2898 = vmul.f32 %v2872, %v2897
  %v2899 = vadd.f32 %v2896, %v2898
  %v2900 = vsel %vm305, %v2115, %v2899
  %v2901 = vsel %vm305, %v2227, %v2787
  %v2902 = vsel %vm305, %v2339, %v2675
  %v2903 = vsel %vm305, %v2451, %v2563
  %v2904 = vsel %vm305, %v2563, %v2451
  %v2905 = vsel %vm305, %v2675, %v2339
  %v2906 = vsel %vm305, %v2787, %v2227
  %v2907 = vsel %vm305, %v2899, %v2115
  %v2908 = vld [vmem:[%s53] sm:$0xff]
  %v2909 = vld [vmem:[%s53 + $0x8] sm:$0xff]
  %v2910 = vld [vmem:[%s53 + $0x10] sm:$0xff]
  %v2911 = vld [vmem:[%s53 + $0x18] sm:$0xff]
  %v2912 = vld [vmem:[%s53 + $0x20] sm:$0xff]
  %v2913 = vld [vmem:[%s53 + $0x28] sm:$0xff]
  %v2914 = vld [vmem:[%s53 + $0x30] sm:$0xff]
  %v2915 = vld [vmem:[%s53 + $0x38] sm:$0xff]
  %v2917 = vsel %vm547, %v2900, 0
  %v2920 = vsel %vm547, %v2901, 0
  %v2923 = vsel %vm547, %v2902, 0
  %v2926 = vsel %vm547, %v2903, 0
  %v2929 = vsel %vm547, %v2904, 0
  %v2932 = vsel %vm547, %v2905, 0
  %v2935 = vsel %vm547, %v2906, 0
  %v2938 = vsel %vm547, %v2907, 0
  %2940 = vmatpush.msra.mxu0 0.0
  %2941 = vmatpush.msra.mxu0 0.0
  %2942 = vmatpush.msra.mxu0 0.0
  %2943 = vmatpush.msra.mxu0 0.0
  %2944 = vmatpush.msra.mxu0 0.0
  %2945 = vmatpush.msra.mxu0 0.0
  %2946 = vmatpush.msra.mxu0 0.0
  %2947 = vmatpush.msra.mxu0 0.0
  %2948 = vmatpush.msra.mxu0 %v2915
  %2949 = vmatpush.msra.mxu0 %v2914
  %2950 = vmatpush.msra.mxu0 %v2913
  %2951 = vmatpush.msra.mxu0 %v2912
  %2952 = vmatpush.msra.mxu0 %v2911
  %2953 = vmatpush.msra.mxu0 %v2910
  %2954 = vmatpush.msra.mxu0 %v2909
  %2955 = vmatpush.msra.mxu0 %v2908
  %2956 = vmatmul.f32.gmra.mxu0 %v2917
  %v2957 = vpop.f32.mrf.mxu0
  %v2958 = vadd.f32 0.0, %v2957
  %2959 = vmatmul.f32.gmra.mxu0 %v2920
  %v2960 = vpop.f32.mrf.mxu0
  %v2961 = vadd.f32 0.0, %v2960
  %2962 = vmatmul.f32.gmra.mxu0 %v2923
  %v2963 = vpop.f32.mrf.mxu0
  %v2964 = vadd.f32 0.0, %v2963
  %2965 = vmatmul.f32.gmra.mxu0 %v2926
  %v2966 = vpop.f32.mrf.mxu0
  %v2967 = vadd.f32 0.0, %v2966
  %2968 = vmatmul.f32.gmra.mxu0 %v2929
  %v2969 = vpop.f32.mrf.mxu0
  %v2970 = vadd.f32 0.0, %v2969
  %2971 = vmatmul.f32.gmra.mxu0 %v2932
  %v2972 = vpop.f32.mrf.mxu0
  %v2973 = vadd.f32 0.0, %v2972
  %2974 = vmatmul.f32.gmra.mxu0 %v2935
  %v2975 = vpop.f32.mrf.mxu0
  %v2976 = vadd.f32 0.0, %v2975
  %2977 = vmatmul.f32.gmra.mxu0 %v2938
  %v2978 = vpop.f32.mrf.mxu0
  %v2979 = vadd.f32 0.0, %v2978
  %2980 = vdwg.mxu0
  %v2981 = vsel %vm305, %v2958, %v2979
  %v2982 = vsel %vm305, %v2961, %v2976
  %v2983 = vsel %vm305, %v2964, %v2973
  %v2984 = vsel %vm305, %v2967, %v2970
  %v2985 = vsel %vm305, %v2970, %v2967
  %v2986 = vsel %vm305, %v2973, %v2964
  %v2987 = vsel %vm305, %v2976, %v2961
  %v2988 = vsel %vm305, %v2979, %v2958
  %v2989 = vld [vmem:[%s57] sm:$0x1]
  %v2991 = vperm.slane %v2989, 0
  %v2993 = vadd.f32 %v2981, %v2991
  %v2994 = vadd.f32 %v2982, %v2991
  %v2995 = vadd.f32 %v2983, %v2991
  %v2996 = vadd.f32 %v2984, %v2991
  %v2997 = vadd.f32 %v2985, %v2991
  %v2998 = vadd.f32 %v2986, %v2991
  %v2999 = vadd.f32 %v2987, %v2991
  %v3000 = vadd.f32 %v2988, %v2991
  %3001 = vst.msk [vmem:[#allocation2] sm:$0xff] %vm547, %v2993
  %3002 = vst.msk [vmem:[#allocation2 + $0x8] sm:$0xff] %vm547, %v2994
  %3003 = vst.msk [vmem:[#allocation2 + $0x10] sm:$0xff] %vm547, %v2995
  %3004 = vst.msk [vmem:[#allocation2 + $0x18] sm:$0xff] %vm547, %v2996
  %3005 = vst.msk [vmem:[#allocation2 + $0x20] sm:$0xff] %vm547, %v2997
  %3006 = vst.msk [vmem:[#allocation2 + $0x28] sm:$0xff] %vm547, %v2998
  %3007 = vst.msk [vmem:[#allocation2 + $0x30] sm:$0xff] %vm547, %v2999
  %3008 = vst.msk [vmem:[#allocation2 + $0x38] sm:$0xff] %vm547, %v3000
  %v3009 = vld [vmem:[%s59] sm:$0xff]
  %v3010 = vld [vmem:[%s59 + $0x8] sm:$0xff]
  %v3011 = vld [vmem:[%s59 + $0x10] sm:$0xff]
  %v3012 = vld [vmem:[%s59 + $0x18] sm:$0xff]
  %v3013 = vld [vmem:[%s59 + $0x20] sm:$0xff]
  %v3014 = vld [vmem:[%s59 + $0x28] sm:$0xff]
  %v3015 = vld [vmem:[%s59 + $0x30] sm:$0xff]
  %v3016 = vld [vmem:[%s59 + $0x38] sm:$0xff]
  %3017 = vmatpush.msra.mxu0 0.0
  %3018 = vmatpush.msra.mxu0 0.0
  %3019 = vmatpush.msra.mxu0 0.0
  %3020 = vmatpush.msra.mxu0 0.0
  %3021 = vmatpush.msra.mxu0 0.0
  %3022 = vmatpush.msra.mxu0 0.0
  %3023 = vmatpush.msra.mxu0 0.0
  %3024 = vmatpush.msra.mxu0 0.0
  %3025 = vmatpush.msra.mxu0 %v3016
  %3026 = vmatpush.msra.mxu0 %v3015
  %3027 = vmatpush.msra.mxu0 %v3014
  %3028 = vmatpush.msra.mxu0 %v3013
  %3029 = vmatpush.msra.mxu0 %v3012
  %3030 = vmatpush.msra.mxu0 %v3011
  %3031 = vmatpush.msra.mxu0 %v3010
  %3032 = vmatpush.msra.mxu0 %v3009
  %3033 = vmatmul.f32.gmra.mxu0 %v2917
  %v3034 = vpop.f32.mrf.mxu0
  %v3035 = vadd.f32 0.0, %v3034
  %3036 = vmatmul.f32.gmra.mxu0 %v2920
  %v3037 = vpop.f32.mrf.mxu0
  %v3038 = vadd.f32 0.0, %v3037
  %3039 = vmatmul.f32.gmra.mxu0 %v2923
  %v3040 = vpop.f32.mrf.mxu0
  %v3041 = vadd.f32 0.0, %v3040
  %3042 = vmatmul.f32.gmra.mxu0 %v2926
  %v3043 = vpop.f32.mrf.mxu0
  %v3044 = vadd.f32 0.0, %v3043
  %3045 = vmatmul.f32.gmra.mxu0 %v2929
  %v3046 = vpop.f32.mrf.mxu0
  %v3047 = vadd.f32 0.0, %v3046
  %3048 = vmatmul.f32.gmra.mxu0 %v2932
  %v3049 = vpop.f32.mrf.mxu0
  %v3050 = vadd.f32 0.0, %v3049
  %3051 = vmatmul.f32.gmra.mxu0 %v2935
  %v3052 = vpop.f32.mrf.mxu0
  %v3053 = vadd.f32 0.0, %v3052
  %3054 = vmatmul.f32.gmra.mxu0 %v2938
  %v3055 = vpop.f32.mrf.mxu0
  %v3056 = vadd.f32 0.0, %v3055
  %3057 = vdwg.mxu0
  %v3058 = vsel %vm305, %v3035, %v3056
  %v3059 = vsel %vm305, %v3038, %v3053
  %v3060 = vsel %vm305, %v3041, %v3050
  %v3061 = vsel %vm305, %v3044, %v3047
  %v3062 = vsel %vm305, %v3047, %v3044
  %v3063 = vsel %vm305, %v3050, %v3041
  %v3064 = vsel %vm305, %v3053, %v3038
  %v3065 = vsel %vm305, %v3056, %v3035
  %v3066 = vld [vmem:[%s63] sm:$0x1]
  %v3068 = vperm.slane %v3066, 0
  %v3070 = vadd.f32 %v3058, %v3068
  %v3071 = vadd.f32 %v3059, %v3068
  %v3072 = vadd.f32 %v3060, %v3068
  %v3073 = vadd.f32 %v3061, %v3068
  %v3074 = vadd.f32 %v3062, %v3068
  %v3075 = vadd.f32 %v3063, %v3068
  %v3076 = vadd.f32 %v3064, %v3068
  %v3077 = vadd.f32 %v3065, %v3068
  %3078 = vst.msk [vmem:[#allocation3] sm:$0xff] %vm547, %v3070
  %3079 = vst.msk [vmem:[#allocation3 + $0x8] sm:$0xff] %vm547, %v3071
  %3080 = vst.msk [vmem:[#allocation3 + $0x10] sm:$0xff] %vm547, %v3072
  %3081 = vst.msk [vmem:[#allocation3 + $0x18] sm:$0xff] %vm547, %v3073
  %3082 = vst.msk [vmem:[#allocation3 + $0x20] sm:$0xff] %vm547, %v3074
  %3083 = vst.msk [vmem:[#allocation3 + $0x28] sm:$0xff] %vm547, %v3075
  %3084 = vst.msk [vmem:[#allocation3 + $0x30] sm:$0xff] %vm547, %v3076
  %3085 = vst.msk [vmem:[#allocation3 + $0x38] sm:$0xff] %vm547, %v3077
  %v3086 = vld [vmem:[%s65] sm:$0xff]
  %v3087 = vld [vmem:[%s65 + $0x8] sm:$0xff]
  %v3088 = vld [vmem:[%s65 + $0x10] sm:$0xff]
  %v3089 = vld [vmem:[%s65 + $0x18] sm:$0xff]
  %v3090 = vld [vmem:[%s65 + $0x20] sm:$0xff]
  %v3091 = vld [vmem:[%s65 + $0x28] sm:$0xff]
  %v3092 = vld [vmem:[%s65 + $0x30] sm:$0xff]
  %v3093 = vld [vmem:[%s65 + $0x38] sm:$0xff]
  %3094 = vmatpush.msra.mxu0 0.0
  %3095 = vmatpush.msra.mxu0 0.0
  %3096 = vmatpush.msra.mxu0 0.0
  %3097 = vmatpush.msra.mxu0 0.0
  %3098 = vmatpush.msra.mxu0 0.0
  %3099 = vmatpush.msra.mxu0 0.0
  %3100 = vmatpush.msra.mxu0 0.0
  %3101 = vmatpush.msra.mxu0 0.0
  %3102 = vmatpush.msra.mxu0 %v3093
  %3103 = vmatpush.msra.mxu0 %v3092
  %3104 = vmatpush.msra.mxu0 %v3091
  %3105 = vmatpush.msra.mxu0 %v3090
  %3106 = vmatpush.msra.mxu0 %v3089
  %3107 = vmatpush.msra.mxu0 %v3088
  %3108 = vmatpush.msra.mxu0 %v3087
  %3109 = vmatpush.msra.mxu0 %v3086
  %3110 = vmatmul.f32.gmra.mxu0 %v2917
  %v3111 = vpop.f32.mrf.mxu0
  %v3112 = vadd.f32 0.0, %v3111
  %3113 = vmatmul.f32.gmra.mxu0 %v2920
  %v3114 = vpop.f32.mrf.mxu0
  %v3115 = vadd.f32 0.0, %v3114
  %3116 = vmatmul.f32.gmra.mxu0 %v2923
  %v3117 = vpop.f32.mrf.mxu0
  %v3118 = vadd.f32 0.0, %v3117
  %3119 = vmatmul.f32.gmra.mxu0 %v2926
  %v3120 = vpop.f32.mrf.mxu0
  %v3121 = vadd.f32 0.0, %v3120
  %3122 = vmatmul.f32.gmra.mxu0 %v2929
  %v3123 = vpop.f32.mrf.mxu0
  %v3124 = vadd.f32 0.0, %v3123
  %3125 = vmatmul.f32.gmra.mxu0 %v2932
  %v3126 = vpop.f32.mrf.mxu0
  %v3127 = vadd.f32 0.0, %v3126
  %3128 = vmatmul.f32.gmra.mxu0 %v2935
  %v3129 = vpop.f32.mrf.mxu0
  %v3130 = vadd.f32 0.0, %v3129
  %3131 = vmatmul.f32.gmra.mxu0 %v2938
  %v3132 = vpop.f32.mrf.mxu0
  %v3133 = vadd.f32 0.0, %v3132
  %3134 = vdwg.mxu0
  %v3135 = vsel %vm305, %v3112, %v3133
  %v3136 = vsel %vm305, %v3115, %v3130
  %v3137 = vsel %vm305, %v3118, %v3127
  %v3138 = vsel %vm305, %v3121, %v3124
  %v3139 = vsel %vm305, %v3124, %v3121
  %v3140 = vsel %vm305, %v3127, %v3118
  %v3141 = vsel %vm305, %v3130, %v3115
  %v3142 = vsel %vm305, %v3133, %v3112
  %v3143 = vld [vmem:[%s69] sm:$0x1]
  %v3145 = vperm.slane %v3143, 0
  %v3147 = vadd.f32 %v3135, %v3145
  %v3148 = vadd.f32 %v3136, %v3145
  %v3149 = vadd.f32 %v3137, %v3145
  %v3150 = vadd.f32 %v3138, %v3145
  %v3151 = vadd.f32 %v3139, %v3145
  %v3152 = vadd.f32 %v3140, %v3145
  %v3153 = vadd.f32 %v3141, %v3145
  %v3154 = vadd.f32 %v3142, %v3145
  %3155 = vst.msk [vmem:[#allocation4] sm:$0xff] %vm547, %v3147
  %3156 = vst.msk [vmem:[#allocation4 + $0x8] sm:$0xff] %vm547, %v3148
  %3157 = vst.msk [vmem:[#allocation4 + $0x10] sm:$0xff] %vm547, %v3149
  %3158 = vst.msk [vmem:[#allocation4 + $0x18] sm:$0xff] %vm547, %v3150
  %3159 = vst.msk [vmem:[#allocation4 + $0x20] sm:$0xff] %vm547, %v3151
  %3160 = vst.msk [vmem:[#allocation4 + $0x28] sm:$0xff] %vm547, %v3152
  %3161 = vst.msk [vmem:[#allocation4 + $0x30] sm:$0xff] %vm547, %v3153
  %3162 = vst.msk [vmem:[#allocation4 + $0x38] sm:$0xff] %vm547, %v3154
  %v3163 = vld [vmem:[%s55] sm:$0xff]
  %v3164 = vld [vmem:[%s55 + $0x8] sm:$0xff]
  %v3165 = vld [vmem:[%s55 + $0x10] sm:$0xff]
  %v3166 = vld [vmem:[%s55 + $0x18] sm:$0xff]
  %v3167 = vld [vmem:[%s55 + $0x20] sm:$0xff]
  %v3168 = vld [vmem:[%s55 + $0x28] sm:$0xff]
  %v3169 = vld [vmem:[%s55 + $0x30] sm:$0xff]
  %v3170 = vld [vmem:[%s55 + $0x38] sm:$0xff]
  %v3171 = vld [vmem:[%s61] sm:$0xff]
  %v3172 = vld [vmem:[%s61 + $0x8] sm:$0xff]
  %v3173 = vld [vmem:[%s61 + $0x10] sm:$0xff]
  %v3174 = vld [vmem:[%s61 + $0x18] sm:$0xff]
  %v3175 = vld [vmem:[%s61 + $0x20] sm:$0xff]
  %v3176 = vld [vmem:[%s61 + $0x28] sm:$0xff]
  %v3177 = vld [vmem:[%s61 + $0x30] sm:$0xff]
  %v3178 = vld [vmem:[%s61 + $0x38] sm:$0xff]
  %v3179 = vld [vmem:[%s67] sm:$0xff]
  %v3180 = vld [vmem:[%s67 + $0x8] sm:$0xff]
  %v3181 = vld [vmem:[%s67 + $0x10] sm:$0xff]
  %v3182 = vld [vmem:[%s67 + $0x18] sm:$0xff]
  %v3183 = vld [vmem:[%s67 + $0x20] sm:$0xff]
  %v3184 = vld [vmem:[%s67 + $0x28] sm:$0xff]
  %v3185 = vld [vmem:[%s67 + $0x30] sm:$0xff]
  %v3186 = vld [vmem:[%s67 + $0x38] sm:$0xff]
  %v3187 = vld [vmem:[%s71] sm:$0x1]
  %v3189 = vperm.slane %v3187, 0
  %3191 = vmatpush.msra.mxu0 0.0
  %3192 = vmatpush.msra.mxu0 0.0
  %3193 = vmatpush.msra.mxu0 0.0
  %3194 = vmatpush.msra.mxu0 0.0
  %3195 = vmatpush.msra.mxu0 0.0
  %3196 = vmatpush.msra.mxu0 0.0
  %3197 = vmatpush.msra.mxu0 0.0
  %3198 = vmatpush.msra.mxu0 0.0
  %3199 = vmatpush.msra.mxu0 %v3170
  %3200 = vmatpush.msra.mxu0 %v3169
  %3201 = vmatpush.msra.mxu0 %v3168
  %3202 = vmatpush.msra.mxu0 %v3167
  %3203 = vmatpush.msra.mxu0 %v3166
  %3204 = vmatpush.msra.mxu0 %v3165
  %3205 = vmatpush.msra.mxu0 %v3164
  %3206 = vmatpush.msra.mxu0 %v3163
  %3207 = vmatmul.f32.gmra.mxu0 %v821
  %v3208 = vpop.f32.mrf.mxu0
  %v3209 = vadd.f32 0.0, %v3208
  %3210 = vdwg.mxu0
  %3211 = vmatpush.msra.mxu0 0.0
  %3212 = vmatpush.msra.mxu0 0.0
  %3213 = vmatpush.msra.mxu0 0.0
  %3214 = vmatpush.msra.mxu0 0.0
  %3215 = vmatpush.msra.mxu0 0.0
  %3216 = vmatpush.msra.mxu0 0.0
  %3217 = vmatpush.msra.mxu0 0.0
  %3218 = vmatpush.msra.mxu0 0.0
  %3219 = vmatpush.msra.mxu0 %v3178
  %3220 = vmatpush.msra.mxu0 %v3177
  %3221 = vmatpush.msra.mxu0 %v3176
  %3222 = vmatpush.msra.mxu0 %v3175
  %3223 = vmatpush.msra.mxu0 %v3174
  %3224 = vmatpush.msra.mxu0 %v3173
  %3225 = vmatpush.msra.mxu0 %v3172
  %3226 = vmatpush.msra.mxu0 %v3171
  %3227 = vmatmul.f32.gmra.mxu0 %v821
  %v3228 = vpop.f32.mrf.mxu0
  %v3229 = vadd.f32 0.0, %v3228
  %3230 = vdwg.mxu0
  %v3231 = vld [vmem:[#allocation2] sm:$0xff]
  %v3232 = vadd.f32 %v3231, %v3209
  %v3233 = vxor.u32 %v3232, 2147483648
  %v3234 = vmul.f32 %v3233, 1.442695
  %v3235 = vpow.pop %v3234
  %v3236 = vadd.f32 %v3235, 1.0
  %v3237 = vrcp.pop %v3236
  %v3238 = vmul.f32 %v3236, %v3237
  %v3239 = vsub.f32 1.0, %v3238
  %v3240 = vmul.f32 %v3237, %v3239
  %v3241 = vadd.f32 %v3237, %v3240
  %vm3242 = vweird.f32 %v3236
  %vm3243 = vweird.f32 %v3237
  %vm3244 = vmor %vm3242, %vm3243
  %v3245 = vsel %vm3244, %v3237, %v3241
  %v3246 = vand.u32 2147483647, %v3236
  %vm3247 = vcmp.eq.f32.partialorder %v3246, 8.507059e+37
  %v3248 = vand.u32 %v3236, 2147483648
  %v3249 = vor.u32 1.1754944e-38, %v3248
  %v3250 = vsel %vm3247, %v3249, %v3245
  %v3251 = vmul.f32 1.0, %v3250
  %v3252 = vld [vmem:[#allocation3] sm:$0xff]
  %v3253 = vadd.f32 %v3252, %v3229
  %v3254 = vxor.u32 %v3253, 2147483648
  %v3255 = vmul.f32 %v3254, 1.442695
  %v3256 = vpow.pop %v3255
  %v3257 = vadd.f32 %v3256, 1.0
  %v3258 = vrcp.pop %v3257
  %v3259 = vmul.f32 %v3257, %v3258
  %v3260 = vsub.f32 1.0, %v3259
  %v3261 = vmul.f32 %v3258, %v3260
  %v3262 = vadd.f32 %v3258, %v3261
  %vm3263 = vweird.f32 %v3257
  %vm3264 = vweird.f32 %v3258
  %vm3265 = vmor %vm3263, %vm3264
  %v3266 = vsel %vm3265, %v3258, %v3262
  %v3267 = vand.u32 2147483647, %v3257
  %vm3268 = vcmp.eq.f32.partialorder %v3267, 8.507059e+37
  %v3269 = vand.u32 %v3257, 2147483648
  %v3270 = vor.u32 1.1754944e-38, %v3269
  %v3271 = vsel %vm3268, %v3270, %v3266
  %v3272 = vmul.f32 1.0, %v3271
  %v3273 = vld [vmem:[#allocation4] sm:$0xff]
  %3274 = vmatpush.msra.mxu0 0.0
  %3275 = vmatpush.msra.mxu0 0.0
  %3276 = vmatpush.msra.mxu0 0.0
  %3277 = vmatpush.msra.mxu0 0.0
  %3278 = vmatpush.msra.mxu0 0.0
  %3279 = vmatpush.msra.mxu0 0.0
  %3280 = vmatpush.msra.mxu0 0.0
  %3281 = vmatpush.msra.mxu0 0.0
  %3282 = vmatpush.msra.mxu0 %v3186
  %3283 = vmatpush.msra.mxu0 %v3185
  %3284 = vmatpush.msra.mxu0 %v3184
  %3285 = vmatpush.msra.mxu0 %v3183
  %3286 = vmatpush.msra.mxu0 %v3182
  %3287 = vmatpush.msra.mxu0 %v3181
  %3288 = vmatpush.msra.mxu0 %v3180
  %3289 = vmatpush.msra.mxu0 %v3179
  %3290 = vmatmul.f32.gmra.mxu0 %v821
  %v3291 = vpop.f32.mrf.mxu0
  %v3292 = vadd.f32 %v3189, %v3291
  %3293 = vdwg.mxu0
  %v3294 = vmul.f32 %v3251, %v3292
  %v3295 = vadd.f32 %v3273, %v3294
  %v3296 = vtanh.pop %v3295
  %v3297 = vsub.f32 0.0, %v3296
  %v3298 = vmul.f32 %v3272, %v3297
  %v3299 = vadd.f32 %v3296, %v3298
  %v3301 = vsel %vm547, %v3299, 0
  %3303 = vmatpush.msra.mxu0 0.0
  %3304 = vmatpush.msra.mxu0 0.0
  %3305 = vmatpush.msra.mxu0 0.0
  %3306 = vmatpush.msra.mxu0 0.0
  %3307 = vmatpush.msra.mxu0 0.0
  %3308 = vmatpush.msra.mxu0 0.0
  %3309 = vmatpush.msra.mxu0 0.0
  %3310 = vmatpush.msra.mxu0 0.0
  %3311 = vmatpush.msra.mxu0 %v3170
  %3312 = vmatpush.msra.mxu0 %v3169
  %3313 = vmatpush.msra.mxu0 %v3168
  %3314 = vmatpush.msra.mxu0 %v3167
  %3315 = vmatpush.msra.mxu0 %v3166
  %3316 = vmatpush.msra.mxu0 %v3165
  %3317 = vmatpush.msra.mxu0 %v3164
  %3318 = vmatpush.msra.mxu0 %v3163
  %3319 = vmatmul.f32.gmra.mxu0 %v3301
  %v3320 = vpop.f32.mrf.mxu0
  %v3321 = vadd.f32 0.0, %v3320
  %3322 = vdwg.mxu0
  %3323 = vmatpush.msra.mxu0 0.0
  %3324 = vmatpush.msra.mxu0 0.0
  %3325 = vmatpush.msra.mxu0 0.0
  %3326 = vmatpush.msra.mxu0 0.0
  %3327 = vmatpush.msra.mxu0 0.0
  %3328 = vmatpush.msra.mxu0 0.0
  %3329 = vmatpush.msra.mxu0 0.0
  %3330 = vmatpush.msra.mxu0 0.0
  %3331 = vmatpush.msra.mxu0 %v3178
  %3332 = vmatpush.msra.mxu0 %v3177
  %3333 = vmatpush.msra.mxu0 %v3176
  %3334 = vmatpush.msra.mxu0 %v3175
  %3335 = vmatpush.msra.mxu0 %v3174
  %3336 = vmatpush.msra.mxu0 %v3173
  %3337 = vmatpush.msra.mxu0 %v3172
  %3338 = vmatpush.msra.mxu0 %v3171
  %3339 = vmatmul.f32.gmra.mxu0 %v3301
  %v3340 = vpop.f32.mrf.mxu0
  %v3341 = vadd.f32 0.0, %v3340
  %3342 = vdwg.mxu0
  %v3343 = vld [vmem:[#allocation2 + $0x8] sm:$0xff]
  %v3344 = vadd.f32 %v3343, %v3321
  %v3345 = vxor.u32 %v3344, 2147483648
  %v3346 = vmul.f32 %v3345, 1.442695
  %v3347 = vpow.pop %v3346
  %v3348 = vadd.f32 %v3347, 1.0
  %v3349 = vrcp.pop %v3348
  %v3350 = vmul.f32 %v3348, %v3349
  %v3351 = vsub.f32 1.0, %v3350
  %v3352 = vmul.f32 %v3349, %v3351
  %v3353 = vadd.f32 %v3349, %v3352
  %vm3354 = vweird.f32 %v3348
  %vm3355 = vweird.f32 %v3349
  %vm3356 = vmor %vm3354, %vm3355
  %v3357 = vsel %vm3356, %v3349, %v3353
  %v3358 = vand.u32 2147483647, %v3348
  %vm3359 = vcmp.eq.f32.partialorder %v3358, 8.507059e+37
  %v3360 = vand.u32 %v3348, 2147483648
  %v3361 = vor.u32 1.1754944e-38, %v3360
  %v3362 = vsel %vm3359, %v3361, %v3357
  %v3363 = vmul.f32 1.0, %v3362
  %v3364 = vld [vmem:[#allocation3 + $0x8] sm:$0xff]
  %v3365 = vadd.f32 %v3364, %v3341
  %v3366 = vxor.u32 %v3365, 2147483648
  %v3367 = vmul.f32 %v3366, 1.442695
  %v3368 = vpow.pop %v3367
  %v3369 = vadd.f32 %v3368, 1.0
  %v3370 = vrcp.pop %v3369
  %v3371 = vmul.f32 %v3369, %v3370
  %v3372 = vsub.f32 1.0, %v3371
  %v3373 = vmul.f32 %v3370, %v3372
  %v3374 = vadd.f32 %v3370, %v3373
  %vm3375 = vweird.f32 %v3369
  %vm3376 = vweird.f32 %v3370
  %vm3377 = vmor %vm3375, %vm3376
  %v3378 = vsel %vm3377, %v3370, %v3374
  %v3379 = vand.u32 2147483647, %v3369
  %vm3380 = vcmp.eq.f32.partialorder %v3379, 8.507059e+37
  %v3381 = vand.u32 %v3369, 2147483648
  %v3382 = vor.u32 1.1754944e-38, %v3381
  %v3383 = vsel %vm3380, %v3382, %v3378
  %v3384 = vmul.f32 1.0, %v3383
  %v3385 = vld [vmem:[#allocation4 + $0x8] sm:$0xff]
  %3386 = vmatpush.msra.mxu0 0.0
  %3387 = vmatpush.msra.mxu0 0.0
  %3388 = vmatpush.msra.mxu0 0.0
  %3389 = vmatpush.msra.mxu0 0.0
  %3390 = vmatpush.msra.mxu0 0.0
  %3391 = vmatpush.msra.mxu0 0.0
  %3392 = vmatpush.msra.mxu0 0.0
  %3393 = vmatpush.msra.mxu0 0.0
  %3394 = vmatpush.msra.mxu0 %v3186
  %3395 = vmatpush.msra.mxu0 %v3185
  %3396 = vmatpush.msra.mxu0 %v3184
  %3397 = vmatpush.msra.mxu0 %v3183
  %3398 = vmatpush.msra.mxu0 %v3182
  %3399 = vmatpush.msra.mxu0 %v3181
  %3400 = vmatpush.msra.mxu0 %v3180
  %3401 = vmatpush.msra.mxu0 %v3179
  %3402 = vmatmul.f32.gmra.mxu0 %v3301
  %v3403 = vpop.f32.mrf.mxu0
  %v3404 = vadd.f32 %v3189, %v3403
  %3405 = vdwg.mxu0
  %v3406 = vmul.f32 %v3363, %v3404
  %v3407 = vadd.f32 %v3385, %v3406
  %v3408 = vtanh.pop %v3407
  %v3409 = vsub.f32 %v3299, %v3408
  %v3410 = vmul.f32 %v3384, %v3409
  %v3411 = vadd.f32 %v3408, %v3410
  %v3413 = vsel %vm547, %v3411, 0
  %3415 = vmatpush.msra.mxu0 0.0
  %3416 = vmatpush.msra.mxu0 0.0
  %3417 = vmatpush.msra.mxu0 0.0
  %3418 = vmatpush.msra.mxu0 0.0
  %3419 = vmatpush.msra.mxu0 0.0
  %3420 = vmatpush.msra.mxu0 0.0
  %3421 = vmatpush.msra.mxu0 0.0
  %3422 = vmatpush.msra.mxu0 0.0
  %3423 = vmatpush.msra.mxu0 %v3170
  %3424 = vmatpush.msra.mxu0 %v3169
  %3425 = vmatpush.msra.mxu0 %v3168
  %3426 = vmatpush.msra.mxu0 %v3167
  %3427 = vmatpush.msra.mxu0 %v3166
  %3428 = vmatpush.msra.mxu0 %v3165
  %3429 = vmatpush.msra.mxu0 %v3164
  %3430 = vmatpush.msra.mxu0 %v3163
  %3431 = vmatmul.f32.gmra.mxu0 %v3413
  %v3432 = vpop.f32.mrf.mxu0
  %v3433 = vadd.f32 0.0, %v3432
  %3434 = vdwg.mxu0
  %3435 = vmatpush.msra.mxu0 0.0
  %3436 = vmatpush.msra.mxu0 0.0
  %3437 = vmatpush.msra.mxu0 0.0
  %3438 = vmatpush.msra.mxu0 0.0
  %3439 = vmatpush.msra.mxu0 0.0
  %3440 = vmatpush.msra.mxu0 0.0
  %3441 = vmatpush.msra.mxu0 0.0
  %3442 = vmatpush.msra.mxu0 0.0
  %3443 = vmatpush.msra.mxu0 %v3178
  %3444 = vmatpush.msra.mxu0 %v3177
  %3445 = vmatpush.msra.mxu0 %v3176
  %3446 = vmatpush.msra.mxu0 %v3175
  %3447 = vmatpush.msra.mxu0 %v3174
  %3448 = vmatpush.msra.mxu0 %v3173
  %3449 = vmatpush.msra.mxu0 %v3172
  %3450 = vmatpush.msra.mxu0 %v3171
  %3451 = vmatmul.f32.gmra.mxu0 %v3413
  %v3452 = vpop.f32.mrf.mxu0
  %v3453 = vadd.f32 0.0, %v3452
  %3454 = vdwg.mxu0
  %v3455 = vld [vmem:[#allocation2 + $0x10] sm:$0xff]
  %v3456 = vadd.f32 %v3455, %v3433
  %v3457 = vxor.u32 %v3456, 2147483648
  %v3458 = vmul.f32 %v3457, 1.442695
  %v3459 = vpow.pop %v3458
  %v3460 = vadd.f32 %v3459, 1.0
  %v3461 = vrcp.pop %v3460
  %v3462 = vmul.f32 %v3460, %v3461
  %v3463 = vsub.f32 1.0, %v3462
  %v3464 = vmul.f32 %v3461, %v3463
  %v3465 = vadd.f32 %v3461, %v3464
  %vm3466 = vweird.f32 %v3460
  %vm3467 = vweird.f32 %v3461
  %vm3468 = vmor %vm3466, %vm3467
  %v3469 = vsel %vm3468, %v3461, %v3465
  %v3470 = vand.u32 2147483647, %v3460
  %vm3471 = vcmp.eq.f32.partialorder %v3470, 8.507059e+37
  %v3472 = vand.u32 %v3460, 2147483648
  %v3473 = vor.u32 1.1754944e-38, %v3472
  %v3474 = vsel %vm3471, %v3473, %v3469
  %v3475 = vmul.f32 1.0, %v3474
  %v3476 = vld [vmem:[#allocation3 + $0x10] sm:$0xff]
  %v3477 = vadd.f32 %v3476, %v3453
  %v3478 = vxor.u32 %v3477, 2147483648
  %v3479 = vmul.f32 %v3478, 1.442695
  %v3480 = vpow.pop %v3479
  %v3481 = vadd.f32 %v3480, 1.0
  %v3482 = vrcp.pop %v3481
  %v3483 = vmul.f32 %v3481, %v3482
  %v3484 = vsub.f32 1.0, %v3483
  %v3485 = vmul.f32 %v3482, %v3484
  %v3486 = vadd.f32 %v3482, %v3485
  %vm3487 = vweird.f32 %v3481
  %vm3488 = vweird.f32 %v3482
  %vm3489 = vmor %vm3487, %vm3488
  %v3490 = vsel %vm3489, %v3482, %v3486
  %v3491 = vand.u32 2147483647, %v3481
  %vm3492 = vcmp.eq.f32.partialorder %v3491, 8.507059e+37
  %v3493 = vand.u32 %v3481, 2147483648
  %v3494 = vor.u32 1.1754944e-38, %v3493
  %v3495 = vsel %vm3492, %v3494, %v3490
  %v3496 = vmul.f32 1.0, %v3495
  %v3497 = vld [vmem:[#allocation4 + $0x10] sm:$0xff]
  %3498 = vmatpush.msra.mxu0 0.0
  %3499 = vmatpush.msra.mxu0 0.0
  %3500 = vmatpush.msra.mxu0 0.0
  %3501 = vmatpush.msra.mxu0 0.0
  %3502 = vmatpush.msra.mxu0 0.0
  %3503 = vmatpush.msra.mxu0 0.0
  %3504 = vmatpush.msra.mxu0 0.0
  %3505 = vmatpush.msra.mxu0 0.0
  %3506 = vmatpush.msra.mxu0 %v3186
  %3507 = vmatpush.msra.mxu0 %v3185
  %3508 = vmatpush.msra.mxu0 %v3184
  %3509 = vmatpush.msra.mxu0 %v3183
  %3510 = vmatpush.msra.mxu0 %v3182
  %3511 = vmatpush.msra.mxu0 %v3181
  %3512 = vmatpush.msra.mxu0 %v3180
  %3513 = vmatpush.msra.mxu0 %v3179
  %3514 = vmatmul.f32.gmra.mxu0 %v3413
  %v3515 = vpop.f32.mrf.mxu0
  %v3516 = vadd.f32 %v3189, %v3515
  %3517 = vdwg.mxu0
  %v3518 = vmul.f32 %v3475, %v3516
  %v3519 = vadd.f32 %v3497, %v3518
  %v3520 = vtanh.pop %v3519
  %v3521 = vsub.f32 %v3411, %v3520
  %v3522 = vmul.f32 %v3496, %v3521
  %v3523 = vadd.f32 %v3520, %v3522
  %v3525 = vsel %vm547, %v3523, 0
  %3527 = vmatpush.msra.mxu0 0.0
  %3528 = vmatpush.msra.mxu0 0.0
  %3529 = vmatpush.msra.mxu0 0.0
  %3530 = vmatpush.msra.mxu0 0.0
  %3531 = vmatpush.msra.mxu0 0.0
  %3532 = vmatpush.msra.mxu0 0.0
  %3533 = vmatpush.msra.mxu0 0.0
  %3534 = vmatpush.msra.mxu0 0.0
  %3535 = vmatpush.msra.mxu0 %v3170
  %3536 = vmatpush.msra.mxu0 %v3169
  %3537 = vmatpush.msra.mxu0 %v3168
  %3538 = vmatpush.msra.mxu0 %v3167
  %3539 = vmatpush.msra.mxu0 %v3166
  %3540 = vmatpush.msra.mxu0 %v3165
  %3541 = vmatpush.msra.mxu0 %v3164
  %3542 = vmatpush.msra.mxu0 %v3163
  %3543 = vmatmul.f32.gmra.mxu0 %v3525
  %v3544 = vpop.f32.mrf.mxu0
  %v3545 = vadd.f32 0.0, %v3544
  %3546 = vdwg.mxu0
  %3547 = vmatpush.msra.mxu0 0.0
  %3548 = vmatpush.msra.mxu0 0.0
  %3549 = vmatpush.msra.mxu0 0.0
  %3550 = vmatpush.msra.mxu0 0.0
  %3551 = vmatpush.msra.mxu0 0.0
  %3552 = vmatpush.msra.mxu0 0.0
  %3553 = vmatpush.msra.mxu0 0.0
  %3554 = vmatpush.msra.mxu0 0.0
  %3555 = vmatpush.msra.mxu0 %v3178
  %3556 = vmatpush.msra.mxu0 %v3177
  %3557 = vmatpush.msra.mxu0 %v3176
  %3558 = vmatpush.msra.mxu0 %v3175
  %3559 = vmatpush.msra.mxu0 %v3174
  %3560 = vmatpush.msra.mxu0 %v3173
  %3561 = vmatpush.msra.mxu0 %v3172
  %3562 = vmatpush.msra.mxu0 %v3171
  %3563 = vmatmul.f32.gmra.mxu0 %v3525
  %v3564 = vpop.f32.mrf.mxu0
  %v3565 = vadd.f32 0.0, %v3564
  %3566 = vdwg.mxu0
  %v3567 = vld [vmem:[#allocation2 + $0x18] sm:$0xff]
  %v3568 = vadd.f32 %v3567, %v3545
  %v3569 = vxor.u32 %v3568, 2147483648
  %v3570 = vmul.f32 %v3569, 1.442695
  %v3571 = vpow.pop %v3570
  %v3572 = vadd.f32 %v3571, 1.0
  %v3573 = vrcp.pop %v3572
  %v3574 = vmul.f32 %v3572, %v3573
  %v3575 = vsub.f32 1.0, %v3574
  %v3576 = vmul.f32 %v3573, %v3575
  %v3577 = vadd.f32 %v3573, %v3576
  %vm3578 = vweird.f32 %v3572
  %vm3579 = vweird.f32 %v3573
  %vm3580 = vmor %vm3578, %vm3579
  %v3581 = vsel %vm3580, %v3573, %v3577
  %v3582 = vand.u32 2147483647, %v3572
  %vm3583 = vcmp.eq.f32.partialorder %v3582, 8.507059e+37
  %v3584 = vand.u32 %v3572, 2147483648
  %v3585 = vor.u32 1.1754944e-38, %v3584
  %v3586 = vsel %vm3583, %v3585, %v3581
  %v3587 = vmul.f32 1.0, %v3586
  %v3588 = vld [vmem:[#allocation3 + $0x18] sm:$0xff]
  %v3589 = vadd.f32 %v3588, %v3565
  %v3590 = vxor.u32 %v3589, 2147483648
  %v3591 = vmul.f32 %v3590, 1.442695
  %v3592 = vpow.pop %v3591
  %v3593 = vadd.f32 %v3592, 1.0
  %v3594 = vrcp.pop %v3593
  %v3595 = vmul.f32 %v3593, %v3594
  %v3596 = vsub.f32 1.0, %v3595
  %v3597 = vmul.f32 %v3594, %v3596
  %v3598 = vadd.f32 %v3594, %v3597
  %vm3599 = vweird.f32 %v3593
  %vm3600 = vweird.f32 %v3594
  %vm3601 = vmor %vm3599, %vm3600
  %v3602 = vsel %vm3601, %v3594, %v3598
  %v3603 = vand.u32 2147483647, %v3593
  %vm3604 = vcmp.eq.f32.partialorder %v3603, 8.507059e+37
  %v3605 = vand.u32 %v3593, 2147483648
  %v3606 = vor.u32 1.1754944e-38, %v3605
  %v3607 = vsel %vm3604, %v3606, %v3602
  %v3608 = vmul.f32 1.0, %v3607
  %v3609 = vld [vmem:[#allocation4 + $0x18] sm:$0xff]
  %3610 = vmatpush.msra.mxu0 0.0
  %3611 = vmatpush.msra.mxu0 0.0
  %3612 = vmatpush.msra.mxu0 0.0
  %3613 = vmatpush.msra.mxu0 0.0
  %3614 = vmatpush.msra.mxu0 0.0
  %3615 = vmatpush.msra.mxu0 0.0
  %3616 = vmatpush.msra.mxu0 0.0
  %3617 = vmatpush.msra.mxu0 0.0
  %3618 = vmatpush.msra.mxu0 %v3186
  %3619 = vmatpush.msra.mxu0 %v3185
  %3620 = vmatpush.msra.mxu0 %v3184
  %3621 = vmatpush.msra.mxu0 %v3183
  %3622 = vmatpush.msra.mxu0 %v3182
  %3623 = vmatpush.msra.mxu0 %v3181
  %3624 = vmatpush.msra.mxu0 %v3180
  %3625 = vmatpush.msra.mxu0 %v3179
  %3626 = vmatmul.f32.gmra.mxu0 %v3525
  %v3627 = vpop.f32.mrf.mxu0
  %v3628 = vadd.f32 %v3189, %v3627
  %3629 = vdwg.mxu0
  %v3630 = vmul.f32 %v3587, %v3628
  %v3631 = vadd.f32 %v3609, %v3630
  %v3632 = vtanh.pop %v3631
  %v3633 = vsub.f32 %v3523, %v3632
  %v3634 = vmul.f32 %v3608, %v3633
  %v3635 = vadd.f32 %v3632, %v3634
  %v3637 = vsel %vm547, %v3635, 0
  %3639 = vmatpush.msra.mxu0 0.0
  %3640 = vmatpush.msra.mxu0 0.0
  %3641 = vmatpush.msra.mxu0 0.0
  %3642 = vmatpush.msra.mxu0 0.0
  %3643 = vmatpush.msra.mxu0 0.0
  %3644 = vmatpush.msra.mxu0 0.0
  %3645 = vmatpush.msra.mxu0 0.0
  %3646 = vmatpush.msra.mxu0 0.0
  %3647 = vmatpush.msra.mxu0 %v3170
  %3648 = vmatpush.msra.mxu0 %v3169
  %3649 = vmatpush.msra.mxu0 %v3168
  %3650 = vmatpush.msra.mxu0 %v3167
  %3651 = vmatpush.msra.mxu0 %v3166
  %3652 = vmatpush.msra.mxu0 %v3165
  %3653 = vmatpush.msra.mxu0 %v3164
  %3654 = vmatpush.msra.mxu0 %v3163
  %3655 = vmatmul.f32.gmra.mxu0 %v3637
  %v3656 = vpop.f32.mrf.mxu0
  %v3657 = vadd.f32 0.0, %v3656
  %3658 = vdwg.mxu0
  %3659 = vmatpush.msra.mxu0 0.0
  %3660 = vmatpush.msra.mxu0 0.0
  %3661 = vmatpush.msra.mxu0 0.0
  %3662 = vmatpush.msra.mxu0 0.0
  %3663 = vmatpush.msra.mxu0 0.0
  %3664 = vmatpush.msra.mxu0 0.0
  %3665 = vmatpush.msra.mxu0 0.0
  %3666 = vmatpush.msra.mxu0 0.0
  %3667 = vmatpush.msra.mxu0 %v3178
  %3668 = vmatpush.msra.mxu0 %v3177
  %3669 = vmatpush.msra.mxu0 %v3176
  %3670 = vmatpush.msra.mxu0 %v3175
  %3671 = vmatpush.msra.mxu0 %v3174
  %3672 = vmatpush.msra.mxu0 %v3173
  %3673 = vmatpush.msra.mxu0 %v3172
  %3674 = vmatpush.msra.mxu0 %v3171
  %3675 = vmatmul.f32.gmra.mxu0 %v3637
  %v3676 = vpop.f32.mrf.mxu0
  %v3677 = vadd.f32 0.0, %v3676
  %3678 = vdwg.mxu0
  %v3679 = vld [vmem:[#allocation2 + $0x20] sm:$0xff]
  %v3680 = vadd.f32 %v3679, %v3657
  %v3681 = vxor.u32 %v3680, 2147483648
  %v3682 = vmul.f32 %v3681, 1.442695
  %v3683 = vpow.pop %v3682
  %v3684 = vadd.f32 %v3683, 1.0
  %v3685 = vrcp.pop %v3684
  %v3686 = vmul.f32 %v3684, %v3685
  %v3687 = vsub.f32 1.0, %v3686
  %v3688 = vmul.f32 %v3685, %v3687
  %v3689 = vadd.f32 %v3685, %v3688
  %vm3690 = vweird.f32 %v3684
  %vm3691 = vweird.f32 %v3685
  %vm3692 = vmor %vm3690, %vm3691
  %v3693 = vsel %vm3692, %v3685, %v3689
  %v3694 = vand.u32 2147483647, %v3684
  %vm3695 = vcmp.eq.f32.partialorder %v3694, 8.507059e+37
  %v3696 = vand.u32 %v3684, 2147483648
  %v3697 = vor.u32 1.1754944e-38, %v3696
  %v3698 = vsel %vm3695, %v3697, %v3693
  %v3699 = vmul.f32 1.0, %v3698
  %v3700 = vld [vmem:[#allocation3 + $0x20] sm:$0xff]
  %v3701 = vadd.f32 %v3700, %v3677
  %v3702 = vxor.u32 %v3701, 2147483648
  %v3703 = vmul.f32 %v3702, 1.442695
  %v3704 = vpow.pop %v3703
  %v3705 = vadd.f32 %v3704, 1.0
  %v3706 = vrcp.pop %v3705
  %v3707 = vmul.f32 %v3705, %v3706
  %v3708 = vsub.f32 1.0, %v3707
  %v3709 = vmul.f32 %v3706, %v3708
  %v3710 = vadd.f32 %v3706, %v3709
  %vm3711 = vweird.f32 %v3705
  %vm3712 = vweird.f32 %v3706
  %vm3713 = vmor %vm3711, %vm3712
  %v3714 = vsel %vm3713, %v3706, %v3710
  %v3715 = vand.u32 2147483647, %v3705
  %vm3716 = vcmp.eq.f32.partialorder %v3715, 8.507059e+37
  %v3717 = vand.u32 %v3705, 2147483648
  %v3718 = vor.u32 1.1754944e-38, %v3717
  %v3719 = vsel %vm3716, %v3718, %v3714
  %v3720 = vmul.f32 1.0, %v3719
  %v3721 = vld [vmem:[#allocation4 + $0x20] sm:$0xff]
  %3722 = vmatpush.msra.mxu0 0.0
  %3723 = vmatpush.msra.mxu0 0.0
  %3724 = vmatpush.msra.mxu0 0.0
  %3725 = vmatpush.msra.mxu0 0.0
  %3726 = vmatpush.msra.mxu0 0.0
  %3727 = vmatpush.msra.mxu0 0.0
  %3728 = vmatpush.msra.mxu0 0.0
  %3729 = vmatpush.msra.mxu0 0.0
  %3730 = vmatpush.msra.mxu0 %v3186
  %3731 = vmatpush.msra.mxu0 %v3185
  %3732 = vmatpush.msra.mxu0 %v3184
  %3733 = vmatpush.msra.mxu0 %v3183
  %3734 = vmatpush.msra.mxu0 %v3182
  %3735 = vmatpush.msra.mxu0 %v3181
  %3736 = vmatpush.msra.mxu0 %v3180
  %3737 = vmatpush.msra.mxu0 %v3179
  %3738 = vmatmul.f32.gmra.mxu0 %v3637
  %v3739 = vpop.f32.mrf.mxu0
  %v3740 = vadd.f32 %v3189, %v3739
  %3741 = vdwg.mxu0
  %v3742 = vmul.f32 %v3699, %v3740
  %v3743 = vadd.f32 %v3721, %v3742
  %v3744 = vtanh.pop %v3743
  %v3745 = vsub.f32 %v3635, %v3744
  %v3746 = vmul.f32 %v3720, %v3745
  %v3747 = vadd.f32 %v3744, %v3746
  %v3749 = vsel %vm547, %v3747, 0
  %3751 = vmatpush.msra.mxu0 0.0
  %3752 = vmatpush.msra.mxu0 0.0
  %3753 = vmatpush.msra.mxu0 0.0
  %3754 = vmatpush.msra.mxu0 0.0
  %3755 = vmatpush.msra.mxu0 0.0
  %3756 = vmatpush.msra.mxu0 0.0
  %3757 = vmatpush.msra.mxu0 0.0
  %3758 = vmatpush.msra.mxu0 0.0
  %3759 = vmatpush.msra.mxu0 %v3170
  %3760 = vmatpush.msra.mxu0 %v3169
  %3761 = vmatpush.msra.mxu0 %v3168
  %3762 = vmatpush.msra.mxu0 %v3167
  %3763 = vmatpush.msra.mxu0 %v3166
  %3764 = vmatpush.msra.mxu0 %v3165
  %3765 = vmatpush.msra.mxu0 %v3164
  %3766 = vmatpush.msra.mxu0 %v3163
  %3767 = vmatmul.f32.gmra.mxu0 %v3749
  %v3768 = vpop.f32.mrf.mxu0
  %v3769 = vadd.f32 0.0, %v3768
  %3770 = vdwg.mxu0
  %3771 = vmatpush.msra.mxu0 0.0
  %3772 = vmatpush.msra.mxu0 0.0
  %3773 = vmatpush.msra.mxu0 0.0
  %3774 = vmatpush.msra.mxu0 0.0
  %3775 = vmatpush.msra.mxu0 0.0
  %3776 = vmatpush.msra.mxu0 0.0
  %3777 = vmatpush.msra.mxu0 0.0
  %3778 = vmatpush.msra.mxu0 0.0
  %3779 = vmatpush.msra.mxu0 %v3178
  %3780 = vmatpush.msra.mxu0 %v3177
  %3781 = vmatpush.msra.mxu0 %v3176
  %3782 = vmatpush.msra.mxu0 %v3175
  %3783 = vmatpush.msra.mxu0 %v3174
  %3784 = vmatpush.msra.mxu0 %v3173
  %3785 = vmatpush.msra.mxu0 %v3172
  %3786 = vmatpush.msra.mxu0 %v3171
  %3787 = vmatmul.f32.gmra.mxu0 %v3749
  %v3788 = vpop.f32.mrf.mxu0
  %v3789 = vadd.f32 0.0, %v3788
  %3790 = vdwg.mxu0
  %v3791 = vld [vmem:[#allocation2 + $0x28] sm:$0xff]
  %v3792 = vadd.f32 %v3791, %v3769
  %v3793 = vxor.u32 %v3792, 2147483648
  %v3794 = vmul.f32 %v3793, 1.442695
  %v3795 = vpow.pop %v3794
  %v3796 = vadd.f32 %v3795, 1.0
  %v3797 = vrcp.pop %v3796
  %v3798 = vmul.f32 %v3796, %v3797
  %v3799 = vsub.f32 1.0, %v3798
  %v3800 = vmul.f32 %v3797, %v3799
  %v3801 = vadd.f32 %v3797, %v3800
  %vm3802 = vweird.f32 %v3796
  %vm3803 = vweird.f32 %v3797
  %vm3804 = vmor %vm3802, %vm3803
  %v3805 = vsel %vm3804, %v3797, %v3801
  %v3806 = vand.u32 2147483647, %v3796
  %vm3807 = vcmp.eq.f32.partialorder %v3806, 8.507059e+37
  %v3808 = vand.u32 %v3796, 2147483648
  %v3809 = vor.u32 1.1754944e-38, %v3808
  %v3810 = vsel %vm3807, %v3809, %v3805
  %v3811 = vmul.f32 1.0, %v3810
  %v3812 = vld [vmem:[#allocation3 + $0x28] sm:$0xff]
  %v3813 = vadd.f32 %v3812, %v3789
  %v3814 = vxor.u32 %v3813, 2147483648
  %v3815 = vmul.f32 %v3814, 1.442695
  %v3816 = vpow.pop %v3815
  %v3817 = vadd.f32 %v3816, 1.0
  %v3818 = vrcp.pop %v3817
  %v3819 = vmul.f32 %v3817, %v3818
  %v3820 = vsub.f32 1.0, %v3819
  %v3821 = vmul.f32 %v3818, %v3820
  %v3822 = vadd.f32 %v3818, %v3821
  %vm3823 = vweird.f32 %v3817
  %vm3824 = vweird.f32 %v3818
  %vm3825 = vmor %vm3823, %vm3824
  %v3826 = vsel %vm3825, %v3818, %v3822
  %v3827 = vand.u32 2147483647, %v3817
  %vm3828 = vcmp.eq.f32.partialorder %v3827, 8.507059e+37
  %v3829 = vand.u32 %v3817, 2147483648
  %v3830 = vor.u32 1.1754944e-38, %v3829
  %v3831 = vsel %vm3828, %v3830, %v3826
  %v3832 = vmul.f32 1.0, %v3831
  %v3833 = vld [vmem:[#allocation4 + $0x28] sm:$0xff]
  %3834 = vmatpush.msra.mxu0 0.0
  %3835 = vmatpush.msra.mxu0 0.0
  %3836 = vmatpush.msra.mxu0 0.0
  %3837 = vmatpush.msra.mxu0 0.0
  %3838 = vmatpush.msra.mxu0 0.0
  %3839 = vmatpush.msra.mxu0 0.0
  %3840 = vmatpush.msra.mxu0 0.0
  %3841 = vmatpush.msra.mxu0 0.0
  %3842 = vmatpush.msra.mxu0 %v3186
  %3843 = vmatpush.msra.mxu0 %v3185
  %3844 = vmatpush.msra.mxu0 %v3184
  %3845 = vmatpush.msra.mxu0 %v3183
  %3846 = vmatpush.msra.mxu0 %v3182
  %3847 = vmatpush.msra.mxu0 %v3181
  %3848 = vmatpush.msra.mxu0 %v3180
  %3849 = vmatpush.msra.mxu0 %v3179
  %3850 = vmatmul.f32.gmra.mxu0 %v3749
  %v3851 = vpop.f32.mrf.mxu0
  %v3852 = vadd.f32 %v3189, %v3851
  %3853 = vdwg.mxu0
  %v3854 = vmul.f32 %v3811, %v3852
  %v3855 = vadd.f32 %v3833, %v3854
  %v3856 = vtanh.pop %v3855
  %v3857 = vsub.f32 %v3747, %v3856
  %v3858 = vmul.f32 %v3832, %v3857
  %v3859 = vadd.f32 %v3856, %v3858
  %v3861 = vsel %vm547, %v3859, 0
  %3863 = vmatpush.msra.mxu0 0.0
  %3864 = vmatpush.msra.mxu0 0.0
  %3865 = vmatpush.msra.mxu0 0.0
  %3866 = vmatpush.msra.mxu0 0.0
  %3867 = vmatpush.msra.mxu0 0.0
  %3868 = vmatpush.msra.mxu0 0.0
  %3869 = vmatpush.msra.mxu0 0.0
  %3870 = vmatpush.msra.mxu0 0.0
  %3871 = vmatpush.msra.mxu0 %v3170
  %3872 = vmatpush.msra.mxu0 %v3169
  %3873 = vmatpush.msra.mxu0 %v3168
  %3874 = vmatpush.msra.mxu0 %v3167
  %3875 = vmatpush.msra.mxu0 %v3166
  %3876 = vmatpush.msra.mxu0 %v3165
  %3877 = vmatpush.msra.mxu0 %v3164
  %3878 = vmatpush.msra.mxu0 %v3163
  %3879 = vmatmul.f32.gmra.mxu0 %v3861
  %v3880 = vpop.f32.mrf.mxu0
  %v3881 = vadd.f32 0.0, %v3880
  %3882 = vdwg.mxu0
  %3883 = vmatpush.msra.mxu0 0.0
  %3884 = vmatpush.msra.mxu0 0.0
  %3885 = vmatpush.msra.mxu0 0.0
  %3886 = vmatpush.msra.mxu0 0.0
  %3887 = vmatpush.msra.mxu0 0.0
  %3888 = vmatpush.msra.mxu0 0.0
  %3889 = vmatpush.msra.mxu0 0.0
  %3890 = vmatpush.msra.mxu0 0.0
  %3891 = vmatpush.msra.mxu0 %v3178
  %3892 = vmatpush.msra.mxu0 %v3177
  %3893 = vmatpush.msra.mxu0 %v3176
  %3894 = vmatpush.msra.mxu0 %v3175
  %3895 = vmatpush.msra.mxu0 %v3174
  %3896 = vmatpush.msra.mxu0 %v3173
  %3897 = vmatpush.msra.mxu0 %v3172
  %3898 = vmatpush.msra.mxu0 %v3171
  %3899 = vmatmul.f32.gmra.mxu0 %v3861
  %v3900 = vpop.f32.mrf.mxu0
  %v3901 = vadd.f32 0.0, %v3900
  %3902 = vdwg.mxu0
  %v3903 = vld [vmem:[#allocation2 + $0x30] sm:$0xff]
  %v3904 = vadd.f32 %v3903, %v3881
  %v3905 = vxor.u32 %v3904, 2147483648
  %v3906 = vmul.f32 %v3905, 1.442695
  %v3907 = vpow.pop %v3906
  %v3908 = vadd.f32 %v3907, 1.0
  %v3909 = vrcp.pop %v3908
  %v3910 = vmul.f32 %v3908, %v3909
  %v3911 = vsub.f32 1.0, %v3910
  %v3912 = vmul.f32 %v3909, %v3911
  %v3913 = vadd.f32 %v3909, %v3912
  %vm3914 = vweird.f32 %v3908
  %vm3915 = vweird.f32 %v3909
  %vm3916 = vmor %vm3914, %vm3915
  %v3917 = vsel %vm3916, %v3909, %v3913
  %v3918 = vand.u32 2147483647, %v3908
  %vm3919 = vcmp.eq.f32.partialorder %v3918, 8.507059e+37
  %v3920 = vand.u32 %v3908, 2147483648
  %v3921 = vor.u32 1.1754944e-38, %v3920
  %v3922 = vsel %vm3919, %v3921, %v3917
  %v3923 = vmul.f32 1.0, %v3922
  %v3924 = vld [vmem:[#allocation3 + $0x30] sm:$0xff]
  %v3925 = vadd.f32 %v3924, %v3901
  %v3926 = vxor.u32 %v3925, 2147483648
  %v3927 = vmul.f32 %v3926, 1.442695
  %v3928 = vpow.pop %v3927
  %v3929 = vadd.f32 %v3928, 1.0
  %v3930 = vrcp.pop %v3929
  %v3931 = vmul.f32 %v3929, %v3930
  %v3932 = vsub.f32 1.0, %v3931
  %v3933 = vmul.f32 %v3930, %v3932
  %v3934 = vadd.f32 %v3930, %v3933
  %vm3935 = vweird.f32 %v3929
  %vm3936 = vweird.f32 %v3930
  %vm3937 = vmor %vm3935, %vm3936
  %v3938 = vsel %vm3937, %v3930, %v3934
  %v3939 = vand.u32 2147483647, %v3929
  %vm3940 = vcmp.eq.f32.partialorder %v3939, 8.507059e+37
  %v3941 = vand.u32 %v3929, 2147483648
  %v3942 = vor.u32 1.1754944e-38, %v3941
  %v3943 = vsel %vm3940, %v3942, %v3938
  %v3944 = vmul.f32 1.0, %v3943
  %v3945 = vld [vmem:[#allocation4 + $0x30] sm:$0xff]
  %3946 = vmatpush.msra.mxu0 0.0
  %3947 = vmatpush.msra.mxu0 0.0
  %3948 = vmatpush.msra.mxu0 0.0
  %3949 = vmatpush.msra.mxu0 0.0
  %3950 = vmatpush.msra.mxu0 0.0
  %3951 = vmatpush.msra.mxu0 0.0
  %3952 = vmatpush.msra.mxu0 0.0
  %3953 = vmatpush.msra.mxu0 0.0
  %3954 = vmatpush.msra.mxu0 %v3186
  %3955 = vmatpush.msra.mxu0 %v3185
  %3956 = vmatpush.msra.mxu0 %v3184
  %3957 = vmatpush.msra.mxu0 %v3183
  %3958 = vmatpush.msra.mxu0 %v3182
  %3959 = vmatpush.msra.mxu0 %v3181
  %3960 = vmatpush.msra.mxu0 %v3180
  %3961 = vmatpush.msra.mxu0 %v3179
  %3962 = vmatmul.f32.gmra.mxu0 %v3861
  %v3963 = vpop.f32.mrf.mxu0
  %v3964 = vadd.f32 %v3189, %v3963
  %3965 = vdwg.mxu0
  %v3966 = vmul.f32 %v3923, %v3964
  %v3967 = vadd.f32 %v3945, %v3966
  %v3968 = vtanh.pop %v3967
  %v3969 = vsub.f32 %v3859, %v3968
  %v3970 = vmul.f32 %v3944, %v3969
  %v3971 = vadd.f32 %v3968, %v3970
  %v3973 = vsel %vm547, %v3971, 0
  %3975 = vmatpush.msra.mxu0 0.0
  %3976 = vmatpush.msra.mxu0 0.0
  %3977 = vmatpush.msra.mxu0 0.0
  %3978 = vmatpush.msra.mxu0 0.0
  %3979 = vmatpush.msra.mxu0 0.0
  %3980 = vmatpush.msra.mxu0 0.0
  %3981 = vmatpush.msra.mxu0 0.0
  %3982 = vmatpush.msra.mxu0 0.0
  %3983 = vmatpush.msra.mxu0 %v3170
  %3984 = vmatpush.msra.mxu0 %v3169
  %3985 = vmatpush.msra.mxu0 %v3168
  %3986 = vmatpush.msra.mxu0 %v3167
  %3987 = vmatpush.msra.mxu0 %v3166
  %3988 = vmatpush.msra.mxu0 %v3165
  %3989 = vmatpush.msra.mxu0 %v3164
  %3990 = vmatpush.msra.mxu0 %v3163
  %3991 = vmatmul.f32.gmra.mxu0 %v3973
  %v3992 = vpop.f32.mrf.mxu0
  %v3993 = vadd.f32 0.0, %v3992
  %3994 = vdwg.mxu0
  %3995 = vmatpush.msra.mxu0 0.0
  %3996 = vmatpush.msra.mxu0 0.0
  %3997 = vmatpush.msra.mxu0 0.0
  %3998 = vmatpush.msra.mxu0 0.0
  %3999 = vmatpush.msra.mxu0 0.0
  %4000 = vmatpush.msra.mxu0 0.0
  %4001 = vmatpush.msra.mxu0 0.0
  %4002 = vmatpush.msra.mxu0 0.0
  %4003 = vmatpush.msra.mxu0 %v3178
  %4004 = vmatpush.msra.mxu0 %v3177
  %4005 = vmatpush.msra.mxu0 %v3176
  %4006 = vmatpush.msra.mxu0 %v3175
  %4007 = vmatpush.msra.mxu0 %v3174
  %4008 = vmatpush.msra.mxu0 %v3173
  %4009 = vmatpush.msra.mxu0 %v3172
  %4010 = vmatpush.msra.mxu0 %v3171
  %4011 = vmatmul.f32.gmra.mxu0 %v3973
  %v4012 = vpop.f32.mrf.mxu0
  %v4013 = vadd.f32 0.0, %v4012
  %4014 = vdwg.mxu0
  %v4015 = vld [vmem:[#allocation2 + $0x38] sm:$0xff]
  %v4016 = vadd.f32 %v4015, %v3993
  %v4017 = vxor.u32 %v4016, 2147483648
  %v4018 = vmul.f32 %v4017, 1.442695
  %v4019 = vpow.pop %v4018
  %v4020 = vadd.f32 %v4019, 1.0
  %v4021 = vrcp.pop %v4020
  %v4022 = vmul.f32 %v4020, %v4021
  %v4023 = vsub.f32 1.0, %v4022
  %v4024 = vmul.f32 %v4021, %v4023
  %v4025 = vadd.f32 %v4021, %v4024
  %vm4026 = vweird.f32 %v4020
  %vm4027 = vweird.f32 %v4021
  %vm4028 = vmor %vm4026, %vm4027
  %v4029 = vsel %vm4028, %v4021, %v4025
  %v4030 = vand.u32 2147483647, %v4020
  %vm4031 = vcmp.eq.f32.partialorder %v4030, 8.507059e+37
  %v4032 = vand.u32 %v4020, 2147483648
  %v4033 = vor.u32 1.1754944e-38, %v4032
  %v4034 = vsel %vm4031, %v4033, %v4029
  %v4035 = vmul.f32 1.0, %v4034
  %v4036 = vld [vmem:[#allocation3 + $0x38] sm:$0xff]
  %v4037 = vadd.f32 %v4036, %v4013
  %v4038 = vxor.u32 %v4037, 2147483648
  %v4039 = vmul.f32 %v4038, 1.442695
  %v4040 = vpow.pop %v4039
  %v4041 = vadd.f32 %v4040, 1.0
  %v4042 = vrcp.pop %v4041
  %v4043 = vmul.f32 %v4041, %v4042
  %v4044 = vsub.f32 1.0, %v4043
  %v4045 = vmul.f32 %v4042, %v4044
  %v4046 = vadd.f32 %v4042, %v4045
  %vm4047 = vweird.f32 %v4041
  %vm4048 = vweird.f32 %v4042
  %vm4049 = vmor %vm4047, %vm4048
  %v4050 = vsel %vm4049, %v4042, %v4046
  %v4051 = vand.u32 2147483647, %v4041
  %vm4052 = vcmp.eq.f32.partialorder %v4051, 8.507059e+37
  %v4053 = vand.u32 %v4041, 2147483648
  %v4054 = vor.u32 1.1754944e-38, %v4053
  %v4055 = vsel %vm4052, %v4054, %v4050
  %v4056 = vmul.f32 1.0, %v4055
  %v4057 = vld [vmem:[#allocation4 + $0x38] sm:$0xff]
  %4058 = vmatpush.msra.mxu0 0.0
  %4059 = vmatpush.msra.mxu0 0.0
  %4060 = vmatpush.msra.mxu0 0.0
  %4061 = vmatpush.msra.mxu0 0.0
  %4062 = vmatpush.msra.mxu0 0.0
  %4063 = vmatpush.msra.mxu0 0.0
  %4064 = vmatpush.msra.mxu0 0.0
  %4065 = vmatpush.msra.mxu0 0.0
  %4066 = vmatpush.msra.mxu0 %v3186
  %4067 = vmatpush.msra.mxu0 %v3185
  %4068 = vmatpush.msra.mxu0 %v3184
  %4069 = vmatpush.msra.mxu0 %v3183
  %4070 = vmatpush.msra.mxu0 %v3182
  %4071 = vmatpush.msra.mxu0 %v3181
  %4072 = vmatpush.msra.mxu0 %v3180
  %4073 = vmatpush.msra.mxu0 %v3179
  %4074 = vmatmul.f32.gmra.mxu0 %v3973
  %v4075 = vpop.f32.mrf.mxu0
  %v4076 = vadd.f32 %v3189, %v4075
  %4077 = vdwg.mxu0
  %v4078 = vmul.f32 %v4035, %v4076
  %v4079 = vadd.f32 %v4057, %v4078
  %v4080 = vtanh.pop %v4079
  %v4081 = vsub.f32 %v3971, %v4080
  %v4082 = vmul.f32 %v4056, %v4081
  %v4083 = vadd.f32 %v4080, %v4082
  %v4084 = vsel %vm305, %v3299, %v4083
  %v4085 = vsel %vm305, %v3411, %v3971
  %v4086 = vsel %vm305, %v3523, %v3859
  %v4087 = vsel %vm305, %v3635, %v3747
  %v4088 = vsel %vm305, %v3747, %v3635
  %v4089 = vsel %vm305, %v3859, %v3523
  %v4090 = vsel %vm305, %v3971, %v3411
  %v4091 = vsel %vm305, %v4083, %v3299
  %v4092 = vld [vmem:[%s73] sm:$0xff]
  %v4093 = vld [vmem:[%s73 + $0x8] sm:$0xff]
  %v4094 = vld [vmem:[%s73 + $0x10] sm:$0xff]
  %v4095 = vld [vmem:[%s73 + $0x18] sm:$0xff]
  %v4096 = vld [vmem:[%s73 + $0x20] sm:$0xff]
  %v4097 = vld [vmem:[%s73 + $0x28] sm:$0xff]
  %v4098 = vld [vmem:[%s73 + $0x30] sm:$0xff]
  %v4099 = vld [vmem:[%s73 + $0x38] sm:$0xff]
  %v4101 = vsel %vm547, %v4084, 0
  %v4104 = vsel %vm547, %v4085, 0
  %v4107 = vsel %vm547, %v4086, 0
  %v4110 = vsel %vm547, %v4087, 0
  %v4113 = vsel %vm547, %v4088, 0
  %v4116 = vsel %vm547, %v4089, 0
  %v4119 = vsel %vm547, %v4090, 0
  %v4122 = vsel %vm547, %v4091, 0
  %4124 = vmatpush.msra.mxu0 0.0
  %4125 = vmatpush.msra.mxu0 0.0
  %4126 = vmatpush.msra.mxu0 0.0
  %4127 = vmatpush.msra.mxu0 0.0
  %4128 = vmatpush.msra.mxu0 0.0
  %4129 = vmatpush.msra.mxu0 0.0
  %4130 = vmatpush.msra.mxu0 0.0
  %4131 = vmatpush.msra.mxu0 0.0
  %4132 = vmatpush.msra.mxu0 %v4099
  %4133 = vmatpush.msra.mxu0 %v4098
  %4134 = vmatpush.msra.mxu0 %v4097
  %4135 = vmatpush.msra.mxu0 %v4096
  %4136 = vmatpush.msra.mxu0 %v4095
  %4137 = vmatpush.msra.mxu0 %v4094
  %4138 = vmatpush.msra.mxu0 %v4093
  %4139 = vmatpush.msra.mxu0 %v4092
  %4140 = vmatmul.f32.gmra.mxu0 %v4101
  %v4141 = vpop.f32.mrf.mxu0
  %v4142 = vadd.f32 0.0, %v4141
  %4143 = vmatmul.f32.gmra.mxu0 %v4104
  %v4144 = vpop.f32.mrf.mxu0
  %v4145 = vadd.f32 0.0, %v4144
  %4146 = vmatmul.f32.gmra.mxu0 %v4107
  %v4147 = vpop.f32.mrf.mxu0
  %v4148 = vadd.f32 0.0, %v4147
  %4149 = vmatmul.f32.gmra.mxu0 %v4110
  %v4150 = vpop.f32.mrf.mxu0
  %v4151 = vadd.f32 0.0, %v4150
  %4152 = vmatmul.f32.gmra.mxu0 %v4113
  %v4153 = vpop.f32.mrf.mxu0
  %v4154 = vadd.f32 0.0, %v4153
  %4155 = vmatmul.f32.gmra.mxu0 %v4116
  %v4156 = vpop.f32.mrf.mxu0
  %v4157 = vadd.f32 0.0, %v4156
  %4158 = vmatmul.f32.gmra.mxu0 %v4119
  %v4159 = vpop.f32.mrf.mxu0
  %v4160 = vadd.f32 0.0, %v4159
  %4161 = vmatmul.f32.gmra.mxu0 %v4122
  %v4162 = vpop.f32.mrf.mxu0
  %v4163 = vadd.f32 0.0, %v4162
  %4164 = vdwg.mxu0
  %v4165 = vsel %vm305, %v4142, %v4163
  %v4166 = vsel %vm305, %v4145, %v4160
  %v4167 = vsel %vm305, %v4148, %v4157
  %v4168 = vsel %vm305, %v4151, %v4154
  %v4169 = vsel %vm305, %v4154, %v4151
  %v4170 = vsel %vm305, %v4157, %v4148
  %v4171 = vsel %vm305, %v4160, %v4145
  %v4172 = vsel %vm305, %v4163, %v4142
  %v4173 = vld [vmem:[%s77] sm:$0x1]
  %v4175 = vperm.slane %v4173, 0
  %v4177 = vadd.f32 %v4165, %v4175
  %v4178 = vadd.f32 %v4166, %v4175
  %v4179 = vadd.f32 %v4167, %v4175
  %v4180 = vadd.f32 %v4168, %v4175
  %v4181 = vadd.f32 %v4169, %v4175
  %v4182 = vadd.f32 %v4170, %v4175
  %v4183 = vadd.f32 %v4171, %v4175
  %v4184 = vadd.f32 %v4172, %v4175
  %4185 = vst.msk [vmem:[#allocation2] sm:$0xff] %vm547, %v4177
  %4186 = vst.msk [vmem:[#allocation2 + $0x8] sm:$0xff] %vm547, %v4178
  %4187 = vst.msk [vmem:[#allocation2 + $0x10] sm:$0xff] %vm547, %v4179
  %4188 = vst.msk [vmem:[#allocation2 + $0x18] sm:$0xff] %vm547, %v4180
  %4189 = vst.msk [vmem:[#allocation2 + $0x20] sm:$0xff] %vm547, %v4181
  %4190 = vst.msk [vmem:[#allocation2 + $0x28] sm:$0xff] %vm547, %v4182
  %4191 = vst.msk [vmem:[#allocation2 + $0x30] sm:$0xff] %vm547, %v4183
  %4192 = vst.msk [vmem:[#allocation2 + $0x38] sm:$0xff] %vm547, %v4184
  %v4193 = vld [vmem:[%s79] sm:$0xff]
  %v4194 = vld [vmem:[%s79 + $0x8] sm:$0xff]
  %v4195 = vld [vmem:[%s79 + $0x10] sm:$0xff]
  %v4196 = vld [vmem:[%s79 + $0x18] sm:$0xff]
  %v4197 = vld [vmem:[%s79 + $0x20] sm:$0xff]
  %v4198 = vld [vmem:[%s79 + $0x28] sm:$0xff]
  %v4199 = vld [vmem:[%s79 + $0x30] sm:$0xff]
  %v4200 = vld [vmem:[%s79 + $0x38] sm:$0xff]
  %4201 = vmatpush.msra.mxu0 0.0
  %4202 = vmatpush.msra.mxu0 0.0
  %4203 = vmatpush.msra.mxu0 0.0
  %4204 = vmatpush.msra.mxu0 0.0
  %4205 = vmatpush.msra.mxu0 0.0
  %4206 = vmatpush.msra.mxu0 0.0
  %4207 = vmatpush.msra.mxu0 0.0
  %4208 = vmatpush.msra.mxu0 0.0
  %4209 = vmatpush.msra.mxu0 %v4200
  %4210 = vmatpush.msra.mxu0 %v4199
  %4211 = vmatpush.msra.mxu0 %v4198
  %4212 = vmatpush.msra.mxu0 %v4197
  %4213 = vmatpush.msra.mxu0 %v4196
  %4214 = vmatpush.msra.mxu0 %v4195
  %4215 = vmatpush.msra.mxu0 %v4194
  %4216 = vmatpush.msra.mxu0 %v4193
  %4217 = vmatmul.f32.gmra.mxu0 %v4101
  %v4218 = vpop.f32.mrf.mxu0
  %v4219 = vadd.f32 0.0, %v4218
  %4220 = vmatmul.f32.gmra.mxu0 %v4104
  %v4221 = vpop.f32.mrf.mxu0
  %v4222 = vadd.f32 0.0, %v4221
  %4223 = vmatmul.f32.gmra.mxu0 %v4107
  %v4224 = vpop.f32.mrf.mxu0
  %v4225 = vadd.f32 0.0, %v4224
  %4226 = vmatmul.f32.gmra.mxu0 %v4110
  %v4227 = vpop.f32.mrf.mxu0
  %v4228 = vadd.f32 0.0, %v4227
  %4229 = vmatmul.f32.gmra.mxu0 %v4113
  %v4230 = vpop.f32.mrf.mxu0
  %v4231 = vadd.f32 0.0, %v4230
  %4232 = vmatmul.f32.gmra.mxu0 %v4116
  %v4233 = vpop.f32.mrf.mxu0
  %v4234 = vadd.f32 0.0, %v4233
  %4235 = vmatmul.f32.gmra.mxu0 %v4119
  %v4236 = vpop.f32.mrf.mxu0
  %v4237 = vadd.f32 0.0, %v4236
  %4238 = vmatmul.f32.gmra.mxu0 %v4122
  %v4239 = vpop.f32.mrf.mxu0
  %v4240 = vadd.f32 0.0, %v4239
  %4241 = vdwg.mxu0
  %v4242 = vsel %vm305, %v4219, %v4240
  %v4243 = vsel %vm305, %v4222, %v4237
  %v4244 = vsel %vm305, %v4225, %v4234
  %v4245 = vsel %vm305, %v4228, %v4231
  %v4246 = vsel %vm305, %v4231, %v4228
  %v4247 = vsel %vm305, %v4234, %v4225
  %v4248 = vsel %vm305, %v4237, %v4222
  %v4249 = vsel %vm305, %v4240, %v4219
  %v4250 = vld [vmem:[%s83] sm:$0x1]
  %v4252 = vperm.slane %v4250, 0
  %v4254 = vadd.f32 %v4242, %v4252
  %v4255 = vadd.f32 %v4243, %v4252
  %v4256 = vadd.f32 %v4244, %v4252
  %v4257 = vadd.f32 %v4245, %v4252
  %v4258 = vadd.f32 %v4246, %v4252
  %v4259 = vadd.f32 %v4247, %v4252
  %v4260 = vadd.f32 %v4248, %v4252
  %v4261 = vadd.f32 %v4249, %v4252
  %4262 = vst.msk [vmem:[#allocation3] sm:$0xff] %vm547, %v4254
  %4263 = vst.msk [vmem:[#allocation3 + $0x8] sm:$0xff] %vm547, %v4255
  %4264 = vst.msk [vmem:[#allocation3 + $0x10] sm:$0xff] %vm547, %v4256
  %4265 = vst.msk [vmem:[#allocation3 + $0x18] sm:$0xff] %vm547, %v4257
  %4266 = vst.msk [vmem:[#allocation3 + $0x20] sm:$0xff] %vm547, %v4258
  %4267 = vst.msk [vmem:[#allocation3 + $0x28] sm:$0xff] %vm547, %v4259
  %4268 = vst.msk [vmem:[#allocation3 + $0x30] sm:$0xff] %vm547, %v4260
  %4269 = vst.msk [vmem:[#allocation3 + $0x38] sm:$0xff] %vm547, %v4261
  %v4270 = vld [vmem:[%s85] sm:$0xff]
  %v4271 = vld [vmem:[%s85 + $0x8] sm:$0xff]
  %v4272 = vld [vmem:[%s85 + $0x10] sm:$0xff]
  %v4273 = vld [vmem:[%s85 + $0x18] sm:$0xff]
  %v4274 = vld [vmem:[%s85 + $0x20] sm:$0xff]
  %v4275 = vld [vmem:[%s85 + $0x28] sm:$0xff]
  %v4276 = vld [vmem:[%s85 + $0x30] sm:$0xff]
  %v4277 = vld [vmem:[%s85 + $0x38] sm:$0xff]
  %4278 = vmatpush.msra.mxu0 0.0
  %4279 = vmatpush.msra.mxu0 0.0
  %4280 = vmatpush.msra.mxu0 0.0
  %4281 = vmatpush.msra.mxu0 0.0
  %4282 = vmatpush.msra.mxu0 0.0
  %4283 = vmatpush.msra.mxu0 0.0
  %4284 = vmatpush.msra.mxu0 0.0
  %4285 = vmatpush.msra.mxu0 0.0
  %4286 = vmatpush.msra.mxu0 %v4277
  %4287 = vmatpush.msra.mxu0 %v4276
  %4288 = vmatpush.msra.mxu0 %v4275
  %4289 = vmatpush.msra.mxu0 %v4274
  %4290 = vmatpush.msra.mxu0 %v4273
  %4291 = vmatpush.msra.mxu0 %v4272
  %4292 = vmatpush.msra.mxu0 %v4271
  %4293 = vmatpush.msra.mxu0 %v4270
  %4294 = vmatmul.f32.gmra.mxu0 %v4101
  %v4295 = vpop.f32.mrf.mxu0
  %v4296 = vadd.f32 0.0, %v4295
  %4297 = vmatmul.f32.gmra.mxu0 %v4104
  %v4298 = vpop.f32.mrf.mxu0
  %v4299 = vadd.f32 0.0, %v4298
  %4300 = vmatmul.f32.gmra.mxu0 %v4107
  %v4301 = vpop.f32.mrf.mxu0
  %v4302 = vadd.f32 0.0, %v4301
  %4303 = vmatmul.f32.gmra.mxu0 %v4110
  %v4304 = vpop.f32.mrf.mxu0
  %v4305 = vadd.f32 0.0, %v4304
  %4306 = vmatmul.f32.gmra.mxu0 %v4113
  %v4307 = vpop.f32.mrf.mxu0
  %v4308 = vadd.f32 0.0, %v4307
  %4309 = vmatmul.f32.gmra.mxu0 %v4116
  %v4310 = vpop.f32.mrf.mxu0
  %v4311 = vadd.f32 0.0, %v4310
  %4312 = vmatmul.f32.gmra.mxu0 %v4119
  %v4313 = vpop.f32.mrf.mxu0
  %v4314 = vadd.f32 0.0, %v4313
  %4315 = vmatmul.f32.gmra.mxu0 %v4122
  %v4316 = vpop.f32.mrf.mxu0
  %v4317 = vadd.f32 0.0, %v4316
  %4318 = vdwg.mxu0
  %v4319 = vsel %vm305, %v4296, %v4317
  %v4320 = vsel %vm305, %v4299, %v4314
  %v4321 = vsel %vm305, %v4302, %v4311
  %v4322 = vsel %vm305, %v4305, %v4308
  %v4323 = vsel %vm305, %v4308, %v4305
  %v4324 = vsel %vm305, %v4311, %v4302
  %v4325 = vsel %vm305, %v4314, %v4299
  %v4326 = vsel %vm305, %v4317, %v4296
  %v4327 = vld [vmem:[%s89] sm:$0x1]
  %v4329 = vperm.slane %v4327, 0
  %v4331 = vadd.f32 %v4319, %v4329
  %v4332 = vadd.f32 %v4320, %v4329
  %v4333 = vadd.f32 %v4321, %v4329
  %v4334 = vadd.f32 %v4322, %v4329
  %v4335 = vadd.f32 %v4323, %v4329
  %v4336 = vadd.f32 %v4324, %v4329
  %v4337 = vadd.f32 %v4325, %v4329
  %v4338 = vadd.f32 %v4326, %v4329
  %4339 = vst.msk [vmem:[#allocation4] sm:$0xff] %vm547, %v4331
  %4340 = vst.msk [vmem:[#allocation4 + $0x8] sm:$0xff] %vm547, %v4332
  %4341 = vst.msk [vmem:[#allocation4 + $0x10] sm:$0xff] %vm547, %v4333
  %4342 = vst.msk [vmem:[#allocation4 + $0x18] sm:$0xff] %vm547, %v4334
  %4343 = vst.msk [vmem:[#allocation4 + $0x20] sm:$0xff] %vm547, %v4335
  %4344 = vst.msk [vmem:[#allocation4 + $0x28] sm:$0xff] %vm547, %v4336
  %4345 = vst.msk [vmem:[#allocation4 + $0x30] sm:$0xff] %vm547, %v4337
  %4346 = vst.msk [vmem:[#allocation4 + $0x38] sm:$0xff] %vm547, %v4338
  %v4347 = vld [vmem:[%s75] sm:$0xff]
  %v4348 = vld [vmem:[%s75 + $0x8] sm:$0xff]
  %v4349 = vld [vmem:[%s75 + $0x10] sm:$0xff]
  %v4350 = vld [vmem:[%s75 + $0x18] sm:$0xff]
  %v4351 = vld [vmem:[%s75 + $0x20] sm:$0xff]
  %v4352 = vld [vmem:[%s75 + $0x28] sm:$0xff]
  %v4353 = vld [vmem:[%s75 + $0x30] sm:$0xff]
  %v4354 = vld [vmem:[%s75 + $0x38] sm:$0xff]
  %v4355 = vld [vmem:[%s81] sm:$0xff]
  %v4356 = vld [vmem:[%s81 + $0x8] sm:$0xff]
  %v4357 = vld [vmem:[%s81 + $0x10] sm:$0xff]
  %v4358 = vld [vmem:[%s81 + $0x18] sm:$0xff]
  %v4359 = vld [vmem:[%s81 + $0x20] sm:$0xff]
  %v4360 = vld [vmem:[%s81 + $0x28] sm:$0xff]
  %v4361 = vld [vmem:[%s81 + $0x30] sm:$0xff]
  %v4362 = vld [vmem:[%s81 + $0x38] sm:$0xff]
  %v4363 = vld [vmem:[%s87] sm:$0xff]
  %v4364 = vld [vmem:[%s87 + $0x8] sm:$0xff]
  %v4365 = vld [vmem:[%s87 + $0x10] sm:$0xff]
  %v4366 = vld [vmem:[%s87 + $0x18] sm:$0xff]
  %v4367 = vld [vmem:[%s87 + $0x20] sm:$0xff]
  %v4368 = vld [vmem:[%s87 + $0x28] sm:$0xff]
  %v4369 = vld [vmem:[%s87 + $0x30] sm:$0xff]
  %v4370 = vld [vmem:[%s87 + $0x38] sm:$0xff]
  %v4371 = vld [vmem:[%s91] sm:$0x1]
  %v4373 = vperm.slane %v4371, 0
  %4375 = vmatpush.msra.mxu0 0.0
  %4376 = vmatpush.msra.mxu0 0.0
  %4377 = vmatpush.msra.mxu0 0.0
  %4378 = vmatpush.msra.mxu0 0.0
  %4379 = vmatpush.msra.mxu0 0.0
  %4380 = vmatpush.msra.mxu0 0.0
  %4381 = vmatpush.msra.mxu0 0.0
  %4382 = vmatpush.msra.mxu0 0.0
  %4383 = vmatpush.msra.mxu0 %v4354
  %4384 = vmatpush.msra.mxu0 %v4353
  %4385 = vmatpush.msra.mxu0 %v4352
  %4386 = vmatpush.msra.mxu0 %v4351
  %4387 = vmatpush.msra.mxu0 %v4350
  %4388 = vmatpush.msra.mxu0 %v4349
  %4389 = vmatpush.msra.mxu0 %v4348
  %4390 = vmatpush.msra.mxu0 %v4347
  %4391 = vmatmul.f32.gmra.mxu0 %v821
  %v4392 = vpop.f32.mrf.mxu0
  %v4393 = vadd.f32 0.0, %v4392
  %4394 = vdwg.mxu0
  %4395 = vmatpush.msra.mxu0 0.0
  %4396 = vmatpush.msra.mxu0 0.0
  %4397 = vmatpush.msra.mxu0 0.0
  %4398 = vmatpush.msra.mxu0 0.0
  %4399 = vmatpush.msra.mxu0 0.0
  %4400 = vmatpush.msra.mxu0 0.0
  %4401 = vmatpush.msra.mxu0 0.0
  %4402 = vmatpush.msra.mxu0 0.0
  %4403 = vmatpush.msra.mxu0 %v4362
  %4404 = vmatpush.msra.mxu0 %v4361
  %4405 = vmatpush.msra.mxu0 %v4360
  %4406 = vmatpush.msra.mxu0 %v4359
  %4407 = vmatpush.msra.mxu0 %v4358
  %4408 = vmatpush.msra.mxu0 %v4357
  %4409 = vmatpush.msra.mxu0 %v4356
  %4410 = vmatpush.msra.mxu0 %v4355
  %4411 = vmatmul.f32.gmra.mxu0 %v821
  %v4412 = vpop.f32.mrf.mxu0
  %v4413 = vadd.f32 0.0, %v4412
  %4414 = vdwg.mxu0
  %v4415 = vld [vmem:[#allocation2] sm:$0xff]
  %v4416 = vadd.f32 %v4415, %v4393
  %v4417 = vxor.u32 %v4416, 2147483648
  %v4418 = vmul.f32 %v4417, 1.442695
  %v4419 = vpow.pop %v4418
  %v4420 = vadd.f32 %v4419, 1.0
  %v4421 = vrcp.pop %v4420
  %v4422 = vmul.f32 %v4420, %v4421
  %v4423 = vsub.f32 1.0, %v4422
  %v4424 = vmul.f32 %v4421, %v4423
  %v4425 = vadd.f32 %v4421, %v4424
  %vm4426 = vweird.f32 %v4420
  %vm4427 = vweird.f32 %v4421
  %vm4428 = vmor %vm4426, %vm4427
  %v4429 = vsel %vm4428, %v4421, %v4425
  %v4430 = vand.u32 2147483647, %v4420
  %vm4431 = vcmp.eq.f32.partialorder %v4430, 8.507059e+37
  %v4432 = vand.u32 %v4420, 2147483648
  %v4433 = vor.u32 1.1754944e-38, %v4432
  %v4434 = vsel %vm4431, %v4433, %v4429
  %v4435 = vmul.f32 1.0, %v4434
  %v4436 = vld [vmem:[#allocation3] sm:$0xff]
  %v4437 = vadd.f32 %v4436, %v4413
  %v4438 = vxor.u32 %v4437, 2147483648
  %v4439 = vmul.f32 %v4438, 1.442695
  %v4440 = vpow.pop %v4439
  %v4441 = vadd.f32 %v4440, 1.0
  %v4442 = vrcp.pop %v4441
  %v4443 = vmul.f32 %v4441, %v4442
  %v4444 = vsub.f32 1.0, %v4443
  %v4445 = vmul.f32 %v4442, %v4444
  %v4446 = vadd.f32 %v4442, %v4445
  %vm4447 = vweird.f32 %v4441
  %vm4448 = vweird.f32 %v4442
  %vm4449 = vmor %vm4447, %vm4448
  %v4450 = vsel %vm4449, %v4442, %v4446
  %v4451 = vand.u32 2147483647, %v4441
  %vm4452 = vcmp.eq.f32.partialorder %v4451, 8.507059e+37
  %v4453 = vand.u32 %v4441, 2147483648
  %v4454 = vor.u32 1.1754944e-38, %v4453
  %v4455 = vsel %vm4452, %v4454, %v4450
  %v4456 = vmul.f32 1.0, %v4455
  %v4457 = vld [vmem:[#allocation4] sm:$0xff]
  %4458 = vmatpush.msra.mxu0 0.0
  %4459 = vmatpush.msra.mxu0 0.0
  %4460 = vmatpush.msra.mxu0 0.0
  %4461 = vmatpush.msra.mxu0 0.0
  %4462 = vmatpush.msra.mxu0 0.0
  %4463 = vmatpush.msra.mxu0 0.0
  %4464 = vmatpush.msra.mxu0 0.0
  %4465 = vmatpush.msra.mxu0 0.0
  %4466 = vmatpush.msra.mxu0 %v4370
  %4467 = vmatpush.msra.mxu0 %v4369
  %4468 = vmatpush.msra.mxu0 %v4368
  %4469 = vmatpush.msra.mxu0 %v4367
  %4470 = vmatpush.msra.mxu0 %v4366
  %4471 = vmatpush.msra.mxu0 %v4365
  %4472 = vmatpush.msra.mxu0 %v4364
  %4473 = vmatpush.msra.mxu0 %v4363
  %4474 = vmatmul.f32.gmra.mxu0 %v821
  %v4475 = vpop.f32.mrf.mxu0
  %v4476 = vadd.f32 %v4373, %v4475
  %4477 = vdwg.mxu0
  %v4478 = vmul.f32 %v4435, %v4476
  %v4479 = vadd.f32 %v4457, %v4478
  %v4480 = vtanh.pop %v4479
  %v4481 = vsub.f32 0.0, %v4480
  %v4482 = vmul.f32 %v4456, %v4481
  %v4483 = vadd.f32 %v4480, %v4482
  %v4485 = vsel %vm547, %v4483, 0
  %4487 = vmatpush.msra.mxu0 0.0
  %4488 = vmatpush.msra.mxu0 0.0
  %4489 = vmatpush.msra.mxu0 0.0
  %4490 = vmatpush.msra.mxu0 0.0
  %4491 = vmatpush.msra.mxu0 0.0
  %4492 = vmatpush.msra.mxu0 0.0
  %4493 = vmatpush.msra.mxu0 0.0
  %4494 = vmatpush.msra.mxu0 0.0
  %4495 = vmatpush.msra.mxu0 %v4354
  %4496 = vmatpush.msra.mxu0 %v4353
  %4497 = vmatpush.msra.mxu0 %v4352
  %4498 = vmatpush.msra.mxu0 %v4351
  %4499 = vmatpush.msra.mxu0 %v4350
  %4500 = vmatpush.msra.mxu0 %v4349
  %4501 = vmatpush.msra.mxu0 %v4348
  %4502 = vmatpush.msra.mxu0 %v4347
  %4503 = vmatmul.f32.gmra.mxu0 %v4485
  %v4504 = vpop.f32.mrf.mxu0
  %v4505 = vadd.f32 0.0, %v4504
  %4506 = vdwg.mxu0
  %4507 = vmatpush.msra.mxu0 0.0
  %4508 = vmatpush.msra.mxu0 0.0
  %4509 = vmatpush.msra.mxu0 0.0
  %4510 = vmatpush.msra.mxu0 0.0
  %4511 = vmatpush.msra.mxu0 0.0
  %4512 = vmatpush.msra.mxu0 0.0
  %4513 = vmatpush.msra.mxu0 0.0
  %4514 = vmatpush.msra.mxu0 0.0
  %4515 = vmatpush.msra.mxu0 %v4362
  %4516 = vmatpush.msra.mxu0 %v4361
  %4517 = vmatpush.msra.mxu0 %v4360
  %4518 = vmatpush.msra.mxu0 %v4359
  %4519 = vmatpush.msra.mxu0 %v4358
  %4520 = vmatpush.msra.mxu0 %v4357
  %4521 = vmatpush.msra.mxu0 %v4356
  %4522 = vmatpush.msra.mxu0 %v4355
  %4523 = vmatmul.f32.gmra.mxu0 %v4485
  %v4524 = vpop.f32.mrf.mxu0
  %v4525 = vadd.f32 0.0, %v4524
  %4526 = vdwg.mxu0
  %v4527 = vld [vmem:[#allocation2 + $0x8] sm:$0xff]
  %v4528 = vadd.f32 %v4527, %v4505
  %v4529 = vxor.u32 %v4528, 2147483648
  %v4530 = vmul.f32 %v4529, 1.442695
  %v4531 = vpow.pop %v4530
  %v4532 = vadd.f32 %v4531, 1.0
  %v4533 = vrcp.pop %v4532
  %v4534 = vmul.f32 %v4532, %v4533
  %v4535 = vsub.f32 1.0, %v4534
  %v4536 = vmul.f32 %v4533, %v4535
  %v4537 = vadd.f32 %v4533, %v4536
  %vm4538 = vweird.f32 %v4532
  %vm4539 = vweird.f32 %v4533
  %vm4540 = vmor %vm4538, %vm4539
  %v4541 = vsel %vm4540, %v4533, %v4537
  %v4542 = vand.u32 2147483647, %v4532
  %vm4543 = vcmp.eq.f32.partialorder %v4542, 8.507059e+37
  %v4544 = vand.u32 %v4532, 2147483648
  %v4545 = vor.u32 1.1754944e-38, %v4544
  %v4546 = vsel %vm4543, %v4545, %v4541
  %v4547 = vmul.f32 1.0, %v4546
  %v4548 = vld [vmem:[#allocation3 + $0x8] sm:$0xff]
  %v4549 = vadd.f32 %v4548, %v4525
  %v4550 = vxor.u32 %v4549, 2147483648
  %v4551 = vmul.f32 %v4550, 1.442695
  %v4552 = vpow.pop %v4551
  %v4553 = vadd.f32 %v4552, 1.0
  %v4554 = vrcp.pop %v4553
  %v4555 = vmul.f32 %v4553, %v4554
  %v4556 = vsub.f32 1.0, %v4555
  %v4557 = vmul.f32 %v4554, %v4556
  %v4558 = vadd.f32 %v4554, %v4557
  %vm4559 = vweird.f32 %v4553
  %vm4560 = vweird.f32 %v4554
  %vm4561 = vmor %vm4559, %vm4560
  %v4562 = vsel %vm4561, %v4554, %v4558
  %v4563 = vand.u32 2147483647, %v4553
  %vm4564 = vcmp.eq.f32.partialorder %v4563, 8.507059e+37
  %v4565 = vand.u32 %v4553, 2147483648
  %v4566 = vor.u32 1.1754944e-38, %v4565
  %v4567 = vsel %vm4564, %v4566, %v4562
  %v4568 = vmul.f32 1.0, %v4567
  %v4569 = vld [vmem:[#allocation4 + $0x8] sm:$0xff]
  %4570 = vmatpush.msra.mxu0 0.0
  %4571 = vmatpush.msra.mxu0 0.0
  %4572 = vmatpush.msra.mxu0 0.0
  %4573 = vmatpush.msra.mxu0 0.0
  %4574 = vmatpush.msra.mxu0 0.0
  %4575 = vmatpush.msra.mxu0 0.0
  %4576 = vmatpush.msra.mxu0 0.0
  %4577 = vmatpush.msra.mxu0 0.0
  %4578 = vmatpush.msra.mxu0 %v4370
  %4579 = vmatpush.msra.mxu0 %v4369
  %4580 = vmatpush.msra.mxu0 %v4368
  %4581 = vmatpush.msra.mxu0 %v4367
  %4582 = vmatpush.msra.mxu0 %v4366
  %4583 = vmatpush.msra.mxu0 %v4365
  %4584 = vmatpush.msra.mxu0 %v4364
  %4585 = vmatpush.msra.mxu0 %v4363
  %4586 = vmatmul.f32.gmra.mxu0 %v4485
  %v4587 = vpop.f32.mrf.mxu0
  %v4588 = vadd.f32 %v4373, %v4587
  %4589 = vdwg.mxu0
  %v4590 = vmul.f32 %v4547, %v4588
  %v4591 = vadd.f32 %v4569, %v4590
  %v4592 = vtanh.pop %v4591
  %v4593 = vsub.f32 %v4483, %v4592
  %v4594 = vmul.f32 %v4568, %v4593
  %v4595 = vadd.f32 %v4592, %v4594
  %v4597 = vsel %vm547, %v4595, 0
  %4599 = vmatpush.msra.mxu0 0.0
  %4600 = vmatpush.msra.mxu0 0.0
  %4601 = vmatpush.msra.mxu0 0.0
  %4602 = vmatpush.msra.mxu0 0.0
  %4603 = vmatpush.msra.mxu0 0.0
  %4604 = vmatpush.msra.mxu0 0.0
  %4605 = vmatpush.msra.mxu0 0.0
  %4606 = vmatpush.msra.mxu0 0.0
  %4607 = vmatpush.msra.mxu0 %v4354
  %4608 = vmatpush.msra.mxu0 %v4353
  %4609 = vmatpush.msra.mxu0 %v4352
  %4610 = vmatpush.msra.mxu0 %v4351
  %4611 = vmatpush.msra.mxu0 %v4350
  %4612 = vmatpush.msra.mxu0 %v4349
  %4613 = vmatpush.msra.mxu0 %v4348
  %4614 = vmatpush.msra.mxu0 %v4347
  %4615 = vmatmul.f32.gmra.mxu0 %v4597
  %v4616 = vpop.f32.mrf.mxu0
  %v4617 = vadd.f32 0.0, %v4616
  %4618 = vdwg.mxu0
  %4619 = vmatpush.msra.mxu0 0.0
  %4620 = vmatpush.msra.mxu0 0.0
  %4621 = vmatpush.msra.mxu0 0.0
  %4622 = vmatpush.msra.mxu0 0.0
  %4623 = vmatpush.msra.mxu0 0.0
  %4624 = vmatpush.msra.mxu0 0.0
  %4625 = vmatpush.msra.mxu0 0.0
  %4626 = vmatpush.msra.mxu0 0.0
  %4627 = vmatpush.msra.mxu0 %v4362
  %4628 = vmatpush.msra.mxu0 %v4361
  %4629 = vmatpush.msra.mxu0 %v4360
  %4630 = vmatpush.msra.mxu0 %v4359
  %4631 = vmatpush.msra.mxu0 %v4358
  %4632 = vmatpush.msra.mxu0 %v4357
  %4633 = vmatpush.msra.mxu0 %v4356
  %4634 = vmatpush.msra.mxu0 %v4355
  %4635 = vmatmul.f32.gmra.mxu0 %v4597
  %v4636 = vpop.f32.mrf.mxu0
  %v4637 = vadd.f32 0.0, %v4636
  %4638 = vdwg.mxu0
  %v4639 = vld [vmem:[#allocation2 + $0x10] sm:$0xff]
  %v4640 = vadd.f32 %v4639, %v4617
  %v4641 = vxor.u32 %v4640, 2147483648
  %v4642 = vmul.f32 %v4641, 1.442695
  %v4643 = vpow.pop %v4642
  %v4644 = vadd.f32 %v4643, 1.0
  %v4645 = vrcp.pop %v4644
  %v4646 = vmul.f32 %v4644, %v4645
  %v4647 = vsub.f32 1.0, %v4646
  %v4648 = vmul.f32 %v4645, %v4647
  %v4649 = vadd.f32 %v4645, %v4648
  %vm4650 = vweird.f32 %v4644
  %vm4651 = vweird.f32 %v4645
  %vm4652 = vmor %vm4650, %vm4651
  %v4653 = vsel %vm4652, %v4645, %v4649
  %v4654 = vand.u32 2147483647, %v4644
  %vm4655 = vcmp.eq.f32.partialorder %v4654, 8.507059e+37
  %v4656 = vand.u32 %v4644, 2147483648
  %v4657 = vor.u32 1.1754944e-38, %v4656
  %v4658 = vsel %vm4655, %v4657, %v4653
  %v4659 = vmul.f32 1.0, %v4658
  %v4660 = vld [vmem:[#allocation3 + $0x10] sm:$0xff]
  %v4661 = vadd.f32 %v4660, %v4637
  %v4662 = vxor.u32 %v4661, 2147483648
  %v4663 = vmul.f32 %v4662, 1.442695
  %v4664 = vpow.pop %v4663
  %v4665 = vadd.f32 %v4664, 1.0
  %v4666 = vrcp.pop %v4665
  %v4667 = vmul.f32 %v4665, %v4666
  %v4668 = vsub.f32 1.0, %v4667
  %v4669 = vmul.f32 %v4666, %v4668
  %v4670 = vadd.f32 %v4666, %v4669
  %vm4671 = vweird.f32 %v4665
  %vm4672 = vweird.f32 %v4666
  %vm4673 = vmor %vm4671, %vm4672
  %v4674 = vsel %vm4673, %v4666, %v4670
  %v4675 = vand.u32 2147483647, %v4665
  %vm4676 = vcmp.eq.f32.partialorder %v4675, 8.507059e+37
  %v4677 = vand.u32 %v4665, 2147483648
  %v4678 = vor.u32 1.1754944e-38, %v4677
  %v4679 = vsel %vm4676, %v4678, %v4674
  %v4680 = vmul.f32 1.0, %v4679
  %v4681 = vld [vmem:[#allocation4 + $0x10] sm:$0xff]
  %4682 = vmatpush.msra.mxu0 0.0
  %4683 = vmatpush.msra.mxu0 0.0
  %4684 = vmatpush.msra.mxu0 0.0
  %4685 = vmatpush.msra.mxu0 0.0
  %4686 = vmatpush.msra.mxu0 0.0
  %4687 = vmatpush.msra.mxu0 0.0
  %4688 = vmatpush.msra.mxu0 0.0
  %4689 = vmatpush.msra.mxu0 0.0
  %4690 = vmatpush.msra.mxu0 %v4370
  %4691 = vmatpush.msra.mxu0 %v4369
  %4692 = vmatpush.msra.mxu0 %v4368
  %4693 = vmatpush.msra.mxu0 %v4367
  %4694 = vmatpush.msra.mxu0 %v4366
  %4695 = vmatpush.msra.mxu0 %v4365
  %4696 = vmatpush.msra.mxu0 %v4364
  %4697 = vmatpush.msra.mxu0 %v4363
  %4698 = vmatmul.f32.gmra.mxu0 %v4597
  %v4699 = vpop.f32.mrf.mxu0
  %v4700 = vadd.f32 %v4373, %v4699
  %4701 = vdwg.mxu0
  %v4702 = vmul.f32 %v4659, %v4700
  %v4703 = vadd.f32 %v4681, %v4702
  %v4704 = vtanh.pop %v4703
  %v4705 = vsub.f32 %v4595, %v4704
  %v4706 = vmul.f32 %v4680, %v4705
  %v4707 = vadd.f32 %v4704, %v4706
  %v4709 = vsel %vm547, %v4707, 0
  %4711 = vmatpush.msra.mxu0 0.0
  %4712 = vmatpush.msra.mxu0 0.0
  %4713 = vmatpush.msra.mxu0 0.0
  %4714 = vmatpush.msra.mxu0 0.0
  %4715 = vmatpush.msra.mxu0 0.0
  %4716 = vmatpush.msra.mxu0 0.0
  %4717 = vmatpush.msra.mxu0 0.0
  %4718 = vmatpush.msra.mxu0 0.0
  %4719 = vmatpush.msra.mxu0 %v4354
  %4720 = vmatpush.msra.mxu0 %v4353
  %4721 = vmatpush.msra.mxu0 %v4352
  %4722 = vmatpush.msra.mxu0 %v4351
  %4723 = vmatpush.msra.mxu0 %v4350
  %4724 = vmatpush.msra.mxu0 %v4349
  %4725 = vmatpush.msra.mxu0 %v4348
  %4726 = vmatpush.msra.mxu0 %v4347
  %4727 = vmatmul.f32.gmra.mxu0 %v4709
  %v4728 = vpop.f32.mrf.mxu0
  %v4729 = vadd.f32 0.0, %v4728
  %4730 = vdwg.mxu0
  %4731 = vmatpush.msra.mxu0 0.0
  %4732 = vmatpush.msra.mxu0 0.0
  %4733 = vmatpush.msra.mxu0 0.0
  %4734 = vmatpush.msra.mxu0 0.0
  %4735 = vmatpush.msra.mxu0 0.0
  %4736 = vmatpush.msra.mxu0 0.0
  %4737 = vmatpush.msra.mxu0 0.0
  %4738 = vmatpush.msra.mxu0 0.0
  %4739 = vmatpush.msra.mxu0 %v4362
  %4740 = vmatpush.msra.mxu0 %v4361
  %4741 = vmatpush.msra.mxu0 %v4360
  %4742 = vmatpush.msra.mxu0 %v4359
  %4743 = vmatpush.msra.mxu0 %v4358
  %4744 = vmatpush.msra.mxu0 %v4357
  %4745 = vmatpush.msra.mxu0 %v4356
  %4746 = vmatpush.msra.mxu0 %v4355
  %4747 = vmatmul.f32.gmra.mxu0 %v4709
  %v4748 = vpop.f32.mrf.mxu0
  %v4749 = vadd.f32 0.0, %v4748
  %4750 = vdwg.mxu0
  %v4751 = vld [vmem:[#allocation2 + $0x18] sm:$0xff]
  %v4752 = vadd.f32 %v4751, %v4729
  %v4753 = vxor.u32 %v4752, 2147483648
  %v4754 = vmul.f32 %v4753, 1.442695
  %v4755 = vpow.pop %v4754
  %v4756 = vadd.f32 %v4755, 1.0
  %v4757 = vrcp.pop %v4756
  %v4758 = vmul.f32 %v4756, %v4757
  %v4759 = vsub.f32 1.0, %v4758
  %v4760 = vmul.f32 %v4757, %v4759
  %v4761 = vadd.f32 %v4757, %v4760
  %vm4762 = vweird.f32 %v4756
  %vm4763 = vweird.f32 %v4757
  %vm4764 = vmor %vm4762, %vm4763
  %v4765 = vsel %vm4764, %v4757, %v4761
  %v4766 = vand.u32 2147483647, %v4756
  %vm4767 = vcmp.eq.f32.partialorder %v4766, 8.507059e+37
  %v4768 = vand.u32 %v4756, 2147483648
  %v4769 = vor.u32 1.1754944e-38, %v4768
  %v4770 = vsel %vm4767, %v4769, %v4765
  %v4771 = vmul.f32 1.0, %v4770
  %v4772 = vld [vmem:[#allocation3 + $0x18] sm:$0xff]
  %v4773 = vadd.f32 %v4772, %v4749
  %v4774 = vxor.u32 %v4773, 2147483648
  %v4775 = vmul.f32 %v4774, 1.442695
  %v4776 = vpow.pop %v4775
  %v4777 = vadd.f32 %v4776, 1.0
  %v4778 = vrcp.pop %v4777
  %v4779 = vmul.f32 %v4777, %v4778
  %v4780 = vsub.f32 1.0, %v4779
  %v4781 = vmul.f32 %v4778, %v4780
  %v4782 = vadd.f32 %v4778, %v4781
  %vm4783 = vweird.f32 %v4777
  %vm4784 = vweird.f32 %v4778
  %vm4785 = vmor %vm4783, %vm4784
  %v4786 = vsel %vm4785, %v4778, %v4782
  %v4787 = vand.u32 2147483647, %v4777
  %vm4788 = vcmp.eq.f32.partialorder %v4787, 8.507059e+37
  %v4789 = vand.u32 %v4777, 2147483648
  %v4790 = vor.u32 1.1754944e-38, %v4789
  %v4791 = vsel %vm4788, %v4790, %v4786
  %v4792 = vmul.f32 1.0, %v4791
  %v4793 = vld [vmem:[#allocation4 + $0x18] sm:$0xff]
  %4794 = vmatpush.msra.mxu0 0.0
  %4795 = vmatpush.msra.mxu0 0.0
  %4796 = vmatpush.msra.mxu0 0.0
  %4797 = vmatpush.msra.mxu0 0.0
  %4798 = vmatpush.msra.mxu0 0.0
  %4799 = vmatpush.msra.mxu0 0.0
  %4800 = vmatpush.msra.mxu0 0.0
  %4801 = vmatpush.msra.mxu0 0.0
  %4802 = vmatpush.msra.mxu0 %v4370
  %4803 = vmatpush.msra.mxu0 %v4369
  %4804 = vmatpush.msra.mxu0 %v4368
  %4805 = vmatpush.msra.mxu0 %v4367
  %4806 = vmatpush.msra.mxu0 %v4366
  %4807 = vmatpush.msra.mxu0 %v4365
  %4808 = vmatpush.msra.mxu0 %v4364
  %4809 = vmatpush.msra.mxu0 %v4363
  %4810 = vmatmul.f32.gmra.mxu0 %v4709
  %v4811 = vpop.f32.mrf.mxu0
  %v4812 = vadd.f32 %v4373, %v4811
  %4813 = vdwg.mxu0
  %v4814 = vmul.f32 %v4771, %v4812
  %v4815 = vadd.f32 %v4793, %v4814
  %v4816 = vtanh.pop %v4815
  %v4817 = vsub.f32 %v4707, %v4816
  %v4818 = vmul.f32 %v4792, %v4817
  %v4819 = vadd.f32 %v4816, %v4818
  %v4821 = vsel %vm547, %v4819, 0
  %4823 = vmatpush.msra.mxu0 0.0
  %4824 = vmatpush.msra.mxu0 0.0
  %4825 = vmatpush.msra.mxu0 0.0
  %4826 = vmatpush.msra.mxu0 0.0
  %4827 = vmatpush.msra.mxu0 0.0
  %4828 = vmatpush.msra.mxu0 0.0
  %4829 = vmatpush.msra.mxu0 0.0
  %4830 = vmatpush.msra.mxu0 0.0
  %4831 = vmatpush.msra.mxu0 %v4354
  %4832 = vmatpush.msra.mxu0 %v4353
  %4833 = vmatpush.msra.mxu0 %v4352
  %4834 = vmatpush.msra.mxu0 %v4351
  %4835 = vmatpush.msra.mxu0 %v4350
  %4836 = vmatpush.msra.mxu0 %v4349
  %4837 = vmatpush.msra.mxu0 %v4348
  %4838 = vmatpush.msra.mxu0 %v4347
  %4839 = vmatmul.f32.gmra.mxu0 %v4821
  %v4840 = vpop.f32.mrf.mxu0
  %v4841 = vadd.f32 0.0, %v4840
  %4842 = vdwg.mxu0
  %4843 = vmatpush.msra.mxu0 0.0
  %4844 = vmatpush.msra.mxu0 0.0
  %4845 = vmatpush.msra.mxu0 0.0
  %4846 = vmatpush.msra.mxu0 0.0
  %4847 = vmatpush.msra.mxu0 0.0
  %4848 = vmatpush.msra.mxu0 0.0
  %4849 = vmatpush.msra.mxu0 0.0
  %4850 = vmatpush.msra.mxu0 0.0
  %4851 = vmatpush.msra.mxu0 %v4362
  %4852 = vmatpush.msra.mxu0 %v4361
  %4853 = vmatpush.msra.mxu0 %v4360
  %4854 = vmatpush.msra.mxu0 %v4359
  %4855 = vmatpush.msra.mxu0 %v4358
  %4856 = vmatpush.msra.mxu0 %v4357
  %4857 = vmatpush.msra.mxu0 %v4356
  %4858 = vmatpush.msra.mxu0 %v4355
  %4859 = vmatmul.f32.gmra.mxu0 %v4821
  %v4860 = vpop.f32.mrf.mxu0
  %v4861 = vadd.f32 0.0, %v4860
  %4862 = vdwg.mxu0
  %v4863 = vld [vmem:[#allocation2 + $0x20] sm:$0xff]
  %v4864 = vadd.f32 %v4863, %v4841
  %v4865 = vxor.u32 %v4864, 2147483648
  %v4866 = vmul.f32 %v4865, 1.442695
  %v4867 = vpow.pop %v4866
  %v4868 = vadd.f32 %v4867, 1.0
  %v4869 = vrcp.pop %v4868
  %v4870 = vmul.f32 %v4868, %v4869
  %v4871 = vsub.f32 1.0, %v4870
  %v4872 = vmul.f32 %v4869, %v4871
  %v4873 = vadd.f32 %v4869, %v4872
  %vm4874 = vweird.f32 %v4868
  %vm4875 = vweird.f32 %v4869
  %vm4876 = vmor %vm4874, %vm4875
  %v4877 = vsel %vm4876, %v4869, %v4873
  %v4878 = vand.u32 2147483647, %v4868
  %vm4879 = vcmp.eq.f32.partialorder %v4878, 8.507059e+37
  %v4880 = vand.u32 %v4868, 2147483648
  %v4881 = vor.u32 1.1754944e-38, %v4880
  %v4882 = vsel %vm4879, %v4881, %v4877
  %v4883 = vmul.f32 1.0, %v4882
  %v4884 = vld [vmem:[#allocation3 + $0x20] sm:$0xff]
  %v4885 = vadd.f32 %v4884, %v4861
  %v4886 = vxor.u32 %v4885, 2147483648
  %v4887 = vmul.f32 %v4886, 1.442695
  %v4888 = vpow.pop %v4887
  %v4889 = vadd.f32 %v4888, 1.0
  %v4890 = vrcp.pop %v4889
  %v4891 = vmul.f32 %v4889, %v4890
  %v4892 = vsub.f32 1.0, %v4891
  %v4893 = vmul.f32 %v4890, %v4892
  %v4894 = vadd.f32 %v4890, %v4893
  %vm4895 = vweird.f32 %v4889
  %vm4896 = vweird.f32 %v4890
  %vm4897 = vmor %vm4895, %vm4896
  %v4898 = vsel %vm4897, %v4890, %v4894
  %v4899 = vand.u32 2147483647, %v4889
  %vm4900 = vcmp.eq.f32.partialorder %v4899, 8.507059e+37
  %v4901 = vand.u32 %v4889, 2147483648
  %v4902 = vor.u32 1.1754944e-38, %v4901
  %v4903 = vsel %vm4900, %v4902, %v4898
  %v4904 = vmul.f32 1.0, %v4903
  %v4905 = vld [vmem:[#allocation4 + $0x20] sm:$0xff]
  %4906 = vmatpush.msra.mxu0 0.0
  %4907 = vmatpush.msra.mxu0 0.0
  %4908 = vmatpush.msra.mxu0 0.0
  %4909 = vmatpush.msra.mxu0 0.0
  %4910 = vmatpush.msra.mxu0 0.0
  %4911 = vmatpush.msra.mxu0 0.0
  %4912 = vmatpush.msra.mxu0 0.0
  %4913 = vmatpush.msra.mxu0 0.0
  %4914 = vmatpush.msra.mxu0 %v4370
  %4915 = vmatpush.msra.mxu0 %v4369
  %4916 = vmatpush.msra.mxu0 %v4368
  %4917 = vmatpush.msra.mxu0 %v4367
  %4918 = vmatpush.msra.mxu0 %v4366
  %4919 = vmatpush.msra.mxu0 %v4365
  %4920 = vmatpush.msra.mxu0 %v4364
  %4921 = vmatpush.msra.mxu0 %v4363
  %4922 = vmatmul.f32.gmra.mxu0 %v4821
  %v4923 = vpop.f32.mrf.mxu0
  %v4924 = vadd.f32 %v4373, %v4923
  %4925 = vdwg.mxu0
  %v4926 = vmul.f32 %v4883, %v4924
  %v4927 = vadd.f32 %v4905, %v4926
  %v4928 = vtanh.pop %v4927
  %v4929 = vsub.f32 %v4819, %v4928
  %v4930 = vmul.f32 %v4904, %v4929
  %v4931 = vadd.f32 %v4928, %v4930
  %v4933 = vsel %vm547, %v4931, 0
  %4935 = vmatpush.msra.mxu0 0.0
  %4936 = vmatpush.msra.mxu0 0.0
  %4937 = vmatpush.msra.mxu0 0.0
  %4938 = vmatpush.msra.mxu0 0.0
  %4939 = vmatpush.msra.mxu0 0.0
  %4940 = vmatpush.msra.mxu0 0.0
  %4941 = vmatpush.msra.mxu0 0.0
  %4942 = vmatpush.msra.mxu0 0.0
  %4943 = vmatpush.msra.mxu0 %v4354
  %4944 = vmatpush.msra.mxu0 %v4353
  %4945 = vmatpush.msra.mxu0 %v4352
  %4946 = vmatpush.msra.mxu0 %v4351
  %4947 = vmatpush.msra.mxu0 %v4350
  %4948 = vmatpush.msra.mxu0 %v4349
  %4949 = vmatpush.msra.mxu0 %v4348
  %4950 = vmatpush.msra.mxu0 %v4347
  %4951 = vmatmul.f32.gmra.mxu0 %v4933
  %v4952 = vpop.f32.mrf.mxu0
  %v4953 = vadd.f32 0.0, %v4952
  %4954 = vdwg.mxu0
  %4955 = vmatpush.msra.mxu0 0.0
  %4956 = vmatpush.msra.mxu0 0.0
  %4957 = vmatpush.msra.mxu0 0.0
  %4958 = vmatpush.msra.mxu0 0.0
  %4959 = vmatpush.msra.mxu0 0.0
  %4960 = vmatpush.msra.mxu0 0.0
  %4961 = vmatpush.msra.mxu0 0.0
  %4962 = vmatpush.msra.mxu0 0.0
  %4963 = vmatpush.msra.mxu0 %v4362
  %4964 = vmatpush.msra.mxu0 %v4361
  %4965 = vmatpush.msra.mxu0 %v4360
  %4966 = vmatpush.msra.mxu0 %v4359
  %4967 = vmatpush.msra.mxu0 %v4358
  %4968 = vmatpush.msra.mxu0 %v4357
  %4969 = vmatpush.msra.mxu0 %v4356
  %4970 = vmatpush.msra.mxu0 %v4355
  %4971 = vmatmul.f32.gmra.mxu0 %v4933
  %v4972 = vpop.f32.mrf.mxu0
  %v4973 = vadd.f32 0.0, %v4972
  %4974 = vdwg.mxu0
  %v4975 = vld [vmem:[#allocation2 + $0x28] sm:$0xff]
  %v4976 = vadd.f32 %v4975, %v4953
  %v4977 = vxor.u32 %v4976, 2147483648
  %v4978 = vmul.f32 %v4977, 1.442695
  %v4979 = vpow.pop %v4978
  %v4980 = vadd.f32 %v4979, 1.0
  %v4981 = vrcp.pop %v4980
  %v4982 = vmul.f32 %v4980, %v4981
  %v4983 = vsub.f32 1.0, %v4982
  %v4984 = vmul.f32 %v4981, %v4983
  %v4985 = vadd.f32 %v4981, %v4984
  %vm4986 = vweird.f32 %v4980
  %vm4987 = vweird.f32 %v4981
  %vm4988 = vmor %vm4986, %vm4987
  %v4989 = vsel %vm4988, %v4981, %v4985
  %v4990 = vand.u32 2147483647, %v4980
  %vm4991 = vcmp.eq.f32.partialorder %v4990, 8.507059e+37
  %v4992 = vand.u32 %v4980, 2147483648
  %v4993 = vor.u32 1.1754944e-38, %v4992
  %v4994 = vsel %vm4991, %v4993, %v4989
  %v4995 = vmul.f32 1.0, %v4994
  %v4996 = vld [vmem:[#allocation3 + $0x28] sm:$0xff]
  %v4997 = vadd.f32 %v4996, %v4973
  %v4998 = vxor.u32 %v4997, 2147483648
  %v4999 = vmul.f32 %v4998, 1.442695
  %v5000 = vpow.pop %v4999
  %v5001 = vadd.f32 %v5000, 1.0
  %v5002 = vrcp.pop %v5001
  %v5003 = vmul.f32 %v5001, %v5002
  %v5004 = vsub.f32 1.0, %v5003
  %v5005 = vmul.f32 %v5002, %v5004
  %v5006 = vadd.f32 %v5002, %v5005
  %vm5007 = vweird.f32 %v5001
  %vm5008 = vweird.f32 %v5002
  %vm5009 = vmor %vm5007, %vm5008
  %v5010 = vsel %vm5009, %v5002, %v5006
  %v5011 = vand.u32 2147483647, %v5001
  %vm5012 = vcmp.eq.f32.partialorder %v5011, 8.507059e+37
  %v5013 = vand.u32 %v5001, 2147483648
  %v5014 = vor.u32 1.1754944e-38, %v5013
  %v5015 = vsel %vm5012, %v5014, %v5010
  %v5016 = vmul.f32 1.0, %v5015
  %v5017 = vld [vmem:[#allocation4 + $0x28] sm:$0xff]
  %5018 = vmatpush.msra.mxu0 0.0
  %5019 = vmatpush.msra.mxu0 0.0
  %5020 = vmatpush.msra.mxu0 0.0
  %5021 = vmatpush.msra.mxu0 0.0
  %5022 = vmatpush.msra.mxu0 0.0
  %5023 = vmatpush.msra.mxu0 0.0
  %5024 = vmatpush.msra.mxu0 0.0
  %5025 = vmatpush.msra.mxu0 0.0
  %5026 = vmatpush.msra.mxu0 %v4370
  %5027 = vmatpush.msra.mxu0 %v4369
  %5028 = vmatpush.msra.mxu0 %v4368
  %5029 = vmatpush.msra.mxu0 %v4367
  %5030 = vmatpush.msra.mxu0 %v4366
  %5031 = vmatpush.msra.mxu0 %v4365
  %5032 = vmatpush.msra.mxu0 %v4364
  %5033 = vmatpush.msra.mxu0 %v4363
  %5034 = vmatmul.f32.gmra.mxu0 %v4933
  %v5035 = vpop.f32.mrf.mxu0
  %v5036 = vadd.f32 %v4373, %v5035
  %5037 = vdwg.mxu0
  %v5038 = vmul.f32 %v4995, %v5036
  %v5039 = vadd.f32 %v5017, %v5038
  %v5040 = vtanh.pop %v5039
  %v5041 = vsub.f32 %v4931, %v5040
  %v5042 = vmul.f32 %v5016, %v5041
  %v5043 = vadd.f32 %v5040, %v5042
  %v5045 = vsel %vm547, %v5043, 0
  %5047 = vmatpush.msra.mxu0 0.0
  %5048 = vmatpush.msra.mxu0 0.0
  %5049 = vmatpush.msra.mxu0 0.0
  %5050 = vmatpush.msra.mxu0 0.0
  %5051 = vmatpush.msra.mxu0 0.0
  %5052 = vmatpush.msra.mxu0 0.0
  %5053 = vmatpush.msra.mxu0 0.0
  %5054 = vmatpush.msra.mxu0 0.0
  %5055 = vmatpush.msra.mxu0 %v4354
  %5056 = vmatpush.msra.mxu0 %v4353
  %5057 = vmatpush.msra.mxu0 %v4352
  %5058 = vmatpush.msra.mxu0 %v4351
  %5059 = vmatpush.msra.mxu0 %v4350
  %5060 = vmatpush.msra.mxu0 %v4349
  %5061 = vmatpush.msra.mxu0 %v4348
  %5062 = vmatpush.msra.mxu0 %v4347
  %5063 = vmatmul.f32.gmra.mxu0 %v5045
  %v5064 = vpop.f32.mrf.mxu0
  %v5065 = vadd.f32 0.0, %v5064
  %5066 = vdwg.mxu0
  %5067 = vmatpush.msra.mxu0 0.0
  %5068 = vmatpush.msra.mxu0 0.0
  %5069 = vmatpush.msra.mxu0 0.0
  %5070 = vmatpush.msra.mxu0 0.0
  %5071 = vmatpush.msra.mxu0 0.0
  %5072 = vmatpush.msra.mxu0 0.0
  %5073 = vmatpush.msra.mxu0 0.0
  %5074 = vmatpush.msra.mxu0 0.0
  %5075 = vmatpush.msra.mxu0 %v4362
  %5076 = vmatpush.msra.mxu0 %v4361
  %5077 = vmatpush.msra.mxu0 %v4360
  %5078 = vmatpush.msra.mxu0 %v4359
  %5079 = vmatpush.msra.mxu0 %v4358
  %5080 = vmatpush.msra.mxu0 %v4357
  %5081 = vmatpush.msra.mxu0 %v4356
  %5082 = vmatpush.msra.mxu0 %v4355
  %5083 = vmatmul.f32.gmra.mxu0 %v5045
  %v5084 = vpop.f32.mrf.mxu0
  %v5085 = vadd.f32 0.0, %v5084
  %5086 = vdwg.mxu0
  %v5087 = vld [vmem:[#allocation2 + $0x30] sm:$0xff]
  %v5088 = vadd.f32 %v5087, %v5065
  %v5089 = vxor.u32 %v5088, 2147483648
  %v5090 = vmul.f32 %v5089, 1.442695
  %v5091 = vpow.pop %v5090
  %v5092 = vadd.f32 %v5091, 1.0
  %v5093 = vrcp.pop %v5092
  %v5094 = vmul.f32 %v5092, %v5093
  %v5095 = vsub.f32 1.0, %v5094
  %v5096 = vmul.f32 %v5093, %v5095
  %v5097 = vadd.f32 %v5093, %v5096
  %vm5098 = vweird.f32 %v5092
  %vm5099 = vweird.f32 %v5093
  %vm5100 = vmor %vm5098, %vm5099
  %v5101 = vsel %vm5100, %v5093, %v5097
  %v5102 = vand.u32 2147483647, %v5092
  %vm5103 = vcmp.eq.f32.partialorder %v5102, 8.507059e+37
  %v5104 = vand.u32 %v5092, 2147483648
  %v5105 = vor.u32 1.1754944e-38, %v5104
  %v5106 = vsel %vm5103, %v5105, %v5101
  %v5107 = vmul.f32 1.0, %v5106
  %v5108 = vld [vmem:[#allocation3 + $0x30] sm:$0xff]
  %v5109 = vadd.f32 %v5108, %v5085
  %v5110 = vxor.u32 %v5109, 2147483648
  %v5111 = vmul.f32 %v5110, 1.442695
  %v5112 = vpow.pop %v5111
  %v5113 = vadd.f32 %v5112, 1.0
  %v5114 = vrcp.pop %v5113
  %v5115 = vmul.f32 %v5113, %v5114
  %v5116 = vsub.f32 1.0, %v5115
  %v5117 = vmul.f32 %v5114, %v5116
  %v5118 = vadd.f32 %v5114, %v5117
  %vm5119 = vweird.f32 %v5113
  %vm5120 = vweird.f32 %v5114
  %vm5121 = vmor %vm5119, %vm5120
  %v5122 = vsel %vm5121, %v5114, %v5118
  %v5123 = vand.u32 2147483647, %v5113
  %vm5124 = vcmp.eq.f32.partialorder %v5123, 8.507059e+37
  %v5125 = vand.u32 %v5113, 2147483648
  %v5126 = vor.u32 1.1754944e-38, %v5125
  %v5127 = vsel %vm5124, %v5126, %v5122
  %v5128 = vmul.f32 1.0, %v5127
  %v5129 = vld [vmem:[#allocation4 + $0x30] sm:$0xff]
  %5130 = vmatpush.msra.mxu0 0.0
  %5131 = vmatpush.msra.mxu0 0.0
  %5132 = vmatpush.msra.mxu0 0.0
  %5133 = vmatpush.msra.mxu0 0.0
  %5134 = vmatpush.msra.mxu0 0.0
  %5135 = vmatpush.msra.mxu0 0.0
  %5136 = vmatpush.msra.mxu0 0.0
  %5137 = vmatpush.msra.mxu0 0.0
  %5138 = vmatpush.msra.mxu0 %v4370
  %5139 = vmatpush.msra.mxu0 %v4369
  %5140 = vmatpush.msra.mxu0 %v4368
  %5141 = vmatpush.msra.mxu0 %v4367
  %5142 = vmatpush.msra.mxu0 %v4366
  %5143 = vmatpush.msra.mxu0 %v4365
  %5144 = vmatpush.msra.mxu0 %v4364
  %5145 = vmatpush.msra.mxu0 %v4363
  %5146 = vmatmul.f32.gmra.mxu0 %v5045
  %v5147 = vpop.f32.mrf.mxu0
  %v5148 = vadd.f32 %v4373, %v5147
  %5149 = vdwg.mxu0
  %v5150 = vmul.f32 %v5107, %v5148
  %v5151 = vadd.f32 %v5129, %v5150
  %v5152 = vtanh.pop %v5151
  %v5153 = vsub.f32 %v5043, %v5152
  %v5154 = vmul.f32 %v5128, %v5153
  %v5155 = vadd.f32 %v5152, %v5154
  %v5157 = vsel %vm547, %v5155, 0
  %5159 = vmatpush.msra.mxu0 0.0
  %5160 = vmatpush.msra.mxu0 0.0
  %5161 = vmatpush.msra.mxu0 0.0
  %5162 = vmatpush.msra.mxu0 0.0
  %5163 = vmatpush.msra.mxu0 0.0
  %5164 = vmatpush.msra.mxu0 0.0
  %5165 = vmatpush.msra.mxu0 0.0
  %5166 = vmatpush.msra.mxu0 0.0
  %5167 = vmatpush.msra.mxu0 %v4354
  %5168 = vmatpush.msra.mxu0 %v4353
  %5169 = vmatpush.msra.mxu0 %v4352
  %5170 = vmatpush.msra.mxu0 %v4351
  %5171 = vmatpush.msra.mxu0 %v4350
  %5172 = vmatpush.msra.mxu0 %v4349
  %5173 = vmatpush.msra.mxu0 %v4348
  %5174 = vmatpush.msra.mxu0 %v4347
  %5175 = vmatmul.f32.gmra.mxu0 %v5157
  %v5176 = vpop.f32.mrf.mxu0
  %v5177 = vadd.f32 0.0, %v5176
  %5178 = vdwg.mxu0
  %5179 = vmatpush.msra.mxu0 0.0
  %5180 = vmatpush.msra.mxu0 0.0
  %5181 = vmatpush.msra.mxu0 0.0
  %5182 = vmatpush.msra.mxu0 0.0
  %5183 = vmatpush.msra.mxu0 0.0
  %5184 = vmatpush.msra.mxu0 0.0
  %5185 = vmatpush.msra.mxu0 0.0
  %5186 = vmatpush.msra.mxu0 0.0
  %5187 = vmatpush.msra.mxu0 %v4362
  %5188 = vmatpush.msra.mxu0 %v4361
  %5189 = vmatpush.msra.mxu0 %v4360
  %5190 = vmatpush.msra.mxu0 %v4359
  %5191 = vmatpush.msra.mxu0 %v4358
  %5192 = vmatpush.msra.mxu0 %v4357
  %5193 = vmatpush.msra.mxu0 %v4356
  %5194 = vmatpush.msra.mxu0 %v4355
  %5195 = vmatmul.f32.gmra.mxu0 %v5157
  %v5196 = vpop.f32.mrf.mxu0
  %v5197 = vadd.f32 0.0, %v5196
  %5198 = vdwg.mxu0
  %v5199 = vld [vmem:[#allocation2 + $0x38] sm:$0xff]
  %v5200 = vadd.f32 %v5199, %v5177
  %v5201 = vxor.u32 %v5200, 2147483648
  %v5202 = vmul.f32 %v5201, 1.442695
  %v5203 = vpow.pop %v5202
  %v5204 = vadd.f32 %v5203, 1.0
  %v5205 = vrcp.pop %v5204
  %v5206 = vmul.f32 %v5204, %v5205
  %v5207 = vsub.f32 1.0, %v5206
  %v5208 = vmul.f32 %v5205, %v5207
  %v5209 = vadd.f32 %v5205, %v5208
  %vm5210 = vweird.f32 %v5204
  %vm5211 = vweird.f32 %v5205
  %vm5212 = vmor %vm5210, %vm5211
  %v5213 = vsel %vm5212, %v5205, %v5209
  %v5214 = vand.u32 2147483647, %v5204
  %vm5215 = vcmp.eq.f32.partialorder %v5214, 8.507059e+37
  %v5216 = vand.u32 %v5204, 2147483648
  %v5217 = vor.u32 1.1754944e-38, %v5216
  %v5218 = vsel %vm5215, %v5217, %v5213
  %v5219 = vmul.f32 1.0, %v5218
  %v5220 = vld [vmem:[#allocation3 + $0x38] sm:$0xff]
  %v5221 = vadd.f32 %v5220, %v5197
  %v5222 = vxor.u32 %v5221, 2147483648
  %v5223 = vmul.f32 %v5222, 1.442695
  %v5224 = vpow.pop %v5223
  %v5225 = vadd.f32 %v5224, 1.0
  %v5226 = vrcp.pop %v5225
  %v5227 = vmul.f32 %v5225, %v5226
  %v5228 = vsub.f32 1.0, %v5227
  %v5229 = vmul.f32 %v5226, %v5228
  %v5230 = vadd.f32 %v5226, %v5229
  %vm5231 = vweird.f32 %v5225
  %vm5232 = vweird.f32 %v5226
  %vm5233 = vmor %vm5231, %vm5232
  %v5234 = vsel %vm5233, %v5226, %v5230
  %v5235 = vand.u32 2147483647, %v5225
  %vm5236 = vcmp.eq.f32.partialorder %v5235, 8.507059e+37
  %v5237 = vand.u32 %v5225, 2147483648
  %v5238 = vor.u32 1.1754944e-38, %v5237
  %v5239 = vsel %vm5236, %v5238, %v5234
  %v5240 = vmul.f32 1.0, %v5239
  %v5241 = vld [vmem:[#allocation4 + $0x38] sm:$0xff]
  %5242 = vmatpush.msra.mxu0 0.0
  %5243 = vmatpush.msra.mxu0 0.0
  %5244 = vmatpush.msra.mxu0 0.0
  %5245 = vmatpush.msra.mxu0 0.0
  %5246 = vmatpush.msra.mxu0 0.0
  %5247 = vmatpush.msra.mxu0 0.0
  %5248 = vmatpush.msra.mxu0 0.0
  %5249 = vmatpush.msra.mxu0 0.0
  %5250 = vmatpush.msra.mxu0 %v4370
  %5251 = vmatpush.msra.mxu0 %v4369
  %5252 = vmatpush.msra.mxu0 %v4368
  %5253 = vmatpush.msra.mxu0 %v4367
  %5254 = vmatpush.msra.mxu0 %v4366
  %5255 = vmatpush.msra.mxu0 %v4365
  %5256 = vmatpush.msra.mxu0 %v4364
  %5257 = vmatpush.msra.mxu0 %v4363
  %5258 = vmatmul.f32.gmra.mxu0 %v5157
  %v5259 = vpop.f32.mrf.mxu0
  %v5260 = vadd.f32 %v4373, %v5259
  %5261 = vdwg.mxu0
  %v5262 = vmul.f32 %v5219, %v5260
  %v5263 = vadd.f32 %v5241, %v5262
  %v5264 = vtanh.pop %v5263
  %v5265 = vsub.f32 %v5155, %v5264
  %v5266 = vmul.f32 %v5240, %v5265
  %v5267 = vadd.f32 %v5264, %v5266
  %v5268 = vsel %vm305, %v5267, %v4483
  %v5269 = vld [vmem:[%s93] sm:$0xff]
  %v5270 = vld [vmem:[%s93 + $0x8] sm:$0xff]
  %v5271 = vld [vmem:[%s93 + $0x10] sm:$0xff]
  %v5272 = vld [vmem:[%s93 + $0x18] sm:$0xff]
  %v5273 = vld [vmem:[%s93 + $0x20] sm:$0xff]
  %v5274 = vld [vmem:[%s93 + $0x28] sm:$0xff]
  %v5275 = vld [vmem:[%s93 + $0x30] sm:$0xff]
  %v5276 = vld [vmem:[%s93 + $0x38] sm:$0xff]
  %v5277 = vld [vmem:[%s95] sm:$0x1]
  %v5279 = vperm.slane %v5277, 0
  %v5282 = vsel %vm547, %v5268, 0
  %5284 = vmatpush.msra.mxu0 0.0
  %5285 = vmatpush.msra.mxu0 0.0
  %5286 = vmatpush.msra.mxu0 0.0
  %5287 = vmatpush.msra.mxu0 0.0
  %5288 = vmatpush.msra.mxu0 0.0
  %5289 = vmatpush.msra.mxu0 0.0
  %5290 = vmatpush.msra.mxu0 0.0
  %5291 = vmatpush.msra.mxu0 0.0
  %5292 = vmatpush.msra.mxu0 %v5276
  %5293 = vmatpush.msra.mxu0 %v5275
  %5294 = vmatpush.msra.mxu0 %v5274
  %5295 = vmatpush.msra.mxu0 %v5273
  %5296 = vmatpush.msra.mxu0 %v5272
  %5297 = vmatpush.msra.mxu0 %v5271
  %5298 = vmatpush.msra.mxu0 %v5270
  %5299 = vmatpush.msra.mxu0 %v5269
  %5300 = vmatmul.f32.gmra.mxu0 %v5282
  %v5301 = vpop.f32.mrf.mxu0
  %v5302 = vadd.f32 %v5279, %v5301
  %5303 = vdwg.mxu0
  %v5304 = vmax.f32 %v5302, 0.0
  %v5305 = vld [vmem:[%s97] sm:$0xff]
  %v5306 = vld [vmem:[%s97 + $0x8] sm:$0xff]
  %v5307 = vld [vmem:[%s97 + $0x10] sm:$0xff]
  %v5308 = vld [vmem:[%s97 + $0x18] sm:$0xff]
  %v5309 = vld [vmem:[%s99] sm:$0x1]
  %v5311 = vperm.slane %v5309, 0
  %v5314 = vsel %vm305, %v5304, 0
  %5316 = vmatpush.msra.mxu0 0.0
  %5317 = vmatpush.msra.mxu0 0.0
  %5318 = vmatpush.msra.mxu0 0.0
  %5319 = vmatpush.msra.mxu0 0.0
  %5320 = vmatpush.msra.mxu0 0.0
  %5321 = vmatpush.msra.mxu0 0.0
  %5322 = vmatpush.msra.mxu0 0.0
  %5323 = vmatpush.msra.mxu0 0.0
  %5324 = vmatpush.msra.mxu0 0.0
  %5325 = vmatpush.msra.mxu0 0.0
  %5326 = vmatpush.msra.mxu0 0.0
  %5327 = vmatpush.msra.mxu0 0.0
  %5328 = vmatpush.msra.mxu0 %v5308
  %5329 = vmatpush.msra.mxu0 %v5307
  %5330 = vmatpush.msra.mxu0 %v5306
  %5331 = vmatpush.msra.mxu0 %v5305
  %5332 = vmatmul.f32.gmra.mxu0 %v5314
  %v5333 = vpop.f32.mrf.mxu0
  %v5334 = vadd.f32 %v5311, %v5333
  %5335 = vdwg.mxu0
  %vm5336 = vcmask 130048
  %5337 = vst.msk [vmem:[%s101] sm:$0xff] %vm5336, %v5334
  // Predicated region
  $region202: #{vq_encoder_forward.1} parent=0 // pred_check
    _
  $region203: #{vq_encoder_forward.1} parent=0 // pred_check_branch
    %5339 = sbr.rel (0) target = $region205
  $region204: #{vq_encoder_forward.1} parent=0 // pred_region
    _
  $region205: #{vq_encoder_forward.1} parent=0 // pred_fallthru
    _
  // Predicated region
  $region206: #{vq_encoder_forward.1} parent=0 // pred_check
    _
  $region207: #{vq_encoder_forward.1} parent=0 // pred_check_branch
    %5341 = sbr.rel (0) target = $region209
  $region208: #{vq_encoder_forward.1} parent=0 // pred_region
    _
  $region209: #{vq_encoder_forward.1} parent=0 // pred_fallthru
    _

</llo_original>
